<compile_context>
chip_gen: v6e
topology: v6e:2x2x1
jax: 0.10.0
libtpu: 0.0.40
codegen_flags: <defaults>
</compile_context>

<pallas_src>
import functools

import jax
import jax.numpy as jnp
from jax.experimental import pallas as pl
from jax.experimental.pallas import tpu as pltpu


def zsad_kernel(bh_ref, bw_ref, x_ref, y_ref, out_ref, min_ref, *, cb):
    """One grid step: cb channels of batch 0; update running first-occurrence argmin."""
    c = pl.program_id(0)

    bh = bh_ref[...]  # (H, H) truncated band of ones, pre-scaled by 1/(kh*kw)
    bw = bw_ref[...]  # (W, W) truncated band of ones
    hp = jax.lax.Precision.HIGHEST

    def box(a):  # (H, W) -> (H, W): avg_pool2d(5x5, stride 1, pad 2, count_include_pad=True)
        t = jnp.dot(bh, a, precision=hp, preferred_element_type=jnp.float32)
        return jnp.dot(t, bw, precision=hp, preferred_element_type=jnp.float32)

    def cv_for(ci):
        # Linearity of box: (y - box(y)) - (x - box(x)) == d - box(d), d = y - x.
        d = y_ref[ci] - x_ref[ci]            # (H, W)
        ad = jnp.abs(d - box(d))
        return box(ad)

    # ---- block-local min / argmin over this channel chunk (static unroll) ----
    cv_min = cv_for(0)
    arg = jnp.zeros(cv_min.shape, jnp.int32)
    for ci in range(1, cb):
        cvi = cv_for(ci)
        better = cvi < cv_min                # strict '<' => first-occurrence ties
        arg = jnp.where(better, ci, arg)
        cv_min = jnp.where(better, cvi, cv_min)

    # ---- single fold into the running (cross-grid-step) argmin --------------
    @pl.when(c == 0)
    def _():
        min_ref[...] = cv_min
        out_ref[...] = arg

    @pl.when(c > 0)
    def _():
        better = cv_min < min_ref[...]
        out_ref[...] = jnp.where(better, c * cb + arg, out_ref[...]).astype(jnp.int32)
        min_ref[...] = jnp.where(better, cv_min, min_ref[...])


def zero_mean_absolute_difference(x, y, block_size=(5, 5)):
    """x, y: (N, C, H, W) float32.  Returns (H, W) int32 == torch argmin(CV[0], dim=0)."""
    N, C, H, W = x.shape
    kh, kw = block_size
    ph, pw = kh // 2, kw // 2

    # channel chunk size: largest divisor of C that is <= 8.
    cb = 1
    for d in range(min(C, 8), 0, -1):
        if C % d == 0:
            cb = d
            break

    # Truncated 0/1 band matrices: band[i, j] = 1 iff |i - j| <= half.
    # (BH @ A @ BW) reproduces count_include_pad=True exactly (zero contribution
    # outside the image, constant divisor folded into BH).
    def band(n, half):
        i = jnp.arange(n)
        return (jnp.abs(i[:, None] - i[None, :]) <= half).astype(jnp.float32)

    bh = band(H, ph) * (1.0 / float(kh * kw))
    bw = band(W, pw)

    kern = functools.partial(zsad_kernel, cb=cb)

    # roofline hints / VMEM budget
    flops = int(C * (4 * (H * H * W + H * W * W) + 8 * H * W))
    bytes_accessed = int(2 * C * H * W * 4 + (H * H + W * W) * 4 + H * W * 4)
    need = 2 * 2 * cb * H * W * 4 + 2 * (H * H + W * W) * 4 + 3 * H * W * 4
    vmem_limit = int(min(64 * 1024 * 1024, max(32 * 1024 * 1024, 4 * need)))

    return pl.pallas_call(
        kern,
        grid=(C // cb,),
        in_specs=[
            pl.BlockSpec((H, H), lambda c: (0, 0)),                  # BH (constant block)
            pl.BlockSpec((W, W), lambda c: (0, 0)),                  # BW (constant block)
            pl.BlockSpec((None, cb, H, W), lambda c: (0, c, 0, 0)),  # x, batch 0 only
            pl.BlockSpec((None, cb, H, W), lambda c: (0, c, 0, 0)),  # y, batch 0 only
        ],
        out_specs=pl.BlockSpec((H, W), lambda c: (0, 0)),
        out_shape=jax.ShapeDtypeStruct((H, W), jnp.int32),
        scratch_shapes=[pltpu.VMEM((H, W), jnp.float32)],            # running min of CV
        compiler_params=pltpu.CompilerParams(
            dimension_semantics=("arbitrary",),
            vmem_limit_bytes=vmem_limit,
        ),
        cost_estimate=pl.CostEstimate(
            flops=flops, transcendentals=0, bytes_accessed=bytes_accessed),
    )(bh, bw, x.astype(jnp.float32), y.astype(jnp.float32))


def _reference(x, y, block_size=(5, 5)):
    """Pure-JAX reference reproducing avg_pool2d(count_include_pad=True) via shifted sums."""
    kh, kw = block_size
    ph, pw = kh // 2, kw // 2

    def box(a):  # a: (N, C, H, W)
        N, C, H, W = a.shape
        p = jnp.pad(a, ((0, 0), (0, 0), (ph, ph), (pw, pw)))
        acc = jnp.zeros_like(a)
        for i in range(kh):
            for j in range(kw):
                acc = acc + p[:, :, i:i + H, j:j + W]
        return acc / float(kh * kw)

    x2 = x - box(x)
    y2 = y - box(y)
    ad = jnp.abs(y2 - x2)
    CV0 = box(ad)[0]                                  # (C, H, W)
    return jnp.argmin(CV0, axis=0).astype(jnp.int32), CV0


if __name__ == "__main__":
    key = jax.random.PRNGKey(0)
    kx, ky = jax.random.split(key)
    N, C, H, W = 2, 4, 16, 16
    x = jax.random.normal(kx, (N, C, H, W), dtype=jnp.float32)
    y = jax.random.normal(ky, (N, C, H, W), dtype=jnp.float32)

    out = jax.block_until_ready(zero_mean_absolute_difference(x, y))

    ref_arg, ref_cv = _reference(x, y)
    ref_arg = jax.block_until_ready(ref_arg)

    assert out.shape == (H, W) and out.dtype == jnp.int32

    mismatch = out != ref_arg
    if bool(jnp.any(mismatch)):
        # Any disagreement must be a numerical near-tie (different but equally
        # minimal CV up to rounding differences between MXU and VPU sums).
        got_cv = jnp.take_along_axis(ref_cv, out[None], axis=0)[0]
        want_cv = jnp.take_along_axis(ref_cv, ref_arg[None], axis=0)[0]
        gap = jnp.max(jnp.where(mismatch, jnp.abs(got_cv - want_cv), 0.0))
        scale = 1.0 + float(jnp.max(jnp.abs(ref_cv)))
        assert float(gap) <= 1e-3 * scale, (
            f"Pallas argmin mismatch beyond numerical tie: gap={float(gap)}")

    print("KERNEL_OK")
</pallas_src>

<mosaic_0001>
module attributes {stable_mosaic.version = 11 : i64} {
  func.func @zsad_kernel(%arg0: i32, %arg1: memref<16x16xf32, #tpu.memory_space<vmem>>, %arg2: memref<16x16xf32, #tpu.memory_space<vmem>>, %arg3: memref<1x4x16x16xf32, #tpu.memory_space<vmem>>, %arg4: memref<1x4x16x16xf32, #tpu.memory_space<vmem>>, %arg5: memref<16x16xi32, #tpu.memory_space<vmem>>, %arg6: memref<16x16xf32, #tpu.memory_space<vmem>>) attributes {dimension_semantics = [#tpu.dimension_semantics<arbitrary>], iteration_bounds = array<i64: 1>, scalar_prefetch = 0 : i64, scratch_operands = 1 : i64, tpu.core_type = #tpu.core_type<tc>, window_params = [{pipeline_mode = #tpu.pipeline_mode<synchronous>, transform_indices = @transform_0, window_bounds = array<i64: 16, 16>}, {pipeline_mode = #tpu.pipeline_mode<synchronous>, transform_indices = @transform_1, window_bounds = array<i64: 16, 16>}, {transform_indices = @transform_2, window_bounds = array<i64: 1, 4, 16, 16>}, {transform_indices = @transform_3, window_bounds = array<i64: 1, 4, 16, 16>}, {pipeline_mode = #tpu.pipeline_mode<synchronous>, transform_indices = @transform_4, window_bounds = array<i64: 16, 16>}]} {
    %c0 = arith.constant 0 : index
    %c0_0 = arith.constant 0 : index
    %0 = vector.load %arg1[%c0, %c0_0] : memref<16x16xf32, #tpu.memory_space<vmem>>, vector<16x16xf32>
    %c0_1 = arith.constant 0 : index
    %c0_2 = arith.constant 0 : index
    %1 = vector.load %arg2[%c0_1, %c0_2] : memref<16x16xf32, #tpu.memory_space<vmem>>, vector<16x16xf32>
    %c0_3 = arith.constant 0 : index
    %c0_4 = arith.constant 0 : index
    %c0_5 = arith.constant 0 : index
    %c0_6 = arith.constant 0 : index
    %2 = vector.load %arg4[%c0_3, %c0_4, %c0_5, %c0_6] : memref<1x4x16x16xf32, #tpu.memory_space<vmem>>, vector<1x1x16x16xf32>
    %3 = vector.shape_cast %2 : vector<1x1x16x16xf32> to vector<16x16xf32>
    %c0_7 = arith.constant 0 : index
    %c0_8 = arith.constant 0 : index
    %c0_9 = arith.constant 0 : index
    %c0_10 = arith.constant 0 : index
    %4 = vector.load %arg3[%c0_7, %c0_8, %c0_9, %c0_10] : memref<1x4x16x16xf32, #tpu.memory_space<vmem>>, vector<1x1x16x16xf32>
    %5 = vector.shape_cast %4 : vector<1x1x16x16xf32> to vector<16x16xf32>
    %6 = arith.subf %3, %5 : vector<16x16xf32>
    %cst = arith.constant dense<0.000000e+00> : vector<16x16xf32>
    %7 = tpu.matmul %0, %6, %cst {dimension_numbers = #tpu.dot_dimension_numbers<[1], [0], [0], [1], [0, 0, 1, 1], [], []>, precision = #tpu.contract_precision<fp32>} : vector<16x16xf32>, vector<16x16xf32>, vector<16x16xf32> -> vector<16x16xf32>
    %cst_11 = arith.constant dense<0.000000e+00> : vector<16x16xf32>
    %8 = tpu.matmul %7, %1, %cst_11 {dimension_numbers = #tpu.dot_dimension_numbers<[1], [0], [0], [1], [0, 0, 1, 1], [], []>, precision = #tpu.contract_precision<fp32>} : vector<16x16xf32>, vector<16x16xf32>, vector<16x16xf32> -> vector<16x16xf32>
    %9 = arith.subf %6, %8 : vector<16x16xf32>
    %10 = math.absf %9 : vector<16x16xf32>
    %cst_12 = arith.constant dense<0.000000e+00> : vector<16x16xf32>
    %11 = tpu.matmul %0, %10, %cst_12 {dimension_numbers = #tpu.dot_dimension_numbers<[1], [0], [0], [1], [0, 0, 1, 1], [], []>, precision = #tpu.contract_precision<fp32>} : vector<16x16xf32>, vector<16x16xf32>, vector<16x16xf32> -> vector<16x16xf32>
    %cst_13 = arith.constant dense<0.000000e+00> : vector<16x16xf32>
    %12 = tpu.matmul %11, %1, %cst_13 {dimension_numbers = #tpu.dot_dimension_numbers<[1], [0], [0], [1], [0, 0, 1, 1], [], []>, precision = #tpu.contract_precision<fp32>} : vector<16x16xf32>, vector<16x16xf32>, vector<16x16xf32> -> vector<16x16xf32>
    %c0_i32 = arith.constant 0 : i32
    %13 = vector.broadcast %c0_i32 : i32 to vector<16x16xi32>
    %c0_14 = arith.constant 0 : index
    %c1 = arith.constant 1 : index
    %c0_15 = arith.constant 0 : index
    %c0_16 = arith.constant 0 : index
    %14 = vector.load %arg4[%c0_14, %c1, %c0_15, %c0_16] : memref<1x4x16x16xf32, #tpu.memory_space<vmem>>, vector<1x1x16x16xf32>
    %15 = vector.shape_cast %14 : vector<1x1x16x16xf32> to vector<16x16xf32>
    %c0_17 = arith.constant 0 : index
    %c1_18 = arith.constant 1 : index
    %c0_19 = arith.constant 0 : index
    %c0_20 = arith.constant 0 : index
    %16 = vector.load %arg3[%c0_17, %c1_18, %c0_19, %c0_20] : memref<1x4x16x16xf32, #tpu.memory_space<vmem>>, vector<1x1x16x16xf32>
    %17 = vector.shape_cast %16 : vector<1x1x16x16xf32> to vector<16x16xf32>
    %18 = arith.subf %15, %17 : vector<16x16xf32>
    %cst_21 = arith.constant dense<0.000000e+00> : vector<16x16xf32>
    %19 = tpu.matmul %0, %18, %cst_21 {dimension_numbers = #tpu.dot_dimension_numbers<[1], [0], [0], [1], [0, 0, 1, 1], [], []>, precision = #tpu.contract_precision<fp32>} : vector<16x16xf32>, vector<16x16xf32>, vector<16x16xf32> -> vector<16x16xf32>
    %cst_22 = arith.constant dense<0.000000e+00> : vector<16x16xf32>
    %20 = tpu.matmul %19, %1, %cst_22 {dimension_numbers = #tpu.dot_dimension_numbers<[1], [0], [0], [1], [0, 0, 1, 1], [], []>, precision = #tpu.contract_precision<fp32>} : vector<16x16xf32>, vector<16x16xf32>, vector<16x16xf32> -> vector<16x16xf32>
    %21 = arith.subf %18, %20 : vector<16x16xf32>
    %22 = math.absf %21 : vector<16x16xf32>
    %cst_23 = arith.constant dense<0.000000e+00> : vector<16x16xf32>
    %23 = tpu.matmul %0, %22, %cst_23 {dimension_numbers = #tpu.dot_dimension_numbers<[1], [0], [0], [1], [0, 0, 1, 1], [], []>, precision = #tpu.contract_precision<fp32>} : vector<16x16xf32>, vector<16x16xf32>, vector<16x16xf32> -> vector<16x16xf32>
    %cst_24 = arith.constant dense<0.000000e+00> : vector<16x16xf32>
    %24 = tpu.matmul %23, %1, %cst_24 {dimension_numbers = #tpu.dot_dimension_numbers<[1], [0], [0], [1], [0, 0, 1, 1], [], []>, precision = #tpu.contract_precision<fp32>} : vector<16x16xf32>, vector<16x16xf32>, vector<16x16xf32> -> vector<16x16xf32>
    %25 = arith.cmpf olt, %24, %12 : vector<16x16xf32>
    %c1_i32 = arith.constant 1 : i32
    %26 = vector.broadcast %c1_i32 : i32 to vector<16x16xi32>
    %27 = arith.select %25, %26, %13 : vector<16x16xi1>, vector<16x16xi32>
    %28 = arith.select %25, %24, %12 : vector<16x16xi1>, vector<16x16xf32>
    %c0_25 = arith.constant 0 : index
    %c2 = arith.constant 2 : index
    %c0_26 = arith.constant 0 : index
    %c0_27 = arith.constant 0 : index
    %29 = vector.load %arg4[%c0_25, %c2, %c0_26, %c0_27] : memref<1x4x16x16xf32, #tpu.memory_space<vmem>>, vector<1x1x16x16xf32>
    %30 = vector.shape_cast %29 : vector<1x1x16x16xf32> to vector<16x16xf32>
    %c0_28 = arith.constant 0 : index
    %c2_29 = arith.constant 2 : index
    %c0_30 = arith.constant 0 : index
    %c0_31 = arith.constant 0 : index
    %31 = vector.load %arg3[%c0_28, %c2_29, %c0_30, %c0_31] : memref<1x4x16x16xf32, #tpu.memory_space<vmem>>, vector<1x1x16x16xf32>
    %32 = vector.shape_cast %31 : vector<1x1x16x16xf32> to vector<16x16xf32>
    %33 = arith.subf %30, %32 : vector<16x16xf32>
    %cst_32 = arith.constant dense<0.000000e+00> : vector<16x16xf32>
    %34 = tpu.matmul %0, %33, %cst_32 {dimension_numbers = #tpu.dot_dimension_numbers<[1], [0], [0], [1], [0, 0, 1, 1], [], []>, precision = #tpu.contract_precision<fp32>} : vector<16x16xf32>, vector<16x16xf32>, vector<16x16xf32> -> vector<16x16xf32>
    %cst_33 = arith.constant dense<0.000000e+00> : vector<16x16xf32>
    %35 = tpu.matmul %34, %1, %cst_33 {dimension_numbers = #tpu.dot_dimension_numbers<[1], [0], [0], [1], [0, 0, 1, 1], [], []>, precision = #tpu.contract_precision<fp32>} : vector<16x16xf32>, vector<16x16xf32>, vector<16x16xf32> -> vector<16x16xf32>
    %36 = arith.subf %33, %35 : vector<16x16xf32>
    %37 = math.absf %36 : vector<16x16xf32>
    %cst_34 = arith.constant dense<0.000000e+00> : vector<16x16xf32>
    %38 = tpu.matmul %0, %37, %cst_34 {dimension_numbers = #tpu.dot_dimension_numbers<[1], [0], [0], [1], [0, 0, 1, 1], [], []>, precision = #tpu.contract_precision<fp32>} : vector<16x16xf32>, vector<16x16xf32>, vector<16x16xf32> -> vector<16x16xf32>
    %cst_35 = arith.constant dense<0.000000e+00> : vector<16x16xf32>
    %39 = tpu.matmul %38, %1, %cst_35 {dimension_numbers = #tpu.dot_dimension_numbers<[1], [0], [0], [1], [0, 0, 1, 1], [], []>, precision = #tpu.contract_precision<fp32>} : vector<16x16xf32>, vector<16x16xf32>, vector<16x16xf32> -> vector<16x16xf32>
    %40 = arith.cmpf olt, %39, %28 : vector<16x16xf32>
    %c2_i32 = arith.constant 2 : i32
    %41 = vector.broadcast %c2_i32 : i32 to vector<16x16xi32>
    %42 = arith.select %40, %41, %27 : vector<16x16xi1>, vector<16x16xi32>
    %43 = arith.select %40, %39, %28 : vector<16x16xi1>, vector<16x16xf32>
    %c0_36 = arith.constant 0 : index
    %c3 = arith.constant 3 : index
    %c0_37 = arith.constant 0 : index
    %c0_38 = arith.constant 0 : index
    %44 = vector.load %arg4[%c0_36, %c3, %c0_37, %c0_38] : memref<1x4x16x16xf32, #tpu.memory_space<vmem>>, vector<1x1x16x16xf32>
    %45 = vector.shape_cast %44 : vector<1x1x16x16xf32> to vector<16x16xf32>
    %c0_39 = arith.constant 0 : index
    %c3_40 = arith.constant 3 : index
    %c0_41 = arith.constant 0 : index
    %c0_42 = arith.constant 0 : index
    %46 = vector.load %arg3[%c0_39, %c3_40, %c0_41, %c0_42] : memref<1x4x16x16xf32, #tpu.memory_space<vmem>>, vector<1x1x16x16xf32>
    %47 = vector.shape_cast %46 : vector<1x1x16x16xf32> to vector<16x16xf32>
    %48 = arith.subf %45, %47 : vector<16x16xf32>
    %cst_43 = arith.constant dense<0.000000e+00> : vector<16x16xf32>
    %49 = tpu.matmul %0, %48, %cst_43 {dimension_numbers = #tpu.dot_dimension_numbers<[1], [0], [0], [1], [0, 0, 1, 1], [], []>, precision = #tpu.contract_precision<fp32>} : vector<16x16xf32>, vector<16x16xf32>, vector<16x16xf32> -> vector<16x16xf32>
    %cst_44 = arith.constant dense<0.000000e+00> : vector<16x16xf32>
    %50 = tpu.matmul %49, %1, %cst_44 {dimension_numbers = #tpu.dot_dimension_numbers<[1], [0], [0], [1], [0, 0, 1, 1], [], []>, precision = #tpu.contract_precision<fp32>} : vector<16x16xf32>, vector<16x16xf32>, vector<16x16xf32> -> vector<16x16xf32>
    %51 = arith.subf %48, %50 : vector<16x16xf32>
    %52 = math.absf %51 : vector<16x16xf32>
    %cst_45 = arith.constant dense<0.000000e+00> : vector<16x16xf32>
    %53 = tpu.matmul %0, %52, %cst_45 {dimension_numbers = #tpu.dot_dimension_numbers<[1], [0], [0], [1], [0, 0, 1, 1], [], []>, precision = #tpu.contract_precision<fp32>} : vector<16x16xf32>, vector<16x16xf32>, vector<16x16xf32> -> vector<16x16xf32>
    %cst_46 = arith.constant dense<0.000000e+00> : vector<16x16xf32>
    %54 = tpu.matmul %53, %1, %cst_46 {dimension_numbers = #tpu.dot_dimension_numbers<[1], [0], [0], [1], [0, 0, 1, 1], [], []>, precision = #tpu.contract_precision<fp32>} : vector<16x16xf32>, vector<16x16xf32>, vector<16x16xf32> -> vector<16x16xf32>
    %55 = arith.cmpf olt, %54, %43 : vector<16x16xf32>
    %c3_i32 = arith.constant 3 : i32
    %56 = vector.broadcast %c3_i32 : i32 to vector<16x16xi32>
    %57 = arith.select %55, %56, %42 : vector<16x16xi1>, vector<16x16xi32>
    %58 = arith.select %55, %54, %43 : vector<16x16xi1>, vector<16x16xf32>
    %c0_i32_47 = arith.constant 0 : i32
    %59 = arith.cmpi eq, %arg0, %c0_i32_47 : i32
    %60 = arith.extui %59 : i1 to i32
    %c0_i32_48 = arith.constant 0 : i32
    %61 = arith.cmpi ne, %60, %c0_i32_48 : i32
    scf.if %61 {
      %c0_51 = arith.constant 0 : index
      %c0_52 = arith.constant 0 : index
      %65 = vector.load %arg6[%c0_51, %c0_52] : memref<16x16xf32, #tpu.memory_space<vmem>>, vector<16x16xf32>
      tpu.vector_store %arg6[%c0_51, %c0_52], %58 {strides = array<i32>} : memref<16x16xf32, #tpu.memory_space<vmem>>, vector<16x16xf32>,
      %c0_53 = arith.constant 0 : index
      %c0_54 = arith.constant 0 : index
      %66 = vector.load %arg5[%c0_53, %c0_54] : memref<16x16xi32, #tpu.memory_space<vmem>>, vector<16x16xi32>
      tpu.vector_store %arg5[%c0_53, %c0_54], %57 {strides = array<i32>} : memref<16x16xi32, #tpu.memory_space<vmem>>, vector<16x16xi32>,
    } else {
    }
    %c0_i32_49 = arith.constant 0 : i32
    %62 = arith.cmpi sgt, %arg0, %c0_i32_49 : i32
    %63 = arith.extui %62 : i1 to i32
    %c0_i32_50 = arith.constant 0 : i32
    %64 = arith.cmpi ne, %63, %c0_i32_50 : i32
    scf.if %64 {
      %c0_51 = arith.constant 0 : index
      %c0_52 = arith.constant 0 : index
      %65 = vector.load %arg6[%c0_51, %c0_52] : memref<16x16xf32, #tpu.memory_space<vmem>>, vector<16x16xf32>
      %66 = arith.cmpf olt, %58, %65 : vector<16x16xf32>
      %c4_i32 = arith.constant 4 : i32
      %67 = arith.muli %arg0, %c4_i32 : i32
      %68 = vector.broadcast %67 : i32 to vector<16x16xi32>
      %69 = arith.addi %68, %57 : vector<16x16xi32>
      %c0_53 = arith.constant 0 : index
      %c0_54 = arith.constant 0 : index
      %70 = vector.load %arg5[%c0_53, %c0_54] : memref<16x16xi32, #tpu.memory_space<vmem>>, vector<16x16xi32>
      %71 = arith.select %66, %69, %70 : vector<16x16xi1>, vector<16x16xi32>
      %c0_55 = arith.constant 0 : index
      %c0_56 = arith.constant 0 : index
      %72 = vector.load %arg5[%c0_55, %c0_56] : memref<16x16xi32, #tpu.memory_space<vmem>>, vector<16x16xi32>
      tpu.vector_store %arg5[%c0_55, %c0_56], %71 {strides = array<i32>} : memref<16x16xi32, #tpu.memory_space<vmem>>, vector<16x16xi32>,
      %c0_57 = arith.constant 0 : index
      %c0_58 = arith.constant 0 : index
      %73 = vector.load %arg6[%c0_57, %c0_58] : memref<16x16xf32, #tpu.memory_space<vmem>>, vector<16x16xf32>
      %74 = arith.select %66, %58, %73 : vector<16x16xi1>, vector<16x16xf32>
      %c0_59 = arith.constant 0 : index
      %c0_60 = arith.constant 0 : index
      %75 = vector.load %arg6[%c0_59, %c0_60] : memref<16x16xf32, #tpu.memory_space<vmem>>, vector<16x16xf32>
      tpu.vector_store %arg6[%c0_59, %c0_60], %74 {strides = array<i32>} : memref<16x16xf32, #tpu.memory_space<vmem>>, vector<16x16xf32>,
    } else {
    }
    return
  }
  func.func @transform_0(%arg0: i32) -> (i32, i32) {
    %c0_i32 = arith.constant 0 : i32
    %c0_i32_0 = arith.constant 0 : i32
    %c0_i32_1 = arith.constant 0 : i32
    return %c0_i32, %c0_i32_0 : i32, i32
  }
  func.func @transform_1(%arg0: i32) -> (i32, i32) {
    %c0_i32 = arith.constant 0 : i32
    %c0_i32_0 = arith.constant 0 : i32
    %c0_i32_1 = arith.constant 0 : i32
    return %c0_i32, %c0_i32_0 : i32, i32
  }
  func.func @transform_2(%arg0: i32) -> (i32, i32, i32, i32) {
    %c0_i32 = arith.constant 0 : i32
    %c0_i32_0 = arith.constant 0 : i32
    %c0_i32_1 = arith.constant 0 : i32
    %c0_i32_2 = arith.constant 0 : i32
    return %c0_i32, %arg0, %c0_i32_0, %c0_i32_1 : i32, i32, i32, i32
  }
  func.func @transform_3(%arg0: i32) -> (i32, i32, i32, i32) {
    %c0_i32 = arith.constant 0 : i32
    %c0_i32_0 = arith.constant 0 : i32
    %c0_i32_1 = arith.constant 0 : i32
    %c0_i32_2 = arith.constant 0 : i32
    return %c0_i32, %arg0, %c0_i32_0, %c0_i32_1 : i32, i32, i32, i32
  }
  func.func @transform_4(%arg0: i32) -> (i32, i32) {
    %c0_i32 = arith.constant 0 : i32
    %c0_i32_0 = arith.constant 0 : i32
    %c0_i32_1 = arith.constant 0 : i32
    return %c0_i32, %c0_i32_0 : i32, i32
  }
}

</mosaic_0001>

<llo_original>
// kernel: tpu_custom_call.1
$region0: #{tpu_custom_call.1}
  #allocation0 [shape = 'u32[]', space=smem, size = 0x4, offset = 0x4, fixed_abs, tag = 'smem constant byte address 0x4 - core index']
  #allocation1 [shape = 'u32[144,128]{1,0:T(1,128)}', space=vmem, size = 0x12000, scoped, tag = 'internal scratch']
  #allocation2 [shape = 'f32[16,16]{1,0:T(8,128)}', space=vmem, size = 0x2000, scoped, tag = 'scratch operand']
  %s0 = inlined_call_operand.hbm [shape: f32[16,16], index: 0, kind: input, shape index: {}]
  %s1 = inlined_call_operand.hbm [shape: f32[16,16], index: 1, kind: input, shape index: {}]
  %s2 = inlined_call_operand.hbm [shape: f32[2,4,16,16], index: 2, kind: input, shape index: {}]
  %s3 = inlined_call_operand.hbm [shape: f32[2,4,16,16], index: 3, kind: input, shape index: {}]
  %s4 = inlined_call_operand.hbm [shape: s32[16,16], index: 4, kind: output, shape index: {}]
  %s5 = sld [smem:[#allocation0]]
  $region50: #{tpu_custom_call.1} parent=0
    _
  %s7 = ssub.s32 1, %s5
  %s8 = scalar_select 0, %s7, %s5
  $region1: #{tpu_custom_call.1} parent=0
    #allocation3 [shape = 'u8[8192]{0}', space=vmem, size = 0x2000, scoped, tag = 'input window, operand 0, single buffered']
    #allocation4 [shape = 's32[1]{0}', space=sflag, size = 0x4, scoped, tag = 'scoped memory for tpu_custom_call.1']
    #allocation5 [shape = 's32[1]{0}', space=sflag, size = 0x4, scoped, tag = 'scoped memory for tpu_custom_call.1']
    #allocation6 [shape = 'u8[8192]{0}', space=vmem, size = 0x2000, scoped, tag = 'input window, operand 1, single buffered']
    #allocation7 [shape = 's32[1]{0}', space=sflag, size = 0x4, scoped, tag = 'scoped memory for tpu_custom_call.1']
    #allocation8 [shape = 'u8[32768]{0}', space=vmem, size = 0x8000, scoped, tag = 'input window, operand 2, single buffered']
    #allocation9 [shape = 'u8[32768]{0}', space=vmem, size = 0x8000, scoped, tag = 'input window, operand 3, single buffered']
    #allocation10 [shape = 's32[1]{0}', space=sflag, size = 0x4, scoped, tag = 'scoped memory for tpu_custom_call.1']
    #allocation11 [shape = 'u8[8192]{0}', space=vmem, size = 0x2000, scoped, tag = 'output window, operand 0, single buffered']
    %9 = vsyncpa [#allocation4], 0
    %10 = vsyncpa [#allocation7], 0
    %11 = vsyncpa [#allocation10], 0
    %12 = vsyncpa [#allocation5], 0
    // Predicated region
    $region2: #{tpu_custom_call.1} parent=1 // pred_check
      _
    $region3: #{tpu_custom_call.1} parent=1 // pred_check_branch
      %14 = sbr.rel (0) target = $region5
    $region4: #{tpu_custom_call.1} parent=1 // pred_region
      %s16 = ssub.s32 256, 256
      %17 = vsyncadd [#allocation4], %s16
      %s18 = sshll.u32 [#allocation3], 4
      %s19 = int_to_ptr.vmem [resolvable:$true] %s18
      %24 = dma.hbm_to_vmem [thread:$0]  %s0, 256, %s19, [#allocation4], 128, 128, 8
    $region5: #{tpu_custom_call.1} parent=1 // pred_fallthru
      _
    // Predicated region
    $region6: #{tpu_custom_call.1} parent=1 // pred_check
      _
    $region7: #{tpu_custom_call.1} parent=1 // pred_check_branch
      %26 = sbr.rel (0) target = $region9
    $region8: #{tpu_custom_call.1} parent=1 // pred_region
      %s28 = ssub.s32 256, 256
      %29 = vsyncadd [#allocation7], %s28
      %s30 = sshll.u32 [#allocation6], 4
      %s31 = int_to_ptr.vmem [resolvable:$true] %s30
      %36 = dma.hbm_to_vmem [thread:$0]  %s1, 256, %s31, [#allocation7], 128, 128, 8
    $region9: #{tpu_custom_call.1} parent=1 // pred_fallthru
      _
    // Predicated region
    $region10: #{tpu_custom_call.1} parent=1 // pred_check
      _
    $region11: #{tpu_custom_call.1} parent=1 // pred_check_branch
      %38 = sbr.rel (0) target = $region13
    $region12: #{tpu_custom_call.1} parent=1 // pred_region
      %s40 = ssub.s32 1024, 1024
      %41 = vsyncadd [#allocation7], %s40
      %s42 = sshll.u32 [#allocation8], 4
      %s43 = int_to_ptr.vmem [resolvable:$true] %s42
      %48 = dma.hbm_to_vmem [thread:$0]  %s2, 1024, %s43, [#allocation7], 128, 128, 8
    $region13: #{tpu_custom_call.1} parent=1 // pred_fallthru
      _
    // Predicated region
    $region14: #{tpu_custom_call.1} parent=1 // pred_check
      _
    $region15: #{tpu_custom_call.1} parent=1 // pred_check_branch
      %50 = sbr.rel (0) target = $region17
    $region16: #{tpu_custom_call.1} parent=1 // pred_region
      %s52 = ssub.s32 1024, 1024
      %53 = vsyncadd [#allocation10], %s52
      %s54 = sshll.u32 [#allocation9], 4
      %s55 = int_to_ptr.vmem [resolvable:$true] %s54
      %60 = dma.hbm_to_vmem [thread:$0]  %s3, 1024, %s55, [#allocation10], 128, 128, 8
    $region17: #{tpu_custom_call.1} parent=1 // pred_fallthru
      _
    // Predicated region
    $region18: #{tpu_custom_call.1} parent=1 // pred_check
      _
    $region19: #{tpu_custom_call.1} parent=1 // pred_check_branch
      %62 = sbr.rel (0) target = $region21
    $region20: #{tpu_custom_call.1} parent=1 // pred_region
      %63 = dma.done [#allocation4], 256
    $region21: #{tpu_custom_call.1} parent=1 // pred_fallthru
      _
    // Predicated region
    $region22: #{tpu_custom_call.1} parent=1 // pred_check
      _
    $region23: #{tpu_custom_call.1} parent=1 // pred_check_branch
      %65 = sbr.rel (0) target = $region25
    $region24: #{tpu_custom_call.1} parent=1 // pred_region
      %66 = dma.done [#allocation7], 256
    $region25: #{tpu_custom_call.1} parent=1 // pred_fallthru
      _
    // Predicated region
    $region26: #{tpu_custom_call.1} parent=1 // pred_check
      _
    $region27: #{tpu_custom_call.1} parent=1 // pred_check_branch
      %68 = sbr.rel (0) target = $region29
    $region28: #{tpu_custom_call.1} parent=1 // pred_region
      %69 = dma.done [#allocation7], 1024
    $region29: #{tpu_custom_call.1} parent=1 // pred_fallthru
      _
    // Predicated region
    $region30: #{tpu_custom_call.1} parent=1 // pred_check
      _
    $region31: #{tpu_custom_call.1} parent=1 // pred_check_branch
      %71 = sbr.rel (0) target = $region33
    $region32: #{tpu_custom_call.1} parent=1 // pred_region
      %72 = dma.done [#allocation10], 1024
    $region33: #{tpu_custom_call.1} parent=1 // pred_fallthru
      _
    %v73 = vld [vmem:[#allocation3] sm:$0xff]
    %v74 = vld [vmem:[#allocation3 + $0x8] sm:$0xff]
    %v75 = vld [vmem:[#allocation6] sm:$0xff]
    %v76 = vld [vmem:[#allocation6 + $0x8] sm:$0xff]
    %v77 = vld [vmem:[#allocation9] sm:$0xff]
    %v78 = vld [vmem:[#allocation9 + $0x8] sm:$0xff]
    %v79 = vld [vmem:[#allocation8] sm:$0xff]
    %v80 = vld [vmem:[#allocation8 + $0x8] sm:$0xff]
    %v81 = vsub.f32 %v77, %v79
    %v82 = vsub.f32 %v78, %v80
    %vm83 = vcmask 130048
    %v85 = vsel %vm83, %v73, 0
    %v88 = vsel %vm83, %v74, 0
    %90 = vmatprep.subr.mxu0 0.0
    %91 = vmatpush1.msra.mxu0 0.0
    %92 = vmatprep.subr.mxu0 0.0
    %93 = vmatpush1.msra.mxu0 0.0
    %94 = vmatprep.subr.mxu0 0.0
    %95 = vmatpush1.msra.mxu0 0.0
    %96 = vmatprep.subr.mxu0 0.0
    %97 = vmatpush1.msra.mxu0 0.0
    %98 = vmatprep.subr.mxu0 0.0
    %99 = vmatpush1.msra.mxu0 0.0
    %100 = vmatprep.subr.mxu0 0.0
    %101 = vmatpush1.msra.mxu0 0.0
    %102 = vmatprep.subr.mxu0 0.0
    %103 = vmatpush1.msra.mxu0 0.0
    %104 = vmatprep.subr.mxu0 0.0
    %105 = vmatpush1.msra.mxu0 0.0
    %106 = vmatprep.subr.mxu0 0.0
    %107 = vmatpush1.msra.mxu0 0.0
    %108 = vmatprep.subr.mxu0 0.0
    %109 = vmatpush1.msra.mxu0 0.0
    %110 = vmatprep.subr.mxu0 0.0
    %111 = vmatpush1.msra.mxu0 0.0
    %112 = vmatprep.subr.mxu0 0.0
    %113 = vmatpush1.msra.mxu0 0.0
    %114 = vmatprep.subr.mxu0 0.0
    %115 = vmatpush1.msra.mxu0 0.0
    %116 = vmatprep.subr.mxu0 0.0
    %117 = vmatpush1.msra.mxu0 0.0
    %118 = vmatprep.subr.mxu0 0.0
    %v119 = vand.u32 %v82, 4294901760
    %120 = vmatpush1.msra.mxu0 %v119
    %121 = vmatprep.subr.mxu0 0.0
    %v122 = vand.u32 %v81, 4294901760
    %123 = vmatpush1.msra.mxu0 %v122
    %124 = vmatprep.subr.mxu0 0.0
    %125 = vmatpush2.msra.mxu0 0.0
    %126 = vmatprep.subr.mxu0 0.0
    %127 = vmatpush2.msra.mxu0 0.0
    %128 = vmatprep.subr.mxu0 0.0
    %129 = vmatpush2.msra.mxu0 0.0
    %130 = vmatprep.subr.mxu0 0.0
    %131 = vmatpush2.msra.mxu0 0.0
    %132 = vmatprep.subr.mxu0 0.0
    %133 = vmatpush2.msra.mxu0 0.0
    %134 = vmatprep.subr.mxu0 0.0
    %135 = vmatpush2.msra.mxu0 0.0
    %136 = vmatprep.subr.mxu0 0.0
    %137 = vmatpush2.msra.mxu0 0.0
    %138 = vmatprep.subr.mxu0 0.0
    %139 = vmatpush2.msra.mxu0 0.0
    %140 = vmatprep.subr.mxu0 0.0
    %141 = vmatpush2.msra.mxu0 0.0
    %142 = vmatprep.subr.mxu0 0.0
    %143 = vmatpush2.msra.mxu0 0.0
    %144 = vmatprep.subr.mxu0 0.0
    %145 = vmatpush2.msra.mxu0 0.0
    %146 = vmatprep.subr.mxu0 0.0
    %147 = vmatpush2.msra.mxu0 0.0
    %148 = vmatprep.subr.mxu0 0.0
    %149 = vmatpush2.msra.mxu0 0.0
    %150 = vmatprep.subr.mxu0 0.0
    %151 = vmatpush2.msra.mxu0 0.0
    %152 = vmatprep.subr.mxu0 0.0
    %153 = vmatpush2.msra.mxu0 0.0
    %154 = vmatprep.subr.mxu0 0.0
    %155 = vmatpush2.msra.mxu0 0.0
    %156 = vmatprep.mubr.f32.mxu0 0.0
    %v157 = vand.u32 %v85, 4294901760
    %v158 = vsub.f32 %v85, %v157
    %v159 = vand.u32 %v158, 4294901760
    %v160 = vsub.f32 %v158, %v159
    %v161 = vand.u32 %v160, 4294901760
    %162 = vmatmul.mubr.f32.gmra.mxu0 %v161
    %v163 = vpop.f32.mrf.mxu0
    %v164 = vadd.f32 0.0, %v163
    %v165 = vpop.f32.mrf.mxu0
    %166 = vmatprep.mubr.f32.mxu0 0.0
    %v167 = vand.u32 %v88, 4294901760
    %v168 = vsub.f32 %v88, %v167
    %v169 = vand.u32 %v168, 4294901760
    %v170 = vsub.f32 %v168, %v169
    %v171 = vand.u32 %v170, 4294901760
    %172 = vmatmul.mubr.f32.gmra.mxu0 %v171
    %v173 = vpop.f32.mrf.mxu0
    %v174 = vadd.f32 0.0, %v173
    %v175 = vpop.f32.mrf.mxu0
    %176 = vdwg.mxu0
    %177 = vmatprep.subr.mxu0 0.0
    %178 = vmatpush1.msra.mxu0 0.0
    %179 = vmatprep.subr.mxu0 0.0
    %180 = vmatpush1.msra.mxu0 0.0
    %181 = vmatprep.subr.mxu0 0.0
    %182 = vmatpush1.msra.mxu0 0.0
    %183 = vmatprep.subr.mxu0 0.0
    %184 = vmatpush1.msra.mxu0 0.0
    %185 = vmatprep.subr.mxu0 0.0
    %186 = vmatpush1.msra.mxu0 0.0
    %187 = vmatprep.subr.mxu0 0.0
    %188 = vmatpush1.msra.mxu0 0.0
    %189 = vmatprep.subr.mxu0 0.0
    %190 = vmatpush1.msra.mxu0 0.0
    %191 = vmatprep.subr.mxu0 0.0
    %192 = vmatpush1.msra.mxu0 0.0
    %193 = vmatprep.subr.mxu0 0.0
    %194 = vmatpush1.msra.mxu0 0.0
    %195 = vmatprep.subr.mxu0 0.0
    %196 = vmatpush1.msra.mxu0 0.0
    %197 = vmatprep.subr.mxu0 0.0
    %198 = vmatpush1.msra.mxu0 0.0
    %199 = vmatprep.subr.mxu0 0.0
    %200 = vmatpush1.msra.mxu0 0.0
    %201 = vmatprep.subr.mxu0 0.0
    %202 = vmatpush1.msra.mxu0 0.0
    %203 = vmatprep.subr.mxu0 0.0
    %204 = vmatpush1.msra.mxu0 0.0
    %205 = vmatprep.subr.mxu0 0.0
    %v206 = vand.u32 %v82, 4294901760
    %v207 = vsub.f32 %v82, %v206
    %v208 = vand.u32 %v207, 4294901760
    %v209 = vsub.f32 %v207, %v208
    %v210 = vand.u32 %v209, 4294901760
    %211 = vmatpush1.msra.mxu0 %v210
    %212 = vmatprep.subr.mxu0 0.0
    %v213 = vand.u32 %v81, 4294901760
    %v214 = vsub.f32 %v81, %v213
    %v215 = vand.u32 %v214, 4294901760
    %v216 = vsub.f32 %v214, %v215
    %v217 = vand.u32 %v216, 4294901760
    %218 = vmatpush1.msra.mxu0 %v217
    %219 = vmatprep.subr.mxu0 0.0
    %220 = vmatpush2.msra.mxu0 0.0
    %221 = vmatprep.subr.mxu0 0.0
    %222 = vmatpush2.msra.mxu0 0.0
    %223 = vmatprep.subr.mxu0 0.0
    %224 = vmatpush2.msra.mxu0 0.0
    %225 = vmatprep.subr.mxu0 0.0
    %226 = vmatpush2.msra.mxu0 0.0
    %227 = vmatprep.subr.mxu0 0.0
    %228 = vmatpush2.msra.mxu0 0.0
    %229 = vmatprep.subr.mxu0 0.0
    %230 = vmatpush2.msra.mxu0 0.0
    %231 = vmatprep.subr.mxu0 0.0
    %232 = vmatpush2.msra.mxu0 0.0
    %233 = vmatprep.subr.mxu0 0.0
    %234 = vmatpush2.msra.mxu0 0.0
    %235 = vmatprep.subr.mxu0 0.0
    %236 = vmatpush2.msra.mxu0 0.0
    %237 = vmatprep.subr.mxu0 0.0
    %238 = vmatpush2.msra.mxu0 0.0
    %239 = vmatprep.subr.mxu0 0.0
    %240 = vmatpush2.msra.mxu0 0.0
    %241 = vmatprep.subr.mxu0 0.0
    %242 = vmatpush2.msra.mxu0 0.0
    %243 = vmatprep.subr.mxu0 0.0
    %244 = vmatpush2.msra.mxu0 0.0
    %245 = vmatprep.subr.mxu0 0.0
    %246 = vmatpush2.msra.mxu0 0.0
    %247 = vmatprep.subr.mxu0 0.0
    %248 = vmatpush2.msra.mxu0 0.0
    %249 = vmatprep.subr.mxu0 0.0
    %250 = vmatpush2.msra.mxu0 0.0
    %251 = vmatprep.mubr.f32.mxu0 0.0
    %v252 = vand.u32 %v85, 4294901760
    %253 = vmatmul.mubr.f32.gmra.mxu0 %v252
    %v254 = vpop.f32.mrf.mxu0
    %v255 = vadd.f32 %v164, %v254
    %v256 = vpop.f32.mrf.mxu0
    %257 = vmatprep.mubr.f32.mxu0 0.0
    %v258 = vand.u32 %v88, 4294901760
    %259 = vmatmul.mubr.f32.gmra.mxu0 %v258
    %v260 = vpop.f32.mrf.mxu0
    %v261 = vadd.f32 %v174, %v260
    %v262 = vpop.f32.mrf.mxu0
    %263 = vdwg.mxu0
    %264 = vmatprep.subr.mxu0 0.0
    %265 = vmatpush1.msra.mxu0 0.0
    %266 = vmatprep.subr.mxu0 0.0
    %267 = vmatpush1.msra.mxu0 0.0
    %268 = vmatprep.subr.mxu0 0.0
    %269 = vmatpush1.msra.mxu0 0.0
    %270 = vmatprep.subr.mxu0 0.0
    %271 = vmatpush1.msra.mxu0 0.0
    %272 = vmatprep.subr.mxu0 0.0
    %273 = vmatpush1.msra.mxu0 0.0
    %274 = vmatprep.subr.mxu0 0.0
    %275 = vmatpush1.msra.mxu0 0.0
    %276 = vmatprep.subr.mxu0 0.0
    %277 = vmatpush1.msra.mxu0 0.0
    %278 = vmatprep.subr.mxu0 0.0
    %279 = vmatpush1.msra.mxu0 0.0
    %280 = vmatprep.subr.mxu0 0.0
    %281 = vmatpush1.msra.mxu0 0.0
    %282 = vmatprep.subr.mxu0 0.0
    %283 = vmatpush1.msra.mxu0 0.0
    %284 = vmatprep.subr.mxu0 0.0
    %285 = vmatpush1.msra.mxu0 0.0
    %286 = vmatprep.subr.mxu0 0.0
    %287 = vmatpush1.msra.mxu0 0.0
    %288 = vmatprep.subr.mxu0 0.0
    %289 = vmatpush1.msra.mxu0 0.0
    %290 = vmatprep.subr.mxu0 0.0
    %291 = vmatpush1.msra.mxu0 0.0
    %292 = vmatprep.subr.mxu0 0.0
    %v293 = vand.u32 %v82, 4294901760
    %v294 = vsub.f32 %v82, %v293
    %295 = vmatpush1.msra.mxu0 %v294
    %296 = vmatprep.subr.mxu0 0.0
    %v297 = vand.u32 %v81, 4294901760
    %v298 = vsub.f32 %v81, %v297
    %299 = vmatpush1.msra.mxu0 %v298
    %300 = vmatprep.subr.mxu0 0.0
    %301 = vmatpush2.msra.mxu0 0.0
    %302 = vmatprep.subr.mxu0 0.0
    %303 = vmatpush2.msra.mxu0 0.0
    %304 = vmatprep.subr.mxu0 0.0
    %305 = vmatpush2.msra.mxu0 0.0
    %306 = vmatprep.subr.mxu0 0.0
    %307 = vmatpush2.msra.mxu0 0.0
    %308 = vmatprep.subr.mxu0 0.0
    %309 = vmatpush2.msra.mxu0 0.0
    %310 = vmatprep.subr.mxu0 0.0
    %311 = vmatpush2.msra.mxu0 0.0
    %312 = vmatprep.subr.mxu0 0.0
    %313 = vmatpush2.msra.mxu0 0.0
    %314 = vmatprep.subr.mxu0 0.0
    %315 = vmatpush2.msra.mxu0 0.0
    %316 = vmatprep.subr.mxu0 0.0
    %317 = vmatpush2.msra.mxu0 0.0
    %318 = vmatprep.subr.mxu0 0.0
    %319 = vmatpush2.msra.mxu0 0.0
    %320 = vmatprep.subr.mxu0 0.0
    %321 = vmatpush2.msra.mxu0 0.0
    %322 = vmatprep.subr.mxu0 0.0
    %323 = vmatpush2.msra.mxu0 0.0
    %324 = vmatprep.subr.mxu0 0.0
    %325 = vmatpush2.msra.mxu0 0.0
    %326 = vmatprep.subr.mxu0 0.0
    %327 = vmatpush2.msra.mxu0 0.0
    %328 = vmatprep.subr.mxu0 0.0
    %329 = vmatpush2.msra.mxu0 0.0
    %330 = vmatprep.subr.mxu0 0.0
    %331 = vmatpush2.msra.mxu0 0.0
    %332 = vmatprep.mubr.f32.mxu0 0.0
    %v333 = vand.u32 %v85, 4294901760
    %v334 = vsub.f32 %v85, %v333
    %335 = vmatmul.mubr.f32.gmra.mxu0 %v334
    %v336 = vpop.f32.mrf.mxu0
    %v337 = vadd.f32 %v255, %v336
    %v338 = vpop.f32.mrf.mxu0
    %339 = vmatprep.mubr.f32.mxu0 0.0
    %v340 = vand.u32 %v88, 4294901760
    %v341 = vsub.f32 %v88, %v340
    %342 = vmatmul.mubr.f32.gmra.mxu0 %v341
    %v343 = vpop.f32.mrf.mxu0
    %v344 = vadd.f32 %v261, %v343
    %v345 = vpop.f32.mrf.mxu0
    %346 = vdwg.mxu0
    %347 = vmatprep.subr.mxu0 0.0
    %348 = vmatpush1.msra.mxu0 0.0
    %349 = vmatprep.subr.mxu0 0.0
    %350 = vmatpush1.msra.mxu0 0.0
    %351 = vmatprep.subr.mxu0 0.0
    %352 = vmatpush1.msra.mxu0 0.0
    %353 = vmatprep.subr.mxu0 0.0
    %354 = vmatpush1.msra.mxu0 0.0
    %355 = vmatprep.subr.mxu0 0.0
    %356 = vmatpush1.msra.mxu0 0.0
    %357 = vmatprep.subr.mxu0 0.0
    %358 = vmatpush1.msra.mxu0 0.0
    %359 = vmatprep.subr.mxu0 0.0
    %360 = vmatpush1.msra.mxu0 0.0
    %361 = vmatprep.subr.mxu0 0.0
    %362 = vmatpush1.msra.mxu0 0.0
    %363 = vmatprep.subr.mxu0 0.0
    %364 = vmatpush1.msra.mxu0 0.0
    %365 = vmatprep.subr.mxu0 0.0
    %366 = vmatpush1.msra.mxu0 0.0
    %367 = vmatprep.subr.mxu0 0.0
    %368 = vmatpush1.msra.mxu0 0.0
    %369 = vmatprep.subr.mxu0 0.0
    %370 = vmatpush1.msra.mxu0 0.0
    %371 = vmatprep.subr.mxu0 0.0
    %372 = vmatpush1.msra.mxu0 0.0
    %373 = vmatprep.subr.mxu0 0.0
    %374 = vmatpush1.msra.mxu0 0.0
    %375 = vmatprep.subr.mxu0 0.0
    %v376 = vand.u32 %v82, 4294901760
    %377 = vmatpush1.msra.mxu0 %v376
    %378 = vmatprep.subr.mxu0 0.0
    %v379 = vand.u32 %v81, 4294901760
    %380 = vmatpush1.msra.mxu0 %v379
    %381 = vmatprep.subr.mxu0 0.0
    %382 = vmatpush2.msra.mxu0 0.0
    %383 = vmatprep.subr.mxu0 0.0
    %384 = vmatpush2.msra.mxu0 0.0
    %385 = vmatprep.subr.mxu0 0.0
    %386 = vmatpush2.msra.mxu0 0.0
    %387 = vmatprep.subr.mxu0 0.0
    %388 = vmatpush2.msra.mxu0 0.0
    %389 = vmatprep.subr.mxu0 0.0
    %390 = vmatpush2.msra.mxu0 0.0
    %391 = vmatprep.subr.mxu0 0.0
    %392 = vmatpush2.msra.mxu0 0.0
    %393 = vmatprep.subr.mxu0 0.0
    %394 = vmatpush2.msra.mxu0 0.0
    %395 = vmatprep.subr.mxu0 0.0
    %396 = vmatpush2.msra.mxu0 0.0
    %397 = vmatprep.subr.mxu0 0.0
    %398 = vmatpush2.msra.mxu0 0.0
    %399 = vmatprep.subr.mxu0 0.0
    %400 = vmatpush2.msra.mxu0 0.0
    %401 = vmatprep.subr.mxu0 0.0
    %402 = vmatpush2.msra.mxu0 0.0
    %403 = vmatprep.subr.mxu0 0.0
    %404 = vmatpush2.msra.mxu0 0.0
    %405 = vmatprep.subr.mxu0 0.0
    %406 = vmatpush2.msra.mxu0 0.0
    %407 = vmatprep.subr.mxu0 0.0
    %408 = vmatpush2.msra.mxu0 0.0
    %409 = vmatprep.subr.mxu0 0.0
    %410 = vmatpush2.msra.mxu0 0.0
    %411 = vmatprep.subr.mxu0 0.0
    %412 = vmatpush2.msra.mxu0 0.0
    %413 = vmatprep.mubr.f32.mxu0 0.0
    %v414 = vand.u32 %v85, 4294901760
    %v415 = vsub.f32 %v85, %v414
    %v416 = vand.u32 %v415, 4294901760
    %417 = vmatmul.mubr.f32.gmra.mxu0 %v416
    %v418 = vpop.f32.mrf.mxu0
    %v419 = vadd.f32 %v337, %v418
    %v420 = vpop.f32.mrf.mxu0
    %421 = vmatprep.mubr.f32.mxu0 0.0
    %v422 = vand.u32 %v88, 4294901760
    %v423 = vsub.f32 %v88, %v422
    %v424 = vand.u32 %v423, 4294901760
    %425 = vmatmul.mubr.f32.gmra.mxu0 %v424
    %v426 = vpop.f32.mrf.mxu0
    %v427 = vadd.f32 %v344, %v426
    %v428 = vpop.f32.mrf.mxu0
    %429 = vdwg.mxu0
    %430 = vmatprep.subr.mxu0 0.0
    %431 = vmatpush1.msra.mxu0 0.0
    %432 = vmatprep.subr.mxu0 0.0
    %433 = vmatpush1.msra.mxu0 0.0
    %434 = vmatprep.subr.mxu0 0.0
    %435 = vmatpush1.msra.mxu0 0.0
    %436 = vmatprep.subr.mxu0 0.0
    %437 = vmatpush1.msra.mxu0 0.0
    %438 = vmatprep.subr.mxu0 0.0
    %439 = vmatpush1.msra.mxu0 0.0
    %440 = vmatprep.subr.mxu0 0.0
    %441 = vmatpush1.msra.mxu0 0.0
    %442 = vmatprep.subr.mxu0 0.0
    %443 = vmatpush1.msra.mxu0 0.0
    %444 = vmatprep.subr.mxu0 0.0
    %445 = vmatpush1.msra.mxu0 0.0
    %446 = vmatprep.subr.mxu0 0.0
    %447 = vmatpush1.msra.mxu0 0.0
    %448 = vmatprep.subr.mxu0 0.0
    %449 = vmatpush1.msra.mxu0 0.0
    %450 = vmatprep.subr.mxu0 0.0
    %451 = vmatpush1.msra.mxu0 0.0
    %452 = vmatprep.subr.mxu0 0.0
    %453 = vmatpush1.msra.mxu0 0.0
    %454 = vmatprep.subr.mxu0 0.0
    %455 = vmatpush1.msra.mxu0 0.0
    %456 = vmatprep.subr.mxu0 0.0
    %457 = vmatpush1.msra.mxu0 0.0
    %458 = vmatprep.subr.mxu0 0.0
    %v459 = vand.u32 %v82, 4294901760
    %v460 = vsub.f32 %v82, %v459
    %v461 = vand.u32 %v460, 4294901760
    %462 = vmatpush1.msra.mxu0 %v461
    %463 = vmatprep.subr.mxu0 0.0
    %v464 = vand.u32 %v81, 4294901760
    %v465 = vsub.f32 %v81, %v464
    %v466 = vand.u32 %v465, 4294901760
    %467 = vmatpush1.msra.mxu0 %v466
    %468 = vmatprep.subr.mxu0 0.0
    %469 = vmatpush2.msra.mxu0 0.0
    %470 = vmatprep.subr.mxu0 0.0
    %471 = vmatpush2.msra.mxu0 0.0
    %472 = vmatprep.subr.mxu0 0.0
    %473 = vmatpush2.msra.mxu0 0.0
    %474 = vmatprep.subr.mxu0 0.0
    %475 = vmatpush2.msra.mxu0 0.0
    %476 = vmatprep.subr.mxu0 0.0
    %477 = vmatpush2.msra.mxu0 0.0
    %478 = vmatprep.subr.mxu0 0.0
    %479 = vmatpush2.msra.mxu0 0.0
    %480 = vmatprep.subr.mxu0 0.0
    %481 = vmatpush2.msra.mxu0 0.0
    %482 = vmatprep.subr.mxu0 0.0
    %483 = vmatpush2.msra.mxu0 0.0
    %484 = vmatprep.subr.mxu0 0.0
    %485 = vmatpush2.msra.mxu0 0.0
    %486 = vmatprep.subr.mxu0 0.0
    %487 = vmatpush2.msra.mxu0 0.0
    %488 = vmatprep.subr.mxu0 0.0
    %489 = vmatpush2.msra.mxu0 0.0
    %490 = vmatprep.subr.mxu0 0.0
    %491 = vmatpush2.msra.mxu0 0.0
    %492 = vmatprep.subr.mxu0 0.0
    %493 = vmatpush2.msra.mxu0 0.0
    %494 = vmatprep.subr.mxu0 0.0
    %495 = vmatpush2.msra.mxu0 0.0
    %496 = vmatprep.subr.mxu0 0.0
    %497 = vmatpush2.msra.mxu0 0.0
    %498 = vmatprep.subr.mxu0 0.0
    %499 = vmatpush2.msra.mxu0 0.0
    %500 = vmatprep.mubr.f32.mxu0 0.0
    %v501 = vand.u32 %v85, 4294901760
    %502 = vmatmul.mubr.f32.gmra.mxu0 %v501
    %v503 = vpop.f32.mrf.mxu0
    %v504 = vadd.f32 %v419, %v503
    %v505 = vpop.f32.mrf.mxu0
    %506 = vmatprep.mubr.f32.mxu0 0.0
    %v507 = vand.u32 %v88, 4294901760
    %508 = vmatmul.mubr.f32.gmra.mxu0 %v507
    %v509 = vpop.f32.mrf.mxu0
    %v510 = vadd.f32 %v427, %v509
    %v511 = vpop.f32.mrf.mxu0
    %512 = vdwg.mxu0
    %513 = vmatprep.subr.mxu0 0.0
    %514 = vmatpush1.msra.mxu0 0.0
    %515 = vmatprep.subr.mxu0 0.0
    %516 = vmatpush1.msra.mxu0 0.0
    %517 = vmatprep.subr.mxu0 0.0
    %518 = vmatpush1.msra.mxu0 0.0
    %519 = vmatprep.subr.mxu0 0.0
    %520 = vmatpush1.msra.mxu0 0.0
    %521 = vmatprep.subr.mxu0 0.0
    %522 = vmatpush1.msra.mxu0 0.0
    %523 = vmatprep.subr.mxu0 0.0
    %524 = vmatpush1.msra.mxu0 0.0
    %525 = vmatprep.subr.mxu0 0.0
    %526 = vmatpush1.msra.mxu0 0.0
    %527 = vmatprep.subr.mxu0 0.0
    %528 = vmatpush1.msra.mxu0 0.0
    %529 = vmatprep.subr.mxu0 0.0
    %530 = vmatpush1.msra.mxu0 0.0
    %531 = vmatprep.subr.mxu0 0.0
    %532 = vmatpush1.msra.mxu0 0.0
    %533 = vmatprep.subr.mxu0 0.0
    %534 = vmatpush1.msra.mxu0 0.0
    %535 = vmatprep.subr.mxu0 0.0
    %536 = vmatpush1.msra.mxu0 0.0
    %537 = vmatprep.subr.mxu0 0.0
    %538 = vmatpush1.msra.mxu0 0.0
    %539 = vmatprep.subr.mxu0 0.0
    %540 = vmatpush1.msra.mxu0 0.0
    %541 = vmatprep.subr.mxu0 0.0
    %v542 = vand.u32 %v82, 4294901760
    %543 = vmatpush1.msra.mxu0 %v542
    %544 = vmatprep.subr.mxu0 0.0
    %v545 = vand.u32 %v81, 4294901760
    %546 = vmatpush1.msra.mxu0 %v545
    %547 = vmatprep.subr.mxu0 0.0
    %548 = vmatpush2.msra.mxu0 0.0
    %549 = vmatprep.subr.mxu0 0.0
    %550 = vmatpush2.msra.mxu0 0.0
    %551 = vmatprep.subr.mxu0 0.0
    %552 = vmatpush2.msra.mxu0 0.0
    %553 = vmatprep.subr.mxu0 0.0
    %554 = vmatpush2.msra.mxu0 0.0
    %555 = vmatprep.subr.mxu0 0.0
    %556 = vmatpush2.msra.mxu0 0.0
    %557 = vmatprep.subr.mxu0 0.0
    %558 = vmatpush2.msra.mxu0 0.0
    %559 = vmatprep.subr.mxu0 0.0
    %560 = vmatpush2.msra.mxu0 0.0
    %561 = vmatprep.subr.mxu0 0.0
    %562 = vmatpush2.msra.mxu0 0.0
    %563 = vmatprep.subr.mxu0 0.0
    %564 = vmatpush2.msra.mxu0 0.0
    %565 = vmatprep.subr.mxu0 0.0
    %566 = vmatpush2.msra.mxu0 0.0
    %567 = vmatprep.subr.mxu0 0.0
    %568 = vmatpush2.msra.mxu0 0.0
    %569 = vmatprep.subr.mxu0 0.0
    %570 = vmatpush2.msra.mxu0 0.0
    %571 = vmatprep.subr.mxu0 0.0
    %572 = vmatpush2.msra.mxu0 0.0
    %573 = vmatprep.subr.mxu0 0.0
    %574 = vmatpush2.msra.mxu0 0.0
    %575 = vmatprep.subr.mxu0 0.0
    %576 = vmatpush2.msra.mxu0 0.0
    %577 = vmatprep.subr.mxu0 0.0
    %578 = vmatpush2.msra.mxu0 0.0
    %579 = vmatprep.mubr.f32.mxu0 0.0
    %v580 = vand.u32 %v85, 4294901760
    %581 = vmatmul.mubr.f32.gmra.mxu0 %v580
    %v582 = vpop.f32.mrf.mxu0
    %v583 = vadd.f32 %v504, %v582
    %v584 = vpop.f32.mrf.mxu0
    %585 = vmatprep.mubr.f32.mxu0 0.0
    %v586 = vand.u32 %v88, 4294901760
    %587 = vmatmul.mubr.f32.gmra.mxu0 %v586
    %v588 = vpop.f32.mrf.mxu0
    %v589 = vadd.f32 %v510, %v588
    %v590 = vpop.f32.mrf.mxu0
    %591 = vdwg.mxu0
    %v593 = vsel %vm83, %v583, 0
    %v596 = vsel %vm83, %v589, 0
    %598 = vmatprep.subr.mxu0 0.0
    %599 = vmatpush1.msra.mxu0 0.0
    %600 = vmatprep.subr.mxu0 0.0
    %601 = vmatpush1.msra.mxu0 0.0
    %602 = vmatprep.subr.mxu0 0.0
    %603 = vmatpush1.msra.mxu0 0.0
    %604 = vmatprep.subr.mxu0 0.0
    %605 = vmatpush1.msra.mxu0 0.0
    %606 = vmatprep.subr.mxu0 0.0
    %607 = vmatpush1.msra.mxu0 0.0
    %608 = vmatprep.subr.mxu0 0.0
    %609 = vmatpush1.msra.mxu0 0.0
    %610 = vmatprep.subr.mxu0 0.0
    %611 = vmatpush1.msra.mxu0 0.0
    %612 = vmatprep.subr.mxu0 0.0
    %613 = vmatpush1.msra.mxu0 0.0
    %614 = vmatprep.subr.mxu0 0.0
    %615 = vmatpush1.msra.mxu0 0.0
    %616 = vmatprep.subr.mxu0 0.0
    %617 = vmatpush1.msra.mxu0 0.0
    %618 = vmatprep.subr.mxu0 0.0
    %619 = vmatpush1.msra.mxu0 0.0
    %620 = vmatprep.subr.mxu0 0.0
    %621 = vmatpush1.msra.mxu0 0.0
    %622 = vmatprep.subr.mxu0 0.0
    %623 = vmatpush1.msra.mxu0 0.0
    %624 = vmatprep.subr.mxu0 0.0
    %625 = vmatpush1.msra.mxu0 0.0
    %626 = vmatprep.subr.mxu0 0.0
    %v627 = vand.u32 %v76, 4294901760
    %628 = vmatpush1.msra.mxu0 %v627
    %629 = vmatprep.subr.mxu0 0.0
    %v630 = vand.u32 %v75, 4294901760
    %631 = vmatpush1.msra.mxu0 %v630
    %632 = vmatprep.subr.mxu0 0.0
    %633 = vmatpush2.msra.mxu0 0.0
    %634 = vmatprep.subr.mxu0 0.0
    %635 = vmatpush2.msra.mxu0 0.0
    %636 = vmatprep.subr.mxu0 0.0
    %637 = vmatpush2.msra.mxu0 0.0
    %638 = vmatprep.subr.mxu0 0.0
    %639 = vmatpush2.msra.mxu0 0.0
    %640 = vmatprep.subr.mxu0 0.0
    %641 = vmatpush2.msra.mxu0 0.0
    %642 = vmatprep.subr.mxu0 0.0
    %643 = vmatpush2.msra.mxu0 0.0
    %644 = vmatprep.subr.mxu0 0.0
    %645 = vmatpush2.msra.mxu0 0.0
    %646 = vmatprep.subr.mxu0 0.0
    %647 = vmatpush2.msra.mxu0 0.0
    %648 = vmatprep.subr.mxu0 0.0
    %649 = vmatpush2.msra.mxu0 0.0
    %650 = vmatprep.subr.mxu0 0.0
    %651 = vmatpush2.msra.mxu0 0.0
    %652 = vmatprep.subr.mxu0 0.0
    %653 = vmatpush2.msra.mxu0 0.0
    %654 = vmatprep.subr.mxu0 0.0
    %655 = vmatpush2.msra.mxu0 0.0
    %656 = vmatprep.subr.mxu0 0.0
    %657 = vmatpush2.msra.mxu0 0.0
    %658 = vmatprep.subr.mxu0 0.0
    %659 = vmatpush2.msra.mxu0 0.0
    %660 = vmatprep.subr.mxu0 0.0
    %661 = vmatpush2.msra.mxu0 0.0
    %662 = vmatprep.subr.mxu0 0.0
    %663 = vmatpush2.msra.mxu0 0.0
    %664 = vmatprep.mubr.f32.mxu0 0.0
    %v665 = vand.u32 %v593, 4294901760
    %v666 = vsub.f32 %v593, %v665
    %v667 = vand.u32 %v666, 4294901760
    %v668 = vsub.f32 %v666, %v667
    %v669 = vand.u32 %v668, 4294901760
    %670 = vmatmul.mubr.f32.gmra.mxu0 %v669
    %v671 = vpop.f32.mrf.mxu0
    %v672 = vadd.f32 0.0, %v671
    %v673 = vpop.f32.mrf.mxu0
    %674 = vmatprep.mubr.f32.mxu0 0.0
    %v675 = vand.u32 %v596, 4294901760
    %v676 = vsub.f32 %v596, %v675
    %v677 = vand.u32 %v676, 4294901760
    %v678 = vsub.f32 %v676, %v677
    %v679 = vand.u32 %v678, 4294901760
    %680 = vmatmul.mubr.f32.gmra.mxu0 %v679
    %v681 = vpop.f32.mrf.mxu0
    %v682 = vadd.f32 0.0, %v681
    %v683 = vpop.f32.mrf.mxu0
    %684 = vdwg.mxu0
    %685 = vmatprep.subr.mxu0 0.0
    %686 = vmatpush1.msra.mxu0 0.0
    %687 = vmatprep.subr.mxu0 0.0
    %688 = vmatpush1.msra.mxu0 0.0
    %689 = vmatprep.subr.mxu0 0.0
    %690 = vmatpush1.msra.mxu0 0.0
    %691 = vmatprep.subr.mxu0 0.0
    %692 = vmatpush1.msra.mxu0 0.0
    %693 = vmatprep.subr.mxu0 0.0
    %694 = vmatpush1.msra.mxu0 0.0
    %695 = vmatprep.subr.mxu0 0.0
    %696 = vmatpush1.msra.mxu0 0.0
    %697 = vmatprep.subr.mxu0 0.0
    %698 = vmatpush1.msra.mxu0 0.0
    %699 = vmatprep.subr.mxu0 0.0
    %700 = vmatpush1.msra.mxu0 0.0
    %701 = vmatprep.subr.mxu0 0.0
    %702 = vmatpush1.msra.mxu0 0.0
    %703 = vmatprep.subr.mxu0 0.0
    %704 = vmatpush1.msra.mxu0 0.0
    %705 = vmatprep.subr.mxu0 0.0
    %706 = vmatpush1.msra.mxu0 0.0
    %707 = vmatprep.subr.mxu0 0.0
    %708 = vmatpush1.msra.mxu0 0.0
    %709 = vmatprep.subr.mxu0 0.0
    %710 = vmatpush1.msra.mxu0 0.0
    %711 = vmatprep.subr.mxu0 0.0
    %712 = vmatpush1.msra.mxu0 0.0
    %713 = vmatprep.subr.mxu0 0.0
    %v714 = vand.u32 %v76, 4294901760
    %v715 = vsub.f32 %v76, %v714
    %v716 = vand.u32 %v715, 4294901760
    %v717 = vsub.f32 %v715, %v716
    %v718 = vand.u32 %v717, 4294901760
    %719 = vmatpush1.msra.mxu0 %v718
    %720 = vmatprep.subr.mxu0 0.0
    %v721 = vand.u32 %v75, 4294901760
    %v722 = vsub.f32 %v75, %v721
    %v723 = vand.u32 %v722, 4294901760
    %v724 = vsub.f32 %v722, %v723
    %v725 = vand.u32 %v724, 4294901760
    %726 = vmatpush1.msra.mxu0 %v725
    %727 = vmatprep.subr.mxu0 0.0
    %728 = vmatpush2.msra.mxu0 0.0
    %729 = vmatprep.subr.mxu0 0.0
    %730 = vmatpush2.msra.mxu0 0.0
    %731 = vmatprep.subr.mxu0 0.0
    %732 = vmatpush2.msra.mxu0 0.0
    %733 = vmatprep.subr.mxu0 0.0
    %734 = vmatpush2.msra.mxu0 0.0
    %735 = vmatprep.subr.mxu0 0.0
    %736 = vmatpush2.msra.mxu0 0.0
    %737 = vmatprep.subr.mxu0 0.0
    %738 = vmatpush2.msra.mxu0 0.0
    %739 = vmatprep.subr.mxu0 0.0
    %740 = vmatpush2.msra.mxu0 0.0
    %741 = vmatprep.subr.mxu0 0.0
    %742 = vmatpush2.msra.mxu0 0.0
    %743 = vmatprep.subr.mxu0 0.0
    %744 = vmatpush2.msra.mxu0 0.0
    %745 = vmatprep.subr.mxu0 0.0
    %746 = vmatpush2.msra.mxu0 0.0
    %747 = vmatprep.subr.mxu0 0.0
    %748 = vmatpush2.msra.mxu0 0.0
    %749 = vmatprep.subr.mxu0 0.0
    %750 = vmatpush2.msra.mxu0 0.0
    %751 = vmatprep.subr.mxu0 0.0
    %752 = vmatpush2.msra.mxu0 0.0
    %753 = vmatprep.subr.mxu0 0.0
    %754 = vmatpush2.msra.mxu0 0.0
    %755 = vmatprep.subr.mxu0 0.0
    %756 = vmatpush2.msra.mxu0 0.0
    %757 = vmatprep.subr.mxu0 0.0
    %758 = vmatpush2.msra.mxu0 0.0
    %759 = vmatprep.mubr.f32.mxu0 0.0
    %v760 = vand.u32 %v593, 4294901760
    %761 = vmatmul.mubr.f32.gmra.mxu0 %v760
    %v762 = vpop.f32.mrf.mxu0
    %v763 = vadd.f32 %v672, %v762
    %v764 = vpop.f32.mrf.mxu0
    %765 = vmatprep.mubr.f32.mxu0 0.0
    %v766 = vand.u32 %v596, 4294901760
    %767 = vmatmul.mubr.f32.gmra.mxu0 %v766
    %v768 = vpop.f32.mrf.mxu0
    %v769 = vadd.f32 %v682, %v768
    %v770 = vpop.f32.mrf.mxu0
    %771 = vdwg.mxu0
    %772 = vmatprep.subr.mxu0 0.0
    %773 = vmatpush1.msra.mxu0 0.0
    %774 = vmatprep.subr.mxu0 0.0
    %775 = vmatpush1.msra.mxu0 0.0
    %776 = vmatprep.subr.mxu0 0.0
    %777 = vmatpush1.msra.mxu0 0.0
    %778 = vmatprep.subr.mxu0 0.0
    %779 = vmatpush1.msra.mxu0 0.0
    %780 = vmatprep.subr.mxu0 0.0
    %781 = vmatpush1.msra.mxu0 0.0
    %782 = vmatprep.subr.mxu0 0.0
    %783 = vmatpush1.msra.mxu0 0.0
    %784 = vmatprep.subr.mxu0 0.0
    %785 = vmatpush1.msra.mxu0 0.0
    %786 = vmatprep.subr.mxu0 0.0
    %787 = vmatpush1.msra.mxu0 0.0
    %788 = vmatprep.subr.mxu0 0.0
    %789 = vmatpush1.msra.mxu0 0.0
    %790 = vmatprep.subr.mxu0 0.0
    %791 = vmatpush1.msra.mxu0 0.0
    %792 = vmatprep.subr.mxu0 0.0
    %793 = vmatpush1.msra.mxu0 0.0
    %794 = vmatprep.subr.mxu0 0.0
    %795 = vmatpush1.msra.mxu0 0.0
    %796 = vmatprep.subr.mxu0 0.0
    %797 = vmatpush1.msra.mxu0 0.0
    %798 = vmatprep.subr.mxu0 0.0
    %799 = vmatpush1.msra.mxu0 0.0
    %800 = vmatprep.subr.mxu0 0.0
    %v801 = vand.u32 %v76, 4294901760
    %v802 = vsub.f32 %v76, %v801
    %803 = vmatpush1.msra.mxu0 %v802
    %804 = vmatprep.subr.mxu0 0.0
    %v805 = vand.u32 %v75, 4294901760
    %v806 = vsub.f32 %v75, %v805
    %807 = vmatpush1.msra.mxu0 %v806
    %808 = vmatprep.subr.mxu0 0.0
    %809 = vmatpush2.msra.mxu0 0.0
    %810 = vmatprep.subr.mxu0 0.0
    %811 = vmatpush2.msra.mxu0 0.0
    %812 = vmatprep.subr.mxu0 0.0
    %813 = vmatpush2.msra.mxu0 0.0
    %814 = vmatprep.subr.mxu0 0.0
    %815 = vmatpush2.msra.mxu0 0.0
    %816 = vmatprep.subr.mxu0 0.0
    %817 = vmatpush2.msra.mxu0 0.0
    %818 = vmatprep.subr.mxu0 0.0
    %819 = vmatpush2.msra.mxu0 0.0
    %820 = vmatprep.subr.mxu0 0.0
    %821 = vmatpush2.msra.mxu0 0.0
    %822 = vmatprep.subr.mxu0 0.0
    %823 = vmatpush2.msra.mxu0 0.0
    %824 = vmatprep.subr.mxu0 0.0
    %825 = vmatpush2.msra.mxu0 0.0
    %826 = vmatprep.subr.mxu0 0.0
    %827 = vmatpush2.msra.mxu0 0.0
    %828 = vmatprep.subr.mxu0 0.0
    %829 = vmatpush2.msra.mxu0 0.0
    %830 = vmatprep.subr.mxu0 0.0
    %831 = vmatpush2.msra.mxu0 0.0
    %832 = vmatprep.subr.mxu0 0.0
    %833 = vmatpush2.msra.mxu0 0.0
    %834 = vmatprep.subr.mxu0 0.0
    %835 = vmatpush2.msra.mxu0 0.0
    %836 = vmatprep.subr.mxu0 0.0
    %837 = vmatpush2.msra.mxu0 0.0
    %838 = vmatprep.subr.mxu0 0.0
    %839 = vmatpush2.msra.mxu0 0.0
    %840 = vmatprep.mubr.f32.mxu0 0.0
    %v841 = vand.u32 %v593, 4294901760
    %v842 = vsub.f32 %v593, %v841
    %843 = vmatmul.mubr.f32.gmra.mxu0 %v842
    %v844 = vpop.f32.mrf.mxu0
    %v845 = vadd.f32 %v763, %v844
    %v846 = vpop.f32.mrf.mxu0
    %847 = vmatprep.mubr.f32.mxu0 0.0
    %v848 = vand.u32 %v596, 4294901760
    %v849 = vsub.f32 %v596, %v848
    %850 = vmatmul.mubr.f32.gmra.mxu0 %v849
    %v851 = vpop.f32.mrf.mxu0
    %v852 = vadd.f32 %v769, %v851
    %v853 = vpop.f32.mrf.mxu0
    %854 = vdwg.mxu0
    %855 = vmatprep.subr.mxu0 0.0
    %856 = vmatpush1.msra.mxu0 0.0
    %857 = vmatprep.subr.mxu0 0.0
    %858 = vmatpush1.msra.mxu0 0.0
    %859 = vmatprep.subr.mxu0 0.0
    %860 = vmatpush1.msra.mxu0 0.0
    %861 = vmatprep.subr.mxu0 0.0
    %862 = vmatpush1.msra.mxu0 0.0
    %863 = vmatprep.subr.mxu0 0.0
    %864 = vmatpush1.msra.mxu0 0.0
    %865 = vmatprep.subr.mxu0 0.0
    %866 = vmatpush1.msra.mxu0 0.0
    %867 = vmatprep.subr.mxu0 0.0
    %868 = vmatpush1.msra.mxu0 0.0
    %869 = vmatprep.subr.mxu0 0.0
    %870 = vmatpush1.msra.mxu0 0.0
    %871 = vmatprep.subr.mxu0 0.0
    %872 = vmatpush1.msra.mxu0 0.0
    %873 = vmatprep.subr.mxu0 0.0
    %874 = vmatpush1.msra.mxu0 0.0
    %875 = vmatprep.subr.mxu0 0.0
    %876 = vmatpush1.msra.mxu0 0.0
    %877 = vmatprep.subr.mxu0 0.0
    %878 = vmatpush1.msra.mxu0 0.0
    %879 = vmatprep.subr.mxu0 0.0
    %880 = vmatpush1.msra.mxu0 0.0
    %881 = vmatprep.subr.mxu0 0.0
    %882 = vmatpush1.msra.mxu0 0.0
    %883 = vmatprep.subr.mxu0 0.0
    %v884 = vand.u32 %v76, 4294901760
    %885 = vmatpush1.msra.mxu0 %v884
    %886 = vmatprep.subr.mxu0 0.0
    %v887 = vand.u32 %v75, 4294901760
    %888 = vmatpush1.msra.mxu0 %v887
    %889 = vmatprep.subr.mxu0 0.0
    %890 = vmatpush2.msra.mxu0 0.0
    %891 = vmatprep.subr.mxu0 0.0
    %892 = vmatpush2.msra.mxu0 0.0
    %893 = vmatprep.subr.mxu0 0.0
    %894 = vmatpush2.msra.mxu0 0.0
    %895 = vmatprep.subr.mxu0 0.0
    %896 = vmatpush2.msra.mxu0 0.0
    %897 = vmatprep.subr.mxu0 0.0
    %898 = vmatpush2.msra.mxu0 0.0
    %899 = vmatprep.subr.mxu0 0.0
    %900 = vmatpush2.msra.mxu0 0.0
    %901 = vmatprep.subr.mxu0 0.0
    %902 = vmatpush2.msra.mxu0 0.0
    %903 = vmatprep.subr.mxu0 0.0
    %904 = vmatpush2.msra.mxu0 0.0
    %905 = vmatprep.subr.mxu0 0.0
    %906 = vmatpush2.msra.mxu0 0.0
    %907 = vmatprep.subr.mxu0 0.0
    %908 = vmatpush2.msra.mxu0 0.0
    %909 = vmatprep.subr.mxu0 0.0
    %910 = vmatpush2.msra.mxu0 0.0
    %911 = vmatprep.subr.mxu0 0.0
    %912 = vmatpush2.msra.mxu0 0.0
    %913 = vmatprep.subr.mxu0 0.0
    %914 = vmatpush2.msra.mxu0 0.0
    %915 = vmatprep.subr.mxu0 0.0
    %916 = vmatpush2.msra.mxu0 0.0
    %917 = vmatprep.subr.mxu0 0.0
    %918 = vmatpush2.msra.mxu0 0.0
    %919 = vmatprep.subr.mxu0 0.0
    %920 = vmatpush2.msra.mxu0 0.0
    %921 = vmatprep.mubr.f32.mxu0 0.0
    %v922 = vand.u32 %v593, 4294901760
    %v923 = vsub.f32 %v593, %v922
    %v924 = vand.u32 %v923, 4294901760
    %925 = vmatmul.mubr.f32.gmra.mxu0 %v924
    %v926 = vpop.f32.mrf.mxu0
    %v927 = vadd.f32 %v845, %v926
    %v928 = vpop.f32.mrf.mxu0
    %929 = vmatprep.mubr.f32.mxu0 0.0
    %v930 = vand.u32 %v596, 4294901760
    %v931 = vsub.f32 %v596, %v930
    %v932 = vand.u32 %v931, 4294901760
    %933 = vmatmul.mubr.f32.gmra.mxu0 %v932
    %v934 = vpop.f32.mrf.mxu0
    %v935 = vadd.f32 %v852, %v934
    %v936 = vpop.f32.mrf.mxu0
    %937 = vdwg.mxu0
    %938 = vmatprep.subr.mxu0 0.0
    %939 = vmatpush1.msra.mxu0 0.0
    %940 = vmatprep.subr.mxu0 0.0
    %941 = vmatpush1.msra.mxu0 0.0
    %942 = vmatprep.subr.mxu0 0.0
    %943 = vmatpush1.msra.mxu0 0.0
    %944 = vmatprep.subr.mxu0 0.0
    %945 = vmatpush1.msra.mxu0 0.0
    %946 = vmatprep.subr.mxu0 0.0
    %947 = vmatpush1.msra.mxu0 0.0
    %948 = vmatprep.subr.mxu0 0.0
    %949 = vmatpush1.msra.mxu0 0.0
    %950 = vmatprep.subr.mxu0 0.0
    %951 = vmatpush1.msra.mxu0 0.0
    %952 = vmatprep.subr.mxu0 0.0
    %953 = vmatpush1.msra.mxu0 0.0
    %954 = vmatprep.subr.mxu0 0.0
    %955 = vmatpush1.msra.mxu0 0.0
    %956 = vmatprep.subr.mxu0 0.0
    %957 = vmatpush1.msra.mxu0 0.0
    %958 = vmatprep.subr.mxu0 0.0
    %959 = vmatpush1.msra.mxu0 0.0
    %960 = vmatprep.subr.mxu0 0.0
    %961 = vmatpush1.msra.mxu0 0.0
    %962 = vmatprep.subr.mxu0 0.0
    %963 = vmatpush1.msra.mxu0 0.0
    %964 = vmatprep.subr.mxu0 0.0
    %965 = vmatpush1.msra.mxu0 0.0
    %966 = vmatprep.subr.mxu0 0.0
    %v967 = vand.u32 %v76, 4294901760
    %v968 = vsub.f32 %v76, %v967
    %v969 = vand.u32 %v968, 4294901760
    %970 = vmatpush1.msra.mxu0 %v969
    %971 = vmatprep.subr.mxu0 0.0
    %v972 = vand.u32 %v75, 4294901760
    %v973 = vsub.f32 %v75, %v972
    %v974 = vand.u32 %v973, 4294901760
    %975 = vmatpush1.msra.mxu0 %v974
    %976 = vmatprep.subr.mxu0 0.0
    %977 = vmatpush2.msra.mxu0 0.0
    %978 = vmatprep.subr.mxu0 0.0
    %979 = vmatpush2.msra.mxu0 0.0
    %980 = vmatprep.subr.mxu0 0.0
    %981 = vmatpush2.msra.mxu0 0.0
    %982 = vmatprep.subr.mxu0 0.0
    %983 = vmatpush2.msra.mxu0 0.0
    %984 = vmatprep.subr.mxu0 0.0
    %985 = vmatpush2.msra.mxu0 0.0
    %986 = vmatprep.subr.mxu0 0.0
    %987 = vmatpush2.msra.mxu0 0.0
    %988 = vmatprep.subr.mxu0 0.0
    %989 = vmatpush2.msra.mxu0 0.0
    %990 = vmatprep.subr.mxu0 0.0
    %991 = vmatpush2.msra.mxu0 0.0
    %992 = vmatprep.subr.mxu0 0.0
    %993 = vmatpush2.msra.mxu0 0.0
    %994 = vmatprep.subr.mxu0 0.0
    %995 = vmatpush2.msra.mxu0 0.0
    %996 = vmatprep.subr.mxu0 0.0
    %997 = vmatpush2.msra.mxu0 0.0
    %998 = vmatprep.subr.mxu0 0.0
    %999 = vmatpush2.msra.mxu0 0.0
    %1000 = vmatprep.subr.mxu0 0.0
    %1001 = vmatpush2.msra.mxu0 0.0
    %1002 = vmatprep.subr.mxu0 0.0
    %1003 = vmatpush2.msra.mxu0 0.0
    %1004 = vmatprep.subr.mxu0 0.0
    %1005 = vmatpush2.msra.mxu0 0.0
    %1006 = vmatprep.subr.mxu0 0.0
    %1007 = vmatpush2.msra.mxu0 0.0
    %1008 = vmatprep.mubr.f32.mxu0 0.0
    %v1009 = vand.u32 %v593, 4294901760
    %1010 = vmatmul.mubr.f32.gmra.mxu0 %v1009
    %v1011 = vpop.f32.mrf.mxu0
    %v1012 = vadd.f32 %v927, %v1011
    %v1013 = vpop.f32.mrf.mxu0
    %1014 = vmatprep.mubr.f32.mxu0 0.0
    %v1015 = vand.u32 %v596, 4294901760
    %1016 = vmatmul.mubr.f32.gmra.mxu0 %v1015
    %v1017 = vpop.f32.mrf.mxu0
    %v1018 = vadd.f32 %v935, %v1017
    %v1019 = vpop.f32.mrf.mxu0
    %1020 = vdwg.mxu0
    %1021 = vmatprep.subr.mxu0 0.0
    %1022 = vmatpush1.msra.mxu0 0.0
    %1023 = vmatprep.subr.mxu0 0.0
    %1024 = vmatpush1.msra.mxu0 0.0
    %1025 = vmatprep.subr.mxu0 0.0
    %1026 = vmatpush1.msra.mxu0 0.0
    %1027 = vmatprep.subr.mxu0 0.0
    %1028 = vmatpush1.msra.mxu0 0.0
    %1029 = vmatprep.subr.mxu0 0.0
    %1030 = vmatpush1.msra.mxu0 0.0
    %1031 = vmatprep.subr.mxu0 0.0
    %1032 = vmatpush1.msra.mxu0 0.0
    %1033 = vmatprep.subr.mxu0 0.0
    %1034 = vmatpush1.msra.mxu0 0.0
    %1035 = vmatprep.subr.mxu0 0.0
    %1036 = vmatpush1.msra.mxu0 0.0
    %1037 = vmatprep.subr.mxu0 0.0
    %1038 = vmatpush1.msra.mxu0 0.0
    %1039 = vmatprep.subr.mxu0 0.0
    %1040 = vmatpush1.msra.mxu0 0.0
    %1041 = vmatprep.subr.mxu0 0.0
    %1042 = vmatpush1.msra.mxu0 0.0
    %1043 = vmatprep.subr.mxu0 0.0
    %1044 = vmatpush1.msra.mxu0 0.0
    %1045 = vmatprep.subr.mxu0 0.0
    %1046 = vmatpush1.msra.mxu0 0.0
    %1047 = vmatprep.subr.mxu0 0.0
    %1048 = vmatpush1.msra.mxu0 0.0
    %1049 = vmatprep.subr.mxu0 0.0
    %v1050 = vand.u32 %v76, 4294901760
    %1051 = vmatpush1.msra.mxu0 %v1050
    %1052 = vmatprep.subr.mxu0 0.0
    %v1053 = vand.u32 %v75, 4294901760
    %1054 = vmatpush1.msra.mxu0 %v1053
    %1055 = vmatprep.subr.mxu0 0.0
    %1056 = vmatpush2.msra.mxu0 0.0
    %1057 = vmatprep.subr.mxu0 0.0
    %1058 = vmatpush2.msra.mxu0 0.0
    %1059 = vmatprep.subr.mxu0 0.0
    %1060 = vmatpush2.msra.mxu0 0.0
    %1061 = vmatprep.subr.mxu0 0.0
    %1062 = vmatpush2.msra.mxu0 0.0
    %1063 = vmatprep.subr.mxu0 0.0
    %1064 = vmatpush2.msra.mxu0 0.0
    %1065 = vmatprep.subr.mxu0 0.0
    %1066 = vmatpush2.msra.mxu0 0.0
    %1067 = vmatprep.subr.mxu0 0.0
    %1068 = vmatpush2.msra.mxu0 0.0
    %1069 = vmatprep.subr.mxu0 0.0
    %1070 = vmatpush2.msra.mxu0 0.0
    %1071 = vmatprep.subr.mxu0 0.0
    %1072 = vmatpush2.msra.mxu0 0.0
    %1073 = vmatprep.subr.mxu0 0.0
    %1074 = vmatpush2.msra.mxu0 0.0
    %1075 = vmatprep.subr.mxu0 0.0
    %1076 = vmatpush2.msra.mxu0 0.0
    %1077 = vmatprep.subr.mxu0 0.0
    %1078 = vmatpush2.msra.mxu0 0.0
    %1079 = vmatprep.subr.mxu0 0.0
    %1080 = vmatpush2.msra.mxu0 0.0
    %1081 = vmatprep.subr.mxu0 0.0
    %1082 = vmatpush2.msra.mxu0 0.0
    %1083 = vmatprep.subr.mxu0 0.0
    %1084 = vmatpush2.msra.mxu0 0.0
    %1085 = vmatprep.subr.mxu0 0.0
    %1086 = vmatpush2.msra.mxu0 0.0
    %1087 = vmatprep.mubr.f32.mxu0 0.0
    %v1088 = vand.u32 %v593, 4294901760
    %1089 = vmatmul.mubr.f32.gmra.mxu0 %v1088
    %v1090 = vpop.f32.mrf.mxu0
    %v1091 = vadd.f32 %v1012, %v1090
    %v1092 = vpop.f32.mrf.mxu0
    %1093 = vmatprep.mubr.f32.mxu0 0.0
    %v1094 = vand.u32 %v596, 4294901760
    %1095 = vmatmul.mubr.f32.gmra.mxu0 %v1094
    %v1096 = vpop.f32.mrf.mxu0
    %v1097 = vadd.f32 %v1018, %v1096
    %v1098 = vpop.f32.mrf.mxu0
    %1099 = vdwg.mxu0
    %v1100 = vsub.f32 %v81, %v1091
    %v1101 = vsub.f32 %v82, %v1097
    %v1102 = vand.u32 2147483647, %v1100
    %v1103 = vand.u32 2147483647, %v1101
    %1104 = vmatprep.subr.mxu0 0.0
    %1105 = vmatpush1.msra.mxu0 0.0
    %1106 = vmatprep.subr.mxu0 0.0
    %1107 = vmatpush1.msra.mxu0 0.0
    %1108 = vmatprep.subr.mxu0 0.0
    %1109 = vmatpush1.msra.mxu0 0.0
    %1110 = vmatprep.subr.mxu0 0.0
    %1111 = vmatpush1.msra.mxu0 0.0
    %1112 = vmatprep.subr.mxu0 0.0
    %1113 = vmatpush1.msra.mxu0 0.0
    %1114 = vmatprep.subr.mxu0 0.0
    %1115 = vmatpush1.msra.mxu0 0.0
    %1116 = vmatprep.subr.mxu0 0.0
    %1117 = vmatpush1.msra.mxu0 0.0
    %1118 = vmatprep.subr.mxu0 0.0
    %1119 = vmatpush1.msra.mxu0 0.0
    %1120 = vmatprep.subr.mxu0 0.0
    %1121 = vmatpush1.msra.mxu0 0.0
    %1122 = vmatprep.subr.mxu0 0.0
    %1123 = vmatpush1.msra.mxu0 0.0
    %1124 = vmatprep.subr.mxu0 0.0
    %1125 = vmatpush1.msra.mxu0 0.0
    %1126 = vmatprep.subr.mxu0 0.0
    %1127 = vmatpush1.msra.mxu0 0.0
    %1128 = vmatprep.subr.mxu0 0.0
    %1129 = vmatpush1.msra.mxu0 0.0
    %1130 = vmatprep.subr.mxu0 0.0
    %1131 = vmatpush1.msra.mxu0 0.0
    %1132 = vmatprep.subr.mxu0 0.0
    %v1133 = vand.u32 %v1103, 4294901760
    %1134 = vmatpush1.msra.mxu0 %v1133
    %1135 = vmatprep.subr.mxu0 0.0
    %v1136 = vand.u32 %v1102, 4294901760
    %1137 = vmatpush1.msra.mxu0 %v1136
    %1138 = vmatprep.subr.mxu0 0.0
    %1139 = vmatpush2.msra.mxu0 0.0
    %1140 = vmatprep.subr.mxu0 0.0
    %1141 = vmatpush2.msra.mxu0 0.0
    %1142 = vmatprep.subr.mxu0 0.0
    %1143 = vmatpush2.msra.mxu0 0.0
    %1144 = vmatprep.subr.mxu0 0.0
    %1145 = vmatpush2.msra.mxu0 0.0
    %1146 = vmatprep.subr.mxu0 0.0
    %1147 = vmatpush2.msra.mxu0 0.0
    %1148 = vmatprep.subr.mxu0 0.0
    %1149 = vmatpush2.msra.mxu0 0.0
    %1150 = vmatprep.subr.mxu0 0.0
    %1151 = vmatpush2.msra.mxu0 0.0
    %1152 = vmatprep.subr.mxu0 0.0
    %1153 = vmatpush2.msra.mxu0 0.0
    %1154 = vmatprep.subr.mxu0 0.0
    %1155 = vmatpush2.msra.mxu0 0.0
    %1156 = vmatprep.subr.mxu0 0.0
    %1157 = vmatpush2.msra.mxu0 0.0
    %1158 = vmatprep.subr.mxu0 0.0
    %1159 = vmatpush2.msra.mxu0 0.0
    %1160 = vmatprep.subr.mxu0 0.0
    %1161 = vmatpush2.msra.mxu0 0.0
    %1162 = vmatprep.subr.mxu0 0.0
    %1163 = vmatpush2.msra.mxu0 0.0
    %1164 = vmatprep.subr.mxu0 0.0
    %1165 = vmatpush2.msra.mxu0 0.0
    %1166 = vmatprep.subr.mxu0 0.0
    %1167 = vmatpush2.msra.mxu0 0.0
    %1168 = vmatprep.subr.mxu0 0.0
    %1169 = vmatpush2.msra.mxu0 0.0
    %1170 = vmatprep.mubr.f32.mxu0 0.0
    %v1171 = vand.u32 %v85, 4294901760
    %v1172 = vsub.f32 %v85, %v1171
    %v1173 = vand.u32 %v1172, 4294901760
    %v1174 = vsub.f32 %v1172, %v1173
    %v1175 = vand.u32 %v1174, 4294901760
    %1176 = vmatmul.mubr.f32.gmra.mxu0 %v1175
    %v1177 = vpop.f32.mrf.mxu0
    %v1178 = vadd.f32 0.0, %v1177
    %v1179 = vpop.f32.mrf.mxu0
    %1180 = vmatprep.mubr.f32.mxu0 0.0
    %v1181 = vand.u32 %v88, 4294901760
    %v1182 = vsub.f32 %v88, %v1181
    %v1183 = vand.u32 %v1182, 4294901760
    %v1184 = vsub.f32 %v1182, %v1183
    %v1185 = vand.u32 %v1184, 4294901760
    %1186 = vmatmul.mubr.f32.gmra.mxu0 %v1185
    %v1187 = vpop.f32.mrf.mxu0
    %v1188 = vadd.f32 0.0, %v1187
    %v1189 = vpop.f32.mrf.mxu0
    %1190 = vdwg.mxu0
    %1191 = vmatprep.subr.mxu0 0.0
    %1192 = vmatpush1.msra.mxu0 0.0
    %1193 = vmatprep.subr.mxu0 0.0
    %1194 = vmatpush1.msra.mxu0 0.0
    %1195 = vmatprep.subr.mxu0 0.0
    %1196 = vmatpush1.msra.mxu0 0.0
    %1197 = vmatprep.subr.mxu0 0.0
    %1198 = vmatpush1.msra.mxu0 0.0
    %1199 = vmatprep.subr.mxu0 0.0
    %1200 = vmatpush1.msra.mxu0 0.0
    %1201 = vmatprep.subr.mxu0 0.0
    %1202 = vmatpush1.msra.mxu0 0.0
    %1203 = vmatprep.subr.mxu0 0.0
    %1204 = vmatpush1.msra.mxu0 0.0
    %1205 = vmatprep.subr.mxu0 0.0
    %1206 = vmatpush1.msra.mxu0 0.0
    %1207 = vmatprep.subr.mxu0 0.0
    %1208 = vmatpush1.msra.mxu0 0.0
    %1209 = vmatprep.subr.mxu0 0.0
    %1210 = vmatpush1.msra.mxu0 0.0
    %1211 = vmatprep.subr.mxu0 0.0
    %1212 = vmatpush1.msra.mxu0 0.0
    %1213 = vmatprep.subr.mxu0 0.0
    %1214 = vmatpush1.msra.mxu0 0.0
    %1215 = vmatprep.subr.mxu0 0.0
    %1216 = vmatpush1.msra.mxu0 0.0
    %1217 = vmatprep.subr.mxu0 0.0
    %1218 = vmatpush1.msra.mxu0 0.0
    %1219 = vmatprep.subr.mxu0 0.0
    %v1220 = vand.u32 %v1103, 4294901760
    %v1221 = vsub.f32 %v1103, %v1220
    %v1222 = vand.u32 %v1221, 4294901760
    %v1223 = vsub.f32 %v1221, %v1222
    %v1224 = vand.u32 %v1223, 4294901760
    %1225 = vmatpush1.msra.mxu0 %v1224
    %1226 = vmatprep.subr.mxu0 0.0
    %v1227 = vand.u32 %v1102, 4294901760
    %v1228 = vsub.f32 %v1102, %v1227
    %v1229 = vand.u32 %v1228, 4294901760
    %v1230 = vsub.f32 %v1228, %v1229
    %v1231 = vand.u32 %v1230, 4294901760
    %1232 = vmatpush1.msra.mxu0 %v1231
    %1233 = vmatprep.subr.mxu0 0.0
    %1234 = vmatpush2.msra.mxu0 0.0
    %1235 = vmatprep.subr.mxu0 0.0
    %1236 = vmatpush2.msra.mxu0 0.0
    %1237 = vmatprep.subr.mxu0 0.0
    %1238 = vmatpush2.msra.mxu0 0.0
    %1239 = vmatprep.subr.mxu0 0.0
    %1240 = vmatpush2.msra.mxu0 0.0
    %1241 = vmatprep.subr.mxu0 0.0
    %1242 = vmatpush2.msra.mxu0 0.0
    %1243 = vmatprep.subr.mxu0 0.0
    %1244 = vmatpush2.msra.mxu0 0.0
    %1245 = vmatprep.subr.mxu0 0.0
    %1246 = vmatpush2.msra.mxu0 0.0
    %1247 = vmatprep.subr.mxu0 0.0
    %1248 = vmatpush2.msra.mxu0 0.0
    %1249 = vmatprep.subr.mxu0 0.0
    %1250 = vmatpush2.msra.mxu0 0.0
    %1251 = vmatprep.subr.mxu0 0.0
    %1252 = vmatpush2.msra.mxu0 0.0
    %1253 = vmatprep.subr.mxu0 0.0
    %1254 = vmatpush2.msra.mxu0 0.0
    %1255 = vmatprep.subr.mxu0 0.0
    %1256 = vmatpush2.msra.mxu0 0.0
    %1257 = vmatprep.subr.mxu0 0.0
    %1258 = vmatpush2.msra.mxu0 0.0
    %1259 = vmatprep.subr.mxu0 0.0
    %1260 = vmatpush2.msra.mxu0 0.0
    %1261 = vmatprep.subr.mxu0 0.0
    %1262 = vmatpush2.msra.mxu0 0.0
    %1263 = vmatprep.subr.mxu0 0.0
    %1264 = vmatpush2.msra.mxu0 0.0
    %1265 = vmatprep.mubr.f32.mxu0 0.0
    %v1266 = vand.u32 %v85, 4294901760
    %1267 = vmatmul.mubr.f32.gmra.mxu0 %v1266
    %v1268 = vpop.f32.mrf.mxu0
    %v1269 = vadd.f32 %v1178, %v1268
    %v1270 = vpop.f32.mrf.mxu0
    %1271 = vmatprep.mubr.f32.mxu0 0.0
    %v1272 = vand.u32 %v88, 4294901760
    %1273 = vmatmul.mubr.f32.gmra.mxu0 %v1272
    %v1274 = vpop.f32.mrf.mxu0
    %v1275 = vadd.f32 %v1188, %v1274
    %v1276 = vpop.f32.mrf.mxu0
    %1277 = vdwg.mxu0
    %1278 = vmatprep.subr.mxu0 0.0
    %1279 = vmatpush1.msra.mxu0 0.0
    %1280 = vmatprep.subr.mxu0 0.0
    %1281 = vmatpush1.msra.mxu0 0.0
    %1282 = vmatprep.subr.mxu0 0.0
    %1283 = vmatpush1.msra.mxu0 0.0
    %1284 = vmatprep.subr.mxu0 0.0
    %1285 = vmatpush1.msra.mxu0 0.0
    %1286 = vmatprep.subr.mxu0 0.0
    %1287 = vmatpush1.msra.mxu0 0.0
    %1288 = vmatprep.subr.mxu0 0.0
    %1289 = vmatpush1.msra.mxu0 0.0
    %1290 = vmatprep.subr.mxu0 0.0
    %1291 = vmatpush1.msra.mxu0 0.0
    %1292 = vmatprep.subr.mxu0 0.0
    %1293 = vmatpush1.msra.mxu0 0.0
    %1294 = vmatprep.subr.mxu0 0.0
    %1295 = vmatpush1.msra.mxu0 0.0
    %1296 = vmatprep.subr.mxu0 0.0
    %1297 = vmatpush1.msra.mxu0 0.0
    %1298 = vmatprep.subr.mxu0 0.0
    %1299 = vmatpush1.msra.mxu0 0.0
    %1300 = vmatprep.subr.mxu0 0.0
    %1301 = vmatpush1.msra.mxu0 0.0
    %1302 = vmatprep.subr.mxu0 0.0
    %1303 = vmatpush1.msra.mxu0 0.0
    %1304 = vmatprep.subr.mxu0 0.0
    %1305 = vmatpush1.msra.mxu0 0.0
    %1306 = vmatprep.subr.mxu0 0.0
    %v1307 = vand.u32 %v1103, 4294901760
    %v1308 = vsub.f32 %v1103, %v1307
    %1309 = vmatpush1.msra.mxu0 %v1308
    %1310 = vmatprep.subr.mxu0 0.0
    %v1311 = vand.u32 %v1102, 4294901760
    %v1312 = vsub.f32 %v1102, %v1311
    %1313 = vmatpush1.msra.mxu0 %v1312
    %1314 = vmatprep.subr.mxu0 0.0
    %1315 = vmatpush2.msra.mxu0 0.0
    %1316 = vmatprep.subr.mxu0 0.0
    %1317 = vmatpush2.msra.mxu0 0.0
    %1318 = vmatprep.subr.mxu0 0.0
    %1319 = vmatpush2.msra.mxu0 0.0
    %1320 = vmatprep.subr.mxu0 0.0
    %1321 = vmatpush2.msra.mxu0 0.0
    %1322 = vmatprep.subr.mxu0 0.0
    %1323 = vmatpush2.msra.mxu0 0.0
    %1324 = vmatprep.subr.mxu0 0.0
    %1325 = vmatpush2.msra.mxu0 0.0
    %1326 = vmatprep.subr.mxu0 0.0
    %1327 = vmatpush2.msra.mxu0 0.0
    %1328 = vmatprep.subr.mxu0 0.0
    %1329 = vmatpush2.msra.mxu0 0.0
    %1330 = vmatprep.subr.mxu0 0.0
    %1331 = vmatpush2.msra.mxu0 0.0
    %1332 = vmatprep.subr.mxu0 0.0
    %1333 = vmatpush2.msra.mxu0 0.0
    %1334 = vmatprep.subr.mxu0 0.0
    %1335 = vmatpush2.msra.mxu0 0.0
    %1336 = vmatprep.subr.mxu0 0.0
    %1337 = vmatpush2.msra.mxu0 0.0
    %1338 = vmatprep.subr.mxu0 0.0
    %1339 = vmatpush2.msra.mxu0 0.0
    %1340 = vmatprep.subr.mxu0 0.0
    %1341 = vmatpush2.msra.mxu0 0.0
    %1342 = vmatprep.subr.mxu0 0.0
    %1343 = vmatpush2.msra.mxu0 0.0
    %1344 = vmatprep.subr.mxu0 0.0
    %1345 = vmatpush2.msra.mxu0 0.0
    %1346 = vmatprep.mubr.f32.mxu0 0.0
    %v1347 = vand.u32 %v85, 4294901760
    %v1348 = vsub.f32 %v85, %v1347
    %1349 = vmatmul.mubr.f32.gmra.mxu0 %v1348
    %v1350 = vpop.f32.mrf.mxu0
    %v1351 = vadd.f32 %v1269, %v1350
    %v1352 = vpop.f32.mrf.mxu0
    %1353 = vmatprep.mubr.f32.mxu0 0.0
    %v1354 = vand.u32 %v88, 4294901760
    %v1355 = vsub.f32 %v88, %v1354
    %1356 = vmatmul.mubr.f32.gmra.mxu0 %v1355
    %v1357 = vpop.f32.mrf.mxu0
    %v1358 = vadd.f32 %v1275, %v1357
    %v1359 = vpop.f32.mrf.mxu0
    %1360 = vdwg.mxu0
    %1361 = vmatprep.subr.mxu0 0.0
    %1362 = vmatpush1.msra.mxu0 0.0
    %1363 = vmatprep.subr.mxu0 0.0
    %1364 = vmatpush1.msra.mxu0 0.0
    %1365 = vmatprep.subr.mxu0 0.0
    %1366 = vmatpush1.msra.mxu0 0.0
    %1367 = vmatprep.subr.mxu0 0.0
    %1368 = vmatpush1.msra.mxu0 0.0
    %1369 = vmatprep.subr.mxu0 0.0
    %1370 = vmatpush1.msra.mxu0 0.0
    %1371 = vmatprep.subr.mxu0 0.0
    %1372 = vmatpush1.msra.mxu0 0.0
    %1373 = vmatprep.subr.mxu0 0.0
    %1374 = vmatpush1.msra.mxu0 0.0
    %1375 = vmatprep.subr.mxu0 0.0
    %1376 = vmatpush1.msra.mxu0 0.0
    %1377 = vmatprep.subr.mxu0 0.0
    %1378 = vmatpush1.msra.mxu0 0.0
    %1379 = vmatprep.subr.mxu0 0.0
    %1380 = vmatpush1.msra.mxu0 0.0
    %1381 = vmatprep.subr.mxu0 0.0
    %1382 = vmatpush1.msra.mxu0 0.0
    %1383 = vmatprep.subr.mxu0 0.0
    %1384 = vmatpush1.msra.mxu0 0.0
    %1385 = vmatprep.subr.mxu0 0.0
    %1386 = vmatpush1.msra.mxu0 0.0
    %1387 = vmatprep.subr.mxu0 0.0
    %1388 = vmatpush1.msra.mxu0 0.0
    %1389 = vmatprep.subr.mxu0 0.0
    %v1390 = vand.u32 %v1103, 4294901760
    %1391 = vmatpush1.msra.mxu0 %v1390
    %1392 = vmatprep.subr.mxu0 0.0
    %v1393 = vand.u32 %v1102, 4294901760
    %1394 = vmatpush1.msra.mxu0 %v1393
    %1395 = vmatprep.subr.mxu0 0.0
    %1396 = vmatpush2.msra.mxu0 0.0
    %1397 = vmatprep.subr.mxu0 0.0
    %1398 = vmatpush2.msra.mxu0 0.0
    %1399 = vmatprep.subr.mxu0 0.0
    %1400 = vmatpush2.msra.mxu0 0.0
    %1401 = vmatprep.subr.mxu0 0.0
    %1402 = vmatpush2.msra.mxu0 0.0
    %1403 = vmatprep.subr.mxu0 0.0
    %1404 = vmatpush2.msra.mxu0 0.0
    %1405 = vmatprep.subr.mxu0 0.0
    %1406 = vmatpush2.msra.mxu0 0.0
    %1407 = vmatprep.subr.mxu0 0.0
    %1408 = vmatpush2.msra.mxu0 0.0
    %1409 = vmatprep.subr.mxu0 0.0
    %1410 = vmatpush2.msra.mxu0 0.0
    %1411 = vmatprep.subr.mxu0 0.0
    %1412 = vmatpush2.msra.mxu0 0.0
    %1413 = vmatprep.subr.mxu0 0.0
    %1414 = vmatpush2.msra.mxu0 0.0
    %1415 = vmatprep.subr.mxu0 0.0
    %1416 = vmatpush2.msra.mxu0 0.0
    %1417 = vmatprep.subr.mxu0 0.0
    %1418 = vmatpush2.msra.mxu0 0.0
    %1419 = vmatprep.subr.mxu0 0.0
    %1420 = vmatpush2.msra.mxu0 0.0
    %1421 = vmatprep.subr.mxu0 0.0
    %1422 = vmatpush2.msra.mxu0 0.0
    %1423 = vmatprep.subr.mxu0 0.0
    %1424 = vmatpush2.msra.mxu0 0.0
    %1425 = vmatprep.subr.mxu0 0.0
    %1426 = vmatpush2.msra.mxu0 0.0
    %1427 = vmatprep.mubr.f32.mxu0 0.0
    %v1428 = vand.u32 %v85, 4294901760
    %v1429 = vsub.f32 %v85, %v1428
    %v1430 = vand.u32 %v1429, 4294901760
    %1431 = vmatmul.mubr.f32.gmra.mxu0 %v1430
    %v1432 = vpop.f32.mrf.mxu0
    %v1433 = vadd.f32 %v1351, %v1432
    %v1434 = vpop.f32.mrf.mxu0
    %1435 = vmatprep.mubr.f32.mxu0 0.0
    %v1436 = vand.u32 %v88, 4294901760
    %v1437 = vsub.f32 %v88, %v1436
    %v1438 = vand.u32 %v1437, 4294901760
    %1439 = vmatmul.mubr.f32.gmra.mxu0 %v1438
    %v1440 = vpop.f32.mrf.mxu0
    %v1441 = vadd.f32 %v1358, %v1440
    %v1442 = vpop.f32.mrf.mxu0
    %1443 = vdwg.mxu0
    %1444 = vmatprep.subr.mxu0 0.0
    %1445 = vmatpush1.msra.mxu0 0.0
    %1446 = vmatprep.subr.mxu0 0.0
    %1447 = vmatpush1.msra.mxu0 0.0
    %1448 = vmatprep.subr.mxu0 0.0
    %1449 = vmatpush1.msra.mxu0 0.0
    %1450 = vmatprep.subr.mxu0 0.0
    %1451 = vmatpush1.msra.mxu0 0.0
    %1452 = vmatprep.subr.mxu0 0.0
    %1453 = vmatpush1.msra.mxu0 0.0
    %1454 = vmatprep.subr.mxu0 0.0
    %1455 = vmatpush1.msra.mxu0 0.0
    %1456 = vmatprep.subr.mxu0 0.0
    %1457 = vmatpush1.msra.mxu0 0.0
    %1458 = vmatprep.subr.mxu0 0.0
    %1459 = vmatpush1.msra.mxu0 0.0
    %1460 = vmatprep.subr.mxu0 0.0
    %1461 = vmatpush1.msra.mxu0 0.0
    %1462 = vmatprep.subr.mxu0 0.0
    %1463 = vmatpush1.msra.mxu0 0.0
    %1464 = vmatprep.subr.mxu0 0.0
    %1465 = vmatpush1.msra.mxu0 0.0
    %1466 = vmatprep.subr.mxu0 0.0
    %1467 = vmatpush1.msra.mxu0 0.0
    %1468 = vmatprep.subr.mxu0 0.0
    %1469 = vmatpush1.msra.mxu0 0.0
    %1470 = vmatprep.subr.mxu0 0.0
    %1471 = vmatpush1.msra.mxu0 0.0
    %1472 = vmatprep.subr.mxu0 0.0
    %v1473 = vand.u32 %v1103, 4294901760
    %v1474 = vsub.f32 %v1103, %v1473
    %v1475 = vand.u32 %v1474, 4294901760
    %1476 = vmatpush1.msra.mxu0 %v1475
    %1477 = vmatprep.subr.mxu0 0.0
    %v1478 = vand.u32 %v1102, 4294901760
    %v1479 = vsub.f32 %v1102, %v1478
    %v1480 = vand.u32 %v1479, 4294901760
    %1481 = vmatpush1.msra.mxu0 %v1480
    %1482 = vmatprep.subr.mxu0 0.0
    %1483 = vmatpush2.msra.mxu0 0.0
    %1484 = vmatprep.subr.mxu0 0.0
    %1485 = vmatpush2.msra.mxu0 0.0
    %1486 = vmatprep.subr.mxu0 0.0
    %1487 = vmatpush2.msra.mxu0 0.0
    %1488 = vmatprep.subr.mxu0 0.0
    %1489 = vmatpush2.msra.mxu0 0.0
    %1490 = vmatprep.subr.mxu0 0.0
    %1491 = vmatpush2.msra.mxu0 0.0
    %1492 = vmatprep.subr.mxu0 0.0
    %1493 = vmatpush2.msra.mxu0 0.0
    %1494 = vmatprep.subr.mxu0 0.0
    %1495 = vmatpush2.msra.mxu0 0.0
    %1496 = vmatprep.subr.mxu0 0.0
    %1497 = vmatpush2.msra.mxu0 0.0
    %1498 = vmatprep.subr.mxu0 0.0
    %1499 = vmatpush2.msra.mxu0 0.0
    %1500 = vmatprep.subr.mxu0 0.0
    %1501 = vmatpush2.msra.mxu0 0.0
    %1502 = vmatprep.subr.mxu0 0.0
    %1503 = vmatpush2.msra.mxu0 0.0
    %1504 = vmatprep.subr.mxu0 0.0
    %1505 = vmatpush2.msra.mxu0 0.0
    %1506 = vmatprep.subr.mxu0 0.0
    %1507 = vmatpush2.msra.mxu0 0.0
    %1508 = vmatprep.subr.mxu0 0.0
    %1509 = vmatpush2.msra.mxu0 0.0
    %1510 = vmatprep.subr.mxu0 0.0
    %1511 = vmatpush2.msra.mxu0 0.0
    %1512 = vmatprep.subr.mxu0 0.0
    %1513 = vmatpush2.msra.mxu0 0.0
    %1514 = vmatprep.mubr.f32.mxu0 0.0
    %v1515 = vand.u32 %v85, 4294901760
    %1516 = vmatmul.mubr.f32.gmra.mxu0 %v1515
    %v1517 = vpop.f32.mrf.mxu0
    %v1518 = vadd.f32 %v1433, %v1517
    %v1519 = vpop.f32.mrf.mxu0
    %1520 = vmatprep.mubr.f32.mxu0 0.0
    %v1521 = vand.u32 %v88, 4294901760
    %1522 = vmatmul.mubr.f32.gmra.mxu0 %v1521
    %v1523 = vpop.f32.mrf.mxu0
    %v1524 = vadd.f32 %v1441, %v1523
    %v1525 = vpop.f32.mrf.mxu0
    %1526 = vdwg.mxu0
    %1527 = vmatprep.subr.mxu0 0.0
    %1528 = vmatpush1.msra.mxu0 0.0
    %1529 = vmatprep.subr.mxu0 0.0
    %1530 = vmatpush1.msra.mxu0 0.0
    %1531 = vmatprep.subr.mxu0 0.0
    %1532 = vmatpush1.msra.mxu0 0.0
    %1533 = vmatprep.subr.mxu0 0.0
    %1534 = vmatpush1.msra.mxu0 0.0
    %1535 = vmatprep.subr.mxu0 0.0
    %1536 = vmatpush1.msra.mxu0 0.0
    %1537 = vmatprep.subr.mxu0 0.0
    %1538 = vmatpush1.msra.mxu0 0.0
    %1539 = vmatprep.subr.mxu0 0.0
    %1540 = vmatpush1.msra.mxu0 0.0
    %1541 = vmatprep.subr.mxu0 0.0
    %1542 = vmatpush1.msra.mxu0 0.0
    %1543 = vmatprep.subr.mxu0 0.0
    %1544 = vmatpush1.msra.mxu0 0.0
    %1545 = vmatprep.subr.mxu0 0.0
    %1546 = vmatpush1.msra.mxu0 0.0
    %1547 = vmatprep.subr.mxu0 0.0
    %1548 = vmatpush1.msra.mxu0 0.0
    %1549 = vmatprep.subr.mxu0 0.0
    %1550 = vmatpush1.msra.mxu0 0.0
    %1551 = vmatprep.subr.mxu0 0.0
    %1552 = vmatpush1.msra.mxu0 0.0
    %1553 = vmatprep.subr.mxu0 0.0
    %1554 = vmatpush1.msra.mxu0 0.0
    %1555 = vmatprep.subr.mxu0 0.0
    %v1556 = vand.u32 %v1103, 4294901760
    %1557 = vmatpush1.msra.mxu0 %v1556
    %1558 = vmatprep.subr.mxu0 0.0
    %v1559 = vand.u32 %v1102, 4294901760
    %1560 = vmatpush1.msra.mxu0 %v1559
    %1561 = vmatprep.subr.mxu0 0.0
    %1562 = vmatpush2.msra.mxu0 0.0
    %1563 = vmatprep.subr.mxu0 0.0
    %1564 = vmatpush2.msra.mxu0 0.0
    %1565 = vmatprep.subr.mxu0 0.0
    %1566 = vmatpush2.msra.mxu0 0.0
    %1567 = vmatprep.subr.mxu0 0.0
    %1568 = vmatpush2.msra.mxu0 0.0
    %1569 = vmatprep.subr.mxu0 0.0
    %1570 = vmatpush2.msra.mxu0 0.0
    %1571 = vmatprep.subr.mxu0 0.0
    %1572 = vmatpush2.msra.mxu0 0.0
    %1573 = vmatprep.subr.mxu0 0.0
    %1574 = vmatpush2.msra.mxu0 0.0
    %1575 = vmatprep.subr.mxu0 0.0
    %1576 = vmatpush2.msra.mxu0 0.0
    %1577 = vmatprep.subr.mxu0 0.0
    %1578 = vmatpush2.msra.mxu0 0.0
    %1579 = vmatprep.subr.mxu0 0.0
    %1580 = vmatpush2.msra.mxu0 0.0
    %1581 = vmatprep.subr.mxu0 0.0
    %1582 = vmatpush2.msra.mxu0 0.0
    %1583 = vmatprep.subr.mxu0 0.0
    %1584 = vmatpush2.msra.mxu0 0.0
    %1585 = vmatprep.subr.mxu0 0.0
    %1586 = vmatpush2.msra.mxu0 0.0
    %1587 = vmatprep.subr.mxu0 0.0
    %1588 = vmatpush2.msra.mxu0 0.0
    %1589 = vmatprep.subr.mxu0 0.0
    %1590 = vmatpush2.msra.mxu0 0.0
    %1591 = vmatprep.subr.mxu0 0.0
    %1592 = vmatpush2.msra.mxu0 0.0
    %1593 = vmatprep.mubr.f32.mxu0 0.0
    %v1594 = vand.u32 %v85, 4294901760
    %1595 = vmatmul.mubr.f32.gmra.mxu0 %v1594
    %v1596 = vpop.f32.mrf.mxu0
    %v1597 = vadd.f32 %v1518, %v1596
    %v1598 = vpop.f32.mrf.mxu0
    %1599 = vmatprep.mubr.f32.mxu0 0.0
    %v1600 = vand.u32 %v88, 4294901760
    %1601 = vmatmul.mubr.f32.gmra.mxu0 %v1600
    %v1602 = vpop.f32.mrf.mxu0
    %v1603 = vadd.f32 %v1524, %v1602
    %v1604 = vpop.f32.mrf.mxu0
    %1605 = vdwg.mxu0
    %v1607 = vsel %vm83, %v1597, 0
    %v1610 = vsel %vm83, %v1603, 0
    %1612 = vmatprep.subr.mxu0 0.0
    %1613 = vmatpush1.msra.mxu0 0.0
    %1614 = vmatprep.subr.mxu0 0.0
    %1615 = vmatpush1.msra.mxu0 0.0
    %1616 = vmatprep.subr.mxu0 0.0
    %1617 = vmatpush1.msra.mxu0 0.0
    %1618 = vmatprep.subr.mxu0 0.0
    %1619 = vmatpush1.msra.mxu0 0.0
    %1620 = vmatprep.subr.mxu0 0.0
    %1621 = vmatpush1.msra.mxu0 0.0
    %1622 = vmatprep.subr.mxu0 0.0
    %1623 = vmatpush1.msra.mxu0 0.0
    %1624 = vmatprep.subr.mxu0 0.0
    %1625 = vmatpush1.msra.mxu0 0.0
    %1626 = vmatprep.subr.mxu0 0.0
    %1627 = vmatpush1.msra.mxu0 0.0
    %1628 = vmatprep.subr.mxu0 0.0
    %1629 = vmatpush1.msra.mxu0 0.0
    %1630 = vmatprep.subr.mxu0 0.0
    %1631 = vmatpush1.msra.mxu0 0.0
    %1632 = vmatprep.subr.mxu0 0.0
    %1633 = vmatpush1.msra.mxu0 0.0
    %1634 = vmatprep.subr.mxu0 0.0
    %1635 = vmatpush1.msra.mxu0 0.0
    %1636 = vmatprep.subr.mxu0 0.0
    %1637 = vmatpush1.msra.mxu0 0.0
    %1638 = vmatprep.subr.mxu0 0.0
    %1639 = vmatpush1.msra.mxu0 0.0
    %1640 = vmatprep.subr.mxu0 0.0
    %v1641 = vand.u32 %v76, 4294901760
    %1642 = vmatpush1.msra.mxu0 %v1641
    %1643 = vmatprep.subr.mxu0 0.0
    %v1644 = vand.u32 %v75, 4294901760
    %1645 = vmatpush1.msra.mxu0 %v1644
    %1646 = vmatprep.subr.mxu0 0.0
    %1647 = vmatpush2.msra.mxu0 0.0
    %1648 = vmatprep.subr.mxu0 0.0
    %1649 = vmatpush2.msra.mxu0 0.0
    %1650 = vmatprep.subr.mxu0 0.0
    %1651 = vmatpush2.msra.mxu0 0.0
    %1652 = vmatprep.subr.mxu0 0.0
    %1653 = vmatpush2.msra.mxu0 0.0
    %1654 = vmatprep.subr.mxu0 0.0
    %1655 = vmatpush2.msra.mxu0 0.0
    %1656 = vmatprep.subr.mxu0 0.0
    %1657 = vmatpush2.msra.mxu0 0.0
    %1658 = vmatprep.subr.mxu0 0.0
    %1659 = vmatpush2.msra.mxu0 0.0
    %1660 = vmatprep.subr.mxu0 0.0
    %1661 = vmatpush2.msra.mxu0 0.0
    %1662 = vmatprep.subr.mxu0 0.0
    %1663 = vmatpush2.msra.mxu0 0.0
    %1664 = vmatprep.subr.mxu0 0.0
    %1665 = vmatpush2.msra.mxu0 0.0
    %1666 = vmatprep.subr.mxu0 0.0
    %1667 = vmatpush2.msra.mxu0 0.0
    %1668 = vmatprep.subr.mxu0 0.0
    %1669 = vmatpush2.msra.mxu0 0.0
    %1670 = vmatprep.subr.mxu0 0.0
    %1671 = vmatpush2.msra.mxu0 0.0
    %1672 = vmatprep.subr.mxu0 0.0
    %1673 = vmatpush2.msra.mxu0 0.0
    %1674 = vmatprep.subr.mxu0 0.0
    %1675 = vmatpush2.msra.mxu0 0.0
    %1676 = vmatprep.subr.mxu0 0.0
    %1677 = vmatpush2.msra.mxu0 0.0
    %1678 = vmatprep.mubr.f32.mxu0 0.0
    %v1679 = vand.u32 %v1607, 4294901760
    %v1680 = vsub.f32 %v1607, %v1679
    %v1681 = vand.u32 %v1680, 4294901760
    %v1682 = vsub.f32 %v1680, %v1681
    %v1683 = vand.u32 %v1682, 4294901760
    %1684 = vmatmul.mubr.f32.gmra.mxu0 %v1683
    %v1685 = vpop.f32.mrf.mxu0
    %v1686 = vadd.f32 0.0, %v1685
    %v1687 = vpop.f32.mrf.mxu0
    %1688 = vmatprep.mubr.f32.mxu0 0.0
    %v1689 = vand.u32 %v1610, 4294901760
    %v1690 = vsub.f32 %v1610, %v1689
    %v1691 = vand.u32 %v1690, 4294901760
    %v1692 = vsub.f32 %v1690, %v1691
    %v1693 = vand.u32 %v1692, 4294901760
    %1694 = vmatmul.mubr.f32.gmra.mxu0 %v1693
    %v1695 = vpop.f32.mrf.mxu0
    %v1696 = vadd.f32 0.0, %v1695
    %v1697 = vpop.f32.mrf.mxu0
    %1698 = vdwg.mxu0
    %1699 = vmatprep.subr.mxu0 0.0
    %1700 = vmatpush1.msra.mxu0 0.0
    %1701 = vmatprep.subr.mxu0 0.0
    %1702 = vmatpush1.msra.mxu0 0.0
    %1703 = vmatprep.subr.mxu0 0.0
    %1704 = vmatpush1.msra.mxu0 0.0
    %1705 = vmatprep.subr.mxu0 0.0
    %1706 = vmatpush1.msra.mxu0 0.0
    %1707 = vmatprep.subr.mxu0 0.0
    %1708 = vmatpush1.msra.mxu0 0.0
    %1709 = vmatprep.subr.mxu0 0.0
    %1710 = vmatpush1.msra.mxu0 0.0
    %1711 = vmatprep.subr.mxu0 0.0
    %1712 = vmatpush1.msra.mxu0 0.0
    %1713 = vmatprep.subr.mxu0 0.0
    %1714 = vmatpush1.msra.mxu0 0.0
    %1715 = vmatprep.subr.mxu0 0.0
    %1716 = vmatpush1.msra.mxu0 0.0
    %1717 = vmatprep.subr.mxu0 0.0
    %1718 = vmatpush1.msra.mxu0 0.0
    %1719 = vmatprep.subr.mxu0 0.0
    %1720 = vmatpush1.msra.mxu0 0.0
    %1721 = vmatprep.subr.mxu0 0.0
    %1722 = vmatpush1.msra.mxu0 0.0
    %1723 = vmatprep.subr.mxu0 0.0
    %1724 = vmatpush1.msra.mxu0 0.0
    %1725 = vmatprep.subr.mxu0 0.0
    %1726 = vmatpush1.msra.mxu0 0.0
    %1727 = vmatprep.subr.mxu0 0.0
    %v1728 = vand.u32 %v76, 4294901760
    %v1729 = vsub.f32 %v76, %v1728
    %v1730 = vand.u32 %v1729, 4294901760
    %v1731 = vsub.f32 %v1729, %v1730
    %v1732 = vand.u32 %v1731, 4294901760
    %1733 = vmatpush1.msra.mxu0 %v1732
    %1734 = vmatprep.subr.mxu0 0.0
    %v1735 = vand.u32 %v75, 4294901760
    %v1736 = vsub.f32 %v75, %v1735
    %v1737 = vand.u32 %v1736, 4294901760
    %v1738 = vsub.f32 %v1736, %v1737
    %v1739 = vand.u32 %v1738, 4294901760
    %1740 = vmatpush1.msra.mxu0 %v1739
    %1741 = vmatprep.subr.mxu0 0.0
    %1742 = vmatpush2.msra.mxu0 0.0
    %1743 = vmatprep.subr.mxu0 0.0
    %1744 = vmatpush2.msra.mxu0 0.0
    %1745 = vmatprep.subr.mxu0 0.0
    %1746 = vmatpush2.msra.mxu0 0.0
    %1747 = vmatprep.subr.mxu0 0.0
    %1748 = vmatpush2.msra.mxu0 0.0
    %1749 = vmatprep.subr.mxu0 0.0
    %1750 = vmatpush2.msra.mxu0 0.0
    %1751 = vmatprep.subr.mxu0 0.0
    %1752 = vmatpush2.msra.mxu0 0.0
    %1753 = vmatprep.subr.mxu0 0.0
    %1754 = vmatpush2.msra.mxu0 0.0
    %1755 = vmatprep.subr.mxu0 0.0
    %1756 = vmatpush2.msra.mxu0 0.0
    %1757 = vmatprep.subr.mxu0 0.0
    %1758 = vmatpush2.msra.mxu0 0.0
    %1759 = vmatprep.subr.mxu0 0.0
    %1760 = vmatpush2.msra.mxu0 0.0
    %1761 = vmatprep.subr.mxu0 0.0
    %1762 = vmatpush2.msra.mxu0 0.0
    %1763 = vmatprep.subr.mxu0 0.0
    %1764 = vmatpush2.msra.mxu0 0.0
    %1765 = vmatprep.subr.mxu0 0.0
    %1766 = vmatpush2.msra.mxu0 0.0
    %1767 = vmatprep.subr.mxu0 0.0
    %1768 = vmatpush2.msra.mxu0 0.0
    %1769 = vmatprep.subr.mxu0 0.0
    %1770 = vmatpush2.msra.mxu0 0.0
    %1771 = vmatprep.subr.mxu0 0.0
    %1772 = vmatpush2.msra.mxu0 0.0
    %1773 = vmatprep.mubr.f32.mxu0 0.0
    %v1774 = vand.u32 %v1607, 4294901760
    %1775 = vmatmul.mubr.f32.gmra.mxu0 %v1774
    %v1776 = vpop.f32.mrf.mxu0
    %v1777 = vadd.f32 %v1686, %v1776
    %v1778 = vpop.f32.mrf.mxu0
    %1779 = vmatprep.mubr.f32.mxu0 0.0
    %v1780 = vand.u32 %v1610, 4294901760
    %1781 = vmatmul.mubr.f32.gmra.mxu0 %v1780
    %v1782 = vpop.f32.mrf.mxu0
    %v1783 = vadd.f32 %v1696, %v1782
    %v1784 = vpop.f32.mrf.mxu0
    %1785 = vdwg.mxu0
    %1786 = vmatprep.subr.mxu0 0.0
    %1787 = vmatpush1.msra.mxu0 0.0
    %1788 = vmatprep.subr.mxu0 0.0
    %1789 = vmatpush1.msra.mxu0 0.0
    %1790 = vmatprep.subr.mxu0 0.0
    %1791 = vmatpush1.msra.mxu0 0.0
    %1792 = vmatprep.subr.mxu0 0.0
    %1793 = vmatpush1.msra.mxu0 0.0
    %1794 = vmatprep.subr.mxu0 0.0
    %1795 = vmatpush1.msra.mxu0 0.0
    %1796 = vmatprep.subr.mxu0 0.0
    %1797 = vmatpush1.msra.mxu0 0.0
    %1798 = vmatprep.subr.mxu0 0.0
    %1799 = vmatpush1.msra.mxu0 0.0
    %1800 = vmatprep.subr.mxu0 0.0
    %1801 = vmatpush1.msra.mxu0 0.0
    %1802 = vmatprep.subr.mxu0 0.0
    %1803 = vmatpush1.msra.mxu0 0.0
    %1804 = vmatprep.subr.mxu0 0.0
    %1805 = vmatpush1.msra.mxu0 0.0
    %1806 = vmatprep.subr.mxu0 0.0
    %1807 = vmatpush1.msra.mxu0 0.0
    %1808 = vmatprep.subr.mxu0 0.0
    %1809 = vmatpush1.msra.mxu0 0.0
    %1810 = vmatprep.subr.mxu0 0.0
    %1811 = vmatpush1.msra.mxu0 0.0
    %1812 = vmatprep.subr.mxu0 0.0
    %1813 = vmatpush1.msra.mxu0 0.0
    %1814 = vmatprep.subr.mxu0 0.0
    %v1815 = vand.u32 %v76, 4294901760
    %v1816 = vsub.f32 %v76, %v1815
    %1817 = vmatpush1.msra.mxu0 %v1816
    %1818 = vmatprep.subr.mxu0 0.0
    %v1819 = vand.u32 %v75, 4294901760
    %v1820 = vsub.f32 %v75, %v1819
    %1821 = vmatpush1.msra.mxu0 %v1820
    %1822 = vmatprep.subr.mxu0 0.0
    %1823 = vmatpush2.msra.mxu0 0.0
    %1824 = vmatprep.subr.mxu0 0.0
    %1825 = vmatpush2.msra.mxu0 0.0
    %1826 = vmatprep.subr.mxu0 0.0
    %1827 = vmatpush2.msra.mxu0 0.0
    %1828 = vmatprep.subr.mxu0 0.0
    %1829 = vmatpush2.msra.mxu0 0.0
    %1830 = vmatprep.subr.mxu0 0.0
    %1831 = vmatpush2.msra.mxu0 0.0
    %1832 = vmatprep.subr.mxu0 0.0
    %1833 = vmatpush2.msra.mxu0 0.0
    %1834 = vmatprep.subr.mxu0 0.0
    %1835 = vmatpush2.msra.mxu0 0.0
    %1836 = vmatprep.subr.mxu0 0.0
    %1837 = vmatpush2.msra.mxu0 0.0
    %1838 = vmatprep.subr.mxu0 0.0
    %1839 = vmatpush2.msra.mxu0 0.0
    %1840 = vmatprep.subr.mxu0 0.0
    %1841 = vmatpush2.msra.mxu0 0.0
    %1842 = vmatprep.subr.mxu0 0.0
    %1843 = vmatpush2.msra.mxu0 0.0
    %1844 = vmatprep.subr.mxu0 0.0
    %1845 = vmatpush2.msra.mxu0 0.0
    %1846 = vmatprep.subr.mxu0 0.0
    %1847 = vmatpush2.msra.mxu0 0.0
    %1848 = vmatprep.subr.mxu0 0.0
    %1849 = vmatpush2.msra.mxu0 0.0
    %1850 = vmatprep.subr.mxu0 0.0
    %1851 = vmatpush2.msra.mxu0 0.0
    %1852 = vmatprep.subr.mxu0 0.0
    %1853 = vmatpush2.msra.mxu0 0.0
    %1854 = vmatprep.mubr.f32.mxu0 0.0
    %v1855 = vand.u32 %v1607, 4294901760
    %v1856 = vsub.f32 %v1607, %v1855
    %1857 = vmatmul.mubr.f32.gmra.mxu0 %v1856
    %v1858 = vpop.f32.mrf.mxu0
    %v1859 = vadd.f32 %v1777, %v1858
    %v1860 = vpop.f32.mrf.mxu0
    %1861 = vmatprep.mubr.f32.mxu0 0.0
    %v1862 = vand.u32 %v1610, 4294901760
    %v1863 = vsub.f32 %v1610, %v1862
    %1864 = vmatmul.mubr.f32.gmra.mxu0 %v1863
    %v1865 = vpop.f32.mrf.mxu0
    %v1866 = vadd.f32 %v1783, %v1865
    %v1867 = vpop.f32.mrf.mxu0
    %1868 = vdwg.mxu0
    %1869 = vmatprep.subr.mxu0 0.0
    %1870 = vmatpush1.msra.mxu0 0.0
    %1871 = vmatprep.subr.mxu0 0.0
    %1872 = vmatpush1.msra.mxu0 0.0
    %1873 = vmatprep.subr.mxu0 0.0
    %1874 = vmatpush1.msra.mxu0 0.0
    %1875 = vmatprep.subr.mxu0 0.0
    %1876 = vmatpush1.msra.mxu0 0.0
    %1877 = vmatprep.subr.mxu0 0.0
    %1878 = vmatpush1.msra.mxu0 0.0
    %1879 = vmatprep.subr.mxu0 0.0
    %1880 = vmatpush1.msra.mxu0 0.0
    %1881 = vmatprep.subr.mxu0 0.0
    %1882 = vmatpush1.msra.mxu0 0.0
    %1883 = vmatprep.subr.mxu0 0.0
    %1884 = vmatpush1.msra.mxu0 0.0
    %1885 = vmatprep.subr.mxu0 0.0
    %1886 = vmatpush1.msra.mxu0 0.0
    %1887 = vmatprep.subr.mxu0 0.0
    %1888 = vmatpush1.msra.mxu0 0.0
    %1889 = vmatprep.subr.mxu0 0.0
    %1890 = vmatpush1.msra.mxu0 0.0
    %1891 = vmatprep.subr.mxu0 0.0
    %1892 = vmatpush1.msra.mxu0 0.0
    %1893 = vmatprep.subr.mxu0 0.0
    %1894 = vmatpush1.msra.mxu0 0.0
    %1895 = vmatprep.subr.mxu0 0.0
    %1896 = vmatpush1.msra.mxu0 0.0
    %1897 = vmatprep.subr.mxu0 0.0
    %v1898 = vand.u32 %v76, 4294901760
    %1899 = vmatpush1.msra.mxu0 %v1898
    %1900 = vmatprep.subr.mxu0 0.0
    %v1901 = vand.u32 %v75, 4294901760
    %1902 = vmatpush1.msra.mxu0 %v1901
    %1903 = vmatprep.subr.mxu0 0.0
    %1904 = vmatpush2.msra.mxu0 0.0
    %1905 = vmatprep.subr.mxu0 0.0
    %1906 = vmatpush2.msra.mxu0 0.0
    %1907 = vmatprep.subr.mxu0 0.0
    %1908 = vmatpush2.msra.mxu0 0.0
    %1909 = vmatprep.subr.mxu0 0.0
    %1910 = vmatpush2.msra.mxu0 0.0
    %1911 = vmatprep.subr.mxu0 0.0
    %1912 = vmatpush2.msra.mxu0 0.0
    %1913 = vmatprep.subr.mxu0 0.0
    %1914 = vmatpush2.msra.mxu0 0.0
    %1915 = vmatprep.subr.mxu0 0.0
    %1916 = vmatpush2.msra.mxu0 0.0
    %1917 = vmatprep.subr.mxu0 0.0
    %1918 = vmatpush2.msra.mxu0 0.0
    %1919 = vmatprep.subr.mxu0 0.0
    %1920 = vmatpush2.msra.mxu0 0.0
    %1921 = vmatprep.subr.mxu0 0.0
    %1922 = vmatpush2.msra.mxu0 0.0
    %1923 = vmatprep.subr.mxu0 0.0
    %1924 = vmatpush2.msra.mxu0 0.0
    %1925 = vmatprep.subr.mxu0 0.0
    %1926 = vmatpush2.msra.mxu0 0.0
    %1927 = vmatprep.subr.mxu0 0.0
    %1928 = vmatpush2.msra.mxu0 0.0
    %1929 = vmatprep.subr.mxu0 0.0
    %1930 = vmatpush2.msra.mxu0 0.0
    %1931 = vmatprep.subr.mxu0 0.0
    %1932 = vmatpush2.msra.mxu0 0.0
    %1933 = vmatprep.subr.mxu0 0.0
    %1934 = vmatpush2.msra.mxu0 0.0
    %1935 = vmatprep.mubr.f32.mxu0 0.0
    %v1936 = vand.u32 %v1607, 4294901760
    %v1937 = vsub.f32 %v1607, %v1936
    %v1938 = vand.u32 %v1937, 4294901760
    %1939 = vmatmul.mubr.f32.gmra.mxu0 %v1938
    %v1940 = vpop.f32.mrf.mxu0
    %v1941 = vadd.f32 %v1859, %v1940
    %v1942 = vpop.f32.mrf.mxu0
    %1943 = vmatprep.mubr.f32.mxu0 0.0
    %v1944 = vand.u32 %v1610, 4294901760
    %v1945 = vsub.f32 %v1610, %v1944
    %v1946 = vand.u32 %v1945, 4294901760
    %1947 = vmatmul.mubr.f32.gmra.mxu0 %v1946
    %v1948 = vpop.f32.mrf.mxu0
    %v1949 = vadd.f32 %v1866, %v1948
    %v1950 = vpop.f32.mrf.mxu0
    %1951 = vdwg.mxu0
    %1952 = vmatprep.subr.mxu0 0.0
    %1953 = vmatpush1.msra.mxu0 0.0
    %1954 = vmatprep.subr.mxu0 0.0
    %1955 = vmatpush1.msra.mxu0 0.0
    %1956 = vmatprep.subr.mxu0 0.0
    %1957 = vmatpush1.msra.mxu0 0.0
    %1958 = vmatprep.subr.mxu0 0.0
    %1959 = vmatpush1.msra.mxu0 0.0
    %1960 = vmatprep.subr.mxu0 0.0
    %1961 = vmatpush1.msra.mxu0 0.0
    %1962 = vmatprep.subr.mxu0 0.0
    %1963 = vmatpush1.msra.mxu0 0.0
    %1964 = vmatprep.subr.mxu0 0.0
    %1965 = vmatpush1.msra.mxu0 0.0
    %1966 = vmatprep.subr.mxu0 0.0
    %1967 = vmatpush1.msra.mxu0 0.0
    %1968 = vmatprep.subr.mxu0 0.0
    %1969 = vmatpush1.msra.mxu0 0.0
    %1970 = vmatprep.subr.mxu0 0.0
    %1971 = vmatpush1.msra.mxu0 0.0
    %1972 = vmatprep.subr.mxu0 0.0
    %1973 = vmatpush1.msra.mxu0 0.0
    %1974 = vmatprep.subr.mxu0 0.0
    %1975 = vmatpush1.msra.mxu0 0.0
    %1976 = vmatprep.subr.mxu0 0.0
    %1977 = vmatpush1.msra.mxu0 0.0
    %1978 = vmatprep.subr.mxu0 0.0
    %1979 = vmatpush1.msra.mxu0 0.0
    %1980 = vmatprep.subr.mxu0 0.0
    %v1981 = vand.u32 %v76, 4294901760
    %v1982 = vsub.f32 %v76, %v1981
    %v1983 = vand.u32 %v1982, 4294901760
    %1984 = vmatpush1.msra.mxu0 %v1983
    %1985 = vmatprep.subr.mxu0 0.0
    %v1986 = vand.u32 %v75, 4294901760
    %v1987 = vsub.f32 %v75, %v1986
    %v1988 = vand.u32 %v1987, 4294901760
    %1989 = vmatpush1.msra.mxu0 %v1988
    %1990 = vmatprep.subr.mxu0 0.0
    %1991 = vmatpush2.msra.mxu0 0.0
    %1992 = vmatprep.subr.mxu0 0.0
    %1993 = vmatpush2.msra.mxu0 0.0
    %1994 = vmatprep.subr.mxu0 0.0
    %1995 = vmatpush2.msra.mxu0 0.0
    %1996 = vmatprep.subr.mxu0 0.0
    %1997 = vmatpush2.msra.mxu0 0.0
    %1998 = vmatprep.subr.mxu0 0.0
    %1999 = vmatpush2.msra.mxu0 0.0
    %2000 = vmatprep.subr.mxu0 0.0
    %2001 = vmatpush2.msra.mxu0 0.0
    %2002 = vmatprep.subr.mxu0 0.0
    %2003 = vmatpush2.msra.mxu0 0.0
    %2004 = vmatprep.subr.mxu0 0.0
    %2005 = vmatpush2.msra.mxu0 0.0
    %2006 = vmatprep.subr.mxu0 0.0
    %2007 = vmatpush2.msra.mxu0 0.0
    %2008 = vmatprep.subr.mxu0 0.0
    %2009 = vmatpush2.msra.mxu0 0.0
    %2010 = vmatprep.subr.mxu0 0.0
    %2011 = vmatpush2.msra.mxu0 0.0
    %2012 = vmatprep.subr.mxu0 0.0
    %2013 = vmatpush2.msra.mxu0 0.0
    %2014 = vmatprep.subr.mxu0 0.0
    %2015 = vmatpush2.msra.mxu0 0.0
    %2016 = vmatprep.subr.mxu0 0.0
    %2017 = vmatpush2.msra.mxu0 0.0
    %2018 = vmatprep.subr.mxu0 0.0
    %2019 = vmatpush2.msra.mxu0 0.0
    %2020 = vmatprep.subr.mxu0 0.0
    %2021 = vmatpush2.msra.mxu0 0.0
    %2022 = vmatprep.mubr.f32.mxu0 0.0
    %v2023 = vand.u32 %v1607, 4294901760
    %2024 = vmatmul.mubr.f32.gmra.mxu0 %v2023
    %v2025 = vpop.f32.mrf.mxu0
    %v2026 = vadd.f32 %v1941, %v2025
    %v2027 = vpop.f32.mrf.mxu0
    %2028 = vmatprep.mubr.f32.mxu0 0.0
    %v2029 = vand.u32 %v1610, 4294901760
    %2030 = vmatmul.mubr.f32.gmra.mxu0 %v2029
    %v2031 = vpop.f32.mrf.mxu0
    %v2032 = vadd.f32 %v1949, %v2031
    %v2033 = vpop.f32.mrf.mxu0
    %2034 = vdwg.mxu0
    %2035 = vmatprep.subr.mxu0 0.0
    %2036 = vmatpush1.msra.mxu0 0.0
    %2037 = vmatprep.subr.mxu0 0.0
    %2038 = vmatpush1.msra.mxu0 0.0
    %2039 = vmatprep.subr.mxu0 0.0
    %2040 = vmatpush1.msra.mxu0 0.0
    %2041 = vmatprep.subr.mxu0 0.0
    %2042 = vmatpush1.msra.mxu0 0.0
    %2043 = vmatprep.subr.mxu0 0.0
    %2044 = vmatpush1.msra.mxu0 0.0
    %2045 = vmatprep.subr.mxu0 0.0
    %2046 = vmatpush1.msra.mxu0 0.0
    %2047 = vmatprep.subr.mxu0 0.0
    %2048 = vmatpush1.msra.mxu0 0.0
    %2049 = vmatprep.subr.mxu0 0.0
    %2050 = vmatpush1.msra.mxu0 0.0
    %2051 = vmatprep.subr.mxu0 0.0
    %2052 = vmatpush1.msra.mxu0 0.0
    %2053 = vmatprep.subr.mxu0 0.0
    %2054 = vmatpush1.msra.mxu0 0.0
    %2055 = vmatprep.subr.mxu0 0.0
    %2056 = vmatpush1.msra.mxu0 0.0
    %2057 = vmatprep.subr.mxu0 0.0
    %2058 = vmatpush1.msra.mxu0 0.0
    %2059 = vmatprep.subr.mxu0 0.0
    %2060 = vmatpush1.msra.mxu0 0.0
    %2061 = vmatprep.subr.mxu0 0.0
    %2062 = vmatpush1.msra.mxu0 0.0
    %2063 = vmatprep.subr.mxu0 0.0
    %v2064 = vand.u32 %v76, 4294901760
    %2065 = vmatpush1.msra.mxu0 %v2064
    %2066 = vmatprep.subr.mxu0 0.0
    %v2067 = vand.u32 %v75, 4294901760
    %2068 = vmatpush1.msra.mxu0 %v2067
    %2069 = vmatprep.subr.mxu0 0.0
    %2070 = vmatpush2.msra.mxu0 0.0
    %2071 = vmatprep.subr.mxu0 0.0
    %2072 = vmatpush2.msra.mxu0 0.0
    %2073 = vmatprep.subr.mxu0 0.0
    %2074 = vmatpush2.msra.mxu0 0.0
    %2075 = vmatprep.subr.mxu0 0.0
    %2076 = vmatpush2.msra.mxu0 0.0
    %2077 = vmatprep.subr.mxu0 0.0
    %2078 = vmatpush2.msra.mxu0 0.0
    %2079 = vmatprep.subr.mxu0 0.0
    %2080 = vmatpush2.msra.mxu0 0.0
    %2081 = vmatprep.subr.mxu0 0.0
    %2082 = vmatpush2.msra.mxu0 0.0
    %2083 = vmatprep.subr.mxu0 0.0
    %2084 = vmatpush2.msra.mxu0 0.0
    %2085 = vmatprep.subr.mxu0 0.0
    %2086 = vmatpush2.msra.mxu0 0.0
    %2087 = vmatprep.subr.mxu0 0.0
    %2088 = vmatpush2.msra.mxu0 0.0
    %2089 = vmatprep.subr.mxu0 0.0
    %2090 = vmatpush2.msra.mxu0 0.0
    %2091 = vmatprep.subr.mxu0 0.0
    %2092 = vmatpush2.msra.mxu0 0.0
    %2093 = vmatprep.subr.mxu0 0.0
    %2094 = vmatpush2.msra.mxu0 0.0
    %2095 = vmatprep.subr.mxu0 0.0
    %2096 = vmatpush2.msra.mxu0 0.0
    %2097 = vmatprep.subr.mxu0 0.0
    %2098 = vmatpush2.msra.mxu0 0.0
    %2099 = vmatprep.subr.mxu0 0.0
    %2100 = vmatpush2.msra.mxu0 0.0
    %2101 = vmatprep.mubr.f32.mxu0 0.0
    %v2102 = vand.u32 %v1607, 4294901760
    %2103 = vmatmul.mubr.f32.gmra.mxu0 %v2102
    %v2104 = vpop.f32.mrf.mxu0
    %v2105 = vadd.f32 %v2026, %v2104
    %v2106 = vpop.f32.mrf.mxu0
    %2107 = vmatprep.mubr.f32.mxu0 0.0
    %v2108 = vand.u32 %v1610, 4294901760
    %2109 = vmatmul.mubr.f32.gmra.mxu0 %v2108
    %v2110 = vpop.f32.mrf.mxu0
    %v2111 = vadd.f32 %v2032, %v2110
    %v2112 = vpop.f32.mrf.mxu0
    %2113 = vdwg.mxu0
    %s2114 = scalar_lea.vmem [#allocation9], 16
    %v2115 = vld [vmem:[%s2114] sm:$0xff]
    %v2116 = vld [vmem:[%s2114 + $0x8] sm:$0xff]
    %s2117 = scalar_lea.vmem [#allocation8], 16
    %v2118 = vld [vmem:[%s2117] sm:$0xff]
    %v2119 = vld [vmem:[%s2117 + $0x8] sm:$0xff]
    %v2120 = vsub.f32 %v2115, %v2118
    %v2121 = vsub.f32 %v2116, %v2119
    %2122 = vmatprep.subr.mxu0 0.0
    %2123 = vmatpush1.msra.mxu0 0.0
    %2124 = vmatprep.subr.mxu0 0.0
    %2125 = vmatpush1.msra.mxu0 0.0
    %2126 = vmatprep.subr.mxu0 0.0
    %2127 = vmatpush1.msra.mxu0 0.0
    %2128 = vmatprep.subr.mxu0 0.0
    %2129 = vmatpush1.msra.mxu0 0.0
    %2130 = vmatprep.subr.mxu0 0.0
    %2131 = vmatpush1.msra.mxu0 0.0
    %2132 = vmatprep.subr.mxu0 0.0
    %2133 = vmatpush1.msra.mxu0 0.0
    %2134 = vmatprep.subr.mxu0 0.0
    %2135 = vmatpush1.msra.mxu0 0.0
    %2136 = vmatprep.subr.mxu0 0.0
    %2137 = vmatpush1.msra.mxu0 0.0
    %2138 = vmatprep.subr.mxu0 0.0
    %2139 = vmatpush1.msra.mxu0 0.0
    %2140 = vmatprep.subr.mxu0 0.0
    %2141 = vmatpush1.msra.mxu0 0.0
    %2142 = vmatprep.subr.mxu0 0.0
    %2143 = vmatpush1.msra.mxu0 0.0
    %2144 = vmatprep.subr.mxu0 0.0
    %2145 = vmatpush1.msra.mxu0 0.0
    %2146 = vmatprep.subr.mxu0 0.0
    %2147 = vmatpush1.msra.mxu0 0.0
    %2148 = vmatprep.subr.mxu0 0.0
    %2149 = vmatpush1.msra.mxu0 0.0
    %2150 = vmatprep.subr.mxu0 0.0
    %v2151 = vand.u32 %v2121, 4294901760
    %2152 = vmatpush1.msra.mxu0 %v2151
    %2153 = vmatprep.subr.mxu0 0.0
    %v2154 = vand.u32 %v2120, 4294901760
    %2155 = vmatpush1.msra.mxu0 %v2154
    %2156 = vmatprep.subr.mxu0 0.0
    %2157 = vmatpush2.msra.mxu0 0.0
    %2158 = vmatprep.subr.mxu0 0.0
    %2159 = vmatpush2.msra.mxu0 0.0
    %2160 = vmatprep.subr.mxu0 0.0
    %2161 = vmatpush2.msra.mxu0 0.0
    %2162 = vmatprep.subr.mxu0 0.0
    %2163 = vmatpush2.msra.mxu0 0.0
    %2164 = vmatprep.subr.mxu0 0.0
    %2165 = vmatpush2.msra.mxu0 0.0
    %2166 = vmatprep.subr.mxu0 0.0
    %2167 = vmatpush2.msra.mxu0 0.0
    %2168 = vmatprep.subr.mxu0 0.0
    %2169 = vmatpush2.msra.mxu0 0.0
    %2170 = vmatprep.subr.mxu0 0.0
    %2171 = vmatpush2.msra.mxu0 0.0
    %2172 = vmatprep.subr.mxu0 0.0
    %2173 = vmatpush2.msra.mxu0 0.0
    %2174 = vmatprep.subr.mxu0 0.0
    %2175 = vmatpush2.msra.mxu0 0.0
    %2176 = vmatprep.subr.mxu0 0.0
    %2177 = vmatpush2.msra.mxu0 0.0
    %2178 = vmatprep.subr.mxu0 0.0
    %2179 = vmatpush2.msra.mxu0 0.0
    %2180 = vmatprep.subr.mxu0 0.0
    %2181 = vmatpush2.msra.mxu0 0.0
    %2182 = vmatprep.subr.mxu0 0.0
    %2183 = vmatpush2.msra.mxu0 0.0
    %2184 = vmatprep.subr.mxu0 0.0
    %2185 = vmatpush2.msra.mxu0 0.0
    %2186 = vmatprep.subr.mxu0 0.0
    %2187 = vmatpush2.msra.mxu0 0.0
    %2188 = vmatprep.mubr.f32.mxu0 0.0
    %v2189 = vand.u32 %v85, 4294901760
    %v2190 = vsub.f32 %v85, %v2189
    %v2191 = vand.u32 %v2190, 4294901760
    %v2192 = vsub.f32 %v2190, %v2191
    %v2193 = vand.u32 %v2192, 4294901760
    %2194 = vmatmul.mubr.f32.gmra.mxu0 %v2193
    %v2195 = vpop.f32.mrf.mxu0
    %v2196 = vadd.f32 0.0, %v2195
    %v2197 = vpop.f32.mrf.mxu0
    %2198 = vmatprep.mubr.f32.mxu0 0.0
    %v2199 = vand.u32 %v88, 4294901760
    %v2200 = vsub.f32 %v88, %v2199
    %v2201 = vand.u32 %v2200, 4294901760
    %v2202 = vsub.f32 %v2200, %v2201
    %v2203 = vand.u32 %v2202, 4294901760
    %2204 = vmatmul.mubr.f32.gmra.mxu0 %v2203
    %v2205 = vpop.f32.mrf.mxu0
    %v2206 = vadd.f32 0.0, %v2205
    %v2207 = vpop.f32.mrf.mxu0
    %2208 = vdwg.mxu0
    %2209 = vmatprep.subr.mxu0 0.0
    %2210 = vmatpush1.msra.mxu0 0.0
    %2211 = vmatprep.subr.mxu0 0.0
    %2212 = vmatpush1.msra.mxu0 0.0
    %2213 = vmatprep.subr.mxu0 0.0
    %2214 = vmatpush1.msra.mxu0 0.0
    %2215 = vmatprep.subr.mxu0 0.0
    %2216 = vmatpush1.msra.mxu0 0.0
    %2217 = vmatprep.subr.mxu0 0.0
    %2218 = vmatpush1.msra.mxu0 0.0
    %2219 = vmatprep.subr.mxu0 0.0
    %2220 = vmatpush1.msra.mxu0 0.0
    %2221 = vmatprep.subr.mxu0 0.0
    %2222 = vmatpush1.msra.mxu0 0.0
    %2223 = vmatprep.subr.mxu0 0.0
    %2224 = vmatpush1.msra.mxu0 0.0
    %2225 = vmatprep.subr.mxu0 0.0
    %2226 = vmatpush1.msra.mxu0 0.0
    %2227 = vmatprep.subr.mxu0 0.0
    %2228 = vmatpush1.msra.mxu0 0.0
    %2229 = vmatprep.subr.mxu0 0.0
    %2230 = vmatpush1.msra.mxu0 0.0
    %2231 = vmatprep.subr.mxu0 0.0
    %2232 = vmatpush1.msra.mxu0 0.0
    %2233 = vmatprep.subr.mxu0 0.0
    %2234 = vmatpush1.msra.mxu0 0.0
    %2235 = vmatprep.subr.mxu0 0.0
    %2236 = vmatpush1.msra.mxu0 0.0
    %2237 = vmatprep.subr.mxu0 0.0
    %v2238 = vand.u32 %v2121, 4294901760
    %v2239 = vsub.f32 %v2121, %v2238
    %v2240 = vand.u32 %v2239, 4294901760
    %v2241 = vsub.f32 %v2239, %v2240
    %v2242 = vand.u32 %v2241, 4294901760
    %2243 = vmatpush1.msra.mxu0 %v2242
    %2244 = vmatprep.subr.mxu0 0.0
    %v2245 = vand.u32 %v2120, 4294901760
    %v2246 = vsub.f32 %v2120, %v2245
    %v2247 = vand.u32 %v2246, 4294901760
    %v2248 = vsub.f32 %v2246, %v2247
    %v2249 = vand.u32 %v2248, 4294901760
    %2250 = vmatpush1.msra.mxu0 %v2249
    %2251 = vmatprep.subr.mxu0 0.0
    %2252 = vmatpush2.msra.mxu0 0.0
    %2253 = vmatprep.subr.mxu0 0.0
    %2254 = vmatpush2.msra.mxu0 0.0
    %2255 = vmatprep.subr.mxu0 0.0
    %2256 = vmatpush2.msra.mxu0 0.0
    %2257 = vmatprep.subr.mxu0 0.0
    %2258 = vmatpush2.msra.mxu0 0.0
    %2259 = vmatprep.subr.mxu0 0.0
    %2260 = vmatpush2.msra.mxu0 0.0
    %2261 = vmatprep.subr.mxu0 0.0
    %2262 = vmatpush2.msra.mxu0 0.0
    %2263 = vmatprep.subr.mxu0 0.0
    %2264 = vmatpush2.msra.mxu0 0.0
    %2265 = vmatprep.subr.mxu0 0.0
    %2266 = vmatpush2.msra.mxu0 0.0
    %2267 = vmatprep.subr.mxu0 0.0
    %2268 = vmatpush2.msra.mxu0 0.0
    %2269 = vmatprep.subr.mxu0 0.0
    %2270 = vmatpush2.msra.mxu0 0.0
    %2271 = vmatprep.subr.mxu0 0.0
    %2272 = vmatpush2.msra.mxu0 0.0
    %2273 = vmatprep.subr.mxu0 0.0
    %2274 = vmatpush2.msra.mxu0 0.0
    %2275 = vmatprep.subr.mxu0 0.0
    %2276 = vmatpush2.msra.mxu0 0.0
    %2277 = vmatprep.subr.mxu0 0.0
    %2278 = vmatpush2.msra.mxu0 0.0
    %2279 = vmatprep.subr.mxu0 0.0
    %2280 = vmatpush2.msra.mxu0 0.0
    %2281 = vmatprep.subr.mxu0 0.0
    %2282 = vmatpush2.msra.mxu0 0.0
    %2283 = vmatprep.mubr.f32.mxu0 0.0
    %v2284 = vand.u32 %v85, 4294901760
    %2285 = vmatmul.mubr.f32.gmra.mxu0 %v2284
    %v2286 = vpop.f32.mrf.mxu0
    %v2287 = vadd.f32 %v2196, %v2286
    %v2288 = vpop.f32.mrf.mxu0
    %2289 = vmatprep.mubr.f32.mxu0 0.0
    %v2290 = vand.u32 %v88, 4294901760
    %2291 = vmatmul.mubr.f32.gmra.mxu0 %v2290
    %v2292 = vpop.f32.mrf.mxu0
    %v2293 = vadd.f32 %v2206, %v2292
    %v2294 = vpop.f32.mrf.mxu0
    %2295 = vdwg.mxu0
    %2296 = vmatprep.subr.mxu0 0.0
    %2297 = vmatpush1.msra.mxu0 0.0
    %2298 = vmatprep.subr.mxu0 0.0
    %2299 = vmatpush1.msra.mxu0 0.0
    %2300 = vmatprep.subr.mxu0 0.0
    %2301 = vmatpush1.msra.mxu0 0.0
    %2302 = vmatprep.subr.mxu0 0.0
    %2303 = vmatpush1.msra.mxu0 0.0
    %2304 = vmatprep.subr.mxu0 0.0
    %2305 = vmatpush1.msra.mxu0 0.0
    %2306 = vmatprep.subr.mxu0 0.0
    %2307 = vmatpush1.msra.mxu0 0.0
    %2308 = vmatprep.subr.mxu0 0.0
    %2309 = vmatpush1.msra.mxu0 0.0
    %2310 = vmatprep.subr.mxu0 0.0
    %2311 = vmatpush1.msra.mxu0 0.0
    %2312 = vmatprep.subr.mxu0 0.0
    %2313 = vmatpush1.msra.mxu0 0.0
    %2314 = vmatprep.subr.mxu0 0.0
    %2315 = vmatpush1.msra.mxu0 0.0
    %2316 = vmatprep.subr.mxu0 0.0
    %2317 = vmatpush1.msra.mxu0 0.0
    %2318 = vmatprep.subr.mxu0 0.0
    %2319 = vmatpush1.msra.mxu0 0.0
    %2320 = vmatprep.subr.mxu0 0.0
    %2321 = vmatpush1.msra.mxu0 0.0
    %2322 = vmatprep.subr.mxu0 0.0
    %2323 = vmatpush1.msra.mxu0 0.0
    %2324 = vmatprep.subr.mxu0 0.0
    %v2325 = vand.u32 %v2121, 4294901760
    %v2326 = vsub.f32 %v2121, %v2325
    %2327 = vmatpush1.msra.mxu0 %v2326
    %2328 = vmatprep.subr.mxu0 0.0
    %v2329 = vand.u32 %v2120, 4294901760
    %v2330 = vsub.f32 %v2120, %v2329
    %2331 = vmatpush1.msra.mxu0 %v2330
    %2332 = vmatprep.subr.mxu0 0.0
    %2333 = vmatpush2.msra.mxu0 0.0
    %2334 = vmatprep.subr.mxu0 0.0
    %2335 = vmatpush2.msra.mxu0 0.0
    %2336 = vmatprep.subr.mxu0 0.0
    %2337 = vmatpush2.msra.mxu0 0.0
    %2338 = vmatprep.subr.mxu0 0.0
    %2339 = vmatpush2.msra.mxu0 0.0
    %2340 = vmatprep.subr.mxu0 0.0
    %2341 = vmatpush2.msra.mxu0 0.0
    %2342 = vmatprep.subr.mxu0 0.0
    %2343 = vmatpush2.msra.mxu0 0.0
    %2344 = vmatprep.subr.mxu0 0.0
    %2345 = vmatpush2.msra.mxu0 0.0
    %2346 = vmatprep.subr.mxu0 0.0
    %2347 = vmatpush2.msra.mxu0 0.0
    %2348 = vmatprep.subr.mxu0 0.0
    %2349 = vmatpush2.msra.mxu0 0.0
    %2350 = vmatprep.subr.mxu0 0.0
    %2351 = vmatpush2.msra.mxu0 0.0
    %2352 = vmatprep.subr.mxu0 0.0
    %2353 = vmatpush2.msra.mxu0 0.0
    %2354 = vmatprep.subr.mxu0 0.0
    %2355 = vmatpush2.msra.mxu0 0.0
    %2356 = vmatprep.subr.mxu0 0.0
    %2357 = vmatpush2.msra.mxu0 0.0
    %2358 = vmatprep.subr.mxu0 0.0
    %2359 = vmatpush2.msra.mxu0 0.0
    %2360 = vmatprep.subr.mxu0 0.0
    %2361 = vmatpush2.msra.mxu0 0.0
    %2362 = vmatprep.subr.mxu0 0.0
    %2363 = vmatpush2.msra.mxu0 0.0
    %2364 = vmatprep.mubr.f32.mxu0 0.0
    %v2365 = vand.u32 %v85, 4294901760
    %v2366 = vsub.f32 %v85, %v2365
    %2367 = vmatmul.mubr.f32.gmra.mxu0 %v2366
    %v2368 = vpop.f32.mrf.mxu0
    %v2369 = vadd.f32 %v2287, %v2368
    %v2370 = vpop.f32.mrf.mxu0
    %2371 = vmatprep.mubr.f32.mxu0 0.0
    %v2372 = vand.u32 %v88, 4294901760
    %v2373 = vsub.f32 %v88, %v2372
    %2374 = vmatmul.mubr.f32.gmra.mxu0 %v2373
    %v2375 = vpop.f32.mrf.mxu0
    %v2376 = vadd.f32 %v2293, %v2375
    %v2377 = vpop.f32.mrf.mxu0
    %2378 = vdwg.mxu0
    %2379 = vmatprep.subr.mxu0 0.0
    %2380 = vmatpush1.msra.mxu0 0.0
    %2381 = vmatprep.subr.mxu0 0.0
    %2382 = vmatpush1.msra.mxu0 0.0
    %2383 = vmatprep.subr.mxu0 0.0
    %2384 = vmatpush1.msra.mxu0 0.0
    %2385 = vmatprep.subr.mxu0 0.0
    %2386 = vmatpush1.msra.mxu0 0.0
    %2387 = vmatprep.subr.mxu0 0.0
    %2388 = vmatpush1.msra.mxu0 0.0
    %2389 = vmatprep.subr.mxu0 0.0
    %2390 = vmatpush1.msra.mxu0 0.0
    %2391 = vmatprep.subr.mxu0 0.0
    %2392 = vmatpush1.msra.mxu0 0.0
    %2393 = vmatprep.subr.mxu0 0.0
    %2394 = vmatpush1.msra.mxu0 0.0
    %2395 = vmatprep.subr.mxu0 0.0
    %2396 = vmatpush1.msra.mxu0 0.0
    %2397 = vmatprep.subr.mxu0 0.0
    %2398 = vmatpush1.msra.mxu0 0.0
    %2399 = vmatprep.subr.mxu0 0.0
    %2400 = vmatpush1.msra.mxu0 0.0
    %2401 = vmatprep.subr.mxu0 0.0
    %2402 = vmatpush1.msra.mxu0 0.0
    %2403 = vmatprep.subr.mxu0 0.0
    %2404 = vmatpush1.msra.mxu0 0.0
    %2405 = vmatprep.subr.mxu0 0.0
    %2406 = vmatpush1.msra.mxu0 0.0
    %2407 = vmatprep.subr.mxu0 0.0
    %v2408 = vand.u32 %v2121, 4294901760
    %2409 = vmatpush1.msra.mxu0 %v2408
    %2410 = vmatprep.subr.mxu0 0.0
    %v2411 = vand.u32 %v2120, 4294901760
    %2412 = vmatpush1.msra.mxu0 %v2411
    %2413 = vmatprep.subr.mxu0 0.0
    %2414 = vmatpush2.msra.mxu0 0.0
    %2415 = vmatprep.subr.mxu0 0.0
    %2416 = vmatpush2.msra.mxu0 0.0
    %2417 = vmatprep.subr.mxu0 0.0
    %2418 = vmatpush2.msra.mxu0 0.0
    %2419 = vmatprep.subr.mxu0 0.0
    %2420 = vmatpush2.msra.mxu0 0.0
    %2421 = vmatprep.subr.mxu0 0.0
    %2422 = vmatpush2.msra.mxu0 0.0
    %2423 = vmatprep.subr.mxu0 0.0
    %2424 = vmatpush2.msra.mxu0 0.0
    %2425 = vmatprep.subr.mxu0 0.0
    %2426 = vmatpush2.msra.mxu0 0.0
    %2427 = vmatprep.subr.mxu0 0.0
    %2428 = vmatpush2.msra.mxu0 0.0
    %2429 = vmatprep.subr.mxu0 0.0
    %2430 = vmatpush2.msra.mxu0 0.0
    %2431 = vmatprep.subr.mxu0 0.0
    %2432 = vmatpush2.msra.mxu0 0.0
    %2433 = vmatprep.subr.mxu0 0.0
    %2434 = vmatpush2.msra.mxu0 0.0
    %2435 = vmatprep.subr.mxu0 0.0
    %2436 = vmatpush2.msra.mxu0 0.0
    %2437 = vmatprep.subr.mxu0 0.0
    %2438 = vmatpush2.msra.mxu0 0.0
    %2439 = vmatprep.subr.mxu0 0.0
    %2440 = vmatpush2.msra.mxu0 0.0
    %2441 = vmatprep.subr.mxu0 0.0
    %2442 = vmatpush2.msra.mxu0 0.0
    %2443 = vmatprep.subr.mxu0 0.0
    %2444 = vmatpush2.msra.mxu0 0.0
    %2445 = vmatprep.mubr.f32.mxu0 0.0
    %v2446 = vand.u32 %v85, 4294901760
    %v2447 = vsub.f32 %v85, %v2446
    %v2448 = vand.u32 %v2447, 4294901760
    %2449 = vmatmul.mubr.f32.gmra.mxu0 %v2448
    %v2450 = vpop.f32.mrf.mxu0
    %v2451 = vadd.f32 %v2369, %v2450
    %v2452 = vpop.f32.mrf.mxu0
    %2453 = vmatprep.mubr.f32.mxu0 0.0
    %v2454 = vand.u32 %v88, 4294901760
    %v2455 = vsub.f32 %v88, %v2454
    %v2456 = vand.u32 %v2455, 4294901760
    %2457 = vmatmul.mubr.f32.gmra.mxu0 %v2456
    %v2458 = vpop.f32.mrf.mxu0
    %v2459 = vadd.f32 %v2376, %v2458
    %v2460 = vpop.f32.mrf.mxu0
    %2461 = vdwg.mxu0
    %2462 = vmatprep.subr.mxu0 0.0
    %2463 = vmatpush1.msra.mxu0 0.0
    %2464 = vmatprep.subr.mxu0 0.0
    %2465 = vmatpush1.msra.mxu0 0.0
    %2466 = vmatprep.subr.mxu0 0.0
    %2467 = vmatpush1.msra.mxu0 0.0
    %2468 = vmatprep.subr.mxu0 0.0
    %2469 = vmatpush1.msra.mxu0 0.0
    %2470 = vmatprep.subr.mxu0 0.0
    %2471 = vmatpush1.msra.mxu0 0.0
    %2472 = vmatprep.subr.mxu0 0.0
    %2473 = vmatpush1.msra.mxu0 0.0
    %2474 = vmatprep.subr.mxu0 0.0
    %2475 = vmatpush1.msra.mxu0 0.0
    %2476 = vmatprep.subr.mxu0 0.0
    %2477 = vmatpush1.msra.mxu0 0.0
    %2478 = vmatprep.subr.mxu0 0.0
    %2479 = vmatpush1.msra.mxu0 0.0
    %2480 = vmatprep.subr.mxu0 0.0
    %2481 = vmatpush1.msra.mxu0 0.0
    %2482 = vmatprep.subr.mxu0 0.0
    %2483 = vmatpush1.msra.mxu0 0.0
    %2484 = vmatprep.subr.mxu0 0.0
    %2485 = vmatpush1.msra.mxu0 0.0
    %2486 = vmatprep.subr.mxu0 0.0
    %2487 = vmatpush1.msra.mxu0 0.0
    %2488 = vmatprep.subr.mxu0 0.0
    %2489 = vmatpush1.msra.mxu0 0.0
    %2490 = vmatprep.subr.mxu0 0.0
    %v2491 = vand.u32 %v2121, 4294901760
    %v2492 = vsub.f32 %v2121, %v2491
    %v2493 = vand.u32 %v2492, 4294901760
    %2494 = vmatpush1.msra.mxu0 %v2493
    %2495 = vmatprep.subr.mxu0 0.0
    %v2496 = vand.u32 %v2120, 4294901760
    %v2497 = vsub.f32 %v2120, %v2496
    %v2498 = vand.u32 %v2497, 4294901760
    %2499 = vmatpush1.msra.mxu0 %v2498
    %2500 = vmatprep.subr.mxu0 0.0
    %2501 = vmatpush2.msra.mxu0 0.0
    %2502 = vmatprep.subr.mxu0 0.0
    %2503 = vmatpush2.msra.mxu0 0.0
    %2504 = vmatprep.subr.mxu0 0.0
    %2505 = vmatpush2.msra.mxu0 0.0
    %2506 = vmatprep.subr.mxu0 0.0
    %2507 = vmatpush2.msra.mxu0 0.0
    %2508 = vmatprep.subr.mxu0 0.0
    %2509 = vmatpush2.msra.mxu0 0.0
    %2510 = vmatprep.subr.mxu0 0.0
    %2511 = vmatpush2.msra.mxu0 0.0
    %2512 = vmatprep.subr.mxu0 0.0
    %2513 = vmatpush2.msra.mxu0 0.0
    %2514 = vmatprep.subr.mxu0 0.0
    %2515 = vmatpush2.msra.mxu0 0.0
    %2516 = vmatprep.subr.mxu0 0.0
    %2517 = vmatpush2.msra.mxu0 0.0
    %2518 = vmatprep.subr.mxu0 0.0
    %2519 = vmatpush2.msra.mxu0 0.0
    %2520 = vmatprep.subr.mxu0 0.0
    %2521 = vmatpush2.msra.mxu0 0.0
    %2522 = vmatprep.subr.mxu0 0.0
    %2523 = vmatpush2.msra.mxu0 0.0
    %2524 = vmatprep.subr.mxu0 0.0
    %2525 = vmatpush2.msra.mxu0 0.0
    %2526 = vmatprep.subr.mxu0 0.0
    %2527 = vmatpush2.msra.mxu0 0.0
    %2528 = vmatprep.subr.mxu0 0.0
    %2529 = vmatpush2.msra.mxu0 0.0
    %2530 = vmatprep.subr.mxu0 0.0
    %2531 = vmatpush2.msra.mxu0 0.0
    %2532 = vmatprep.mubr.f32.mxu0 0.0
    %v2533 = vand.u32 %v85, 4294901760
    %2534 = vmatmul.mubr.f32.gmra.mxu0 %v2533
    %v2535 = vpop.f32.mrf.mxu0
    %v2536 = vadd.f32 %v2451, %v2535
    %v2537 = vpop.f32.mrf.mxu0
    %2538 = vmatprep.mubr.f32.mxu0 0.0
    %v2539 = vand.u32 %v88, 4294901760
    %2540 = vmatmul.mubr.f32.gmra.mxu0 %v2539
    %v2541 = vpop.f32.mrf.mxu0
    %v2542 = vadd.f32 %v2459, %v2541
    %v2543 = vpop.f32.mrf.mxu0
    %2544 = vdwg.mxu0
    %2545 = vmatprep.subr.mxu0 0.0
    %2546 = vmatpush1.msra.mxu0 0.0
    %2547 = vmatprep.subr.mxu0 0.0
    %2548 = vmatpush1.msra.mxu0 0.0
    %2549 = vmatprep.subr.mxu0 0.0
    %2550 = vmatpush1.msra.mxu0 0.0
    %2551 = vmatprep.subr.mxu0 0.0
    %2552 = vmatpush1.msra.mxu0 0.0
    %2553 = vmatprep.subr.mxu0 0.0
    %2554 = vmatpush1.msra.mxu0 0.0
    %2555 = vmatprep.subr.mxu0 0.0
    %2556 = vmatpush1.msra.mxu0 0.0
    %2557 = vmatprep.subr.mxu0 0.0
    %2558 = vmatpush1.msra.mxu0 0.0
    %2559 = vmatprep.subr.mxu0 0.0
    %2560 = vmatpush1.msra.mxu0 0.0
    %2561 = vmatprep.subr.mxu0 0.0
    %2562 = vmatpush1.msra.mxu0 0.0
    %2563 = vmatprep.subr.mxu0 0.0
    %2564 = vmatpush1.msra.mxu0 0.0
    %2565 = vmatprep.subr.mxu0 0.0
    %2566 = vmatpush1.msra.mxu0 0.0
    %2567 = vmatprep.subr.mxu0 0.0
    %2568 = vmatpush1.msra.mxu0 0.0
    %2569 = vmatprep.subr.mxu0 0.0
    %2570 = vmatpush1.msra.mxu0 0.0
    %2571 = vmatprep.subr.mxu0 0.0
    %2572 = vmatpush1.msra.mxu0 0.0
    %2573 = vmatprep.subr.mxu0 0.0
    %v2574 = vand.u32 %v2121, 4294901760
    %2575 = vmatpush1.msra.mxu0 %v2574
    %2576 = vmatprep.subr.mxu0 0.0
    %v2577 = vand.u32 %v2120, 4294901760
    %2578 = vmatpush1.msra.mxu0 %v2577
    %2579 = vmatprep.subr.mxu0 0.0
    %2580 = vmatpush2.msra.mxu0 0.0
    %2581 = vmatprep.subr.mxu0 0.0
    %2582 = vmatpush2.msra.mxu0 0.0
    %2583 = vmatprep.subr.mxu0 0.0
    %2584 = vmatpush2.msra.mxu0 0.0
    %2585 = vmatprep.subr.mxu0 0.0
    %2586 = vmatpush2.msra.mxu0 0.0
    %2587 = vmatprep.subr.mxu0 0.0
    %2588 = vmatpush2.msra.mxu0 0.0
    %2589 = vmatprep.subr.mxu0 0.0
    %2590 = vmatpush2.msra.mxu0 0.0
    %2591 = vmatprep.subr.mxu0 0.0
    %2592 = vmatpush2.msra.mxu0 0.0
    %2593 = vmatprep.subr.mxu0 0.0
    %2594 = vmatpush2.msra.mxu0 0.0
    %2595 = vmatprep.subr.mxu0 0.0
    %2596 = vmatpush2.msra.mxu0 0.0
    %2597 = vmatprep.subr.mxu0 0.0
    %2598 = vmatpush2.msra.mxu0 0.0
    %2599 = vmatprep.subr.mxu0 0.0
    %2600 = vmatpush2.msra.mxu0 0.0
    %2601 = vmatprep.subr.mxu0 0.0
    %2602 = vmatpush2.msra.mxu0 0.0
    %2603 = vmatprep.subr.mxu0 0.0
    %2604 = vmatpush2.msra.mxu0 0.0
    %2605 = vmatprep.subr.mxu0 0.0
    %2606 = vmatpush2.msra.mxu0 0.0
    %2607 = vmatprep.subr.mxu0 0.0
    %2608 = vmatpush2.msra.mxu0 0.0
    %2609 = vmatprep.subr.mxu0 0.0
    %2610 = vmatpush2.msra.mxu0 0.0
    %2611 = vmatprep.mubr.f32.mxu0 0.0
    %v2612 = vand.u32 %v85, 4294901760
    %2613 = vmatmul.mubr.f32.gmra.mxu0 %v2612
    %v2614 = vpop.f32.mrf.mxu0
    %v2615 = vadd.f32 %v2536, %v2614
    %v2616 = vpop.f32.mrf.mxu0
    %2617 = vmatprep.mubr.f32.mxu0 0.0
    %v2618 = vand.u32 %v88, 4294901760
    %2619 = vmatmul.mubr.f32.gmra.mxu0 %v2618
    %v2620 = vpop.f32.mrf.mxu0
    %v2621 = vadd.f32 %v2542, %v2620
    %v2622 = vpop.f32.mrf.mxu0
    %2623 = vdwg.mxu0
    %v2625 = vsel %vm83, %v2615, 0
    %v2628 = vsel %vm83, %v2621, 0
    %2630 = vmatprep.subr.mxu0 0.0
    %2631 = vmatpush1.msra.mxu0 0.0
    %2632 = vmatprep.subr.mxu0 0.0
    %2633 = vmatpush1.msra.mxu0 0.0
    %2634 = vmatprep.subr.mxu0 0.0
    %2635 = vmatpush1.msra.mxu0 0.0
    %2636 = vmatprep.subr.mxu0 0.0
    %2637 = vmatpush1.msra.mxu0 0.0
    %2638 = vmatprep.subr.mxu0 0.0
    %2639 = vmatpush1.msra.mxu0 0.0
    %2640 = vmatprep.subr.mxu0 0.0
    %2641 = vmatpush1.msra.mxu0 0.0
    %2642 = vmatprep.subr.mxu0 0.0
    %2643 = vmatpush1.msra.mxu0 0.0
    %2644 = vmatprep.subr.mxu0 0.0
    %2645 = vmatpush1.msra.mxu0 0.0
    %2646 = vmatprep.subr.mxu0 0.0
    %2647 = vmatpush1.msra.mxu0 0.0
    %2648 = vmatprep.subr.mxu0 0.0
    %2649 = vmatpush1.msra.mxu0 0.0
    %2650 = vmatprep.subr.mxu0 0.0
    %2651 = vmatpush1.msra.mxu0 0.0
    %2652 = vmatprep.subr.mxu0 0.0
    %2653 = vmatpush1.msra.mxu0 0.0
    %2654 = vmatprep.subr.mxu0 0.0
    %2655 = vmatpush1.msra.mxu0 0.0
    %2656 = vmatprep.subr.mxu0 0.0
    %2657 = vmatpush1.msra.mxu0 0.0
    %2658 = vmatprep.subr.mxu0 0.0
    %v2659 = vand.u32 %v76, 4294901760
    %2660 = vmatpush1.msra.mxu0 %v2659
    %2661 = vmatprep.subr.mxu0 0.0
    %v2662 = vand.u32 %v75, 4294901760
    %2663 = vmatpush1.msra.mxu0 %v2662
    %2664 = vmatprep.subr.mxu0 0.0
    %2665 = vmatpush2.msra.mxu0 0.0
    %2666 = vmatprep.subr.mxu0 0.0
    %2667 = vmatpush2.msra.mxu0 0.0
    %2668 = vmatprep.subr.mxu0 0.0
    %2669 = vmatpush2.msra.mxu0 0.0
    %2670 = vmatprep.subr.mxu0 0.0
    %2671 = vmatpush2.msra.mxu0 0.0
    %2672 = vmatprep.subr.mxu0 0.0
    %2673 = vmatpush2.msra.mxu0 0.0
    %2674 = vmatprep.subr.mxu0 0.0
    %2675 = vmatpush2.msra.mxu0 0.0
    %2676 = vmatprep.subr.mxu0 0.0
    %2677 = vmatpush2.msra.mxu0 0.0
    %2678 = vmatprep.subr.mxu0 0.0
    %2679 = vmatpush2.msra.mxu0 0.0
    %2680 = vmatprep.subr.mxu0 0.0
    %2681 = vmatpush2.msra.mxu0 0.0
    %2682 = vmatprep.subr.mxu0 0.0
    %2683 = vmatpush2.msra.mxu0 0.0
    %2684 = vmatprep.subr.mxu0 0.0
    %2685 = vmatpush2.msra.mxu0 0.0
    %2686 = vmatprep.subr.mxu0 0.0
    %2687 = vmatpush2.msra.mxu0 0.0
    %2688 = vmatprep.subr.mxu0 0.0
    %2689 = vmatpush2.msra.mxu0 0.0
    %2690 = vmatprep.subr.mxu0 0.0
    %2691 = vmatpush2.msra.mxu0 0.0
    %2692 = vmatprep.subr.mxu0 0.0
    %2693 = vmatpush2.msra.mxu0 0.0
    %2694 = vmatprep.subr.mxu0 0.0
    %2695 = vmatpush2.msra.mxu0 0.0
    %2696 = vmatprep.mubr.f32.mxu0 0.0
    %v2697 = vand.u32 %v2625, 4294901760
    %v2698 = vsub.f32 %v2625, %v2697
    %v2699 = vand.u32 %v2698, 4294901760
    %v2700 = vsub.f32 %v2698, %v2699
    %v2701 = vand.u32 %v2700, 4294901760
    %2702 = vmatmul.mubr.f32.gmra.mxu0 %v2701
    %v2703 = vpop.f32.mrf.mxu0
    %v2704 = vadd.f32 0.0, %v2703
    %v2705 = vpop.f32.mrf.mxu0
    %2706 = vmatprep.mubr.f32.mxu0 0.0
    %v2707 = vand.u32 %v2628, 4294901760
    %v2708 = vsub.f32 %v2628, %v2707
    %v2709 = vand.u32 %v2708, 4294901760
    %v2710 = vsub.f32 %v2708, %v2709
    %v2711 = vand.u32 %v2710, 4294901760
    %2712 = vmatmul.mubr.f32.gmra.mxu0 %v2711
    %v2713 = vpop.f32.mrf.mxu0
    %v2714 = vadd.f32 0.0, %v2713
    %v2715 = vpop.f32.mrf.mxu0
    %2716 = vdwg.mxu0
    %2717 = vmatprep.subr.mxu0 0.0
    %2718 = vmatpush1.msra.mxu0 0.0
    %2719 = vmatprep.subr.mxu0 0.0
    %2720 = vmatpush1.msra.mxu0 0.0
    %2721 = vmatprep.subr.mxu0 0.0
    %2722 = vmatpush1.msra.mxu0 0.0
    %2723 = vmatprep.subr.mxu0 0.0
    %2724 = vmatpush1.msra.mxu0 0.0
    %2725 = vmatprep.subr.mxu0 0.0
    %2726 = vmatpush1.msra.mxu0 0.0
    %2727 = vmatprep.subr.mxu0 0.0
    %2728 = vmatpush1.msra.mxu0 0.0
    %2729 = vmatprep.subr.mxu0 0.0
    %2730 = vmatpush1.msra.mxu0 0.0
    %2731 = vmatprep.subr.mxu0 0.0
    %2732 = vmatpush1.msra.mxu0 0.0
    %2733 = vmatprep.subr.mxu0 0.0
    %2734 = vmatpush1.msra.mxu0 0.0
    %2735 = vmatprep.subr.mxu0 0.0
    %2736 = vmatpush1.msra.mxu0 0.0
    %2737 = vmatprep.subr.mxu0 0.0
    %2738 = vmatpush1.msra.mxu0 0.0
    %2739 = vmatprep.subr.mxu0 0.0
    %2740 = vmatpush1.msra.mxu0 0.0
    %2741 = vmatprep.subr.mxu0 0.0
    %2742 = vmatpush1.msra.mxu0 0.0
    %2743 = vmatprep.subr.mxu0 0.0
    %2744 = vmatpush1.msra.mxu0 0.0
    %2745 = vmatprep.subr.mxu0 0.0
    %v2746 = vand.u32 %v76, 4294901760
    %v2747 = vsub.f32 %v76, %v2746
    %v2748 = vand.u32 %v2747, 4294901760
    %v2749 = vsub.f32 %v2747, %v2748
    %v2750 = vand.u32 %v2749, 4294901760
    %2751 = vmatpush1.msra.mxu0 %v2750
    %2752 = vmatprep.subr.mxu0 0.0
    %v2753 = vand.u32 %v75, 4294901760
    %v2754 = vsub.f32 %v75, %v2753
    %v2755 = vand.u32 %v2754, 4294901760
    %v2756 = vsub.f32 %v2754, %v2755
    %v2757 = vand.u32 %v2756, 4294901760
    %2758 = vmatpush1.msra.mxu0 %v2757
    %2759 = vmatprep.subr.mxu0 0.0
    %2760 = vmatpush2.msra.mxu0 0.0
    %2761 = vmatprep.subr.mxu0 0.0
    %2762 = vmatpush2.msra.mxu0 0.0
    %2763 = vmatprep.subr.mxu0 0.0
    %2764 = vmatpush2.msra.mxu0 0.0
    %2765 = vmatprep.subr.mxu0 0.0
    %2766 = vmatpush2.msra.mxu0 0.0
    %2767 = vmatprep.subr.mxu0 0.0
    %2768 = vmatpush2.msra.mxu0 0.0
    %2769 = vmatprep.subr.mxu0 0.0
    %2770 = vmatpush2.msra.mxu0 0.0
    %2771 = vmatprep.subr.mxu0 0.0
    %2772 = vmatpush2.msra.mxu0 0.0
    %2773 = vmatprep.subr.mxu0 0.0
    %2774 = vmatpush2.msra.mxu0 0.0
    %2775 = vmatprep.subr.mxu0 0.0
    %2776 = vmatpush2.msra.mxu0 0.0
    %2777 = vmatprep.subr.mxu0 0.0
    %2778 = vmatpush2.msra.mxu0 0.0
    %2779 = vmatprep.subr.mxu0 0.0
    %2780 = vmatpush2.msra.mxu0 0.0
    %2781 = vmatprep.subr.mxu0 0.0
    %2782 = vmatpush2.msra.mxu0 0.0
    %2783 = vmatprep.subr.mxu0 0.0
    %2784 = vmatpush2.msra.mxu0 0.0
    %2785 = vmatprep.subr.mxu0 0.0
    %2786 = vmatpush2.msra.mxu0 0.0
    %2787 = vmatprep.subr.mxu0 0.0
    %2788 = vmatpush2.msra.mxu0 0.0
    %2789 = vmatprep.subr.mxu0 0.0
    %2790 = vmatpush2.msra.mxu0 0.0
    %2791 = vmatprep.mubr.f32.mxu0 0.0
    %v2792 = vand.u32 %v2625, 4294901760
    %2793 = vmatmul.mubr.f32.gmra.mxu0 %v2792
    %v2794 = vpop.f32.mrf.mxu0
    %v2795 = vadd.f32 %v2704, %v2794
    %v2796 = vpop.f32.mrf.mxu0
    %2797 = vmatprep.mubr.f32.mxu0 0.0
    %v2798 = vand.u32 %v2628, 4294901760
    %2799 = vmatmul.mubr.f32.gmra.mxu0 %v2798
    %v2800 = vpop.f32.mrf.mxu0
    %v2801 = vadd.f32 %v2714, %v2800
    %v2802 = vpop.f32.mrf.mxu0
    %2803 = vdwg.mxu0
    %2804 = vmatprep.subr.mxu0 0.0
    %2805 = vmatpush1.msra.mxu0 0.0
    %2806 = vmatprep.subr.mxu0 0.0
    %2807 = vmatpush1.msra.mxu0 0.0
    %2808 = vmatprep.subr.mxu0 0.0
    %2809 = vmatpush1.msra.mxu0 0.0
    %2810 = vmatprep.subr.mxu0 0.0
    %2811 = vmatpush1.msra.mxu0 0.0
    %2812 = vmatprep.subr.mxu0 0.0
    %2813 = vmatpush1.msra.mxu0 0.0
    %2814 = vmatprep.subr.mxu0 0.0
    %2815 = vmatpush1.msra.mxu0 0.0
    %2816 = vmatprep.subr.mxu0 0.0
    %2817 = vmatpush1.msra.mxu0 0.0
    %2818 = vmatprep.subr.mxu0 0.0
    %2819 = vmatpush1.msra.mxu0 0.0
    %2820 = vmatprep.subr.mxu0 0.0
    %2821 = vmatpush1.msra.mxu0 0.0
    %2822 = vmatprep.subr.mxu0 0.0
    %2823 = vmatpush1.msra.mxu0 0.0
    %2824 = vmatprep.subr.mxu0 0.0
    %2825 = vmatpush1.msra.mxu0 0.0
    %2826 = vmatprep.subr.mxu0 0.0
    %2827 = vmatpush1.msra.mxu0 0.0
    %2828 = vmatprep.subr.mxu0 0.0
    %2829 = vmatpush1.msra.mxu0 0.0
    %2830 = vmatprep.subr.mxu0 0.0
    %2831 = vmatpush1.msra.mxu0 0.0
    %2832 = vmatprep.subr.mxu0 0.0
    %v2833 = vand.u32 %v76, 4294901760
    %v2834 = vsub.f32 %v76, %v2833
    %2835 = vmatpush1.msra.mxu0 %v2834
    %2836 = vmatprep.subr.mxu0 0.0
    %v2837 = vand.u32 %v75, 4294901760
    %v2838 = vsub.f32 %v75, %v2837
    %2839 = vmatpush1.msra.mxu0 %v2838
    %2840 = vmatprep.subr.mxu0 0.0
    %2841 = vmatpush2.msra.mxu0 0.0
    %2842 = vmatprep.subr.mxu0 0.0
    %2843 = vmatpush2.msra.mxu0 0.0
    %2844 = vmatprep.subr.mxu0 0.0
    %2845 = vmatpush2.msra.mxu0 0.0
    %2846 = vmatprep.subr.mxu0 0.0
    %2847 = vmatpush2.msra.mxu0 0.0
    %2848 = vmatprep.subr.mxu0 0.0
    %2849 = vmatpush2.msra.mxu0 0.0
    %2850 = vmatprep.subr.mxu0 0.0
    %2851 = vmatpush2.msra.mxu0 0.0
    %2852 = vmatprep.subr.mxu0 0.0
    %2853 = vmatpush2.msra.mxu0 0.0
    %2854 = vmatprep.subr.mxu0 0.0
    %2855 = vmatpush2.msra.mxu0 0.0
    %2856 = vmatprep.subr.mxu0 0.0
    %2857 = vmatpush2.msra.mxu0 0.0
    %2858 = vmatprep.subr.mxu0 0.0
    %2859 = vmatpush2.msra.mxu0 0.0
    %2860 = vmatprep.subr.mxu0 0.0
    %2861 = vmatpush2.msra.mxu0 0.0
    %2862 = vmatprep.subr.mxu0 0.0
    %2863 = vmatpush2.msra.mxu0 0.0
    %2864 = vmatprep.subr.mxu0 0.0
    %2865 = vmatpush2.msra.mxu0 0.0
    %2866 = vmatprep.subr.mxu0 0.0
    %2867 = vmatpush2.msra.mxu0 0.0
    %2868 = vmatprep.subr.mxu0 0.0
    %2869 = vmatpush2.msra.mxu0 0.0
    %2870 = vmatprep.subr.mxu0 0.0
    %2871 = vmatpush2.msra.mxu0 0.0
    %2872 = vmatprep.mubr.f32.mxu0 0.0
    %v2873 = vand.u32 %v2625, 4294901760
    %v2874 = vsub.f32 %v2625, %v2873
    %2875 = vmatmul.mubr.f32.gmra.mxu0 %v2874
    %v2876 = vpop.f32.mrf.mxu0
    %v2877 = vadd.f32 %v2795, %v2876
    %v2878 = vpop.f32.mrf.mxu0
    %2879 = vmatprep.mubr.f32.mxu0 0.0
    %v2880 = vand.u32 %v2628, 4294901760
    %v2881 = vsub.f32 %v2628, %v2880
    %2882 = vmatmul.mubr.f32.gmra.mxu0 %v2881
    %v2883 = vpop.f32.mrf.mxu0
    %v2884 = vadd.f32 %v2801, %v2883
    %v2885 = vpop.f32.mrf.mxu0
    %2886 = vdwg.mxu0
    %2887 = vmatprep.subr.mxu0 0.0
    %2888 = vmatpush1.msra.mxu0 0.0
    %2889 = vmatprep.subr.mxu0 0.0
    %2890 = vmatpush1.msra.mxu0 0.0
    %2891 = vmatprep.subr.mxu0 0.0
    %2892 = vmatpush1.msra.mxu0 0.0
    %2893 = vmatprep.subr.mxu0 0.0
    %2894 = vmatpush1.msra.mxu0 0.0
    %2895 = vmatprep.subr.mxu0 0.0
    %2896 = vmatpush1.msra.mxu0 0.0
    %2897 = vmatprep.subr.mxu0 0.0
    %2898 = vmatpush1.msra.mxu0 0.0
    %2899 = vmatprep.subr.mxu0 0.0
    %2900 = vmatpush1.msra.mxu0 0.0
    %2901 = vmatprep.subr.mxu0 0.0
    %2902 = vmatpush1.msra.mxu0 0.0
    %2903 = vmatprep.subr.mxu0 0.0
    %2904 = vmatpush1.msra.mxu0 0.0
    %2905 = vmatprep.subr.mxu0 0.0
    %2906 = vmatpush1.msra.mxu0 0.0
    %2907 = vmatprep.subr.mxu0 0.0
    %2908 = vmatpush1.msra.mxu0 0.0
    %2909 = vmatprep.subr.mxu0 0.0
    %2910 = vmatpush1.msra.mxu0 0.0
    %2911 = vmatprep.subr.mxu0 0.0
    %2912 = vmatpush1.msra.mxu0 0.0
    %2913 = vmatprep.subr.mxu0 0.0
    %2914 = vmatpush1.msra.mxu0 0.0
    %2915 = vmatprep.subr.mxu0 0.0
    %v2916 = vand.u32 %v76, 4294901760
    %2917 = vmatpush1.msra.mxu0 %v2916
    %2918 = vmatprep.subr.mxu0 0.0
    %v2919 = vand.u32 %v75, 4294901760
    %2920 = vmatpush1.msra.mxu0 %v2919
    %2921 = vmatprep.subr.mxu0 0.0
    %2922 = vmatpush2.msra.mxu0 0.0
    %2923 = vmatprep.subr.mxu0 0.0
    %2924 = vmatpush2.msra.mxu0 0.0
    %2925 = vmatprep.subr.mxu0 0.0
    %2926 = vmatpush2.msra.mxu0 0.0
    %2927 = vmatprep.subr.mxu0 0.0
    %2928 = vmatpush2.msra.mxu0 0.0
    %2929 = vmatprep.subr.mxu0 0.0
    %2930 = vmatpush2.msra.mxu0 0.0
    %2931 = vmatprep.subr.mxu0 0.0
    %2932 = vmatpush2.msra.mxu0 0.0
    %2933 = vmatprep.subr.mxu0 0.0
    %2934 = vmatpush2.msra.mxu0 0.0
    %2935 = vmatprep.subr.mxu0 0.0
    %2936 = vmatpush2.msra.mxu0 0.0
    %2937 = vmatprep.subr.mxu0 0.0
    %2938 = vmatpush2.msra.mxu0 0.0
    %2939 = vmatprep.subr.mxu0 0.0
    %2940 = vmatpush2.msra.mxu0 0.0
    %2941 = vmatprep.subr.mxu0 0.0
    %2942 = vmatpush2.msra.mxu0 0.0
    %2943 = vmatprep.subr.mxu0 0.0
    %2944 = vmatpush2.msra.mxu0 0.0
    %2945 = vmatprep.subr.mxu0 0.0
    %2946 = vmatpush2.msra.mxu0 0.0
    %2947 = vmatprep.subr.mxu0 0.0
    %2948 = vmatpush2.msra.mxu0 0.0
    %2949 = vmatprep.subr.mxu0 0.0
    %2950 = vmatpush2.msra.mxu0 0.0
    %2951 = vmatprep.subr.mxu0 0.0
    %2952 = vmatpush2.msra.mxu0 0.0
    %2953 = vmatprep.mubr.f32.mxu0 0.0
    %v2954 = vand.u32 %v2625, 4294901760
    %v2955 = vsub.f32 %v2625, %v2954
    %v2956 = vand.u32 %v2955, 4294901760
    %2957 = vmatmul.mubr.f32.gmra.mxu0 %v2956
    %v2958 = vpop.f32.mrf.mxu0
    %v2959 = vadd.f32 %v2877, %v2958
    %v2960 = vpop.f32.mrf.mxu0
    %2961 = vmatprep.mubr.f32.mxu0 0.0
    %v2962 = vand.u32 %v2628, 4294901760
    %v2963 = vsub.f32 %v2628, %v2962
    %v2964 = vand.u32 %v2963, 4294901760
    %2965 = vmatmul.mubr.f32.gmra.mxu0 %v2964
    %v2966 = vpop.f32.mrf.mxu0
    %v2967 = vadd.f32 %v2884, %v2966
    %v2968 = vpop.f32.mrf.mxu0
    %2969 = vdwg.mxu0
    %2970 = vmatprep.subr.mxu0 0.0
    %2971 = vmatpush1.msra.mxu0 0.0
    %2972 = vmatprep.subr.mxu0 0.0
    %2973 = vmatpush1.msra.mxu0 0.0
    %2974 = vmatprep.subr.mxu0 0.0
    %2975 = vmatpush1.msra.mxu0 0.0
    %2976 = vmatprep.subr.mxu0 0.0
    %2977 = vmatpush1.msra.mxu0 0.0
    %2978 = vmatprep.subr.mxu0 0.0
    %2979 = vmatpush1.msra.mxu0 0.0
    %2980 = vmatprep.subr.mxu0 0.0
    %2981 = vmatpush1.msra.mxu0 0.0
    %2982 = vmatprep.subr.mxu0 0.0
    %2983 = vmatpush1.msra.mxu0 0.0
    %2984 = vmatprep.subr.mxu0 0.0
    %2985 = vmatpush1.msra.mxu0 0.0
    %2986 = vmatprep.subr.mxu0 0.0
    %2987 = vmatpush1.msra.mxu0 0.0
    %2988 = vmatprep.subr.mxu0 0.0
    %2989 = vmatpush1.msra.mxu0 0.0
    %2990 = vmatprep.subr.mxu0 0.0
    %2991 = vmatpush1.msra.mxu0 0.0
    %2992 = vmatprep.subr.mxu0 0.0
    %2993 = vmatpush1.msra.mxu0 0.0
    %2994 = vmatprep.subr.mxu0 0.0
    %2995 = vmatpush1.msra.mxu0 0.0
    %2996 = vmatprep.subr.mxu0 0.0
    %2997 = vmatpush1.msra.mxu0 0.0
    %2998 = vmatprep.subr.mxu0 0.0
    %v2999 = vand.u32 %v76, 4294901760
    %v3000 = vsub.f32 %v76, %v2999
    %v3001 = vand.u32 %v3000, 4294901760
    %3002 = vmatpush1.msra.mxu0 %v3001
    %3003 = vmatprep.subr.mxu0 0.0
    %v3004 = vand.u32 %v75, 4294901760
    %v3005 = vsub.f32 %v75, %v3004
    %v3006 = vand.u32 %v3005, 4294901760
    %3007 = vmatpush1.msra.mxu0 %v3006
    %3008 = vmatprep.subr.mxu0 0.0
    %3009 = vmatpush2.msra.mxu0 0.0
    %3010 = vmatprep.subr.mxu0 0.0
    %3011 = vmatpush2.msra.mxu0 0.0
    %3012 = vmatprep.subr.mxu0 0.0
    %3013 = vmatpush2.msra.mxu0 0.0
    %3014 = vmatprep.subr.mxu0 0.0
    %3015 = vmatpush2.msra.mxu0 0.0
    %3016 = vmatprep.subr.mxu0 0.0
    %3017 = vmatpush2.msra.mxu0 0.0
    %3018 = vmatprep.subr.mxu0 0.0
    %3019 = vmatpush2.msra.mxu0 0.0
    %3020 = vmatprep.subr.mxu0 0.0
    %3021 = vmatpush2.msra.mxu0 0.0
    %3022 = vmatprep.subr.mxu0 0.0
    %3023 = vmatpush2.msra.mxu0 0.0
    %3024 = vmatprep.subr.mxu0 0.0
    %3025 = vmatpush2.msra.mxu0 0.0
    %3026 = vmatprep.subr.mxu0 0.0
    %3027 = vmatpush2.msra.mxu0 0.0
    %3028 = vmatprep.subr.mxu0 0.0
    %3029 = vmatpush2.msra.mxu0 0.0
    %3030 = vmatprep.subr.mxu0 0.0
    %3031 = vmatpush2.msra.mxu0 0.0
    %3032 = vmatprep.subr.mxu0 0.0
    %3033 = vmatpush2.msra.mxu0 0.0
    %3034 = vmatprep.subr.mxu0 0.0
    %3035 = vmatpush2.msra.mxu0 0.0
    %3036 = vmatprep.subr.mxu0 0.0
    %3037 = vmatpush2.msra.mxu0 0.0
    %3038 = vmatprep.subr.mxu0 0.0
    %3039 = vmatpush2.msra.mxu0 0.0
    %3040 = vmatprep.mubr.f32.mxu0 0.0
    %v3041 = vand.u32 %v2625, 4294901760
    %3042 = vmatmul.mubr.f32.gmra.mxu0 %v3041
    %v3043 = vpop.f32.mrf.mxu0
    %v3044 = vadd.f32 %v2959, %v3043
    %v3045 = vpop.f32.mrf.mxu0
    %3046 = vmatprep.mubr.f32.mxu0 0.0
    %v3047 = vand.u32 %v2628, 4294901760
    %3048 = vmatmul.mubr.f32.gmra.mxu0 %v3047
    %v3049 = vpop.f32.mrf.mxu0
    %v3050 = vadd.f32 %v2967, %v3049
    %v3051 = vpop.f32.mrf.mxu0
    %3052 = vdwg.mxu0
    %3053 = vmatprep.subr.mxu0 0.0
    %3054 = vmatpush1.msra.mxu0 0.0
    %3055 = vmatprep.subr.mxu0 0.0
    %3056 = vmatpush1.msra.mxu0 0.0
    %3057 = vmatprep.subr.mxu0 0.0
    %3058 = vmatpush1.msra.mxu0 0.0
    %3059 = vmatprep.subr.mxu0 0.0
    %3060 = vmatpush1.msra.mxu0 0.0
    %3061 = vmatprep.subr.mxu0 0.0
    %3062 = vmatpush1.msra.mxu0 0.0
    %3063 = vmatprep.subr.mxu0 0.0
    %3064 = vmatpush1.msra.mxu0 0.0
    %3065 = vmatprep.subr.mxu0 0.0
    %3066 = vmatpush1.msra.mxu0 0.0
    %3067 = vmatprep.subr.mxu0 0.0
    %3068 = vmatpush1.msra.mxu0 0.0
    %3069 = vmatprep.subr.mxu0 0.0
    %3070 = vmatpush1.msra.mxu0 0.0
    %3071 = vmatprep.subr.mxu0 0.0
    %3072 = vmatpush1.msra.mxu0 0.0
    %3073 = vmatprep.subr.mxu0 0.0
    %3074 = vmatpush1.msra.mxu0 0.0
    %3075 = vmatprep.subr.mxu0 0.0
    %3076 = vmatpush1.msra.mxu0 0.0
    %3077 = vmatprep.subr.mxu0 0.0
    %3078 = vmatpush1.msra.mxu0 0.0
    %3079 = vmatprep.subr.mxu0 0.0
    %3080 = vmatpush1.msra.mxu0 0.0
    %3081 = vmatprep.subr.mxu0 0.0
    %v3082 = vand.u32 %v76, 4294901760
    %3083 = vmatpush1.msra.mxu0 %v3082
    %3084 = vmatprep.subr.mxu0 0.0
    %v3085 = vand.u32 %v75, 4294901760
    %3086 = vmatpush1.msra.mxu0 %v3085
    %3087 = vmatprep.subr.mxu0 0.0
    %3088 = vmatpush2.msra.mxu0 0.0
    %3089 = vmatprep.subr.mxu0 0.0
    %3090 = vmatpush2.msra.mxu0 0.0
    %3091 = vmatprep.subr.mxu0 0.0
    %3092 = vmatpush2.msra.mxu0 0.0
    %3093 = vmatprep.subr.mxu0 0.0
    %3094 = vmatpush2.msra.mxu0 0.0
    %3095 = vmatprep.subr.mxu0 0.0
    %3096 = vmatpush2.msra.mxu0 0.0
    %3097 = vmatprep.subr.mxu0 0.0
    %3098 = vmatpush2.msra.mxu0 0.0
    %3099 = vmatprep.subr.mxu0 0.0
    %3100 = vmatpush2.msra.mxu0 0.0
    %3101 = vmatprep.subr.mxu0 0.0
    %3102 = vmatpush2.msra.mxu0 0.0
    %3103 = vmatprep.subr.mxu0 0.0
    %3104 = vmatpush2.msra.mxu0 0.0
    %3105 = vmatprep.subr.mxu0 0.0
    %3106 = vmatpush2.msra.mxu0 0.0
    %3107 = vmatprep.subr.mxu0 0.0
    %3108 = vmatpush2.msra.mxu0 0.0
    %3109 = vmatprep.subr.mxu0 0.0
    %3110 = vmatpush2.msra.mxu0 0.0
    %3111 = vmatprep.subr.mxu0 0.0
    %3112 = vmatpush2.msra.mxu0 0.0
    %3113 = vmatprep.subr.mxu0 0.0
    %3114 = vmatpush2.msra.mxu0 0.0
    %3115 = vmatprep.subr.mxu0 0.0
    %3116 = vmatpush2.msra.mxu0 0.0
    %3117 = vmatprep.subr.mxu0 0.0
    %3118 = vmatpush2.msra.mxu0 0.0
    %3119 = vmatprep.mubr.f32.mxu0 0.0
    %v3120 = vand.u32 %v2625, 4294901760
    %3121 = vmatmul.mubr.f32.gmra.mxu0 %v3120
    %v3122 = vpop.f32.mrf.mxu0
    %v3123 = vadd.f32 %v3044, %v3122
    %v3124 = vpop.f32.mrf.mxu0
    %3125 = vmatprep.mubr.f32.mxu0 0.0
    %v3126 = vand.u32 %v2628, 4294901760
    %3127 = vmatmul.mubr.f32.gmra.mxu0 %v3126
    %v3128 = vpop.f32.mrf.mxu0
    %v3129 = vadd.f32 %v3050, %v3128
    %v3130 = vpop.f32.mrf.mxu0
    %3131 = vdwg.mxu0
    %v3132 = vsub.f32 %v2120, %v3123
    %v3133 = vsub.f32 %v2121, %v3129
    %v3134 = vand.u32 2147483647, %v3132
    %v3135 = vand.u32 2147483647, %v3133
    %3136 = vmatprep.subr.mxu0 0.0
    %3137 = vmatpush1.msra.mxu0 0.0
    %3138 = vmatprep.subr.mxu0 0.0
    %3139 = vmatpush1.msra.mxu0 0.0
    %3140 = vmatprep.subr.mxu0 0.0
    %3141 = vmatpush1.msra.mxu0 0.0
    %3142 = vmatprep.subr.mxu0 0.0
    %3143 = vmatpush1.msra.mxu0 0.0
    %3144 = vmatprep.subr.mxu0 0.0
    %3145 = vmatpush1.msra.mxu0 0.0
    %3146 = vmatprep.subr.mxu0 0.0
    %3147 = vmatpush1.msra.mxu0 0.0
    %3148 = vmatprep.subr.mxu0 0.0
    %3149 = vmatpush1.msra.mxu0 0.0
    %3150 = vmatprep.subr.mxu0 0.0
    %3151 = vmatpush1.msra.mxu0 0.0
    %3152 = vmatprep.subr.mxu0 0.0
    %3153 = vmatpush1.msra.mxu0 0.0
    %3154 = vmatprep.subr.mxu0 0.0
    %3155 = vmatpush1.msra.mxu0 0.0
    %3156 = vmatprep.subr.mxu0 0.0
    %3157 = vmatpush1.msra.mxu0 0.0
    %3158 = vmatprep.subr.mxu0 0.0
    %3159 = vmatpush1.msra.mxu0 0.0
    %3160 = vmatprep.subr.mxu0 0.0
    %3161 = vmatpush1.msra.mxu0 0.0
    %3162 = vmatprep.subr.mxu0 0.0
    %3163 = vmatpush1.msra.mxu0 0.0
    %3164 = vmatprep.subr.mxu0 0.0
    %v3165 = vand.u32 %v3135, 4294901760
    %3166 = vmatpush1.msra.mxu0 %v3165
    %3167 = vmatprep.subr.mxu0 0.0
    %v3168 = vand.u32 %v3134, 4294901760
    %3169 = vmatpush1.msra.mxu0 %v3168
    %3170 = vmatprep.subr.mxu0 0.0
    %3171 = vmatpush2.msra.mxu0 0.0
    %3172 = vmatprep.subr.mxu0 0.0
    %3173 = vmatpush2.msra.mxu0 0.0
    %3174 = vmatprep.subr.mxu0 0.0
    %3175 = vmatpush2.msra.mxu0 0.0
    %3176 = vmatprep.subr.mxu0 0.0
    %3177 = vmatpush2.msra.mxu0 0.0
    %3178 = vmatprep.subr.mxu0 0.0
    %3179 = vmatpush2.msra.mxu0 0.0
    %3180 = vmatprep.subr.mxu0 0.0
    %3181 = vmatpush2.msra.mxu0 0.0
    %3182 = vmatprep.subr.mxu0 0.0
    %3183 = vmatpush2.msra.mxu0 0.0
    %3184 = vmatprep.subr.mxu0 0.0
    %3185 = vmatpush2.msra.mxu0 0.0
    %3186 = vmatprep.subr.mxu0 0.0
    %3187 = vmatpush2.msra.mxu0 0.0
    %3188 = vmatprep.subr.mxu0 0.0
    %3189 = vmatpush2.msra.mxu0 0.0
    %3190 = vmatprep.subr.mxu0 0.0
    %3191 = vmatpush2.msra.mxu0 0.0
    %3192 = vmatprep.subr.mxu0 0.0
    %3193 = vmatpush2.msra.mxu0 0.0
    %3194 = vmatprep.subr.mxu0 0.0
    %3195 = vmatpush2.msra.mxu0 0.0
    %3196 = vmatprep.subr.mxu0 0.0
    %3197 = vmatpush2.msra.mxu0 0.0
    %3198 = vmatprep.subr.mxu0 0.0
    %3199 = vmatpush2.msra.mxu0 0.0
    %3200 = vmatprep.subr.mxu0 0.0
    %3201 = vmatpush2.msra.mxu0 0.0
    %3202 = vmatprep.mubr.f32.mxu0 0.0
    %v3203 = vand.u32 %v85, 4294901760
    %v3204 = vsub.f32 %v85, %v3203
    %v3205 = vand.u32 %v3204, 4294901760
    %v3206 = vsub.f32 %v3204, %v3205
    %v3207 = vand.u32 %v3206, 4294901760
    %3208 = vmatmul.mubr.f32.gmra.mxu0 %v3207
    %v3209 = vpop.f32.mrf.mxu0
    %v3210 = vadd.f32 0.0, %v3209
    %v3211 = vpop.f32.mrf.mxu0
    %3212 = vmatprep.mubr.f32.mxu0 0.0
    %v3213 = vand.u32 %v88, 4294901760
    %v3214 = vsub.f32 %v88, %v3213
    %v3215 = vand.u32 %v3214, 4294901760
    %v3216 = vsub.f32 %v3214, %v3215
    %v3217 = vand.u32 %v3216, 4294901760
    %3218 = vmatmul.mubr.f32.gmra.mxu0 %v3217
    %v3219 = vpop.f32.mrf.mxu0
    %v3220 = vadd.f32 0.0, %v3219
    %v3221 = vpop.f32.mrf.mxu0
    %3222 = vdwg.mxu0
    %3223 = vmatprep.subr.mxu0 0.0
    %3224 = vmatpush1.msra.mxu0 0.0
    %3225 = vmatprep.subr.mxu0 0.0
    %3226 = vmatpush1.msra.mxu0 0.0
    %3227 = vmatprep.subr.mxu0 0.0
    %3228 = vmatpush1.msra.mxu0 0.0
    %3229 = vmatprep.subr.mxu0 0.0
    %3230 = vmatpush1.msra.mxu0 0.0
    %3231 = vmatprep.subr.mxu0 0.0
    %3232 = vmatpush1.msra.mxu0 0.0
    %3233 = vmatprep.subr.mxu0 0.0
    %3234 = vmatpush1.msra.mxu0 0.0
    %3235 = vmatprep.subr.mxu0 0.0
    %3236 = vmatpush1.msra.mxu0 0.0
    %3237 = vmatprep.subr.mxu0 0.0
    %3238 = vmatpush1.msra.mxu0 0.0
    %3239 = vmatprep.subr.mxu0 0.0
    %3240 = vmatpush1.msra.mxu0 0.0
    %3241 = vmatprep.subr.mxu0 0.0
    %3242 = vmatpush1.msra.mxu0 0.0
    %3243 = vmatprep.subr.mxu0 0.0
    %3244 = vmatpush1.msra.mxu0 0.0
    %3245 = vmatprep.subr.mxu0 0.0
    %3246 = vmatpush1.msra.mxu0 0.0
    %3247 = vmatprep.subr.mxu0 0.0
    %3248 = vmatpush1.msra.mxu0 0.0
    %3249 = vmatprep.subr.mxu0 0.0
    %3250 = vmatpush1.msra.mxu0 0.0
    %3251 = vmatprep.subr.mxu0 0.0
    %v3252 = vand.u32 %v3135, 4294901760
    %v3253 = vsub.f32 %v3135, %v3252
    %v3254 = vand.u32 %v3253, 4294901760
    %v3255 = vsub.f32 %v3253, %v3254
    %v3256 = vand.u32 %v3255, 4294901760
    %3257 = vmatpush1.msra.mxu0 %v3256
    %3258 = vmatprep.subr.mxu0 0.0
    %v3259 = vand.u32 %v3134, 4294901760
    %v3260 = vsub.f32 %v3134, %v3259
    %v3261 = vand.u32 %v3260, 4294901760
    %v3262 = vsub.f32 %v3260, %v3261
    %v3263 = vand.u32 %v3262, 4294901760
    %3264 = vmatpush1.msra.mxu0 %v3263
    %3265 = vmatprep.subr.mxu0 0.0
    %3266 = vmatpush2.msra.mxu0 0.0
    %3267 = vmatprep.subr.mxu0 0.0
    %3268 = vmatpush2.msra.mxu0 0.0
    %3269 = vmatprep.subr.mxu0 0.0
    %3270 = vmatpush2.msra.mxu0 0.0
    %3271 = vmatprep.subr.mxu0 0.0
    %3272 = vmatpush2.msra.mxu0 0.0
    %3273 = vmatprep.subr.mxu0 0.0
    %3274 = vmatpush2.msra.mxu0 0.0
    %3275 = vmatprep.subr.mxu0 0.0
    %3276 = vmatpush2.msra.mxu0 0.0
    %3277 = vmatprep.subr.mxu0 0.0
    %3278 = vmatpush2.msra.mxu0 0.0
    %3279 = vmatprep.subr.mxu0 0.0
    %3280 = vmatpush2.msra.mxu0 0.0
    %3281 = vmatprep.subr.mxu0 0.0
    %3282 = vmatpush2.msra.mxu0 0.0
    %3283 = vmatprep.subr.mxu0 0.0
    %3284 = vmatpush2.msra.mxu0 0.0
    %3285 = vmatprep.subr.mxu0 0.0
    %3286 = vmatpush2.msra.mxu0 0.0
    %3287 = vmatprep.subr.mxu0 0.0
    %3288 = vmatpush2.msra.mxu0 0.0
    %3289 = vmatprep.subr.mxu0 0.0
    %3290 = vmatpush2.msra.mxu0 0.0
    %3291 = vmatprep.subr.mxu0 0.0
    %3292 = vmatpush2.msra.mxu0 0.0
    %3293 = vmatprep.subr.mxu0 0.0
    %3294 = vmatpush2.msra.mxu0 0.0
    %3295 = vmatprep.subr.mxu0 0.0
    %3296 = vmatpush2.msra.mxu0 0.0
    %3297 = vmatprep.mubr.f32.mxu0 0.0
    %v3298 = vand.u32 %v85, 4294901760
    %3299 = vmatmul.mubr.f32.gmra.mxu0 %v3298
    %v3300 = vpop.f32.mrf.mxu0
    %v3301 = vadd.f32 %v3210, %v3300
    %v3302 = vpop.f32.mrf.mxu0
    %3303 = vmatprep.mubr.f32.mxu0 0.0
    %v3304 = vand.u32 %v88, 4294901760
    %3305 = vmatmul.mubr.f32.gmra.mxu0 %v3304
    %v3306 = vpop.f32.mrf.mxu0
    %v3307 = vadd.f32 %v3220, %v3306
    %v3308 = vpop.f32.mrf.mxu0
    %3309 = vdwg.mxu0
    %3310 = vmatprep.subr.mxu0 0.0
    %3311 = vmatpush1.msra.mxu0 0.0
    %3312 = vmatprep.subr.mxu0 0.0
    %3313 = vmatpush1.msra.mxu0 0.0
    %3314 = vmatprep.subr.mxu0 0.0
    %3315 = vmatpush1.msra.mxu0 0.0
    %3316 = vmatprep.subr.mxu0 0.0
    %3317 = vmatpush1.msra.mxu0 0.0
    %3318 = vmatprep.subr.mxu0 0.0
    %3319 = vmatpush1.msra.mxu0 0.0
    %3320 = vmatprep.subr.mxu0 0.0
    %3321 = vmatpush1.msra.mxu0 0.0
    %3322 = vmatprep.subr.mxu0 0.0
    %3323 = vmatpush1.msra.mxu0 0.0
    %3324 = vmatprep.subr.mxu0 0.0
    %3325 = vmatpush1.msra.mxu0 0.0
    %3326 = vmatprep.subr.mxu0 0.0
    %3327 = vmatpush1.msra.mxu0 0.0
    %3328 = vmatprep.subr.mxu0 0.0
    %3329 = vmatpush1.msra.mxu0 0.0
    %3330 = vmatprep.subr.mxu0 0.0
    %3331 = vmatpush1.msra.mxu0 0.0
    %3332 = vmatprep.subr.mxu0 0.0
    %3333 = vmatpush1.msra.mxu0 0.0
    %3334 = vmatprep.subr.mxu0 0.0
    %3335 = vmatpush1.msra.mxu0 0.0
    %3336 = vmatprep.subr.mxu0 0.0
    %3337 = vmatpush1.msra.mxu0 0.0
    %3338 = vmatprep.subr.mxu0 0.0
    %v3339 = vand.u32 %v3135, 4294901760
    %v3340 = vsub.f32 %v3135, %v3339
    %3341 = vmatpush1.msra.mxu0 %v3340
    %3342 = vmatprep.subr.mxu0 0.0
    %v3343 = vand.u32 %v3134, 4294901760
    %v3344 = vsub.f32 %v3134, %v3343
    %3345 = vmatpush1.msra.mxu0 %v3344
    %3346 = vmatprep.subr.mxu0 0.0
    %3347 = vmatpush2.msra.mxu0 0.0
    %3348 = vmatprep.subr.mxu0 0.0
    %3349 = vmatpush2.msra.mxu0 0.0
    %3350 = vmatprep.subr.mxu0 0.0
    %3351 = vmatpush2.msra.mxu0 0.0
    %3352 = vmatprep.subr.mxu0 0.0
    %3353 = vmatpush2.msra.mxu0 0.0
    %3354 = vmatprep.subr.mxu0 0.0
    %3355 = vmatpush2.msra.mxu0 0.0
    %3356 = vmatprep.subr.mxu0 0.0
    %3357 = vmatpush2.msra.mxu0 0.0
    %3358 = vmatprep.subr.mxu0 0.0
    %3359 = vmatpush2.msra.mxu0 0.0
    %3360 = vmatprep.subr.mxu0 0.0
    %3361 = vmatpush2.msra.mxu0 0.0
    %3362 = vmatprep.subr.mxu0 0.0
    %3363 = vmatpush2.msra.mxu0 0.0
    %3364 = vmatprep.subr.mxu0 0.0
    %3365 = vmatpush2.msra.mxu0 0.0
    %3366 = vmatprep.subr.mxu0 0.0
    %3367 = vmatpush2.msra.mxu0 0.0
    %3368 = vmatprep.subr.mxu0 0.0
    %3369 = vmatpush2.msra.mxu0 0.0
    %3370 = vmatprep.subr.mxu0 0.0
    %3371 = vmatpush2.msra.mxu0 0.0
    %3372 = vmatprep.subr.mxu0 0.0
    %3373 = vmatpush2.msra.mxu0 0.0
    %3374 = vmatprep.subr.mxu0 0.0
    %3375 = vmatpush2.msra.mxu0 0.0
    %3376 = vmatprep.subr.mxu0 0.0
    %3377 = vmatpush2.msra.mxu0 0.0
    %3378 = vmatprep.mubr.f32.mxu0 0.0
    %v3379 = vand.u32 %v85, 4294901760
    %v3380 = vsub.f32 %v85, %v3379
    %3381 = vmatmul.mubr.f32.gmra.mxu0 %v3380
    %v3382 = vpop.f32.mrf.mxu0
    %v3383 = vadd.f32 %v3301, %v3382
    %v3384 = vpop.f32.mrf.mxu0
    %3385 = vmatprep.mubr.f32.mxu0 0.0
    %v3386 = vand.u32 %v88, 4294901760
    %v3387 = vsub.f32 %v88, %v3386
    %3388 = vmatmul.mubr.f32.gmra.mxu0 %v3387
    %v3389 = vpop.f32.mrf.mxu0
    %v3390 = vadd.f32 %v3307, %v3389
    %v3391 = vpop.f32.mrf.mxu0
    %3392 = vdwg.mxu0
    %3393 = vmatprep.subr.mxu0 0.0
    %3394 = vmatpush1.msra.mxu0 0.0
    %3395 = vmatprep.subr.mxu0 0.0
    %3396 = vmatpush1.msra.mxu0 0.0
    %3397 = vmatprep.subr.mxu0 0.0
    %3398 = vmatpush1.msra.mxu0 0.0
    %3399 = vmatprep.subr.mxu0 0.0
    %3400 = vmatpush1.msra.mxu0 0.0
    %3401 = vmatprep.subr.mxu0 0.0
    %3402 = vmatpush1.msra.mxu0 0.0
    %3403 = vmatprep.subr.mxu0 0.0
    %3404 = vmatpush1.msra.mxu0 0.0
    %3405 = vmatprep.subr.mxu0 0.0
    %3406 = vmatpush1.msra.mxu0 0.0
    %3407 = vmatprep.subr.mxu0 0.0
    %3408 = vmatpush1.msra.mxu0 0.0
    %3409 = vmatprep.subr.mxu0 0.0
    %3410 = vmatpush1.msra.mxu0 0.0
    %3411 = vmatprep.subr.mxu0 0.0
    %3412 = vmatpush1.msra.mxu0 0.0
    %3413 = vmatprep.subr.mxu0 0.0
    %3414 = vmatpush1.msra.mxu0 0.0
    %3415 = vmatprep.subr.mxu0 0.0
    %3416 = vmatpush1.msra.mxu0 0.0
    %3417 = vmatprep.subr.mxu0 0.0
    %3418 = vmatpush1.msra.mxu0 0.0
    %3419 = vmatprep.subr.mxu0 0.0
    %3420 = vmatpush1.msra.mxu0 0.0
    %3421 = vmatprep.subr.mxu0 0.0
    %v3422 = vand.u32 %v3135, 4294901760
    %3423 = vmatpush1.msra.mxu0 %v3422
    %3424 = vmatprep.subr.mxu0 0.0
    %v3425 = vand.u32 %v3134, 4294901760
    %3426 = vmatpush1.msra.mxu0 %v3425
    %3427 = vmatprep.subr.mxu0 0.0
    %3428 = vmatpush2.msra.mxu0 0.0
    %3429 = vmatprep.subr.mxu0 0.0
    %3430 = vmatpush2.msra.mxu0 0.0
    %3431 = vmatprep.subr.mxu0 0.0
    %3432 = vmatpush2.msra.mxu0 0.0
    %3433 = vmatprep.subr.mxu0 0.0
    %3434 = vmatpush2.msra.mxu0 0.0
    %3435 = vmatprep.subr.mxu0 0.0
    %3436 = vmatpush2.msra.mxu0 0.0
    %3437 = vmatprep.subr.mxu0 0.0
    %3438 = vmatpush2.msra.mxu0 0.0
    %3439 = vmatprep.subr.mxu0 0.0
    %3440 = vmatpush2.msra.mxu0 0.0
    %3441 = vmatprep.subr.mxu0 0.0
    %3442 = vmatpush2.msra.mxu0 0.0
    %3443 = vmatprep.subr.mxu0 0.0
    %3444 = vmatpush2.msra.mxu0 0.0
    %3445 = vmatprep.subr.mxu0 0.0
    %3446 = vmatpush2.msra.mxu0 0.0
    %3447 = vmatprep.subr.mxu0 0.0
    %3448 = vmatpush2.msra.mxu0 0.0
    %3449 = vmatprep.subr.mxu0 0.0
    %3450 = vmatpush2.msra.mxu0 0.0
    %3451 = vmatprep.subr.mxu0 0.0
    %3452 = vmatpush2.msra.mxu0 0.0
    %3453 = vmatprep.subr.mxu0 0.0
    %3454 = vmatpush2.msra.mxu0 0.0
    %3455 = vmatprep.subr.mxu0 0.0
    %3456 = vmatpush2.msra.mxu0 0.0
    %3457 = vmatprep.subr.mxu0 0.0
    %3458 = vmatpush2.msra.mxu0 0.0
    %3459 = vmatprep.mubr.f32.mxu0 0.0
    %v3460 = vand.u32 %v85, 4294901760
    %v3461 = vsub.f32 %v85, %v3460
    %v3462 = vand.u32 %v3461, 4294901760
    %3463 = vmatmul.mubr.f32.gmra.mxu0 %v3462
    %v3464 = vpop.f32.mrf.mxu0
    %v3465 = vadd.f32 %v3383, %v3464
    %v3466 = vpop.f32.mrf.mxu0
    %3467 = vmatprep.mubr.f32.mxu0 0.0
    %v3468 = vand.u32 %v88, 4294901760
    %v3469 = vsub.f32 %v88, %v3468
    %v3470 = vand.u32 %v3469, 4294901760
    %3471 = vmatmul.mubr.f32.gmra.mxu0 %v3470
    %v3472 = vpop.f32.mrf.mxu0
    %v3473 = vadd.f32 %v3390, %v3472
    %v3474 = vpop.f32.mrf.mxu0
    %3475 = vdwg.mxu0
    %3476 = vmatprep.subr.mxu0 0.0
    %3477 = vmatpush1.msra.mxu0 0.0
    %3478 = vmatprep.subr.mxu0 0.0
    %3479 = vmatpush1.msra.mxu0 0.0
    %3480 = vmatprep.subr.mxu0 0.0
    %3481 = vmatpush1.msra.mxu0 0.0
    %3482 = vmatprep.subr.mxu0 0.0
    %3483 = vmatpush1.msra.mxu0 0.0
    %3484 = vmatprep.subr.mxu0 0.0
    %3485 = vmatpush1.msra.mxu0 0.0
    %3486 = vmatprep.subr.mxu0 0.0
    %3487 = vmatpush1.msra.mxu0 0.0
    %3488 = vmatprep.subr.mxu0 0.0
    %3489 = vmatpush1.msra.mxu0 0.0
    %3490 = vmatprep.subr.mxu0 0.0
    %3491 = vmatpush1.msra.mxu0 0.0
    %3492 = vmatprep.subr.mxu0 0.0
    %3493 = vmatpush1.msra.mxu0 0.0
    %3494 = vmatprep.subr.mxu0 0.0
    %3495 = vmatpush1.msra.mxu0 0.0
    %3496 = vmatprep.subr.mxu0 0.0
    %3497 = vmatpush1.msra.mxu0 0.0
    %3498 = vmatprep.subr.mxu0 0.0
    %3499 = vmatpush1.msra.mxu0 0.0
    %3500 = vmatprep.subr.mxu0 0.0
    %3501 = vmatpush1.msra.mxu0 0.0
    %3502 = vmatprep.subr.mxu0 0.0
    %3503 = vmatpush1.msra.mxu0 0.0
    %3504 = vmatprep.subr.mxu0 0.0
    %v3505 = vand.u32 %v3135, 4294901760
    %v3506 = vsub.f32 %v3135, %v3505
    %v3507 = vand.u32 %v3506, 4294901760
    %3508 = vmatpush1.msra.mxu0 %v3507
    %3509 = vmatprep.subr.mxu0 0.0
    %v3510 = vand.u32 %v3134, 4294901760
    %v3511 = vsub.f32 %v3134, %v3510
    %v3512 = vand.u32 %v3511, 4294901760
    %3513 = vmatpush1.msra.mxu0 %v3512
    %3514 = vmatprep.subr.mxu0 0.0
    %3515 = vmatpush2.msra.mxu0 0.0
    %3516 = vmatprep.subr.mxu0 0.0
    %3517 = vmatpush2.msra.mxu0 0.0
    %3518 = vmatprep.subr.mxu0 0.0
    %3519 = vmatpush2.msra.mxu0 0.0
    %3520 = vmatprep.subr.mxu0 0.0
    %3521 = vmatpush2.msra.mxu0 0.0
    %3522 = vmatprep.subr.mxu0 0.0
    %3523 = vmatpush2.msra.mxu0 0.0
    %3524 = vmatprep.subr.mxu0 0.0
    %3525 = vmatpush2.msra.mxu0 0.0
    %3526 = vmatprep.subr.mxu0 0.0
    %3527 = vmatpush2.msra.mxu0 0.0
    %3528 = vmatprep.subr.mxu0 0.0
    %3529 = vmatpush2.msra.mxu0 0.0
    %3530 = vmatprep.subr.mxu0 0.0
    %3531 = vmatpush2.msra.mxu0 0.0
    %3532 = vmatprep.subr.mxu0 0.0
    %3533 = vmatpush2.msra.mxu0 0.0
    %3534 = vmatprep.subr.mxu0 0.0
    %3535 = vmatpush2.msra.mxu0 0.0
    %3536 = vmatprep.subr.mxu0 0.0
    %3537 = vmatpush2.msra.mxu0 0.0
    %3538 = vmatprep.subr.mxu0 0.0
    %3539 = vmatpush2.msra.mxu0 0.0
    %3540 = vmatprep.subr.mxu0 0.0
    %3541 = vmatpush2.msra.mxu0 0.0
    %3542 = vmatprep.subr.mxu0 0.0
    %3543 = vmatpush2.msra.mxu0 0.0
    %3544 = vmatprep.subr.mxu0 0.0
    %3545 = vmatpush2.msra.mxu0 0.0
    %3546 = vmatprep.mubr.f32.mxu0 0.0
    %v3547 = vand.u32 %v85, 4294901760
    %3548 = vmatmul.mubr.f32.gmra.mxu0 %v3547
    %v3549 = vpop.f32.mrf.mxu0
    %v3550 = vadd.f32 %v3465, %v3549
    %v3551 = vpop.f32.mrf.mxu0
    %3552 = vmatprep.mubr.f32.mxu0 0.0
    %v3553 = vand.u32 %v88, 4294901760
    %3554 = vmatmul.mubr.f32.gmra.mxu0 %v3553
    %v3555 = vpop.f32.mrf.mxu0
    %v3556 = vadd.f32 %v3473, %v3555
    %v3557 = vpop.f32.mrf.mxu0
    %3558 = vdwg.mxu0
    %3559 = vmatprep.subr.mxu0 0.0
    %3560 = vmatpush1.msra.mxu0 0.0
    %3561 = vmatprep.subr.mxu0 0.0
    %3562 = vmatpush1.msra.mxu0 0.0
    %3563 = vmatprep.subr.mxu0 0.0
    %3564 = vmatpush1.msra.mxu0 0.0
    %3565 = vmatprep.subr.mxu0 0.0
    %3566 = vmatpush1.msra.mxu0 0.0
    %3567 = vmatprep.subr.mxu0 0.0
    %3568 = vmatpush1.msra.mxu0 0.0
    %3569 = vmatprep.subr.mxu0 0.0
    %3570 = vmatpush1.msra.mxu0 0.0
    %3571 = vmatprep.subr.mxu0 0.0
    %3572 = vmatpush1.msra.mxu0 0.0
    %3573 = vmatprep.subr.mxu0 0.0
    %3574 = vmatpush1.msra.mxu0 0.0
    %3575 = vmatprep.subr.mxu0 0.0
    %3576 = vmatpush1.msra.mxu0 0.0
    %3577 = vmatprep.subr.mxu0 0.0
    %3578 = vmatpush1.msra.mxu0 0.0
    %3579 = vmatprep.subr.mxu0 0.0
    %3580 = vmatpush1.msra.mxu0 0.0
    %3581 = vmatprep.subr.mxu0 0.0
    %3582 = vmatpush1.msra.mxu0 0.0
    %3583 = vmatprep.subr.mxu0 0.0
    %3584 = vmatpush1.msra.mxu0 0.0
    %3585 = vmatprep.subr.mxu0 0.0
    %3586 = vmatpush1.msra.mxu0 0.0
    %3587 = vmatprep.subr.mxu0 0.0
    %v3588 = vand.u32 %v3135, 4294901760
    %3589 = vmatpush1.msra.mxu0 %v3588
    %3590 = vmatprep.subr.mxu0 0.0
    %v3591 = vand.u32 %v3134, 4294901760
    %3592 = vmatpush1.msra.mxu0 %v3591
    %3593 = vmatprep.subr.mxu0 0.0
    %3594 = vmatpush2.msra.mxu0 0.0
    %3595 = vmatprep.subr.mxu0 0.0
    %3596 = vmatpush2.msra.mxu0 0.0
    %3597 = vmatprep.subr.mxu0 0.0
    %3598 = vmatpush2.msra.mxu0 0.0
    %3599 = vmatprep.subr.mxu0 0.0
    %3600 = vmatpush2.msra.mxu0 0.0
    %3601 = vmatprep.subr.mxu0 0.0
    %3602 = vmatpush2.msra.mxu0 0.0
    %3603 = vmatprep.subr.mxu0 0.0
    %3604 = vmatpush2.msra.mxu0 0.0
    %3605 = vmatprep.subr.mxu0 0.0
    %3606 = vmatpush2.msra.mxu0 0.0
    %3607 = vmatprep.subr.mxu0 0.0
    %3608 = vmatpush2.msra.mxu0 0.0
    %3609 = vmatprep.subr.mxu0 0.0
    %3610 = vmatpush2.msra.mxu0 0.0
    %3611 = vmatprep.subr.mxu0 0.0
    %3612 = vmatpush2.msra.mxu0 0.0
    %3613 = vmatprep.subr.mxu0 0.0
    %3614 = vmatpush2.msra.mxu0 0.0
    %3615 = vmatprep.subr.mxu0 0.0
    %3616 = vmatpush2.msra.mxu0 0.0
    %3617 = vmatprep.subr.mxu0 0.0
    %3618 = vmatpush2.msra.mxu0 0.0
    %3619 = vmatprep.subr.mxu0 0.0
    %3620 = vmatpush2.msra.mxu0 0.0
    %3621 = vmatprep.subr.mxu0 0.0
    %3622 = vmatpush2.msra.mxu0 0.0
    %3623 = vmatprep.subr.mxu0 0.0
    %3624 = vmatpush2.msra.mxu0 0.0
    %3625 = vmatprep.mubr.f32.mxu0 0.0
    %v3626 = vand.u32 %v85, 4294901760
    %3627 = vmatmul.mubr.f32.gmra.mxu0 %v3626
    %v3628 = vpop.f32.mrf.mxu0
    %v3629 = vadd.f32 %v3550, %v3628
    %v3630 = vpop.f32.mrf.mxu0
    %3631 = vmatprep.mubr.f32.mxu0 0.0
    %v3632 = vand.u32 %v88, 4294901760
    %3633 = vmatmul.mubr.f32.gmra.mxu0 %v3632
    %v3634 = vpop.f32.mrf.mxu0
    %v3635 = vadd.f32 %v3556, %v3634
    %v3636 = vpop.f32.mrf.mxu0
    %3637 = vdwg.mxu0
    %v3639 = vsel %vm83, %v3629, 0
    %v3642 = vsel %vm83, %v3635, 0
    %3644 = vmatprep.subr.mxu0 0.0
    %3645 = vmatpush1.msra.mxu0 0.0
    %3646 = vmatprep.subr.mxu0 0.0
    %3647 = vmatpush1.msra.mxu0 0.0
    %3648 = vmatprep.subr.mxu0 0.0
    %3649 = vmatpush1.msra.mxu0 0.0
    %3650 = vmatprep.subr.mxu0 0.0
    %3651 = vmatpush1.msra.mxu0 0.0
    %3652 = vmatprep.subr.mxu0 0.0
    %3653 = vmatpush1.msra.mxu0 0.0
    %3654 = vmatprep.subr.mxu0 0.0
    %3655 = vmatpush1.msra.mxu0 0.0
    %3656 = vmatprep.subr.mxu0 0.0
    %3657 = vmatpush1.msra.mxu0 0.0
    %3658 = vmatprep.subr.mxu0 0.0
    %3659 = vmatpush1.msra.mxu0 0.0
    %3660 = vmatprep.subr.mxu0 0.0
    %3661 = vmatpush1.msra.mxu0 0.0
    %3662 = vmatprep.subr.mxu0 0.0
    %3663 = vmatpush1.msra.mxu0 0.0
    %3664 = vmatprep.subr.mxu0 0.0
    %3665 = vmatpush1.msra.mxu0 0.0
    %3666 = vmatprep.subr.mxu0 0.0
    %3667 = vmatpush1.msra.mxu0 0.0
    %3668 = vmatprep.subr.mxu0 0.0
    %3669 = vmatpush1.msra.mxu0 0.0
    %3670 = vmatprep.subr.mxu0 0.0
    %3671 = vmatpush1.msra.mxu0 0.0
    %3672 = vmatprep.subr.mxu0 0.0
    %v3673 = vand.u32 %v76, 4294901760
    %3674 = vmatpush1.msra.mxu0 %v3673
    %3675 = vmatprep.subr.mxu0 0.0
    %v3676 = vand.u32 %v75, 4294901760
    %3677 = vmatpush1.msra.mxu0 %v3676
    %3678 = vmatprep.subr.mxu0 0.0
    %3679 = vmatpush2.msra.mxu0 0.0
    %3680 = vmatprep.subr.mxu0 0.0
    %3681 = vmatpush2.msra.mxu0 0.0
    %3682 = vmatprep.subr.mxu0 0.0
    %3683 = vmatpush2.msra.mxu0 0.0
    %3684 = vmatprep.subr.mxu0 0.0
    %3685 = vmatpush2.msra.mxu0 0.0
    %3686 = vmatprep.subr.mxu0 0.0
    %3687 = vmatpush2.msra.mxu0 0.0
    %3688 = vmatprep.subr.mxu0 0.0
    %3689 = vmatpush2.msra.mxu0 0.0
    %3690 = vmatprep.subr.mxu0 0.0
    %3691 = vmatpush2.msra.mxu0 0.0
    %3692 = vmatprep.subr.mxu0 0.0
    %3693 = vmatpush2.msra.mxu0 0.0
    %3694 = vmatprep.subr.mxu0 0.0
    %3695 = vmatpush2.msra.mxu0 0.0
    %3696 = vmatprep.subr.mxu0 0.0
    %3697 = vmatpush2.msra.mxu0 0.0
    %3698 = vmatprep.subr.mxu0 0.0
    %3699 = vmatpush2.msra.mxu0 0.0
    %3700 = vmatprep.subr.mxu0 0.0
    %3701 = vmatpush2.msra.mxu0 0.0
    %3702 = vmatprep.subr.mxu0 0.0
    %3703 = vmatpush2.msra.mxu0 0.0
    %3704 = vmatprep.subr.mxu0 0.0
    %3705 = vmatpush2.msra.mxu0 0.0
    %3706 = vmatprep.subr.mxu0 0.0
    %3707 = vmatpush2.msra.mxu0 0.0
    %3708 = vmatprep.subr.mxu0 0.0
    %3709 = vmatpush2.msra.mxu0 0.0
    %3710 = vmatprep.mubr.f32.mxu0 0.0
    %v3711 = vand.u32 %v3639, 4294901760
    %v3712 = vsub.f32 %v3639, %v3711
    %v3713 = vand.u32 %v3712, 4294901760
    %v3714 = vsub.f32 %v3712, %v3713
    %v3715 = vand.u32 %v3714, 4294901760
    %3716 = vmatmul.mubr.f32.gmra.mxu0 %v3715
    %v3717 = vpop.f32.mrf.mxu0
    %v3718 = vadd.f32 0.0, %v3717
    %v3719 = vpop.f32.mrf.mxu0
    %3720 = vmatprep.mubr.f32.mxu0 0.0
    %v3721 = vand.u32 %v3642, 4294901760
    %v3722 = vsub.f32 %v3642, %v3721
    %v3723 = vand.u32 %v3722, 4294901760
    %v3724 = vsub.f32 %v3722, %v3723
    %v3725 = vand.u32 %v3724, 4294901760
    %3726 = vmatmul.mubr.f32.gmra.mxu0 %v3725
    %v3727 = vpop.f32.mrf.mxu0
    %v3728 = vadd.f32 0.0, %v3727
    %v3729 = vpop.f32.mrf.mxu0
    %3730 = vdwg.mxu0
    %3731 = vmatprep.subr.mxu0 0.0
    %3732 = vmatpush1.msra.mxu0 0.0
    %3733 = vmatprep.subr.mxu0 0.0
    %3734 = vmatpush1.msra.mxu0 0.0
    %3735 = vmatprep.subr.mxu0 0.0
    %3736 = vmatpush1.msra.mxu0 0.0
    %3737 = vmatprep.subr.mxu0 0.0
    %3738 = vmatpush1.msra.mxu0 0.0
    %3739 = vmatprep.subr.mxu0 0.0
    %3740 = vmatpush1.msra.mxu0 0.0
    %3741 = vmatprep.subr.mxu0 0.0
    %3742 = vmatpush1.msra.mxu0 0.0
    %3743 = vmatprep.subr.mxu0 0.0
    %3744 = vmatpush1.msra.mxu0 0.0
    %3745 = vmatprep.subr.mxu0 0.0
    %3746 = vmatpush1.msra.mxu0 0.0
    %3747 = vmatprep.subr.mxu0 0.0
    %3748 = vmatpush1.msra.mxu0 0.0
    %3749 = vmatprep.subr.mxu0 0.0
    %3750 = vmatpush1.msra.mxu0 0.0
    %3751 = vmatprep.subr.mxu0 0.0
    %3752 = vmatpush1.msra.mxu0 0.0
    %3753 = vmatprep.subr.mxu0 0.0
    %3754 = vmatpush1.msra.mxu0 0.0
    %3755 = vmatprep.subr.mxu0 0.0
    %3756 = vmatpush1.msra.mxu0 0.0
    %3757 = vmatprep.subr.mxu0 0.0
    %3758 = vmatpush1.msra.mxu0 0.0
    %3759 = vmatprep.subr.mxu0 0.0
    %v3760 = vand.u32 %v76, 4294901760
    %v3761 = vsub.f32 %v76, %v3760
    %v3762 = vand.u32 %v3761, 4294901760
    %v3763 = vsub.f32 %v3761, %v3762
    %v3764 = vand.u32 %v3763, 4294901760
    %3765 = vmatpush1.msra.mxu0 %v3764
    %3766 = vmatprep.subr.mxu0 0.0
    %v3767 = vand.u32 %v75, 4294901760
    %v3768 = vsub.f32 %v75, %v3767
    %v3769 = vand.u32 %v3768, 4294901760
    %v3770 = vsub.f32 %v3768, %v3769
    %v3771 = vand.u32 %v3770, 4294901760
    %3772 = vmatpush1.msra.mxu0 %v3771
    %3773 = vmatprep.subr.mxu0 0.0
    %3774 = vmatpush2.msra.mxu0 0.0
    %3775 = vmatprep.subr.mxu0 0.0
    %3776 = vmatpush2.msra.mxu0 0.0
    %3777 = vmatprep.subr.mxu0 0.0
    %3778 = vmatpush2.msra.mxu0 0.0
    %3779 = vmatprep.subr.mxu0 0.0
    %3780 = vmatpush2.msra.mxu0 0.0
    %3781 = vmatprep.subr.mxu0 0.0
    %3782 = vmatpush2.msra.mxu0 0.0
    %3783 = vmatprep.subr.mxu0 0.0
    %3784 = vmatpush2.msra.mxu0 0.0
    %3785 = vmatprep.subr.mxu0 0.0
    %3786 = vmatpush2.msra.mxu0 0.0
    %3787 = vmatprep.subr.mxu0 0.0
    %3788 = vmatpush2.msra.mxu0 0.0
    %3789 = vmatprep.subr.mxu0 0.0
    %3790 = vmatpush2.msra.mxu0 0.0
    %3791 = vmatprep.subr.mxu0 0.0
    %3792 = vmatpush2.msra.mxu0 0.0
    %3793 = vmatprep.subr.mxu0 0.0
    %3794 = vmatpush2.msra.mxu0 0.0
    %3795 = vmatprep.subr.mxu0 0.0
    %3796 = vmatpush2.msra.mxu0 0.0
    %3797 = vmatprep.subr.mxu0 0.0
    %3798 = vmatpush2.msra.mxu0 0.0
    %3799 = vmatprep.subr.mxu0 0.0
    %3800 = vmatpush2.msra.mxu0 0.0
    %3801 = vmatprep.subr.mxu0 0.0
    %3802 = vmatpush2.msra.mxu0 0.0
    %3803 = vmatprep.subr.mxu0 0.0
    %3804 = vmatpush2.msra.mxu0 0.0
    %3805 = vmatprep.mubr.f32.mxu0 0.0
    %v3806 = vand.u32 %v3639, 4294901760
    %3807 = vmatmul.mubr.f32.gmra.mxu0 %v3806
    %v3808 = vpop.f32.mrf.mxu0
    %v3809 = vadd.f32 %v3718, %v3808
    %v3810 = vpop.f32.mrf.mxu0
    %3811 = vmatprep.mubr.f32.mxu0 0.0
    %v3812 = vand.u32 %v3642, 4294901760
    %3813 = vmatmul.mubr.f32.gmra.mxu0 %v3812
    %v3814 = vpop.f32.mrf.mxu0
    %v3815 = vadd.f32 %v3728, %v3814
    %v3816 = vpop.f32.mrf.mxu0
    %3817 = vdwg.mxu0
    %3818 = vmatprep.subr.mxu0 0.0
    %3819 = vmatpush1.msra.mxu0 0.0
    %3820 = vmatprep.subr.mxu0 0.0
    %3821 = vmatpush1.msra.mxu0 0.0
    %3822 = vmatprep.subr.mxu0 0.0
    %3823 = vmatpush1.msra.mxu0 0.0
    %3824 = vmatprep.subr.mxu0 0.0
    %3825 = vmatpush1.msra.mxu0 0.0
    %3826 = vmatprep.subr.mxu0 0.0
    %3827 = vmatpush1.msra.mxu0 0.0
    %3828 = vmatprep.subr.mxu0 0.0
    %3829 = vmatpush1.msra.mxu0 0.0
    %3830 = vmatprep.subr.mxu0 0.0
    %3831 = vmatpush1.msra.mxu0 0.0
    %3832 = vmatprep.subr.mxu0 0.0
    %3833 = vmatpush1.msra.mxu0 0.0
    %3834 = vmatprep.subr.mxu0 0.0
    %3835 = vmatpush1.msra.mxu0 0.0
    %3836 = vmatprep.subr.mxu0 0.0
    %3837 = vmatpush1.msra.mxu0 0.0
    %3838 = vmatprep.subr.mxu0 0.0
    %3839 = vmatpush1.msra.mxu0 0.0
    %3840 = vmatprep.subr.mxu0 0.0
    %3841 = vmatpush1.msra.mxu0 0.0
    %3842 = vmatprep.subr.mxu0 0.0
    %3843 = vmatpush1.msra.mxu0 0.0
    %3844 = vmatprep.subr.mxu0 0.0
    %3845 = vmatpush1.msra.mxu0 0.0
    %3846 = vmatprep.subr.mxu0 0.0
    %v3847 = vand.u32 %v76, 4294901760
    %v3848 = vsub.f32 %v76, %v3847
    %3849 = vmatpush1.msra.mxu0 %v3848
    %3850 = vmatprep.subr.mxu0 0.0
    %v3851 = vand.u32 %v75, 4294901760
    %v3852 = vsub.f32 %v75, %v3851
    %3853 = vmatpush1.msra.mxu0 %v3852
    %3854 = vmatprep.subr.mxu0 0.0
    %3855 = vmatpush2.msra.mxu0 0.0
    %3856 = vmatprep.subr.mxu0 0.0
    %3857 = vmatpush2.msra.mxu0 0.0
    %3858 = vmatprep.subr.mxu0 0.0
    %3859 = vmatpush2.msra.mxu0 0.0
    %3860 = vmatprep.subr.mxu0 0.0
    %3861 = vmatpush2.msra.mxu0 0.0
    %3862 = vmatprep.subr.mxu0 0.0
    %3863 = vmatpush2.msra.mxu0 0.0
    %3864 = vmatprep.subr.mxu0 0.0
    %3865 = vmatpush2.msra.mxu0 0.0
    %3866 = vmatprep.subr.mxu0 0.0
    %3867 = vmatpush2.msra.mxu0 0.0
    %3868 = vmatprep.subr.mxu0 0.0
    %3869 = vmatpush2.msra.mxu0 0.0
    %3870 = vmatprep.subr.mxu0 0.0
    %3871 = vmatpush2.msra.mxu0 0.0
    %3872 = vmatprep.subr.mxu0 0.0
    %3873 = vmatpush2.msra.mxu0 0.0
    %3874 = vmatprep.subr.mxu0 0.0
    %3875 = vmatpush2.msra.mxu0 0.0
    %3876 = vmatprep.subr.mxu0 0.0
    %3877 = vmatpush2.msra.mxu0 0.0
    %3878 = vmatprep.subr.mxu0 0.0
    %3879 = vmatpush2.msra.mxu0 0.0
    %3880 = vmatprep.subr.mxu0 0.0
    %3881 = vmatpush2.msra.mxu0 0.0
    %3882 = vmatprep.subr.mxu0 0.0
    %3883 = vmatpush2.msra.mxu0 0.0
    %3884 = vmatprep.subr.mxu0 0.0
    %3885 = vmatpush2.msra.mxu0 0.0
    %3886 = vmatprep.mubr.f32.mxu0 0.0
    %v3887 = vand.u32 %v3639, 4294901760
    %v3888 = vsub.f32 %v3639, %v3887
    %3889 = vmatmul.mubr.f32.gmra.mxu0 %v3888
    %v3890 = vpop.f32.mrf.mxu0
    %v3891 = vadd.f32 %v3809, %v3890
    %v3892 = vpop.f32.mrf.mxu0
    %3893 = vmatprep.mubr.f32.mxu0 0.0
    %v3894 = vand.u32 %v3642, 4294901760
    %v3895 = vsub.f32 %v3642, %v3894
    %3896 = vmatmul.mubr.f32.gmra.mxu0 %v3895
    %v3897 = vpop.f32.mrf.mxu0
    %v3898 = vadd.f32 %v3815, %v3897
    %v3899 = vpop.f32.mrf.mxu0
    %3900 = vdwg.mxu0
    %3901 = vmatprep.subr.mxu0 0.0
    %3902 = vmatpush1.msra.mxu0 0.0
    %3903 = vmatprep.subr.mxu0 0.0
    %3904 = vmatpush1.msra.mxu0 0.0
    %3905 = vmatprep.subr.mxu0 0.0
    %3906 = vmatpush1.msra.mxu0 0.0
    %3907 = vmatprep.subr.mxu0 0.0
    %3908 = vmatpush1.msra.mxu0 0.0
    %3909 = vmatprep.subr.mxu0 0.0
    %3910 = vmatpush1.msra.mxu0 0.0
    %3911 = vmatprep.subr.mxu0 0.0
    %3912 = vmatpush1.msra.mxu0 0.0
    %3913 = vmatprep.subr.mxu0 0.0
    %3914 = vmatpush1.msra.mxu0 0.0
    %3915 = vmatprep.subr.mxu0 0.0
    %3916 = vmatpush1.msra.mxu0 0.0
    %3917 = vmatprep.subr.mxu0 0.0
    %3918 = vmatpush1.msra.mxu0 0.0
    %3919 = vmatprep.subr.mxu0 0.0
    %3920 = vmatpush1.msra.mxu0 0.0
    %3921 = vmatprep.subr.mxu0 0.0
    %3922 = vmatpush1.msra.mxu0 0.0
    %3923 = vmatprep.subr.mxu0 0.0
    %3924 = vmatpush1.msra.mxu0 0.0
    %3925 = vmatprep.subr.mxu0 0.0
    %3926 = vmatpush1.msra.mxu0 0.0
    %3927 = vmatprep.subr.mxu0 0.0
    %3928 = vmatpush1.msra.mxu0 0.0
    %3929 = vmatprep.subr.mxu0 0.0
    %v3930 = vand.u32 %v76, 4294901760
    %3931 = vmatpush1.msra.mxu0 %v3930
    %3932 = vmatprep.subr.mxu0 0.0
    %v3933 = vand.u32 %v75, 4294901760
    %3934 = vmatpush1.msra.mxu0 %v3933
    %3935 = vmatprep.subr.mxu0 0.0
    %3936 = vmatpush2.msra.mxu0 0.0
    %3937 = vmatprep.subr.mxu0 0.0
    %3938 = vmatpush2.msra.mxu0 0.0
    %3939 = vmatprep.subr.mxu0 0.0
    %3940 = vmatpush2.msra.mxu0 0.0
    %3941 = vmatprep.subr.mxu0 0.0
    %3942 = vmatpush2.msra.mxu0 0.0
    %3943 = vmatprep.subr.mxu0 0.0
    %3944 = vmatpush2.msra.mxu0 0.0
    %3945 = vmatprep.subr.mxu0 0.0
    %3946 = vmatpush2.msra.mxu0 0.0
    %3947 = vmatprep.subr.mxu0 0.0
    %3948 = vmatpush2.msra.mxu0 0.0
    %3949 = vmatprep.subr.mxu0 0.0
    %3950 = vmatpush2.msra.mxu0 0.0
    %3951 = vmatprep.subr.mxu0 0.0
    %3952 = vmatpush2.msra.mxu0 0.0
    %3953 = vmatprep.subr.mxu0 0.0
    %3954 = vmatpush2.msra.mxu0 0.0
    %3955 = vmatprep.subr.mxu0 0.0
    %3956 = vmatpush2.msra.mxu0 0.0
    %3957 = vmatprep.subr.mxu0 0.0
    %3958 = vmatpush2.msra.mxu0 0.0
    %3959 = vmatprep.subr.mxu0 0.0
    %3960 = vmatpush2.msra.mxu0 0.0
    %3961 = vmatprep.subr.mxu0 0.0
    %3962 = vmatpush2.msra.mxu0 0.0
    %3963 = vmatprep.subr.mxu0 0.0
    %3964 = vmatpush2.msra.mxu0 0.0
    %3965 = vmatprep.subr.mxu0 0.0
    %3966 = vmatpush2.msra.mxu0 0.0
    %3967 = vmatprep.mubr.f32.mxu0 0.0
    %v3968 = vand.u32 %v3639, 4294901760
    %v3969 = vsub.f32 %v3639, %v3968
    %v3970 = vand.u32 %v3969, 4294901760
    %3971 = vmatmul.mubr.f32.gmra.mxu0 %v3970
    %v3972 = vpop.f32.mrf.mxu0
    %v3973 = vadd.f32 %v3891, %v3972
    %v3974 = vpop.f32.mrf.mxu0
    %3975 = vmatprep.mubr.f32.mxu0 0.0
    %v3976 = vand.u32 %v3642, 4294901760
    %v3977 = vsub.f32 %v3642, %v3976
    %v3978 = vand.u32 %v3977, 4294901760
    %3979 = vmatmul.mubr.f32.gmra.mxu0 %v3978
    %v3980 = vpop.f32.mrf.mxu0
    %v3981 = vadd.f32 %v3898, %v3980
    %v3982 = vpop.f32.mrf.mxu0
    %3983 = vdwg.mxu0
    %3984 = vmatprep.subr.mxu0 0.0
    %3985 = vmatpush1.msra.mxu0 0.0
    %3986 = vmatprep.subr.mxu0 0.0
    %3987 = vmatpush1.msra.mxu0 0.0
    %3988 = vmatprep.subr.mxu0 0.0
    %3989 = vmatpush1.msra.mxu0 0.0
    %3990 = vmatprep.subr.mxu0 0.0
    %3991 = vmatpush1.msra.mxu0 0.0
    %3992 = vmatprep.subr.mxu0 0.0
    %3993 = vmatpush1.msra.mxu0 0.0
    %3994 = vmatprep.subr.mxu0 0.0
    %3995 = vmatpush1.msra.mxu0 0.0
    %3996 = vmatprep.subr.mxu0 0.0
    %3997 = vmatpush1.msra.mxu0 0.0
    %3998 = vmatprep.subr.mxu0 0.0
    %3999 = vmatpush1.msra.mxu0 0.0
    %4000 = vmatprep.subr.mxu0 0.0
    %4001 = vmatpush1.msra.mxu0 0.0
    %4002 = vmatprep.subr.mxu0 0.0
    %4003 = vmatpush1.msra.mxu0 0.0
    %4004 = vmatprep.subr.mxu0 0.0
    %4005 = vmatpush1.msra.mxu0 0.0
    %4006 = vmatprep.subr.mxu0 0.0
    %4007 = vmatpush1.msra.mxu0 0.0
    %4008 = vmatprep.subr.mxu0 0.0
    %4009 = vmatpush1.msra.mxu0 0.0
    %4010 = vmatprep.subr.mxu0 0.0
    %4011 = vmatpush1.msra.mxu0 0.0
    %4012 = vmatprep.subr.mxu0 0.0
    %v4013 = vand.u32 %v76, 4294901760
    %v4014 = vsub.f32 %v76, %v4013
    %v4015 = vand.u32 %v4014, 4294901760
    %4016 = vmatpush1.msra.mxu0 %v4015
    %4017 = vmatprep.subr.mxu0 0.0
    %v4018 = vand.u32 %v75, 4294901760
    %v4019 = vsub.f32 %v75, %v4018
    %v4020 = vand.u32 %v4019, 4294901760
    %4021 = vmatpush1.msra.mxu0 %v4020
    %4022 = vmatprep.subr.mxu0 0.0
    %4023 = vmatpush2.msra.mxu0 0.0
    %4024 = vmatprep.subr.mxu0 0.0
    %4025 = vmatpush2.msra.mxu0 0.0
    %4026 = vmatprep.subr.mxu0 0.0
    %4027 = vmatpush2.msra.mxu0 0.0
    %4028 = vmatprep.subr.mxu0 0.0
    %4029 = vmatpush2.msra.mxu0 0.0
    %4030 = vmatprep.subr.mxu0 0.0
    %4031 = vmatpush2.msra.mxu0 0.0
    %4032 = vmatprep.subr.mxu0 0.0
    %4033 = vmatpush2.msra.mxu0 0.0
    %4034 = vmatprep.subr.mxu0 0.0
    %4035 = vmatpush2.msra.mxu0 0.0
    %4036 = vmatprep.subr.mxu0 0.0
    %4037 = vmatpush2.msra.mxu0 0.0
    %4038 = vmatprep.subr.mxu0 0.0
    %4039 = vmatpush2.msra.mxu0 0.0
    %4040 = vmatprep.subr.mxu0 0.0
    %4041 = vmatpush2.msra.mxu0 0.0
    %4042 = vmatprep.subr.mxu0 0.0
    %4043 = vmatpush2.msra.mxu0 0.0
    %4044 = vmatprep.subr.mxu0 0.0
    %4045 = vmatpush2.msra.mxu0 0.0
    %4046 = vmatprep.subr.mxu0 0.0
    %4047 = vmatpush2.msra.mxu0 0.0
    %4048 = vmatprep.subr.mxu0 0.0
    %4049 = vmatpush2.msra.mxu0 0.0
    %4050 = vmatprep.subr.mxu0 0.0
    %4051 = vmatpush2.msra.mxu0 0.0
    %4052 = vmatprep.subr.mxu0 0.0
    %4053 = vmatpush2.msra.mxu0 0.0
    %4054 = vmatprep.mubr.f32.mxu0 0.0
    %v4055 = vand.u32 %v3639, 4294901760
    %4056 = vmatmul.mubr.f32.gmra.mxu0 %v4055
    %v4057 = vpop.f32.mrf.mxu0
    %v4058 = vadd.f32 %v3973, %v4057
    %v4059 = vpop.f32.mrf.mxu0
    %4060 = vmatprep.mubr.f32.mxu0 0.0
    %v4061 = vand.u32 %v3642, 4294901760
    %4062 = vmatmul.mubr.f32.gmra.mxu0 %v4061
    %v4063 = vpop.f32.mrf.mxu0
    %v4064 = vadd.f32 %v3981, %v4063
    %v4065 = vpop.f32.mrf.mxu0
    %4066 = vdwg.mxu0
    %4067 = vmatprep.subr.mxu0 0.0
    %4068 = vmatpush1.msra.mxu0 0.0
    %4069 = vmatprep.subr.mxu0 0.0
    %4070 = vmatpush1.msra.mxu0 0.0
    %4071 = vmatprep.subr.mxu0 0.0
    %4072 = vmatpush1.msra.mxu0 0.0
    %4073 = vmatprep.subr.mxu0 0.0
    %4074 = vmatpush1.msra.mxu0 0.0
    %4075 = vmatprep.subr.mxu0 0.0
    %4076 = vmatpush1.msra.mxu0 0.0
    %4077 = vmatprep.subr.mxu0 0.0
    %4078 = vmatpush1.msra.mxu0 0.0
    %4079 = vmatprep.subr.mxu0 0.0
    %4080 = vmatpush1.msra.mxu0 0.0
    %4081 = vmatprep.subr.mxu0 0.0
    %4082 = vmatpush1.msra.mxu0 0.0
    %4083 = vmatprep.subr.mxu0 0.0
    %4084 = vmatpush1.msra.mxu0 0.0
    %4085 = vmatprep.subr.mxu0 0.0
    %4086 = vmatpush1.msra.mxu0 0.0
    %4087 = vmatprep.subr.mxu0 0.0
    %4088 = vmatpush1.msra.mxu0 0.0
    %4089 = vmatprep.subr.mxu0 0.0
    %4090 = vmatpush1.msra.mxu0 0.0
    %4091 = vmatprep.subr.mxu0 0.0
    %4092 = vmatpush1.msra.mxu0 0.0
    %4093 = vmatprep.subr.mxu0 0.0
    %4094 = vmatpush1.msra.mxu0 0.0
    %4095 = vmatprep.subr.mxu0 0.0
    %v4096 = vand.u32 %v76, 4294901760
    %4097 = vmatpush1.msra.mxu0 %v4096
    %4098 = vmatprep.subr.mxu0 0.0
    %v4099 = vand.u32 %v75, 4294901760
    %4100 = vmatpush1.msra.mxu0 %v4099
    %4101 = vmatprep.subr.mxu0 0.0
    %4102 = vmatpush2.msra.mxu0 0.0
    %4103 = vmatprep.subr.mxu0 0.0
    %4104 = vmatpush2.msra.mxu0 0.0
    %4105 = vmatprep.subr.mxu0 0.0
    %4106 = vmatpush2.msra.mxu0 0.0
    %4107 = vmatprep.subr.mxu0 0.0
    %4108 = vmatpush2.msra.mxu0 0.0
    %4109 = vmatprep.subr.mxu0 0.0
    %4110 = vmatpush2.msra.mxu0 0.0
    %4111 = vmatprep.subr.mxu0 0.0
    %4112 = vmatpush2.msra.mxu0 0.0
    %4113 = vmatprep.subr.mxu0 0.0
    %4114 = vmatpush2.msra.mxu0 0.0
    %4115 = vmatprep.subr.mxu0 0.0
    %4116 = vmatpush2.msra.mxu0 0.0
    %4117 = vmatprep.subr.mxu0 0.0
    %4118 = vmatpush2.msra.mxu0 0.0
    %4119 = vmatprep.subr.mxu0 0.0
    %4120 = vmatpush2.msra.mxu0 0.0
    %4121 = vmatprep.subr.mxu0 0.0
    %4122 = vmatpush2.msra.mxu0 0.0
    %4123 = vmatprep.subr.mxu0 0.0
    %4124 = vmatpush2.msra.mxu0 0.0
    %4125 = vmatprep.subr.mxu0 0.0
    %4126 = vmatpush2.msra.mxu0 0.0
    %4127 = vmatprep.subr.mxu0 0.0
    %4128 = vmatpush2.msra.mxu0 0.0
    %4129 = vmatprep.subr.mxu0 0.0
    %4130 = vmatpush2.msra.mxu0 0.0
    %4131 = vmatprep.subr.mxu0 0.0
    %4132 = vmatpush2.msra.mxu0 0.0
    %4133 = vmatprep.mubr.f32.mxu0 0.0
    %v4134 = vand.u32 %v3639, 4294901760
    %4135 = vmatmul.mubr.f32.gmra.mxu0 %v4134
    %v4136 = vpop.f32.mrf.mxu0
    %v4137 = vadd.f32 %v4058, %v4136
    %v4138 = vpop.f32.mrf.mxu0
    %4139 = vmatprep.mubr.f32.mxu0 0.0
    %v4140 = vand.u32 %v3642, 4294901760
    %4141 = vmatmul.mubr.f32.gmra.mxu0 %v4140
    %v4142 = vpop.f32.mrf.mxu0
    %v4143 = vadd.f32 %v4064, %v4142
    %v4144 = vpop.f32.mrf.mxu0
    %4145 = vdwg.mxu0
    %vm4146 = vcmp.lt.f32.partialorder %v4137, %v2105
    %vm4147 = vcmp.lt.f32.partialorder %v4143, %v2111
    %v4148 = vsel %vm4146, 1, 0
    %v4149 = vsel %vm4147, 1, 0
    %v4150 = vsel %vm4146, %v4137, %v2105
    %v4151 = vsel %vm4147, %v4143, %v2111
    %s4152 = scalar_lea.vmem [#allocation9], 32
    %v4153 = vld [vmem:[%s4152] sm:$0xff]
    %v4154 = vld [vmem:[%s4152 + $0x8] sm:$0xff]
    %s4155 = scalar_lea.vmem [#allocation8], 32
    %v4156 = vld [vmem:[%s4155] sm:$0xff]
    %v4157 = vld [vmem:[%s4155 + $0x8] sm:$0xff]
    %v4158 = vsub.f32 %v4153, %v4156
    %v4159 = vsub.f32 %v4154, %v4157
    %4160 = vmatprep.subr.mxu0 0.0
    %4161 = vmatpush1.msra.mxu0 0.0
    %4162 = vmatprep.subr.mxu0 0.0
    %4163 = vmatpush1.msra.mxu0 0.0
    %4164 = vmatprep.subr.mxu0 0.0
    %4165 = vmatpush1.msra.mxu0 0.0
    %4166 = vmatprep.subr.mxu0 0.0
    %4167 = vmatpush1.msra.mxu0 0.0
    %4168 = vmatprep.subr.mxu0 0.0
    %4169 = vmatpush1.msra.mxu0 0.0
    %4170 = vmatprep.subr.mxu0 0.0
    %4171 = vmatpush1.msra.mxu0 0.0
    %4172 = vmatprep.subr.mxu0 0.0
    %4173 = vmatpush1.msra.mxu0 0.0
    %4174 = vmatprep.subr.mxu0 0.0
    %4175 = vmatpush1.msra.mxu0 0.0
    %4176 = vmatprep.subr.mxu0 0.0
    %4177 = vmatpush1.msra.mxu0 0.0
    %4178 = vmatprep.subr.mxu0 0.0
    %4179 = vmatpush1.msra.mxu0 0.0
    %4180 = vmatprep.subr.mxu0 0.0
    %4181 = vmatpush1.msra.mxu0 0.0
    %4182 = vmatprep.subr.mxu0 0.0
    %4183 = vmatpush1.msra.mxu0 0.0
    %4184 = vmatprep.subr.mxu0 0.0
    %4185 = vmatpush1.msra.mxu0 0.0
    %4186 = vmatprep.subr.mxu0 0.0
    %4187 = vmatpush1.msra.mxu0 0.0
    %4188 = vmatprep.subr.mxu0 0.0
    %v4189 = vand.u32 %v4159, 4294901760
    %4190 = vmatpush1.msra.mxu0 %v4189
    %4191 = vmatprep.subr.mxu0 0.0
    %v4192 = vand.u32 %v4158, 4294901760
    %4193 = vmatpush1.msra.mxu0 %v4192
    %4194 = vmatprep.subr.mxu0 0.0
    %4195 = vmatpush2.msra.mxu0 0.0
    %4196 = vmatprep.subr.mxu0 0.0
    %4197 = vmatpush2.msra.mxu0 0.0
    %4198 = vmatprep.subr.mxu0 0.0
    %4199 = vmatpush2.msra.mxu0 0.0
    %4200 = vmatprep.subr.mxu0 0.0
    %4201 = vmatpush2.msra.mxu0 0.0
    %4202 = vmatprep.subr.mxu0 0.0
    %4203 = vmatpush2.msra.mxu0 0.0
    %4204 = vmatprep.subr.mxu0 0.0
    %4205 = vmatpush2.msra.mxu0 0.0
    %4206 = vmatprep.subr.mxu0 0.0
    %4207 = vmatpush2.msra.mxu0 0.0
    %4208 = vmatprep.subr.mxu0 0.0
    %4209 = vmatpush2.msra.mxu0 0.0
    %4210 = vmatprep.subr.mxu0 0.0
    %4211 = vmatpush2.msra.mxu0 0.0
    %4212 = vmatprep.subr.mxu0 0.0
    %4213 = vmatpush2.msra.mxu0 0.0
    %4214 = vmatprep.subr.mxu0 0.0
    %4215 = vmatpush2.msra.mxu0 0.0
    %4216 = vmatprep.subr.mxu0 0.0
    %4217 = vmatpush2.msra.mxu0 0.0
    %4218 = vmatprep.subr.mxu0 0.0
    %4219 = vmatpush2.msra.mxu0 0.0
    %4220 = vmatprep.subr.mxu0 0.0
    %4221 = vmatpush2.msra.mxu0 0.0
    %4222 = vmatprep.subr.mxu0 0.0
    %4223 = vmatpush2.msra.mxu0 0.0
    %4224 = vmatprep.subr.mxu0 0.0
    %4225 = vmatpush2.msra.mxu0 0.0
    %4226 = vmatprep.mubr.f32.mxu0 0.0
    %v4227 = vand.u32 %v85, 4294901760
    %v4228 = vsub.f32 %v85, %v4227
    %v4229 = vand.u32 %v4228, 4294901760
    %v4230 = vsub.f32 %v4228, %v4229
    %v4231 = vand.u32 %v4230, 4294901760
    %4232 = vmatmul.mubr.f32.gmra.mxu0 %v4231
    %v4233 = vpop.f32.mrf.mxu0
    %v4234 = vadd.f32 0.0, %v4233
    %v4235 = vpop.f32.mrf.mxu0
    %4236 = vmatprep.mubr.f32.mxu0 0.0
    %v4237 = vand.u32 %v88, 4294901760
    %v4238 = vsub.f32 %v88, %v4237
    %v4239 = vand.u32 %v4238, 4294901760
    %v4240 = vsub.f32 %v4238, %v4239
    %v4241 = vand.u32 %v4240, 4294901760
    %4242 = vmatmul.mubr.f32.gmra.mxu0 %v4241
    %v4243 = vpop.f32.mrf.mxu0
    %v4244 = vadd.f32 0.0, %v4243
    %v4245 = vpop.f32.mrf.mxu0
    %4246 = vdwg.mxu0
    %4247 = vmatprep.subr.mxu0 0.0
    %4248 = vmatpush1.msra.mxu0 0.0
    %4249 = vmatprep.subr.mxu0 0.0
    %4250 = vmatpush1.msra.mxu0 0.0
    %4251 = vmatprep.subr.mxu0 0.0
    %4252 = vmatpush1.msra.mxu0 0.0
    %4253 = vmatprep.subr.mxu0 0.0
    %4254 = vmatpush1.msra.mxu0 0.0
    %4255 = vmatprep.subr.mxu0 0.0
    %4256 = vmatpush1.msra.mxu0 0.0
    %4257 = vmatprep.subr.mxu0 0.0
    %4258 = vmatpush1.msra.mxu0 0.0
    %4259 = vmatprep.subr.mxu0 0.0
    %4260 = vmatpush1.msra.mxu0 0.0
    %4261 = vmatprep.subr.mxu0 0.0
    %4262 = vmatpush1.msra.mxu0 0.0
    %4263 = vmatprep.subr.mxu0 0.0
    %4264 = vmatpush1.msra.mxu0 0.0
    %4265 = vmatprep.subr.mxu0 0.0
    %4266 = vmatpush1.msra.mxu0 0.0
    %4267 = vmatprep.subr.mxu0 0.0
    %4268 = vmatpush1.msra.mxu0 0.0
    %4269 = vmatprep.subr.mxu0 0.0
    %4270 = vmatpush1.msra.mxu0 0.0
    %4271 = vmatprep.subr.mxu0 0.0
    %4272 = vmatpush1.msra.mxu0 0.0
    %4273 = vmatprep.subr.mxu0 0.0
    %4274 = vmatpush1.msra.mxu0 0.0
    %4275 = vmatprep.subr.mxu0 0.0
    %v4276 = vand.u32 %v4159, 4294901760
    %v4277 = vsub.f32 %v4159, %v4276
    %v4278 = vand.u32 %v4277, 4294901760
    %v4279 = vsub.f32 %v4277, %v4278
    %v4280 = vand.u32 %v4279, 4294901760
    %4281 = vmatpush1.msra.mxu0 %v4280
    %4282 = vmatprep.subr.mxu0 0.0
    %v4283 = vand.u32 %v4158, 4294901760
    %v4284 = vsub.f32 %v4158, %v4283
    %v4285 = vand.u32 %v4284, 4294901760
    %v4286 = vsub.f32 %v4284, %v4285
    %v4287 = vand.u32 %v4286, 4294901760
    %4288 = vmatpush1.msra.mxu0 %v4287
    %4289 = vmatprep.subr.mxu0 0.0
    %4290 = vmatpush2.msra.mxu0 0.0
    %4291 = vmatprep.subr.mxu0 0.0
    %4292 = vmatpush2.msra.mxu0 0.0
    %4293 = vmatprep.subr.mxu0 0.0
    %4294 = vmatpush2.msra.mxu0 0.0
    %4295 = vmatprep.subr.mxu0 0.0
    %4296 = vmatpush2.msra.mxu0 0.0
    %4297 = vmatprep.subr.mxu0 0.0
    %4298 = vmatpush2.msra.mxu0 0.0
    %4299 = vmatprep.subr.mxu0 0.0
    %4300 = vmatpush2.msra.mxu0 0.0
    %4301 = vmatprep.subr.mxu0 0.0
    %4302 = vmatpush2.msra.mxu0 0.0
    %4303 = vmatprep.subr.mxu0 0.0
    %4304 = vmatpush2.msra.mxu0 0.0
    %4305 = vmatprep.subr.mxu0 0.0
    %4306 = vmatpush2.msra.mxu0 0.0
    %4307 = vmatprep.subr.mxu0 0.0
    %4308 = vmatpush2.msra.mxu0 0.0
    %4309 = vmatprep.subr.mxu0 0.0
    %4310 = vmatpush2.msra.mxu0 0.0
    %4311 = vmatprep.subr.mxu0 0.0
    %4312 = vmatpush2.msra.mxu0 0.0
    %4313 = vmatprep.subr.mxu0 0.0
    %4314 = vmatpush2.msra.mxu0 0.0
    %4315 = vmatprep.subr.mxu0 0.0
    %4316 = vmatpush2.msra.mxu0 0.0
    %4317 = vmatprep.subr.mxu0 0.0
    %4318 = vmatpush2.msra.mxu0 0.0
    %4319 = vmatprep.subr.mxu0 0.0
    %4320 = vmatpush2.msra.mxu0 0.0
    %4321 = vmatprep.mubr.f32.mxu0 0.0
    %v4322 = vand.u32 %v85, 4294901760
    %4323 = vmatmul.mubr.f32.gmra.mxu0 %v4322
    %v4324 = vpop.f32.mrf.mxu0
    %v4325 = vadd.f32 %v4234, %v4324
    %v4326 = vpop.f32.mrf.mxu0
    %4327 = vmatprep.mubr.f32.mxu0 0.0
    %v4328 = vand.u32 %v88, 4294901760
    %4329 = vmatmul.mubr.f32.gmra.mxu0 %v4328
    %v4330 = vpop.f32.mrf.mxu0
    %v4331 = vadd.f32 %v4244, %v4330
    %v4332 = vpop.f32.mrf.mxu0
    %4333 = vdwg.mxu0
    %4334 = vmatprep.subr.mxu0 0.0
    %4335 = vmatpush1.msra.mxu0 0.0
    %4336 = vmatprep.subr.mxu0 0.0
    %4337 = vmatpush1.msra.mxu0 0.0
    %4338 = vmatprep.subr.mxu0 0.0
    %4339 = vmatpush1.msra.mxu0 0.0
    %4340 = vmatprep.subr.mxu0 0.0
    %4341 = vmatpush1.msra.mxu0 0.0
    %4342 = vmatprep.subr.mxu0 0.0
    %4343 = vmatpush1.msra.mxu0 0.0
    %4344 = vmatprep.subr.mxu0 0.0
    %4345 = vmatpush1.msra.mxu0 0.0
    %4346 = vmatprep.subr.mxu0 0.0
    %4347 = vmatpush1.msra.mxu0 0.0
    %4348 = vmatprep.subr.mxu0 0.0
    %4349 = vmatpush1.msra.mxu0 0.0
    %4350 = vmatprep.subr.mxu0 0.0
    %4351 = vmatpush1.msra.mxu0 0.0
    %4352 = vmatprep.subr.mxu0 0.0
    %4353 = vmatpush1.msra.mxu0 0.0
    %4354 = vmatprep.subr.mxu0 0.0
    %4355 = vmatpush1.msra.mxu0 0.0
    %4356 = vmatprep.subr.mxu0 0.0
    %4357 = vmatpush1.msra.mxu0 0.0
    %4358 = vmatprep.subr.mxu0 0.0
    %4359 = vmatpush1.msra.mxu0 0.0
    %4360 = vmatprep.subr.mxu0 0.0
    %4361 = vmatpush1.msra.mxu0 0.0
    %4362 = vmatprep.subr.mxu0 0.0
    %v4363 = vand.u32 %v4159, 4294901760
    %v4364 = vsub.f32 %v4159, %v4363
    %4365 = vmatpush1.msra.mxu0 %v4364
    %4366 = vmatprep.subr.mxu0 0.0
    %v4367 = vand.u32 %v4158, 4294901760
    %v4368 = vsub.f32 %v4158, %v4367
    %4369 = vmatpush1.msra.mxu0 %v4368
    %4370 = vmatprep.subr.mxu0 0.0
    %4371 = vmatpush2.msra.mxu0 0.0
    %4372 = vmatprep.subr.mxu0 0.0
    %4373 = vmatpush2.msra.mxu0 0.0
    %4374 = vmatprep.subr.mxu0 0.0
    %4375 = vmatpush2.msra.mxu0 0.0
    %4376 = vmatprep.subr.mxu0 0.0
    %4377 = vmatpush2.msra.mxu0 0.0
    %4378 = vmatprep.subr.mxu0 0.0
    %4379 = vmatpush2.msra.mxu0 0.0
    %4380 = vmatprep.subr.mxu0 0.0
    %4381 = vmatpush2.msra.mxu0 0.0
    %4382 = vmatprep.subr.mxu0 0.0
    %4383 = vmatpush2.msra.mxu0 0.0
    %4384 = vmatprep.subr.mxu0 0.0
    %4385 = vmatpush2.msra.mxu0 0.0
    %4386 = vmatprep.subr.mxu0 0.0
    %4387 = vmatpush2.msra.mxu0 0.0
    %4388 = vmatprep.subr.mxu0 0.0
    %4389 = vmatpush2.msra.mxu0 0.0
    %4390 = vmatprep.subr.mxu0 0.0
    %4391 = vmatpush2.msra.mxu0 0.0
    %4392 = vmatprep.subr.mxu0 0.0
    %4393 = vmatpush2.msra.mxu0 0.0
    %4394 = vmatprep.subr.mxu0 0.0
    %4395 = vmatpush2.msra.mxu0 0.0
    %4396 = vmatprep.subr.mxu0 0.0
    %4397 = vmatpush2.msra.mxu0 0.0
    %4398 = vmatprep.subr.mxu0 0.0
    %4399 = vmatpush2.msra.mxu0 0.0
    %4400 = vmatprep.subr.mxu0 0.0
    %4401 = vmatpush2.msra.mxu0 0.0
    %4402 = vmatprep.mubr.f32.mxu0 0.0
    %v4403 = vand.u32 %v85, 4294901760
    %v4404 = vsub.f32 %v85, %v4403
    %4405 = vmatmul.mubr.f32.gmra.mxu0 %v4404
    %v4406 = vpop.f32.mrf.mxu0
    %v4407 = vadd.f32 %v4325, %v4406
    %v4408 = vpop.f32.mrf.mxu0
    %4409 = vmatprep.mubr.f32.mxu0 0.0
    %v4410 = vand.u32 %v88, 4294901760
    %v4411 = vsub.f32 %v88, %v4410
    %4412 = vmatmul.mubr.f32.gmra.mxu0 %v4411
    %v4413 = vpop.f32.mrf.mxu0
    %v4414 = vadd.f32 %v4331, %v4413
    %v4415 = vpop.f32.mrf.mxu0
    %4416 = vdwg.mxu0
    %4417 = vmatprep.subr.mxu0 0.0
    %4418 = vmatpush1.msra.mxu0 0.0
    %4419 = vmatprep.subr.mxu0 0.0
    %4420 = vmatpush1.msra.mxu0 0.0
    %4421 = vmatprep.subr.mxu0 0.0
    %4422 = vmatpush1.msra.mxu0 0.0
    %4423 = vmatprep.subr.mxu0 0.0
    %4424 = vmatpush1.msra.mxu0 0.0
    %4425 = vmatprep.subr.mxu0 0.0
    %4426 = vmatpush1.msra.mxu0 0.0
    %4427 = vmatprep.subr.mxu0 0.0
    %4428 = vmatpush1.msra.mxu0 0.0
    %4429 = vmatprep.subr.mxu0 0.0
    %4430 = vmatpush1.msra.mxu0 0.0
    %4431 = vmatprep.subr.mxu0 0.0
    %4432 = vmatpush1.msra.mxu0 0.0
    %4433 = vmatprep.subr.mxu0 0.0
    %4434 = vmatpush1.msra.mxu0 0.0
    %4435 = vmatprep.subr.mxu0 0.0
    %4436 = vmatpush1.msra.mxu0 0.0
    %4437 = vmatprep.subr.mxu0 0.0
    %4438 = vmatpush1.msra.mxu0 0.0
    %4439 = vmatprep.subr.mxu0 0.0
    %4440 = vmatpush1.msra.mxu0 0.0
    %4441 = vmatprep.subr.mxu0 0.0
    %4442 = vmatpush1.msra.mxu0 0.0
    %4443 = vmatprep.subr.mxu0 0.0
    %4444 = vmatpush1.msra.mxu0 0.0
    %4445 = vmatprep.subr.mxu0 0.0
    %v4446 = vand.u32 %v4159, 4294901760
    %4447 = vmatpush1.msra.mxu0 %v4446
    %4448 = vmatprep.subr.mxu0 0.0
    %v4449 = vand.u32 %v4158, 4294901760
    %4450 = vmatpush1.msra.mxu0 %v4449
    %4451 = vmatprep.subr.mxu0 0.0
    %4452 = vmatpush2.msra.mxu0 0.0
    %4453 = vmatprep.subr.mxu0 0.0
    %4454 = vmatpush2.msra.mxu0 0.0
    %4455 = vmatprep.subr.mxu0 0.0
    %4456 = vmatpush2.msra.mxu0 0.0
    %4457 = vmatprep.subr.mxu0 0.0
    %4458 = vmatpush2.msra.mxu0 0.0
    %4459 = vmatprep.subr.mxu0 0.0
    %4460 = vmatpush2.msra.mxu0 0.0
    %4461 = vmatprep.subr.mxu0 0.0
    %4462 = vmatpush2.msra.mxu0 0.0
    %4463 = vmatprep.subr.mxu0 0.0
    %4464 = vmatpush2.msra.mxu0 0.0
    %4465 = vmatprep.subr.mxu0 0.0
    %4466 = vmatpush2.msra.mxu0 0.0
    %4467 = vmatprep.subr.mxu0 0.0
    %4468 = vmatpush2.msra.mxu0 0.0
    %4469 = vmatprep.subr.mxu0 0.0
    %4470 = vmatpush2.msra.mxu0 0.0
    %4471 = vmatprep.subr.mxu0 0.0
    %4472 = vmatpush2.msra.mxu0 0.0
    %4473 = vmatprep.subr.mxu0 0.0
    %4474 = vmatpush2.msra.mxu0 0.0
    %4475 = vmatprep.subr.mxu0 0.0
    %4476 = vmatpush2.msra.mxu0 0.0
    %4477 = vmatprep.subr.mxu0 0.0
    %4478 = vmatpush2.msra.mxu0 0.0
    %4479 = vmatprep.subr.mxu0 0.0
    %4480 = vmatpush2.msra.mxu0 0.0
    %4481 = vmatprep.subr.mxu0 0.0
    %4482 = vmatpush2.msra.mxu0 0.0
    %4483 = vmatprep.mubr.f32.mxu0 0.0
    %v4484 = vand.u32 %v85, 4294901760
    %v4485 = vsub.f32 %v85, %v4484
    %v4486 = vand.u32 %v4485, 4294901760
    %4487 = vmatmul.mubr.f32.gmra.mxu0 %v4486
    %v4488 = vpop.f32.mrf.mxu0
    %v4489 = vadd.f32 %v4407, %v4488
    %v4490 = vpop.f32.mrf.mxu0
    %4491 = vmatprep.mubr.f32.mxu0 0.0
    %v4492 = vand.u32 %v88, 4294901760
    %v4493 = vsub.f32 %v88, %v4492
    %v4494 = vand.u32 %v4493, 4294901760
    %4495 = vmatmul.mubr.f32.gmra.mxu0 %v4494
    %v4496 = vpop.f32.mrf.mxu0
    %v4497 = vadd.f32 %v4414, %v4496
    %v4498 = vpop.f32.mrf.mxu0
    %4499 = vdwg.mxu0
    %4500 = vmatprep.subr.mxu0 0.0
    %4501 = vmatpush1.msra.mxu0 0.0
    %4502 = vmatprep.subr.mxu0 0.0
    %4503 = vmatpush1.msra.mxu0 0.0
    %4504 = vmatprep.subr.mxu0 0.0
    %4505 = vmatpush1.msra.mxu0 0.0
    %4506 = vmatprep.subr.mxu0 0.0
    %4507 = vmatpush1.msra.mxu0 0.0
    %4508 = vmatprep.subr.mxu0 0.0
    %4509 = vmatpush1.msra.mxu0 0.0
    %4510 = vmatprep.subr.mxu0 0.0
    %4511 = vmatpush1.msra.mxu0 0.0
    %4512 = vmatprep.subr.mxu0 0.0
    %4513 = vmatpush1.msra.mxu0 0.0
    %4514 = vmatprep.subr.mxu0 0.0
    %4515 = vmatpush1.msra.mxu0 0.0
    %4516 = vmatprep.subr.mxu0 0.0
    %4517 = vmatpush1.msra.mxu0 0.0
    %4518 = vmatprep.subr.mxu0 0.0
    %4519 = vmatpush1.msra.mxu0 0.0
    %4520 = vmatprep.subr.mxu0 0.0
    %4521 = vmatpush1.msra.mxu0 0.0
    %4522 = vmatprep.subr.mxu0 0.0
    %4523 = vmatpush1.msra.mxu0 0.0
    %4524 = vmatprep.subr.mxu0 0.0
    %4525 = vmatpush1.msra.mxu0 0.0
    %4526 = vmatprep.subr.mxu0 0.0
    %4527 = vmatpush1.msra.mxu0 0.0
    %4528 = vmatprep.subr.mxu0 0.0
    %v4529 = vand.u32 %v4159, 4294901760
    %v4530 = vsub.f32 %v4159, %v4529
    %v4531 = vand.u32 %v4530, 4294901760
    %4532 = vmatpush1.msra.mxu0 %v4531
    %4533 = vmatprep.subr.mxu0 0.0
    %v4534 = vand.u32 %v4158, 4294901760
    %v4535 = vsub.f32 %v4158, %v4534
    %v4536 = vand.u32 %v4535, 4294901760
    %4537 = vmatpush1.msra.mxu0 %v4536
    %4538 = vmatprep.subr.mxu0 0.0
    %4539 = vmatpush2.msra.mxu0 0.0
    %4540 = vmatprep.subr.mxu0 0.0
    %4541 = vmatpush2.msra.mxu0 0.0
    %4542 = vmatprep.subr.mxu0 0.0
    %4543 = vmatpush2.msra.mxu0 0.0
    %4544 = vmatprep.subr.mxu0 0.0
    %4545 = vmatpush2.msra.mxu0 0.0
    %4546 = vmatprep.subr.mxu0 0.0
    %4547 = vmatpush2.msra.mxu0 0.0
    %4548 = vmatprep.subr.mxu0 0.0
    %4549 = vmatpush2.msra.mxu0 0.0
    %4550 = vmatprep.subr.mxu0 0.0
    %4551 = vmatpush2.msra.mxu0 0.0
    %4552 = vmatprep.subr.mxu0 0.0
    %4553 = vmatpush2.msra.mxu0 0.0
    %4554 = vmatprep.subr.mxu0 0.0
    %4555 = vmatpush2.msra.mxu0 0.0
    %4556 = vmatprep.subr.mxu0 0.0
    %4557 = vmatpush2.msra.mxu0 0.0
    %4558 = vmatprep.subr.mxu0 0.0
    %4559 = vmatpush2.msra.mxu0 0.0
    %4560 = vmatprep.subr.mxu0 0.0
    %4561 = vmatpush2.msra.mxu0 0.0
    %4562 = vmatprep.subr.mxu0 0.0
    %4563 = vmatpush2.msra.mxu0 0.0
    %4564 = vmatprep.subr.mxu0 0.0
    %4565 = vmatpush2.msra.mxu0 0.0
    %4566 = vmatprep.subr.mxu0 0.0
    %4567 = vmatpush2.msra.mxu0 0.0
    %4568 = vmatprep.subr.mxu0 0.0
    %4569 = vmatpush2.msra.mxu0 0.0
    %4570 = vmatprep.mubr.f32.mxu0 0.0
    %v4571 = vand.u32 %v85, 4294901760
    %4572 = vmatmul.mubr.f32.gmra.mxu0 %v4571
    %v4573 = vpop.f32.mrf.mxu0
    %v4574 = vadd.f32 %v4489, %v4573
    %v4575 = vpop.f32.mrf.mxu0
    %4576 = vmatprep.mubr.f32.mxu0 0.0
    %v4577 = vand.u32 %v88, 4294901760
    %4578 = vmatmul.mubr.f32.gmra.mxu0 %v4577
    %v4579 = vpop.f32.mrf.mxu0
    %v4580 = vadd.f32 %v4497, %v4579
    %v4581 = vpop.f32.mrf.mxu0
    %4582 = vdwg.mxu0
    %4583 = vmatprep.subr.mxu0 0.0
    %4584 = vmatpush1.msra.mxu0 0.0
    %4585 = vmatprep.subr.mxu0 0.0
    %4586 = vmatpush1.msra.mxu0 0.0
    %4587 = vmatprep.subr.mxu0 0.0
    %4588 = vmatpush1.msra.mxu0 0.0
    %4589 = vmatprep.subr.mxu0 0.0
    %4590 = vmatpush1.msra.mxu0 0.0
    %4591 = vmatprep.subr.mxu0 0.0
    %4592 = vmatpush1.msra.mxu0 0.0
    %4593 = vmatprep.subr.mxu0 0.0
    %4594 = vmatpush1.msra.mxu0 0.0
    %4595 = vmatprep.subr.mxu0 0.0
    %4596 = vmatpush1.msra.mxu0 0.0
    %4597 = vmatprep.subr.mxu0 0.0
    %4598 = vmatpush1.msra.mxu0 0.0
    %4599 = vmatprep.subr.mxu0 0.0
    %4600 = vmatpush1.msra.mxu0 0.0
    %4601 = vmatprep.subr.mxu0 0.0
    %4602 = vmatpush1.msra.mxu0 0.0
    %4603 = vmatprep.subr.mxu0 0.0
    %4604 = vmatpush1.msra.mxu0 0.0
    %4605 = vmatprep.subr.mxu0 0.0
    %4606 = vmatpush1.msra.mxu0 0.0
    %4607 = vmatprep.subr.mxu0 0.0
    %4608 = vmatpush1.msra.mxu0 0.0
    %4609 = vmatprep.subr.mxu0 0.0
    %4610 = vmatpush1.msra.mxu0 0.0
    %4611 = vmatprep.subr.mxu0 0.0
    %v4612 = vand.u32 %v4159, 4294901760
    %4613 = vmatpush1.msra.mxu0 %v4612
    %4614 = vmatprep.subr.mxu0 0.0
    %v4615 = vand.u32 %v4158, 4294901760
    %4616 = vmatpush1.msra.mxu0 %v4615
    %4617 = vmatprep.subr.mxu0 0.0
    %4618 = vmatpush2.msra.mxu0 0.0
    %4619 = vmatprep.subr.mxu0 0.0
    %4620 = vmatpush2.msra.mxu0 0.0
    %4621 = vmatprep.subr.mxu0 0.0
    %4622 = vmatpush2.msra.mxu0 0.0
    %4623 = vmatprep.subr.mxu0 0.0
    %4624 = vmatpush2.msra.mxu0 0.0
    %4625 = vmatprep.subr.mxu0 0.0
    %4626 = vmatpush2.msra.mxu0 0.0
    %4627 = vmatprep.subr.mxu0 0.0
    %4628 = vmatpush2.msra.mxu0 0.0
    %4629 = vmatprep.subr.mxu0 0.0
    %4630 = vmatpush2.msra.mxu0 0.0
    %4631 = vmatprep.subr.mxu0 0.0
    %4632 = vmatpush2.msra.mxu0 0.0
    %4633 = vmatprep.subr.mxu0 0.0
    %4634 = vmatpush2.msra.mxu0 0.0
    %4635 = vmatprep.subr.mxu0 0.0
    %4636 = vmatpush2.msra.mxu0 0.0
    %4637 = vmatprep.subr.mxu0 0.0
    %4638 = vmatpush2.msra.mxu0 0.0
    %4639 = vmatprep.subr.mxu0 0.0
    %4640 = vmatpush2.msra.mxu0 0.0
    %4641 = vmatprep.subr.mxu0 0.0
    %4642 = vmatpush2.msra.mxu0 0.0
    %4643 = vmatprep.subr.mxu0 0.0
    %4644 = vmatpush2.msra.mxu0 0.0
    %4645 = vmatprep.subr.mxu0 0.0
    %4646 = vmatpush2.msra.mxu0 0.0
    %4647 = vmatprep.subr.mxu0 0.0
    %4648 = vmatpush2.msra.mxu0 0.0
    %4649 = vmatprep.mubr.f32.mxu0 0.0
    %v4650 = vand.u32 %v85, 4294901760
    %4651 = vmatmul.mubr.f32.gmra.mxu0 %v4650
    %v4652 = vpop.f32.mrf.mxu0
    %v4653 = vadd.f32 %v4574, %v4652
    %v4654 = vpop.f32.mrf.mxu0
    %4655 = vmatprep.mubr.f32.mxu0 0.0
    %v4656 = vand.u32 %v88, 4294901760
    %4657 = vmatmul.mubr.f32.gmra.mxu0 %v4656
    %v4658 = vpop.f32.mrf.mxu0
    %v4659 = vadd.f32 %v4580, %v4658
    %v4660 = vpop.f32.mrf.mxu0
    %4661 = vdwg.mxu0
    %v4663 = vsel %vm83, %v4653, 0
    %v4666 = vsel %vm83, %v4659, 0
    %4668 = vmatprep.subr.mxu0 0.0
    %4669 = vmatpush1.msra.mxu0 0.0
    %4670 = vmatprep.subr.mxu0 0.0
    %4671 = vmatpush1.msra.mxu0 0.0
    %4672 = vmatprep.subr.mxu0 0.0
    %4673 = vmatpush1.msra.mxu0 0.0
    %4674 = vmatprep.subr.mxu0 0.0
    %4675 = vmatpush1.msra.mxu0 0.0
    %4676 = vmatprep.subr.mxu0 0.0
    %4677 = vmatpush1.msra.mxu0 0.0
    %4678 = vmatprep.subr.mxu0 0.0
    %4679 = vmatpush1.msra.mxu0 0.0
    %4680 = vmatprep.subr.mxu0 0.0
    %4681 = vmatpush1.msra.mxu0 0.0
    %4682 = vmatprep.subr.mxu0 0.0
    %4683 = vmatpush1.msra.mxu0 0.0
    %4684 = vmatprep.subr.mxu0 0.0
    %4685 = vmatpush1.msra.mxu0 0.0
    %4686 = vmatprep.subr.mxu0 0.0
    %4687 = vmatpush1.msra.mxu0 0.0
    %4688 = vmatprep.subr.mxu0 0.0
    %4689 = vmatpush1.msra.mxu0 0.0
    %4690 = vmatprep.subr.mxu0 0.0
    %4691 = vmatpush1.msra.mxu0 0.0
    %4692 = vmatprep.subr.mxu0 0.0
    %4693 = vmatpush1.msra.mxu0 0.0
    %4694 = vmatprep.subr.mxu0 0.0
    %4695 = vmatpush1.msra.mxu0 0.0
    %4696 = vmatprep.subr.mxu0 0.0
    %v4697 = vand.u32 %v76, 4294901760
    %4698 = vmatpush1.msra.mxu0 %v4697
    %4699 = vmatprep.subr.mxu0 0.0
    %v4700 = vand.u32 %v75, 4294901760
    %4701 = vmatpush1.msra.mxu0 %v4700
    %4702 = vmatprep.subr.mxu0 0.0
    %4703 = vmatpush2.msra.mxu0 0.0
    %4704 = vmatprep.subr.mxu0 0.0
    %4705 = vmatpush2.msra.mxu0 0.0
    %4706 = vmatprep.subr.mxu0 0.0
    %4707 = vmatpush2.msra.mxu0 0.0
    %4708 = vmatprep.subr.mxu0 0.0
    %4709 = vmatpush2.msra.mxu0 0.0
    %4710 = vmatprep.subr.mxu0 0.0
    %4711 = vmatpush2.msra.mxu0 0.0
    %4712 = vmatprep.subr.mxu0 0.0
    %4713 = vmatpush2.msra.mxu0 0.0
    %4714 = vmatprep.subr.mxu0 0.0
    %4715 = vmatpush2.msra.mxu0 0.0
    %4716 = vmatprep.subr.mxu0 0.0
    %4717 = vmatpush2.msra.mxu0 0.0
    %4718 = vmatprep.subr.mxu0 0.0
    %4719 = vmatpush2.msra.mxu0 0.0
    %4720 = vmatprep.subr.mxu0 0.0
    %4721 = vmatpush2.msra.mxu0 0.0
    %4722 = vmatprep.subr.mxu0 0.0
    %4723 = vmatpush2.msra.mxu0 0.0
    %4724 = vmatprep.subr.mxu0 0.0
    %4725 = vmatpush2.msra.mxu0 0.0
    %4726 = vmatprep.subr.mxu0 0.0
    %4727 = vmatpush2.msra.mxu0 0.0
    %4728 = vmatprep.subr.mxu0 0.0
    %4729 = vmatpush2.msra.mxu0 0.0
    %4730 = vmatprep.subr.mxu0 0.0
    %4731 = vmatpush2.msra.mxu0 0.0
    %4732 = vmatprep.subr.mxu0 0.0
    %4733 = vmatpush2.msra.mxu0 0.0
    %4734 = vmatprep.mubr.f32.mxu0 0.0
    %v4735 = vand.u32 %v4663, 4294901760
    %v4736 = vsub.f32 %v4663, %v4735
    %v4737 = vand.u32 %v4736, 4294901760
    %v4738 = vsub.f32 %v4736, %v4737
    %v4739 = vand.u32 %v4738, 4294901760
    %4740 = vmatmul.mubr.f32.gmra.mxu0 %v4739
    %v4741 = vpop.f32.mrf.mxu0
    %v4742 = vadd.f32 0.0, %v4741
    %v4743 = vpop.f32.mrf.mxu0
    %4744 = vmatprep.mubr.f32.mxu0 0.0
    %v4745 = vand.u32 %v4666, 4294901760
    %v4746 = vsub.f32 %v4666, %v4745
    %v4747 = vand.u32 %v4746, 4294901760
    %v4748 = vsub.f32 %v4746, %v4747
    %v4749 = vand.u32 %v4748, 4294901760
    %4750 = vmatmul.mubr.f32.gmra.mxu0 %v4749
    %v4751 = vpop.f32.mrf.mxu0
    %v4752 = vadd.f32 0.0, %v4751
    %v4753 = vpop.f32.mrf.mxu0
    %4754 = vdwg.mxu0
    %4755 = vmatprep.subr.mxu0 0.0
    %4756 = vmatpush1.msra.mxu0 0.0
    %4757 = vmatprep.subr.mxu0 0.0
    %4758 = vmatpush1.msra.mxu0 0.0
    %4759 = vmatprep.subr.mxu0 0.0
    %4760 = vmatpush1.msra.mxu0 0.0
    %4761 = vmatprep.subr.mxu0 0.0
    %4762 = vmatpush1.msra.mxu0 0.0
    %4763 = vmatprep.subr.mxu0 0.0
    %4764 = vmatpush1.msra.mxu0 0.0
    %4765 = vmatprep.subr.mxu0 0.0
    %4766 = vmatpush1.msra.mxu0 0.0
    %4767 = vmatprep.subr.mxu0 0.0
    %4768 = vmatpush1.msra.mxu0 0.0
    %4769 = vmatprep.subr.mxu0 0.0
    %4770 = vmatpush1.msra.mxu0 0.0
    %4771 = vmatprep.subr.mxu0 0.0
    %4772 = vmatpush1.msra.mxu0 0.0
    %4773 = vmatprep.subr.mxu0 0.0
    %4774 = vmatpush1.msra.mxu0 0.0
    %4775 = vmatprep.subr.mxu0 0.0
    %4776 = vmatpush1.msra.mxu0 0.0
    %4777 = vmatprep.subr.mxu0 0.0
    %4778 = vmatpush1.msra.mxu0 0.0
    %4779 = vmatprep.subr.mxu0 0.0
    %4780 = vmatpush1.msra.mxu0 0.0
    %4781 = vmatprep.subr.mxu0 0.0
    %4782 = vmatpush1.msra.mxu0 0.0
    %4783 = vmatprep.subr.mxu0 0.0
    %v4784 = vand.u32 %v76, 4294901760
    %v4785 = vsub.f32 %v76, %v4784
    %v4786 = vand.u32 %v4785, 4294901760
    %v4787 = vsub.f32 %v4785, %v4786
    %v4788 = vand.u32 %v4787, 4294901760
    %4789 = vmatpush1.msra.mxu0 %v4788
    %4790 = vmatprep.subr.mxu0 0.0
    %v4791 = vand.u32 %v75, 4294901760
    %v4792 = vsub.f32 %v75, %v4791
    %v4793 = vand.u32 %v4792, 4294901760
    %v4794 = vsub.f32 %v4792, %v4793
    %v4795 = vand.u32 %v4794, 4294901760
    %4796 = vmatpush1.msra.mxu0 %v4795
    %4797 = vmatprep.subr.mxu0 0.0
    %4798 = vmatpush2.msra.mxu0 0.0
    %4799 = vmatprep.subr.mxu0 0.0
    %4800 = vmatpush2.msra.mxu0 0.0
    %4801 = vmatprep.subr.mxu0 0.0
    %4802 = vmatpush2.msra.mxu0 0.0
    %4803 = vmatprep.subr.mxu0 0.0
    %4804 = vmatpush2.msra.mxu0 0.0
    %4805 = vmatprep.subr.mxu0 0.0
    %4806 = vmatpush2.msra.mxu0 0.0
    %4807 = vmatprep.subr.mxu0 0.0
    %4808 = vmatpush2.msra.mxu0 0.0
    %4809 = vmatprep.subr.mxu0 0.0
    %4810 = vmatpush2.msra.mxu0 0.0
    %4811 = vmatprep.subr.mxu0 0.0
    %4812 = vmatpush2.msra.mxu0 0.0
    %4813 = vmatprep.subr.mxu0 0.0
    %4814 = vmatpush2.msra.mxu0 0.0
    %4815 = vmatprep.subr.mxu0 0.0
    %4816 = vmatpush2.msra.mxu0 0.0
    %4817 = vmatprep.subr.mxu0 0.0
    %4818 = vmatpush2.msra.mxu0 0.0
    %4819 = vmatprep.subr.mxu0 0.0
    %4820 = vmatpush2.msra.mxu0 0.0
    %4821 = vmatprep.subr.mxu0 0.0
    %4822 = vmatpush2.msra.mxu0 0.0
    %4823 = vmatprep.subr.mxu0 0.0
    %4824 = vmatpush2.msra.mxu0 0.0
    %4825 = vmatprep.subr.mxu0 0.0
    %4826 = vmatpush2.msra.mxu0 0.0
    %4827 = vmatprep.subr.mxu0 0.0
    %4828 = vmatpush2.msra.mxu0 0.0
    %4829 = vmatprep.mubr.f32.mxu0 0.0
    %v4830 = vand.u32 %v4663, 4294901760
    %4831 = vmatmul.mubr.f32.gmra.mxu0 %v4830
    %v4832 = vpop.f32.mrf.mxu0
    %v4833 = vadd.f32 %v4742, %v4832
    %v4834 = vpop.f32.mrf.mxu0
    %4835 = vmatprep.mubr.f32.mxu0 0.0
    %v4836 = vand.u32 %v4666, 4294901760
    %4837 = vmatmul.mubr.f32.gmra.mxu0 %v4836
    %v4838 = vpop.f32.mrf.mxu0
    %v4839 = vadd.f32 %v4752, %v4838
    %v4840 = vpop.f32.mrf.mxu0
    %4841 = vdwg.mxu0
    %4842 = vmatprep.subr.mxu0 0.0
    %4843 = vmatpush1.msra.mxu0 0.0
    %4844 = vmatprep.subr.mxu0 0.0
    %4845 = vmatpush1.msra.mxu0 0.0
    %4846 = vmatprep.subr.mxu0 0.0
    %4847 = vmatpush1.msra.mxu0 0.0
    %4848 = vmatprep.subr.mxu0 0.0
    %4849 = vmatpush1.msra.mxu0 0.0
    %4850 = vmatprep.subr.mxu0 0.0
    %4851 = vmatpush1.msra.mxu0 0.0
    %4852 = vmatprep.subr.mxu0 0.0
    %4853 = vmatpush1.msra.mxu0 0.0
    %4854 = vmatprep.subr.mxu0 0.0
    %4855 = vmatpush1.msra.mxu0 0.0
    %4856 = vmatprep.subr.mxu0 0.0
    %4857 = vmatpush1.msra.mxu0 0.0
    %4858 = vmatprep.subr.mxu0 0.0
    %4859 = vmatpush1.msra.mxu0 0.0
    %4860 = vmatprep.subr.mxu0 0.0
    %4861 = vmatpush1.msra.mxu0 0.0
    %4862 = vmatprep.subr.mxu0 0.0
    %4863 = vmatpush1.msra.mxu0 0.0
    %4864 = vmatprep.subr.mxu0 0.0
    %4865 = vmatpush1.msra.mxu0 0.0
    %4866 = vmatprep.subr.mxu0 0.0
    %4867 = vmatpush1.msra.mxu0 0.0
    %4868 = vmatprep.subr.mxu0 0.0
    %4869 = vmatpush1.msra.mxu0 0.0
    %4870 = vmatprep.subr.mxu0 0.0
    %v4871 = vand.u32 %v76, 4294901760
    %v4872 = vsub.f32 %v76, %v4871
    %4873 = vmatpush1.msra.mxu0 %v4872
    %4874 = vmatprep.subr.mxu0 0.0
    %v4875 = vand.u32 %v75, 4294901760
    %v4876 = vsub.f32 %v75, %v4875
    %4877 = vmatpush1.msra.mxu0 %v4876
    %4878 = vmatprep.subr.mxu0 0.0
    %4879 = vmatpush2.msra.mxu0 0.0
    %4880 = vmatprep.subr.mxu0 0.0
    %4881 = vmatpush2.msra.mxu0 0.0
    %4882 = vmatprep.subr.mxu0 0.0
    %4883 = vmatpush2.msra.mxu0 0.0
    %4884 = vmatprep.subr.mxu0 0.0
    %4885 = vmatpush2.msra.mxu0 0.0
    %4886 = vmatprep.subr.mxu0 0.0
    %4887 = vmatpush2.msra.mxu0 0.0
    %4888 = vmatprep.subr.mxu0 0.0
    %4889 = vmatpush2.msra.mxu0 0.0
    %4890 = vmatprep.subr.mxu0 0.0
    %4891 = vmatpush2.msra.mxu0 0.0
    %4892 = vmatprep.subr.mxu0 0.0
    %4893 = vmatpush2.msra.mxu0 0.0
    %4894 = vmatprep.subr.mxu0 0.0
    %4895 = vmatpush2.msra.mxu0 0.0
    %4896 = vmatprep.subr.mxu0 0.0
    %4897 = vmatpush2.msra.mxu0 0.0
    %4898 = vmatprep.subr.mxu0 0.0
    %4899 = vmatpush2.msra.mxu0 0.0
    %4900 = vmatprep.subr.mxu0 0.0
    %4901 = vmatpush2.msra.mxu0 0.0
    %4902 = vmatprep.subr.mxu0 0.0
    %4903 = vmatpush2.msra.mxu0 0.0
    %4904 = vmatprep.subr.mxu0 0.0
    %4905 = vmatpush2.msra.mxu0 0.0
    %4906 = vmatprep.subr.mxu0 0.0
    %4907 = vmatpush2.msra.mxu0 0.0
    %4908 = vmatprep.subr.mxu0 0.0
    %4909 = vmatpush2.msra.mxu0 0.0
    %4910 = vmatprep.mubr.f32.mxu0 0.0
    %v4911 = vand.u32 %v4663, 4294901760
    %v4912 = vsub.f32 %v4663, %v4911
    %4913 = vmatmul.mubr.f32.gmra.mxu0 %v4912
    %v4914 = vpop.f32.mrf.mxu0
    %v4915 = vadd.f32 %v4833, %v4914
    %v4916 = vpop.f32.mrf.mxu0
    %4917 = vmatprep.mubr.f32.mxu0 0.0
    %v4918 = vand.u32 %v4666, 4294901760
    %v4919 = vsub.f32 %v4666, %v4918
    %4920 = vmatmul.mubr.f32.gmra.mxu0 %v4919
    %v4921 = vpop.f32.mrf.mxu0
    %v4922 = vadd.f32 %v4839, %v4921
    %v4923 = vpop.f32.mrf.mxu0
    %4924 = vdwg.mxu0
    %4925 = vmatprep.subr.mxu0 0.0
    %4926 = vmatpush1.msra.mxu0 0.0
    %4927 = vmatprep.subr.mxu0 0.0
    %4928 = vmatpush1.msra.mxu0 0.0
    %4929 = vmatprep.subr.mxu0 0.0
    %4930 = vmatpush1.msra.mxu0 0.0
    %4931 = vmatprep.subr.mxu0 0.0
    %4932 = vmatpush1.msra.mxu0 0.0
    %4933 = vmatprep.subr.mxu0 0.0
    %4934 = vmatpush1.msra.mxu0 0.0
    %4935 = vmatprep.subr.mxu0 0.0
    %4936 = vmatpush1.msra.mxu0 0.0
    %4937 = vmatprep.subr.mxu0 0.0
    %4938 = vmatpush1.msra.mxu0 0.0
    %4939 = vmatprep.subr.mxu0 0.0
    %4940 = vmatpush1.msra.mxu0 0.0
    %4941 = vmatprep.subr.mxu0 0.0
    %4942 = vmatpush1.msra.mxu0 0.0
    %4943 = vmatprep.subr.mxu0 0.0
    %4944 = vmatpush1.msra.mxu0 0.0
    %4945 = vmatprep.subr.mxu0 0.0
    %4946 = vmatpush1.msra.mxu0 0.0
    %4947 = vmatprep.subr.mxu0 0.0
    %4948 = vmatpush1.msra.mxu0 0.0
    %4949 = vmatprep.subr.mxu0 0.0
    %4950 = vmatpush1.msra.mxu0 0.0
    %4951 = vmatprep.subr.mxu0 0.0
    %4952 = vmatpush1.msra.mxu0 0.0
    %4953 = vmatprep.subr.mxu0 0.0
    %v4954 = vand.u32 %v76, 4294901760
    %4955 = vmatpush1.msra.mxu0 %v4954
    %4956 = vmatprep.subr.mxu0 0.0
    %v4957 = vand.u32 %v75, 4294901760
    %4958 = vmatpush1.msra.mxu0 %v4957
    %4959 = vmatprep.subr.mxu0 0.0
    %4960 = vmatpush2.msra.mxu0 0.0
    %4961 = vmatprep.subr.mxu0 0.0
    %4962 = vmatpush2.msra.mxu0 0.0
    %4963 = vmatprep.subr.mxu0 0.0
    %4964 = vmatpush2.msra.mxu0 0.0
    %4965 = vmatprep.subr.mxu0 0.0
    %4966 = vmatpush2.msra.mxu0 0.0
    %4967 = vmatprep.subr.mxu0 0.0
    %4968 = vmatpush2.msra.mxu0 0.0
    %4969 = vmatprep.subr.mxu0 0.0
    %4970 = vmatpush2.msra.mxu0 0.0
    %4971 = vmatprep.subr.mxu0 0.0
    %4972 = vmatpush2.msra.mxu0 0.0
    %4973 = vmatprep.subr.mxu0 0.0
    %4974 = vmatpush2.msra.mxu0 0.0
    %4975 = vmatprep.subr.mxu0 0.0
    %4976 = vmatpush2.msra.mxu0 0.0
    %4977 = vmatprep.subr.mxu0 0.0
    %4978 = vmatpush2.msra.mxu0 0.0
    %4979 = vmatprep.subr.mxu0 0.0
    %4980 = vmatpush2.msra.mxu0 0.0
    %4981 = vmatprep.subr.mxu0 0.0
    %4982 = vmatpush2.msra.mxu0 0.0
    %4983 = vmatprep.subr.mxu0 0.0
    %4984 = vmatpush2.msra.mxu0 0.0
    %4985 = vmatprep.subr.mxu0 0.0
    %4986 = vmatpush2.msra.mxu0 0.0
    %4987 = vmatprep.subr.mxu0 0.0
    %4988 = vmatpush2.msra.mxu0 0.0
    %4989 = vmatprep.subr.mxu0 0.0
    %4990 = vmatpush2.msra.mxu0 0.0
    %4991 = vmatprep.mubr.f32.mxu0 0.0
    %v4992 = vand.u32 %v4663, 4294901760
    %v4993 = vsub.f32 %v4663, %v4992
    %v4994 = vand.u32 %v4993, 4294901760
    %4995 = vmatmul.mubr.f32.gmra.mxu0 %v4994
    %v4996 = vpop.f32.mrf.mxu0
    %v4997 = vadd.f32 %v4915, %v4996
    %v4998 = vpop.f32.mrf.mxu0
    %4999 = vmatprep.mubr.f32.mxu0 0.0
    %v5000 = vand.u32 %v4666, 4294901760
    %v5001 = vsub.f32 %v4666, %v5000
    %v5002 = vand.u32 %v5001, 4294901760
    %5003 = vmatmul.mubr.f32.gmra.mxu0 %v5002
    %v5004 = vpop.f32.mrf.mxu0
    %v5005 = vadd.f32 %v4922, %v5004
    %v5006 = vpop.f32.mrf.mxu0
    %5007 = vdwg.mxu0
    %5008 = vmatprep.subr.mxu0 0.0
    %5009 = vmatpush1.msra.mxu0 0.0
    %5010 = vmatprep.subr.mxu0 0.0
    %5011 = vmatpush1.msra.mxu0 0.0
    %5012 = vmatprep.subr.mxu0 0.0
    %5013 = vmatpush1.msra.mxu0 0.0
    %5014 = vmatprep.subr.mxu0 0.0
    %5015 = vmatpush1.msra.mxu0 0.0
    %5016 = vmatprep.subr.mxu0 0.0
    %5017 = vmatpush1.msra.mxu0 0.0
    %5018 = vmatprep.subr.mxu0 0.0
    %5019 = vmatpush1.msra.mxu0 0.0
    %5020 = vmatprep.subr.mxu0 0.0
    %5021 = vmatpush1.msra.mxu0 0.0
    %5022 = vmatprep.subr.mxu0 0.0
    %5023 = vmatpush1.msra.mxu0 0.0
    %5024 = vmatprep.subr.mxu0 0.0
    %5025 = vmatpush1.msra.mxu0 0.0
    %5026 = vmatprep.subr.mxu0 0.0
    %5027 = vmatpush1.msra.mxu0 0.0
    %5028 = vmatprep.subr.mxu0 0.0
    %5029 = vmatpush1.msra.mxu0 0.0
    %5030 = vmatprep.subr.mxu0 0.0
    %5031 = vmatpush1.msra.mxu0 0.0
    %5032 = vmatprep.subr.mxu0 0.0
    %5033 = vmatpush1.msra.mxu0 0.0
    %5034 = vmatprep.subr.mxu0 0.0
    %5035 = vmatpush1.msra.mxu0 0.0
    %5036 = vmatprep.subr.mxu0 0.0
    %v5037 = vand.u32 %v76, 4294901760
    %v5038 = vsub.f32 %v76, %v5037
    %v5039 = vand.u32 %v5038, 4294901760
    %5040 = vmatpush1.msra.mxu0 %v5039
    %5041 = vmatprep.subr.mxu0 0.0
    %v5042 = vand.u32 %v75, 4294901760
    %v5043 = vsub.f32 %v75, %v5042
    %v5044 = vand.u32 %v5043, 4294901760
    %5045 = vmatpush1.msra.mxu0 %v5044
    %5046 = vmatprep.subr.mxu0 0.0
    %5047 = vmatpush2.msra.mxu0 0.0
    %5048 = vmatprep.subr.mxu0 0.0
    %5049 = vmatpush2.msra.mxu0 0.0
    %5050 = vmatprep.subr.mxu0 0.0
    %5051 = vmatpush2.msra.mxu0 0.0
    %5052 = vmatprep.subr.mxu0 0.0
    %5053 = vmatpush2.msra.mxu0 0.0
    %5054 = vmatprep.subr.mxu0 0.0
    %5055 = vmatpush2.msra.mxu0 0.0
    %5056 = vmatprep.subr.mxu0 0.0
    %5057 = vmatpush2.msra.mxu0 0.0
    %5058 = vmatprep.subr.mxu0 0.0
    %5059 = vmatpush2.msra.mxu0 0.0
    %5060 = vmatprep.subr.mxu0 0.0
    %5061 = vmatpush2.msra.mxu0 0.0
    %5062 = vmatprep.subr.mxu0 0.0
    %5063 = vmatpush2.msra.mxu0 0.0
    %5064 = vmatprep.subr.mxu0 0.0
    %5065 = vmatpush2.msra.mxu0 0.0
    %5066 = vmatprep.subr.mxu0 0.0
    %5067 = vmatpush2.msra.mxu0 0.0
    %5068 = vmatprep.subr.mxu0 0.0
    %5069 = vmatpush2.msra.mxu0 0.0
    %5070 = vmatprep.subr.mxu0 0.0
    %5071 = vmatpush2.msra.mxu0 0.0
    %5072 = vmatprep.subr.mxu0 0.0
    %5073 = vmatpush2.msra.mxu0 0.0
    %5074 = vmatprep.subr.mxu0 0.0
    %5075 = vmatpush2.msra.mxu0 0.0
    %5076 = vmatprep.subr.mxu0 0.0
    %5077 = vmatpush2.msra.mxu0 0.0
    %5078 = vmatprep.mubr.f32.mxu0 0.0
    %v5079 = vand.u32 %v4663, 4294901760
    %5080 = vmatmul.mubr.f32.gmra.mxu0 %v5079
    %v5081 = vpop.f32.mrf.mxu0
    %v5082 = vadd.f32 %v4997, %v5081
    %v5083 = vpop.f32.mrf.mxu0
    %5084 = vmatprep.mubr.f32.mxu0 0.0
    %v5085 = vand.u32 %v4666, 4294901760
    %5086 = vmatmul.mubr.f32.gmra.mxu0 %v5085
    %v5087 = vpop.f32.mrf.mxu0
    %v5088 = vadd.f32 %v5005, %v5087
    %v5089 = vpop.f32.mrf.mxu0
    %5090 = vdwg.mxu0
    %5091 = vmatprep.subr.mxu0 0.0
    %5092 = vmatpush1.msra.mxu0 0.0
    %5093 = vmatprep.subr.mxu0 0.0
    %5094 = vmatpush1.msra.mxu0 0.0
    %5095 = vmatprep.subr.mxu0 0.0
    %5096 = vmatpush1.msra.mxu0 0.0
    %5097 = vmatprep.subr.mxu0 0.0
    %5098 = vmatpush1.msra.mxu0 0.0
    %5099 = vmatprep.subr.mxu0 0.0
    %5100 = vmatpush1.msra.mxu0 0.0
    %5101 = vmatprep.subr.mxu0 0.0
    %5102 = vmatpush1.msra.mxu0 0.0
    %5103 = vmatprep.subr.mxu0 0.0
    %5104 = vmatpush1.msra.mxu0 0.0
    %5105 = vmatprep.subr.mxu0 0.0
    %5106 = vmatpush1.msra.mxu0 0.0
    %5107 = vmatprep.subr.mxu0 0.0
    %5108 = vmatpush1.msra.mxu0 0.0
    %5109 = vmatprep.subr.mxu0 0.0
    %5110 = vmatpush1.msra.mxu0 0.0
    %5111 = vmatprep.subr.mxu0 0.0
    %5112 = vmatpush1.msra.mxu0 0.0
    %5113 = vmatprep.subr.mxu0 0.0
    %5114 = vmatpush1.msra.mxu0 0.0
    %5115 = vmatprep.subr.mxu0 0.0
    %5116 = vmatpush1.msra.mxu0 0.0
    %5117 = vmatprep.subr.mxu0 0.0
    %5118 = vmatpush1.msra.mxu0 0.0
    %5119 = vmatprep.subr.mxu0 0.0
    %v5120 = vand.u32 %v76, 4294901760
    %5121 = vmatpush1.msra.mxu0 %v5120
    %5122 = vmatprep.subr.mxu0 0.0
    %v5123 = vand.u32 %v75, 4294901760
    %5124 = vmatpush1.msra.mxu0 %v5123
    %5125 = vmatprep.subr.mxu0 0.0
    %5126 = vmatpush2.msra.mxu0 0.0
    %5127 = vmatprep.subr.mxu0 0.0
    %5128 = vmatpush2.msra.mxu0 0.0
    %5129 = vmatprep.subr.mxu0 0.0
    %5130 = vmatpush2.msra.mxu0 0.0
    %5131 = vmatprep.subr.mxu0 0.0
    %5132 = vmatpush2.msra.mxu0 0.0
    %5133 = vmatprep.subr.mxu0 0.0
    %5134 = vmatpush2.msra.mxu0 0.0
    %5135 = vmatprep.subr.mxu0 0.0
    %5136 = vmatpush2.msra.mxu0 0.0
    %5137 = vmatprep.subr.mxu0 0.0
    %5138 = vmatpush2.msra.mxu0 0.0
    %5139 = vmatprep.subr.mxu0 0.0
    %5140 = vmatpush2.msra.mxu0 0.0
    %5141 = vmatprep.subr.mxu0 0.0
    %5142 = vmatpush2.msra.mxu0 0.0
    %5143 = vmatprep.subr.mxu0 0.0
    %5144 = vmatpush2.msra.mxu0 0.0
    %5145 = vmatprep.subr.mxu0 0.0
    %5146 = vmatpush2.msra.mxu0 0.0
    %5147 = vmatprep.subr.mxu0 0.0
    %5148 = vmatpush2.msra.mxu0 0.0
    %5149 = vmatprep.subr.mxu0 0.0
    %5150 = vmatpush2.msra.mxu0 0.0
    %5151 = vmatprep.subr.mxu0 0.0
    %5152 = vmatpush2.msra.mxu0 0.0
    %5153 = vmatprep.subr.mxu0 0.0
    %5154 = vmatpush2.msra.mxu0 0.0
    %5155 = vmatprep.subr.mxu0 0.0
    %5156 = vmatpush2.msra.mxu0 0.0
    %5157 = vmatprep.mubr.f32.mxu0 0.0
    %v5158 = vand.u32 %v4663, 4294901760
    %5159 = vmatmul.mubr.f32.gmra.mxu0 %v5158
    %v5160 = vpop.f32.mrf.mxu0
    %v5161 = vadd.f32 %v5082, %v5160
    %v5162 = vpop.f32.mrf.mxu0
    %5163 = vmatprep.mubr.f32.mxu0 0.0
    %v5164 = vand.u32 %v4666, 4294901760
    %5165 = vmatmul.mubr.f32.gmra.mxu0 %v5164
    %v5166 = vpop.f32.mrf.mxu0
    %v5167 = vadd.f32 %v5088, %v5166
    %v5168 = vpop.f32.mrf.mxu0
    %5169 = vdwg.mxu0
    %v5170 = vsub.f32 %v4158, %v5161
    %v5171 = vsub.f32 %v4159, %v5167
    %v5172 = vand.u32 2147483647, %v5170
    %v5173 = vand.u32 2147483647, %v5171
    %5174 = vmatprep.subr.mxu0 0.0
    %5175 = vmatpush1.msra.mxu0 0.0
    %5176 = vmatprep.subr.mxu0 0.0
    %5177 = vmatpush1.msra.mxu0 0.0
    %5178 = vmatprep.subr.mxu0 0.0
    %5179 = vmatpush1.msra.mxu0 0.0
    %5180 = vmatprep.subr.mxu0 0.0
    %5181 = vmatpush1.msra.mxu0 0.0
    %5182 = vmatprep.subr.mxu0 0.0
    %5183 = vmatpush1.msra.mxu0 0.0
    %5184 = vmatprep.subr.mxu0 0.0
    %5185 = vmatpush1.msra.mxu0 0.0
    %5186 = vmatprep.subr.mxu0 0.0
    %5187 = vmatpush1.msra.mxu0 0.0
    %5188 = vmatprep.subr.mxu0 0.0
    %5189 = vmatpush1.msra.mxu0 0.0
    %5190 = vmatprep.subr.mxu0 0.0
    %5191 = vmatpush1.msra.mxu0 0.0
    %5192 = vmatprep.subr.mxu0 0.0
    %5193 = vmatpush1.msra.mxu0 0.0
    %5194 = vmatprep.subr.mxu0 0.0
    %5195 = vmatpush1.msra.mxu0 0.0
    %5196 = vmatprep.subr.mxu0 0.0
    %5197 = vmatpush1.msra.mxu0 0.0
    %5198 = vmatprep.subr.mxu0 0.0
    %5199 = vmatpush1.msra.mxu0 0.0
    %5200 = vmatprep.subr.mxu0 0.0
    %5201 = vmatpush1.msra.mxu0 0.0
    %5202 = vmatprep.subr.mxu0 0.0
    %v5203 = vand.u32 %v5173, 4294901760
    %5204 = vmatpush1.msra.mxu0 %v5203
    %5205 = vmatprep.subr.mxu0 0.0
    %v5206 = vand.u32 %v5172, 4294901760
    %5207 = vmatpush1.msra.mxu0 %v5206
    %5208 = vmatprep.subr.mxu0 0.0
    %5209 = vmatpush2.msra.mxu0 0.0
    %5210 = vmatprep.subr.mxu0 0.0
    %5211 = vmatpush2.msra.mxu0 0.0
    %5212 = vmatprep.subr.mxu0 0.0
    %5213 = vmatpush2.msra.mxu0 0.0
    %5214 = vmatprep.subr.mxu0 0.0
    %5215 = vmatpush2.msra.mxu0 0.0
    %5216 = vmatprep.subr.mxu0 0.0
    %5217 = vmatpush2.msra.mxu0 0.0
    %5218 = vmatprep.subr.mxu0 0.0
    %5219 = vmatpush2.msra.mxu0 0.0
    %5220 = vmatprep.subr.mxu0 0.0
    %5221 = vmatpush2.msra.mxu0 0.0
    %5222 = vmatprep.subr.mxu0 0.0
    %5223 = vmatpush2.msra.mxu0 0.0
    %5224 = vmatprep.subr.mxu0 0.0
    %5225 = vmatpush2.msra.mxu0 0.0
    %5226 = vmatprep.subr.mxu0 0.0
    %5227 = vmatpush2.msra.mxu0 0.0
    %5228 = vmatprep.subr.mxu0 0.0
    %5229 = vmatpush2.msra.mxu0 0.0
    %5230 = vmatprep.subr.mxu0 0.0
    %5231 = vmatpush2.msra.mxu0 0.0
    %5232 = vmatprep.subr.mxu0 0.0
    %5233 = vmatpush2.msra.mxu0 0.0
    %5234 = vmatprep.subr.mxu0 0.0
    %5235 = vmatpush2.msra.mxu0 0.0
    %5236 = vmatprep.subr.mxu0 0.0
    %5237 = vmatpush2.msra.mxu0 0.0
    %5238 = vmatprep.subr.mxu0 0.0
    %5239 = vmatpush2.msra.mxu0 0.0
    %5240 = vmatprep.mubr.f32.mxu0 0.0
    %v5241 = vand.u32 %v85, 4294901760
    %v5242 = vsub.f32 %v85, %v5241
    %v5243 = vand.u32 %v5242, 4294901760
    %v5244 = vsub.f32 %v5242, %v5243
    %v5245 = vand.u32 %v5244, 4294901760
    %5246 = vmatmul.mubr.f32.gmra.mxu0 %v5245
    %v5247 = vpop.f32.mrf.mxu0
    %v5248 = vadd.f32 0.0, %v5247
    %v5249 = vpop.f32.mrf.mxu0
    %5250 = vmatprep.mubr.f32.mxu0 0.0
    %v5251 = vand.u32 %v88, 4294901760
    %v5252 = vsub.f32 %v88, %v5251
    %v5253 = vand.u32 %v5252, 4294901760
    %v5254 = vsub.f32 %v5252, %v5253
    %v5255 = vand.u32 %v5254, 4294901760
    %5256 = vmatmul.mubr.f32.gmra.mxu0 %v5255
    %v5257 = vpop.f32.mrf.mxu0
    %v5258 = vadd.f32 0.0, %v5257
    %v5259 = vpop.f32.mrf.mxu0
    %5260 = vdwg.mxu0
    %5261 = vmatprep.subr.mxu0 0.0
    %5262 = vmatpush1.msra.mxu0 0.0
    %5263 = vmatprep.subr.mxu0 0.0
    %5264 = vmatpush1.msra.mxu0 0.0
    %5265 = vmatprep.subr.mxu0 0.0
    %5266 = vmatpush1.msra.mxu0 0.0
    %5267 = vmatprep.subr.mxu0 0.0
    %5268 = vmatpush1.msra.mxu0 0.0
    %5269 = vmatprep.subr.mxu0 0.0
    %5270 = vmatpush1.msra.mxu0 0.0
    %5271 = vmatprep.subr.mxu0 0.0
    %5272 = vmatpush1.msra.mxu0 0.0
    %5273 = vmatprep.subr.mxu0 0.0
    %5274 = vmatpush1.msra.mxu0 0.0
    %5275 = vmatprep.subr.mxu0 0.0
    %5276 = vmatpush1.msra.mxu0 0.0
    %5277 = vmatprep.subr.mxu0 0.0
    %5278 = vmatpush1.msra.mxu0 0.0
    %5279 = vmatprep.subr.mxu0 0.0
    %5280 = vmatpush1.msra.mxu0 0.0
    %5281 = vmatprep.subr.mxu0 0.0
    %5282 = vmatpush1.msra.mxu0 0.0
    %5283 = vmatprep.subr.mxu0 0.0
    %5284 = vmatpush1.msra.mxu0 0.0
    %5285 = vmatprep.subr.mxu0 0.0
    %5286 = vmatpush1.msra.mxu0 0.0
    %5287 = vmatprep.subr.mxu0 0.0
    %5288 = vmatpush1.msra.mxu0 0.0
    %5289 = vmatprep.subr.mxu0 0.0
    %v5290 = vand.u32 %v5173, 4294901760
    %v5291 = vsub.f32 %v5173, %v5290
    %v5292 = vand.u32 %v5291, 4294901760
    %v5293 = vsub.f32 %v5291, %v5292
    %v5294 = vand.u32 %v5293, 4294901760
    %5295 = vmatpush1.msra.mxu0 %v5294
    %5296 = vmatprep.subr.mxu0 0.0
    %v5297 = vand.u32 %v5172, 4294901760
    %v5298 = vsub.f32 %v5172, %v5297
    %v5299 = vand.u32 %v5298, 4294901760
    %v5300 = vsub.f32 %v5298, %v5299
    %v5301 = vand.u32 %v5300, 4294901760
    %5302 = vmatpush1.msra.mxu0 %v5301
    %5303 = vmatprep.subr.mxu0 0.0
    %5304 = vmatpush2.msra.mxu0 0.0
    %5305 = vmatprep.subr.mxu0 0.0
    %5306 = vmatpush2.msra.mxu0 0.0
    %5307 = vmatprep.subr.mxu0 0.0
    %5308 = vmatpush2.msra.mxu0 0.0
    %5309 = vmatprep.subr.mxu0 0.0
    %5310 = vmatpush2.msra.mxu0 0.0
    %5311 = vmatprep.subr.mxu0 0.0
    %5312 = vmatpush2.msra.mxu0 0.0
    %5313 = vmatprep.subr.mxu0 0.0
    %5314 = vmatpush2.msra.mxu0 0.0
    %5315 = vmatprep.subr.mxu0 0.0
    %5316 = vmatpush2.msra.mxu0 0.0
    %5317 = vmatprep.subr.mxu0 0.0
    %5318 = vmatpush2.msra.mxu0 0.0
    %5319 = vmatprep.subr.mxu0 0.0
    %5320 = vmatpush2.msra.mxu0 0.0
    %5321 = vmatprep.subr.mxu0 0.0
    %5322 = vmatpush2.msra.mxu0 0.0
    %5323 = vmatprep.subr.mxu0 0.0
    %5324 = vmatpush2.msra.mxu0 0.0
    %5325 = vmatprep.subr.mxu0 0.0
    %5326 = vmatpush2.msra.mxu0 0.0
    %5327 = vmatprep.subr.mxu0 0.0
    %5328 = vmatpush2.msra.mxu0 0.0
    %5329 = vmatprep.subr.mxu0 0.0
    %5330 = vmatpush2.msra.mxu0 0.0
    %5331 = vmatprep.subr.mxu0 0.0
    %5332 = vmatpush2.msra.mxu0 0.0
    %5333 = vmatprep.subr.mxu0 0.0
    %5334 = vmatpush2.msra.mxu0 0.0
    %5335 = vmatprep.mubr.f32.mxu0 0.0
    %v5336 = vand.u32 %v85, 4294901760
    %5337 = vmatmul.mubr.f32.gmra.mxu0 %v5336
    %v5338 = vpop.f32.mrf.mxu0
    %v5339 = vadd.f32 %v5248, %v5338
    %v5340 = vpop.f32.mrf.mxu0
    %5341 = vmatprep.mubr.f32.mxu0 0.0
    %v5342 = vand.u32 %v88, 4294901760
    %5343 = vmatmul.mubr.f32.gmra.mxu0 %v5342
    %v5344 = vpop.f32.mrf.mxu0
    %v5345 = vadd.f32 %v5258, %v5344
    %v5346 = vpop.f32.mrf.mxu0
    %5347 = vdwg.mxu0
    %5348 = vmatprep.subr.mxu0 0.0
    %5349 = vmatpush1.msra.mxu0 0.0
    %5350 = vmatprep.subr.mxu0 0.0
    %5351 = vmatpush1.msra.mxu0 0.0
    %5352 = vmatprep.subr.mxu0 0.0
    %5353 = vmatpush1.msra.mxu0 0.0
    %5354 = vmatprep.subr.mxu0 0.0
    %5355 = vmatpush1.msra.mxu0 0.0
    %5356 = vmatprep.subr.mxu0 0.0
    %5357 = vmatpush1.msra.mxu0 0.0
    %5358 = vmatprep.subr.mxu0 0.0
    %5359 = vmatpush1.msra.mxu0 0.0
    %5360 = vmatprep.subr.mxu0 0.0
    %5361 = vmatpush1.msra.mxu0 0.0
    %5362 = vmatprep.subr.mxu0 0.0
    %5363 = vmatpush1.msra.mxu0 0.0
    %5364 = vmatprep.subr.mxu0 0.0
    %5365 = vmatpush1.msra.mxu0 0.0
    %5366 = vmatprep.subr.mxu0 0.0
    %5367 = vmatpush1.msra.mxu0 0.0
    %5368 = vmatprep.subr.mxu0 0.0
    %5369 = vmatpush1.msra.mxu0 0.0
    %5370 = vmatprep.subr.mxu0 0.0
    %5371 = vmatpush1.msra.mxu0 0.0
    %5372 = vmatprep.subr.mxu0 0.0
    %5373 = vmatpush1.msra.mxu0 0.0
    %5374 = vmatprep.subr.mxu0 0.0
    %5375 = vmatpush1.msra.mxu0 0.0
    %5376 = vmatprep.subr.mxu0 0.0
    %v5377 = vand.u32 %v5173, 4294901760
    %v5378 = vsub.f32 %v5173, %v5377
    %5379 = vmatpush1.msra.mxu0 %v5378
    %5380 = vmatprep.subr.mxu0 0.0
    %v5381 = vand.u32 %v5172, 4294901760
    %v5382 = vsub.f32 %v5172, %v5381
    %5383 = vmatpush1.msra.mxu0 %v5382
    %5384 = vmatprep.subr.mxu0 0.0
    %5385 = vmatpush2.msra.mxu0 0.0
    %5386 = vmatprep.subr.mxu0 0.0
    %5387 = vmatpush2.msra.mxu0 0.0
    %5388 = vmatprep.subr.mxu0 0.0
    %5389 = vmatpush2.msra.mxu0 0.0
    %5390 = vmatprep.subr.mxu0 0.0
    %5391 = vmatpush2.msra.mxu0 0.0
    %5392 = vmatprep.subr.mxu0 0.0
    %5393 = vmatpush2.msra.mxu0 0.0
    %5394 = vmatprep.subr.mxu0 0.0
    %5395 = vmatpush2.msra.mxu0 0.0
    %5396 = vmatprep.subr.mxu0 0.0
    %5397 = vmatpush2.msra.mxu0 0.0
    %5398 = vmatprep.subr.mxu0 0.0
    %5399 = vmatpush2.msra.mxu0 0.0
    %5400 = vmatprep.subr.mxu0 0.0
    %5401 = vmatpush2.msra.mxu0 0.0
    %5402 = vmatprep.subr.mxu0 0.0
    %5403 = vmatpush2.msra.mxu0 0.0
    %5404 = vmatprep.subr.mxu0 0.0
    %5405 = vmatpush2.msra.mxu0 0.0
    %5406 = vmatprep.subr.mxu0 0.0
    %5407 = vmatpush2.msra.mxu0 0.0
    %5408 = vmatprep.subr.mxu0 0.0
    %5409 = vmatpush2.msra.mxu0 0.0
    %5410 = vmatprep.subr.mxu0 0.0
    %5411 = vmatpush2.msra.mxu0 0.0
    %5412 = vmatprep.subr.mxu0 0.0
    %5413 = vmatpush2.msra.mxu0 0.0
    %5414 = vmatprep.subr.mxu0 0.0
    %5415 = vmatpush2.msra.mxu0 0.0
    %5416 = vmatprep.mubr.f32.mxu0 0.0
    %v5417 = vand.u32 %v85, 4294901760
    %v5418 = vsub.f32 %v85, %v5417
    %5419 = vmatmul.mubr.f32.gmra.mxu0 %v5418
    %v5420 = vpop.f32.mrf.mxu0
    %v5421 = vadd.f32 %v5339, %v5420
    %v5422 = vpop.f32.mrf.mxu0
    %5423 = vmatprep.mubr.f32.mxu0 0.0
    %v5424 = vand.u32 %v88, 4294901760
    %v5425 = vsub.f32 %v88, %v5424
    %5426 = vmatmul.mubr.f32.gmra.mxu0 %v5425
    %v5427 = vpop.f32.mrf.mxu0
    %v5428 = vadd.f32 %v5345, %v5427
    %v5429 = vpop.f32.mrf.mxu0
    %5430 = vdwg.mxu0
    %5431 = vmatprep.subr.mxu0 0.0
    %5432 = vmatpush1.msra.mxu0 0.0
    %5433 = vmatprep.subr.mxu0 0.0
    %5434 = vmatpush1.msra.mxu0 0.0
    %5435 = vmatprep.subr.mxu0 0.0
    %5436 = vmatpush1.msra.mxu0 0.0
    %5437 = vmatprep.subr.mxu0 0.0
    %5438 = vmatpush1.msra.mxu0 0.0
    %5439 = vmatprep.subr.mxu0 0.0
    %5440 = vmatpush1.msra.mxu0 0.0
    %5441 = vmatprep.subr.mxu0 0.0
    %5442 = vmatpush1.msra.mxu0 0.0
    %5443 = vmatprep.subr.mxu0 0.0
    %5444 = vmatpush1.msra.mxu0 0.0
    %5445 = vmatprep.subr.mxu0 0.0
    %5446 = vmatpush1.msra.mxu0 0.0
    %5447 = vmatprep.subr.mxu0 0.0
    %5448 = vmatpush1.msra.mxu0 0.0
    %5449 = vmatprep.subr.mxu0 0.0
    %5450 = vmatpush1.msra.mxu0 0.0
    %5451 = vmatprep.subr.mxu0 0.0
    %5452 = vmatpush1.msra.mxu0 0.0
    %5453 = vmatprep.subr.mxu0 0.0
    %5454 = vmatpush1.msra.mxu0 0.0
    %5455 = vmatprep.subr.mxu0 0.0
    %5456 = vmatpush1.msra.mxu0 0.0
    %5457 = vmatprep.subr.mxu0 0.0
    %5458 = vmatpush1.msra.mxu0 0.0
    %5459 = vmatprep.subr.mxu0 0.0
    %v5460 = vand.u32 %v5173, 4294901760
    %5461 = vmatpush1.msra.mxu0 %v5460
    %5462 = vmatprep.subr.mxu0 0.0
    %v5463 = vand.u32 %v5172, 4294901760
    %5464 = vmatpush1.msra.mxu0 %v5463
    %5465 = vmatprep.subr.mxu0 0.0
    %5466 = vmatpush2.msra.mxu0 0.0
    %5467 = vmatprep.subr.mxu0 0.0
    %5468 = vmatpush2.msra.mxu0 0.0
    %5469 = vmatprep.subr.mxu0 0.0
    %5470 = vmatpush2.msra.mxu0 0.0
    %5471 = vmatprep.subr.mxu0 0.0
    %5472 = vmatpush2.msra.mxu0 0.0
    %5473 = vmatprep.subr.mxu0 0.0
    %5474 = vmatpush2.msra.mxu0 0.0
    %5475 = vmatprep.subr.mxu0 0.0
    %5476 = vmatpush2.msra.mxu0 0.0
    %5477 = vmatprep.subr.mxu0 0.0
    %5478 = vmatpush2.msra.mxu0 0.0
    %5479 = vmatprep.subr.mxu0 0.0
    %5480 = vmatpush2.msra.mxu0 0.0
    %5481 = vmatprep.subr.mxu0 0.0
    %5482 = vmatpush2.msra.mxu0 0.0
    %5483 = vmatprep.subr.mxu0 0.0
    %5484 = vmatpush2.msra.mxu0 0.0
    %5485 = vmatprep.subr.mxu0 0.0
    %5486 = vmatpush2.msra.mxu0 0.0
    %5487 = vmatprep.subr.mxu0 0.0
    %5488 = vmatpush2.msra.mxu0 0.0
    %5489 = vmatprep.subr.mxu0 0.0
    %5490 = vmatpush2.msra.mxu0 0.0
    %5491 = vmatprep.subr.mxu0 0.0
    %5492 = vmatpush2.msra.mxu0 0.0
    %5493 = vmatprep.subr.mxu0 0.0
    %5494 = vmatpush2.msra.mxu0 0.0
    %5495 = vmatprep.subr.mxu0 0.0
    %5496 = vmatpush2.msra.mxu0 0.0
    %5497 = vmatprep.mubr.f32.mxu0 0.0
    %v5498 = vand.u32 %v85, 4294901760
    %v5499 = vsub.f32 %v85, %v5498
    %v5500 = vand.u32 %v5499, 4294901760
    %5501 = vmatmul.mubr.f32.gmra.mxu0 %v5500
    %v5502 = vpop.f32.mrf.mxu0
    %v5503 = vadd.f32 %v5421, %v5502
    %v5504 = vpop.f32.mrf.mxu0
    %5505 = vmatprep.mubr.f32.mxu0 0.0
    %v5506 = vand.u32 %v88, 4294901760
    %v5507 = vsub.f32 %v88, %v5506
    %v5508 = vand.u32 %v5507, 4294901760
    %5509 = vmatmul.mubr.f32.gmra.mxu0 %v5508
    %v5510 = vpop.f32.mrf.mxu0
    %v5511 = vadd.f32 %v5428, %v5510
    %v5512 = vpop.f32.mrf.mxu0
    %5513 = vdwg.mxu0
    %5514 = vmatprep.subr.mxu0 0.0
    %5515 = vmatpush1.msra.mxu0 0.0
    %5516 = vmatprep.subr.mxu0 0.0
    %5517 = vmatpush1.msra.mxu0 0.0
    %5518 = vmatprep.subr.mxu0 0.0
    %5519 = vmatpush1.msra.mxu0 0.0
    %5520 = vmatprep.subr.mxu0 0.0
    %5521 = vmatpush1.msra.mxu0 0.0
    %5522 = vmatprep.subr.mxu0 0.0
    %5523 = vmatpush1.msra.mxu0 0.0
    %5524 = vmatprep.subr.mxu0 0.0
    %5525 = vmatpush1.msra.mxu0 0.0
    %5526 = vmatprep.subr.mxu0 0.0
    %5527 = vmatpush1.msra.mxu0 0.0
    %5528 = vmatprep.subr.mxu0 0.0
    %5529 = vmatpush1.msra.mxu0 0.0
    %5530 = vmatprep.subr.mxu0 0.0
    %5531 = vmatpush1.msra.mxu0 0.0
    %5532 = vmatprep.subr.mxu0 0.0
    %5533 = vmatpush1.msra.mxu0 0.0
    %5534 = vmatprep.subr.mxu0 0.0
    %5535 = vmatpush1.msra.mxu0 0.0
    %5536 = vmatprep.subr.mxu0 0.0
    %5537 = vmatpush1.msra.mxu0 0.0
    %5538 = vmatprep.subr.mxu0 0.0
    %5539 = vmatpush1.msra.mxu0 0.0
    %5540 = vmatprep.subr.mxu0 0.0
    %5541 = vmatpush1.msra.mxu0 0.0
    %5542 = vmatprep.subr.mxu0 0.0
    %v5543 = vand.u32 %v5173, 4294901760
    %v5544 = vsub.f32 %v5173, %v5543
    %v5545 = vand.u32 %v5544, 4294901760
    %5546 = vmatpush1.msra.mxu0 %v5545
    %5547 = vmatprep.subr.mxu0 0.0
    %v5548 = vand.u32 %v5172, 4294901760
    %v5549 = vsub.f32 %v5172, %v5548
    %v5550 = vand.u32 %v5549, 4294901760
    %5551 = vmatpush1.msra.mxu0 %v5550
    %5552 = vmatprep.subr.mxu0 0.0
    %5553 = vmatpush2.msra.mxu0 0.0
    %5554 = vmatprep.subr.mxu0 0.0
    %5555 = vmatpush2.msra.mxu0 0.0
    %5556 = vmatprep.subr.mxu0 0.0
    %5557 = vmatpush2.msra.mxu0 0.0
    %5558 = vmatprep.subr.mxu0 0.0
    %5559 = vmatpush2.msra.mxu0 0.0
    %5560 = vmatprep.subr.mxu0 0.0
    %5561 = vmatpush2.msra.mxu0 0.0
    %5562 = vmatprep.subr.mxu0 0.0
    %5563 = vmatpush2.msra.mxu0 0.0
    %5564 = vmatprep.subr.mxu0 0.0
    %5565 = vmatpush2.msra.mxu0 0.0
    %5566 = vmatprep.subr.mxu0 0.0
    %5567 = vmatpush2.msra.mxu0 0.0
    %5568 = vmatprep.subr.mxu0 0.0
    %5569 = vmatpush2.msra.mxu0 0.0
    %5570 = vmatprep.subr.mxu0 0.0
    %5571 = vmatpush2.msra.mxu0 0.0
    %5572 = vmatprep.subr.mxu0 0.0
    %5573 = vmatpush2.msra.mxu0 0.0
    %5574 = vmatprep.subr.mxu0 0.0
    %5575 = vmatpush2.msra.mxu0 0.0
    %5576 = vmatprep.subr.mxu0 0.0
    %5577 = vmatpush2.msra.mxu0 0.0
    %5578 = vmatprep.subr.mxu0 0.0
    %5579 = vmatpush2.msra.mxu0 0.0
    %5580 = vmatprep.subr.mxu0 0.0
    %5581 = vmatpush2.msra.mxu0 0.0
    %5582 = vmatprep.subr.mxu0 0.0
    %5583 = vmatpush2.msra.mxu0 0.0
    %5584 = vmatprep.mubr.f32.mxu0 0.0
    %v5585 = vand.u32 %v85, 4294901760
    %5586 = vmatmul.mubr.f32.gmra.mxu0 %v5585
    %v5587 = vpop.f32.mrf.mxu0
    %v5588 = vadd.f32 %v5503, %v5587
    %v5589 = vpop.f32.mrf.mxu0
    %5590 = vmatprep.mubr.f32.mxu0 0.0
    %v5591 = vand.u32 %v88, 4294901760
    %5592 = vmatmul.mubr.f32.gmra.mxu0 %v5591
    %v5593 = vpop.f32.mrf.mxu0
    %v5594 = vadd.f32 %v5511, %v5593
    %v5595 = vpop.f32.mrf.mxu0
    %5596 = vdwg.mxu0
    %5597 = vmatprep.subr.mxu0 0.0
    %5598 = vmatpush1.msra.mxu0 0.0
    %5599 = vmatprep.subr.mxu0 0.0
    %5600 = vmatpush1.msra.mxu0 0.0
    %5601 = vmatprep.subr.mxu0 0.0
    %5602 = vmatpush1.msra.mxu0 0.0
    %5603 = vmatprep.subr.mxu0 0.0
    %5604 = vmatpush1.msra.mxu0 0.0
    %5605 = vmatprep.subr.mxu0 0.0
    %5606 = vmatpush1.msra.mxu0 0.0
    %5607 = vmatprep.subr.mxu0 0.0
    %5608 = vmatpush1.msra.mxu0 0.0
    %5609 = vmatprep.subr.mxu0 0.0
    %5610 = vmatpush1.msra.mxu0 0.0
    %5611 = vmatprep.subr.mxu0 0.0
    %5612 = vmatpush1.msra.mxu0 0.0
    %5613 = vmatprep.subr.mxu0 0.0
    %5614 = vmatpush1.msra.mxu0 0.0
    %5615 = vmatprep.subr.mxu0 0.0
    %5616 = vmatpush1.msra.mxu0 0.0
    %5617 = vmatprep.subr.mxu0 0.0
    %5618 = vmatpush1.msra.mxu0 0.0
    %5619 = vmatprep.subr.mxu0 0.0
    %5620 = vmatpush1.msra.mxu0 0.0
    %5621 = vmatprep.subr.mxu0 0.0
    %5622 = vmatpush1.msra.mxu0 0.0
    %5623 = vmatprep.subr.mxu0 0.0
    %5624 = vmatpush1.msra.mxu0 0.0
    %5625 = vmatprep.subr.mxu0 0.0
    %v5626 = vand.u32 %v5173, 4294901760
    %5627 = vmatpush1.msra.mxu0 %v5626
    %5628 = vmatprep.subr.mxu0 0.0
    %v5629 = vand.u32 %v5172, 4294901760
    %5630 = vmatpush1.msra.mxu0 %v5629
    %5631 = vmatprep.subr.mxu0 0.0
    %5632 = vmatpush2.msra.mxu0 0.0
    %5633 = vmatprep.subr.mxu0 0.0
    %5634 = vmatpush2.msra.mxu0 0.0
    %5635 = vmatprep.subr.mxu0 0.0
    %5636 = vmatpush2.msra.mxu0 0.0
    %5637 = vmatprep.subr.mxu0 0.0
    %5638 = vmatpush2.msra.mxu0 0.0
    %5639 = vmatprep.subr.mxu0 0.0
    %5640 = vmatpush2.msra.mxu0 0.0
    %5641 = vmatprep.subr.mxu0 0.0
    %5642 = vmatpush2.msra.mxu0 0.0
    %5643 = vmatprep.subr.mxu0 0.0
    %5644 = vmatpush2.msra.mxu0 0.0
    %5645 = vmatprep.subr.mxu0 0.0
    %5646 = vmatpush2.msra.mxu0 0.0
    %5647 = vmatprep.subr.mxu0 0.0
    %5648 = vmatpush2.msra.mxu0 0.0
    %5649 = vmatprep.subr.mxu0 0.0
    %5650 = vmatpush2.msra.mxu0 0.0
    %5651 = vmatprep.subr.mxu0 0.0
    %5652 = vmatpush2.msra.mxu0 0.0
    %5653 = vmatprep.subr.mxu0 0.0
    %5654 = vmatpush2.msra.mxu0 0.0
    %5655 = vmatprep.subr.mxu0 0.0
    %5656 = vmatpush2.msra.mxu0 0.0
    %5657 = vmatprep.subr.mxu0 0.0
    %5658 = vmatpush2.msra.mxu0 0.0
    %5659 = vmatprep.subr.mxu0 0.0
    %5660 = vmatpush2.msra.mxu0 0.0
    %5661 = vmatprep.subr.mxu0 0.0
    %5662 = vmatpush2.msra.mxu0 0.0
    %5663 = vmatprep.mubr.f32.mxu0 0.0
    %v5664 = vand.u32 %v85, 4294901760
    %5665 = vmatmul.mubr.f32.gmra.mxu0 %v5664
    %v5666 = vpop.f32.mrf.mxu0
    %v5667 = vadd.f32 %v5588, %v5666
    %v5668 = vpop.f32.mrf.mxu0
    %5669 = vmatprep.mubr.f32.mxu0 0.0
    %v5670 = vand.u32 %v88, 4294901760
    %5671 = vmatmul.mubr.f32.gmra.mxu0 %v5670
    %v5672 = vpop.f32.mrf.mxu0
    %v5673 = vadd.f32 %v5594, %v5672
    %v5674 = vpop.f32.mrf.mxu0
    %5675 = vdwg.mxu0
    %v5677 = vsel %vm83, %v5667, 0
    %v5680 = vsel %vm83, %v5673, 0
    %5682 = vmatprep.subr.mxu0 0.0
    %5683 = vmatpush1.msra.mxu0 0.0
    %5684 = vmatprep.subr.mxu0 0.0
    %5685 = vmatpush1.msra.mxu0 0.0
    %5686 = vmatprep.subr.mxu0 0.0
    %5687 = vmatpush1.msra.mxu0 0.0
    %5688 = vmatprep.subr.mxu0 0.0
    %5689 = vmatpush1.msra.mxu0 0.0
    %5690 = vmatprep.subr.mxu0 0.0
    %5691 = vmatpush1.msra.mxu0 0.0
    %5692 = vmatprep.subr.mxu0 0.0
    %5693 = vmatpush1.msra.mxu0 0.0
    %5694 = vmatprep.subr.mxu0 0.0
    %5695 = vmatpush1.msra.mxu0 0.0
    %5696 = vmatprep.subr.mxu0 0.0
    %5697 = vmatpush1.msra.mxu0 0.0
    %5698 = vmatprep.subr.mxu0 0.0
    %5699 = vmatpush1.msra.mxu0 0.0
    %5700 = vmatprep.subr.mxu0 0.0
    %5701 = vmatpush1.msra.mxu0 0.0
    %5702 = vmatprep.subr.mxu0 0.0
    %5703 = vmatpush1.msra.mxu0 0.0
    %5704 = vmatprep.subr.mxu0 0.0
    %5705 = vmatpush1.msra.mxu0 0.0
    %5706 = vmatprep.subr.mxu0 0.0
    %5707 = vmatpush1.msra.mxu0 0.0
    %5708 = vmatprep.subr.mxu0 0.0
    %5709 = vmatpush1.msra.mxu0 0.0
    %5710 = vmatprep.subr.mxu0 0.0
    %v5711 = vand.u32 %v76, 4294901760
    %5712 = vmatpush1.msra.mxu0 %v5711
    %5713 = vmatprep.subr.mxu0 0.0
    %v5714 = vand.u32 %v75, 4294901760
    %5715 = vmatpush1.msra.mxu0 %v5714
    %5716 = vmatprep.subr.mxu0 0.0
    %5717 = vmatpush2.msra.mxu0 0.0
    %5718 = vmatprep.subr.mxu0 0.0
    %5719 = vmatpush2.msra.mxu0 0.0
    %5720 = vmatprep.subr.mxu0 0.0
    %5721 = vmatpush2.msra.mxu0 0.0
    %5722 = vmatprep.subr.mxu0 0.0
    %5723 = vmatpush2.msra.mxu0 0.0
    %5724 = vmatprep.subr.mxu0 0.0
    %5725 = vmatpush2.msra.mxu0 0.0
    %5726 = vmatprep.subr.mxu0 0.0
    %5727 = vmatpush2.msra.mxu0 0.0
    %5728 = vmatprep.subr.mxu0 0.0
    %5729 = vmatpush2.msra.mxu0 0.0
    %5730 = vmatprep.subr.mxu0 0.0
    %5731 = vmatpush2.msra.mxu0 0.0
    %5732 = vmatprep.subr.mxu0 0.0
    %5733 = vmatpush2.msra.mxu0 0.0
    %5734 = vmatprep.subr.mxu0 0.0
    %5735 = vmatpush2.msra.mxu0 0.0
    %5736 = vmatprep.subr.mxu0 0.0
    %5737 = vmatpush2.msra.mxu0 0.0
    %5738 = vmatprep.subr.mxu0 0.0
    %5739 = vmatpush2.msra.mxu0 0.0
    %5740 = vmatprep.subr.mxu0 0.0
    %5741 = vmatpush2.msra.mxu0 0.0
    %5742 = vmatprep.subr.mxu0 0.0
    %5743 = vmatpush2.msra.mxu0 0.0
    %5744 = vmatprep.subr.mxu0 0.0
    %5745 = vmatpush2.msra.mxu0 0.0
    %5746 = vmatprep.subr.mxu0 0.0
    %5747 = vmatpush2.msra.mxu0 0.0
    %5748 = vmatprep.mubr.f32.mxu0 0.0
    %v5749 = vand.u32 %v5677, 4294901760
    %v5750 = vsub.f32 %v5677, %v5749
    %v5751 = vand.u32 %v5750, 4294901760
    %v5752 = vsub.f32 %v5750, %v5751
    %v5753 = vand.u32 %v5752, 4294901760
    %5754 = vmatmul.mubr.f32.gmra.mxu0 %v5753
    %v5755 = vpop.f32.mrf.mxu0
    %v5756 = vadd.f32 0.0, %v5755
    %v5757 = vpop.f32.mrf.mxu0
    %5758 = vmatprep.mubr.f32.mxu0 0.0
    %v5759 = vand.u32 %v5680, 4294901760
    %v5760 = vsub.f32 %v5680, %v5759
    %v5761 = vand.u32 %v5760, 4294901760
    %v5762 = vsub.f32 %v5760, %v5761
    %v5763 = vand.u32 %v5762, 4294901760
    %5764 = vmatmul.mubr.f32.gmra.mxu0 %v5763
    %v5765 = vpop.f32.mrf.mxu0
    %v5766 = vadd.f32 0.0, %v5765
    %v5767 = vpop.f32.mrf.mxu0
    %5768 = vdwg.mxu0
    %5769 = vmatprep.subr.mxu0 0.0
    %5770 = vmatpush1.msra.mxu0 0.0
    %5771 = vmatprep.subr.mxu0 0.0
    %5772 = vmatpush1.msra.mxu0 0.0
    %5773 = vmatprep.subr.mxu0 0.0
    %5774 = vmatpush1.msra.mxu0 0.0
    %5775 = vmatprep.subr.mxu0 0.0
    %5776 = vmatpush1.msra.mxu0 0.0
    %5777 = vmatprep.subr.mxu0 0.0
    %5778 = vmatpush1.msra.mxu0 0.0
    %5779 = vmatprep.subr.mxu0 0.0
    %5780 = vmatpush1.msra.mxu0 0.0
    %5781 = vmatprep.subr.mxu0 0.0
    %5782 = vmatpush1.msra.mxu0 0.0
    %5783 = vmatprep.subr.mxu0 0.0
    %5784 = vmatpush1.msra.mxu0 0.0
    %5785 = vmatprep.subr.mxu0 0.0
    %5786 = vmatpush1.msra.mxu0 0.0
    %5787 = vmatprep.subr.mxu0 0.0
    %5788 = vmatpush1.msra.mxu0 0.0
    %5789 = vmatprep.subr.mxu0 0.0
    %5790 = vmatpush1.msra.mxu0 0.0
    %5791 = vmatprep.subr.mxu0 0.0
    %5792 = vmatpush1.msra.mxu0 0.0
    %5793 = vmatprep.subr.mxu0 0.0
    %5794 = vmatpush1.msra.mxu0 0.0
    %5795 = vmatprep.subr.mxu0 0.0
    %5796 = vmatpush1.msra.mxu0 0.0
    %5797 = vmatprep.subr.mxu0 0.0
    %v5798 = vand.u32 %v76, 4294901760
    %v5799 = vsub.f32 %v76, %v5798
    %v5800 = vand.u32 %v5799, 4294901760
    %v5801 = vsub.f32 %v5799, %v5800
    %v5802 = vand.u32 %v5801, 4294901760
    %5803 = vmatpush1.msra.mxu0 %v5802
    %5804 = vmatprep.subr.mxu0 0.0
    %v5805 = vand.u32 %v75, 4294901760
    %v5806 = vsub.f32 %v75, %v5805
    %v5807 = vand.u32 %v5806, 4294901760
    %v5808 = vsub.f32 %v5806, %v5807
    %v5809 = vand.u32 %v5808, 4294901760
    %5810 = vmatpush1.msra.mxu0 %v5809
    %5811 = vmatprep.subr.mxu0 0.0
    %5812 = vmatpush2.msra.mxu0 0.0
    %5813 = vmatprep.subr.mxu0 0.0
    %5814 = vmatpush2.msra.mxu0 0.0
    %5815 = vmatprep.subr.mxu0 0.0
    %5816 = vmatpush2.msra.mxu0 0.0
    %5817 = vmatprep.subr.mxu0 0.0
    %5818 = vmatpush2.msra.mxu0 0.0
    %5819 = vmatprep.subr.mxu0 0.0
    %5820 = vmatpush2.msra.mxu0 0.0
    %5821 = vmatprep.subr.mxu0 0.0
    %5822 = vmatpush2.msra.mxu0 0.0
    %5823 = vmatprep.subr.mxu0 0.0
    %5824 = vmatpush2.msra.mxu0 0.0
    %5825 = vmatprep.subr.mxu0 0.0
    %5826 = vmatpush2.msra.mxu0 0.0
    %5827 = vmatprep.subr.mxu0 0.0
    %5828 = vmatpush2.msra.mxu0 0.0
    %5829 = vmatprep.subr.mxu0 0.0
    %5830 = vmatpush2.msra.mxu0 0.0
    %5831 = vmatprep.subr.mxu0 0.0
    %5832 = vmatpush2.msra.mxu0 0.0
    %5833 = vmatprep.subr.mxu0 0.0
    %5834 = vmatpush2.msra.mxu0 0.0
    %5835 = vmatprep.subr.mxu0 0.0
    %5836 = vmatpush2.msra.mxu0 0.0
    %5837 = vmatprep.subr.mxu0 0.0
    %5838 = vmatpush2.msra.mxu0 0.0
    %5839 = vmatprep.subr.mxu0 0.0
    %5840 = vmatpush2.msra.mxu0 0.0
    %5841 = vmatprep.subr.mxu0 0.0
    %5842 = vmatpush2.msra.mxu0 0.0
    %5843 = vmatprep.mubr.f32.mxu0 0.0
    %v5844 = vand.u32 %v5677, 4294901760
    %5845 = vmatmul.mubr.f32.gmra.mxu0 %v5844
    %v5846 = vpop.f32.mrf.mxu0
    %v5847 = vadd.f32 %v5756, %v5846
    %v5848 = vpop.f32.mrf.mxu0
    %5849 = vmatprep.mubr.f32.mxu0 0.0
    %v5850 = vand.u32 %v5680, 4294901760
    %5851 = vmatmul.mubr.f32.gmra.mxu0 %v5850
    %v5852 = vpop.f32.mrf.mxu0
    %v5853 = vadd.f32 %v5766, %v5852
    %v5854 = vpop.f32.mrf.mxu0
    %5855 = vdwg.mxu0
    %5856 = vmatprep.subr.mxu0 0.0
    %5857 = vmatpush1.msra.mxu0 0.0
    %5858 = vmatprep.subr.mxu0 0.0
    %5859 = vmatpush1.msra.mxu0 0.0
    %5860 = vmatprep.subr.mxu0 0.0
    %5861 = vmatpush1.msra.mxu0 0.0
    %5862 = vmatprep.subr.mxu0 0.0
    %5863 = vmatpush1.msra.mxu0 0.0
    %5864 = vmatprep.subr.mxu0 0.0
    %5865 = vmatpush1.msra.mxu0 0.0
    %5866 = vmatprep.subr.mxu0 0.0
    %5867 = vmatpush1.msra.mxu0 0.0
    %5868 = vmatprep.subr.mxu0 0.0
    %5869 = vmatpush1.msra.mxu0 0.0
    %5870 = vmatprep.subr.mxu0 0.0
    %5871 = vmatpush1.msra.mxu0 0.0
    %5872 = vmatprep.subr.mxu0 0.0
    %5873 = vmatpush1.msra.mxu0 0.0
    %5874 = vmatprep.subr.mxu0 0.0
    %5875 = vmatpush1.msra.mxu0 0.0
    %5876 = vmatprep.subr.mxu0 0.0
    %5877 = vmatpush1.msra.mxu0 0.0
    %5878 = vmatprep.subr.mxu0 0.0
    %5879 = vmatpush1.msra.mxu0 0.0
    %5880 = vmatprep.subr.mxu0 0.0
    %5881 = vmatpush1.msra.mxu0 0.0
    %5882 = vmatprep.subr.mxu0 0.0
    %5883 = vmatpush1.msra.mxu0 0.0
    %5884 = vmatprep.subr.mxu0 0.0
    %v5885 = vand.u32 %v76, 4294901760
    %v5886 = vsub.f32 %v76, %v5885
    %5887 = vmatpush1.msra.mxu0 %v5886
    %5888 = vmatprep.subr.mxu0 0.0
    %v5889 = vand.u32 %v75, 4294901760
    %v5890 = vsub.f32 %v75, %v5889
    %5891 = vmatpush1.msra.mxu0 %v5890
    %5892 = vmatprep.subr.mxu0 0.0
    %5893 = vmatpush2.msra.mxu0 0.0
    %5894 = vmatprep.subr.mxu0 0.0
    %5895 = vmatpush2.msra.mxu0 0.0
    %5896 = vmatprep.subr.mxu0 0.0
    %5897 = vmatpush2.msra.mxu0 0.0
    %5898 = vmatprep.subr.mxu0 0.0
    %5899 = vmatpush2.msra.mxu0 0.0
    %5900 = vmatprep.subr.mxu0 0.0
    %5901 = vmatpush2.msra.mxu0 0.0
    %5902 = vmatprep.subr.mxu0 0.0
    %5903 = vmatpush2.msra.mxu0 0.0
    %5904 = vmatprep.subr.mxu0 0.0
    %5905 = vmatpush2.msra.mxu0 0.0
    %5906 = vmatprep.subr.mxu0 0.0
    %5907 = vmatpush2.msra.mxu0 0.0
    %5908 = vmatprep.subr.mxu0 0.0
    %5909 = vmatpush2.msra.mxu0 0.0
    %5910 = vmatprep.subr.mxu0 0.0
    %5911 = vmatpush2.msra.mxu0 0.0
    %5912 = vmatprep.subr.mxu0 0.0
    %5913 = vmatpush2.msra.mxu0 0.0
    %5914 = vmatprep.subr.mxu0 0.0
    %5915 = vmatpush2.msra.mxu0 0.0
    %5916 = vmatprep.subr.mxu0 0.0
    %5917 = vmatpush2.msra.mxu0 0.0
    %5918 = vmatprep.subr.mxu0 0.0
    %5919 = vmatpush2.msra.mxu0 0.0
    %5920 = vmatprep.subr.mxu0 0.0
    %5921 = vmatpush2.msra.mxu0 0.0
    %5922 = vmatprep.subr.mxu0 0.0
    %5923 = vmatpush2.msra.mxu0 0.0
    %5924 = vmatprep.mubr.f32.mxu0 0.0
    %v5925 = vand.u32 %v5677, 4294901760
    %v5926 = vsub.f32 %v5677, %v5925
    %5927 = vmatmul.mubr.f32.gmra.mxu0 %v5926
    %v5928 = vpop.f32.mrf.mxu0
    %v5929 = vadd.f32 %v5847, %v5928
    %v5930 = vpop.f32.mrf.mxu0
    %5931 = vmatprep.mubr.f32.mxu0 0.0
    %v5932 = vand.u32 %v5680, 4294901760
    %v5933 = vsub.f32 %v5680, %v5932
    %5934 = vmatmul.mubr.f32.gmra.mxu0 %v5933
    %v5935 = vpop.f32.mrf.mxu0
    %v5936 = vadd.f32 %v5853, %v5935
    %v5937 = vpop.f32.mrf.mxu0
    %5938 = vdwg.mxu0
    %5939 = vmatprep.subr.mxu0 0.0
    %5940 = vmatpush1.msra.mxu0 0.0
    %5941 = vmatprep.subr.mxu0 0.0
    %5942 = vmatpush1.msra.mxu0 0.0
    %5943 = vmatprep.subr.mxu0 0.0
    %5944 = vmatpush1.msra.mxu0 0.0
    %5945 = vmatprep.subr.mxu0 0.0
    %5946 = vmatpush1.msra.mxu0 0.0
    %5947 = vmatprep.subr.mxu0 0.0
    %5948 = vmatpush1.msra.mxu0 0.0
    %5949 = vmatprep.subr.mxu0 0.0
    %5950 = vmatpush1.msra.mxu0 0.0
    %5951 = vmatprep.subr.mxu0 0.0
    %5952 = vmatpush1.msra.mxu0 0.0
    %5953 = vmatprep.subr.mxu0 0.0
    %5954 = vmatpush1.msra.mxu0 0.0
    %5955 = vmatprep.subr.mxu0 0.0
    %5956 = vmatpush1.msra.mxu0 0.0
    %5957 = vmatprep.subr.mxu0 0.0
    %5958 = vmatpush1.msra.mxu0 0.0
    %5959 = vmatprep.subr.mxu0 0.0
    %5960 = vmatpush1.msra.mxu0 0.0
    %5961 = vmatprep.subr.mxu0 0.0
    %5962 = vmatpush1.msra.mxu0 0.0
    %5963 = vmatprep.subr.mxu0 0.0
    %5964 = vmatpush1.msra.mxu0 0.0
    %5965 = vmatprep.subr.mxu0 0.0
    %5966 = vmatpush1.msra.mxu0 0.0
    %5967 = vmatprep.subr.mxu0 0.0
    %v5968 = vand.u32 %v76, 4294901760
    %5969 = vmatpush1.msra.mxu0 %v5968
    %5970 = vmatprep.subr.mxu0 0.0
    %v5971 = vand.u32 %v75, 4294901760
    %5972 = vmatpush1.msra.mxu0 %v5971
    %5973 = vmatprep.subr.mxu0 0.0
    %5974 = vmatpush2.msra.mxu0 0.0
    %5975 = vmatprep.subr.mxu0 0.0
    %5976 = vmatpush2.msra.mxu0 0.0
    %5977 = vmatprep.subr.mxu0 0.0
    %5978 = vmatpush2.msra.mxu0 0.0
    %5979 = vmatprep.subr.mxu0 0.0
    %5980 = vmatpush2.msra.mxu0 0.0
    %5981 = vmatprep.subr.mxu0 0.0
    %5982 = vmatpush2.msra.mxu0 0.0
    %5983 = vmatprep.subr.mxu0 0.0
    %5984 = vmatpush2.msra.mxu0 0.0
    %5985 = vmatprep.subr.mxu0 0.0
    %5986 = vmatpush2.msra.mxu0 0.0
    %5987 = vmatprep.subr.mxu0 0.0
    %5988 = vmatpush2.msra.mxu0 0.0
    %5989 = vmatprep.subr.mxu0 0.0
    %5990 = vmatpush2.msra.mxu0 0.0
    %5991 = vmatprep.subr.mxu0 0.0
    %5992 = vmatpush2.msra.mxu0 0.0
    %5993 = vmatprep.subr.mxu0 0.0
    %5994 = vmatpush2.msra.mxu0 0.0
    %5995 = vmatprep.subr.mxu0 0.0
    %5996 = vmatpush2.msra.mxu0 0.0
    %5997 = vmatprep.subr.mxu0 0.0
    %5998 = vmatpush2.msra.mxu0 0.0
    %5999 = vmatprep.subr.mxu0 0.0
    %6000 = vmatpush2.msra.mxu0 0.0
    %6001 = vmatprep.subr.mxu0 0.0
    %6002 = vmatpush2.msra.mxu0 0.0
    %6003 = vmatprep.subr.mxu0 0.0
    %6004 = vmatpush2.msra.mxu0 0.0
    %6005 = vmatprep.mubr.f32.mxu0 0.0
    %v6006 = vand.u32 %v5677, 4294901760
    %v6007 = vsub.f32 %v5677, %v6006
    %v6008 = vand.u32 %v6007, 4294901760
    %6009 = vmatmul.mubr.f32.gmra.mxu0 %v6008
    %v6010 = vpop.f32.mrf.mxu0
    %v6011 = vadd.f32 %v5929, %v6010
    %v6012 = vpop.f32.mrf.mxu0
    %6013 = vmatprep.mubr.f32.mxu0 0.0
    %v6014 = vand.u32 %v5680, 4294901760
    %v6015 = vsub.f32 %v5680, %v6014
    %v6016 = vand.u32 %v6015, 4294901760
    %6017 = vmatmul.mubr.f32.gmra.mxu0 %v6016
    %v6018 = vpop.f32.mrf.mxu0
    %v6019 = vadd.f32 %v5936, %v6018
    %v6020 = vpop.f32.mrf.mxu0
    %6021 = vdwg.mxu0
    %6022 = vmatprep.subr.mxu0 0.0
    %6023 = vmatpush1.msra.mxu0 0.0
    %6024 = vmatprep.subr.mxu0 0.0
    %6025 = vmatpush1.msra.mxu0 0.0
    %6026 = vmatprep.subr.mxu0 0.0
    %6027 = vmatpush1.msra.mxu0 0.0
    %6028 = vmatprep.subr.mxu0 0.0
    %6029 = vmatpush1.msra.mxu0 0.0
    %6030 = vmatprep.subr.mxu0 0.0
    %6031 = vmatpush1.msra.mxu0 0.0
    %6032 = vmatprep.subr.mxu0 0.0
    %6033 = vmatpush1.msra.mxu0 0.0
    %6034 = vmatprep.subr.mxu0 0.0
    %6035 = vmatpush1.msra.mxu0 0.0
    %6036 = vmatprep.subr.mxu0 0.0
    %6037 = vmatpush1.msra.mxu0 0.0
    %6038 = vmatprep.subr.mxu0 0.0
    %6039 = vmatpush1.msra.mxu0 0.0
    %6040 = vmatprep.subr.mxu0 0.0
    %6041 = vmatpush1.msra.mxu0 0.0
    %6042 = vmatprep.subr.mxu0 0.0
    %6043 = vmatpush1.msra.mxu0 0.0
    %6044 = vmatprep.subr.mxu0 0.0
    %6045 = vmatpush1.msra.mxu0 0.0
    %6046 = vmatprep.subr.mxu0 0.0
    %6047 = vmatpush1.msra.mxu0 0.0
    %6048 = vmatprep.subr.mxu0 0.0
    %6049 = vmatpush1.msra.mxu0 0.0
    %6050 = vmatprep.subr.mxu0 0.0
    %v6051 = vand.u32 %v76, 4294901760
    %v6052 = vsub.f32 %v76, %v6051
    %v6053 = vand.u32 %v6052, 4294901760
    %6054 = vmatpush1.msra.mxu0 %v6053
    %6055 = vmatprep.subr.mxu0 0.0
    %v6056 = vand.u32 %v75, 4294901760
    %v6057 = vsub.f32 %v75, %v6056
    %v6058 = vand.u32 %v6057, 4294901760
    %6059 = vmatpush1.msra.mxu0 %v6058
    %6060 = vmatprep.subr.mxu0 0.0
    %6061 = vmatpush2.msra.mxu0 0.0
    %6062 = vmatprep.subr.mxu0 0.0
    %6063 = vmatpush2.msra.mxu0 0.0
    %6064 = vmatprep.subr.mxu0 0.0
    %6065 = vmatpush2.msra.mxu0 0.0
    %6066 = vmatprep.subr.mxu0 0.0
    %6067 = vmatpush2.msra.mxu0 0.0
    %6068 = vmatprep.subr.mxu0 0.0
    %6069 = vmatpush2.msra.mxu0 0.0
    %6070 = vmatprep.subr.mxu0 0.0
    %6071 = vmatpush2.msra.mxu0 0.0
    %6072 = vmatprep.subr.mxu0 0.0
    %6073 = vmatpush2.msra.mxu0 0.0
    %6074 = vmatprep.subr.mxu0 0.0
    %6075 = vmatpush2.msra.mxu0 0.0
    %6076 = vmatprep.subr.mxu0 0.0
    %6077 = vmatpush2.msra.mxu0 0.0
    %6078 = vmatprep.subr.mxu0 0.0
    %6079 = vmatpush2.msra.mxu0 0.0
    %6080 = vmatprep.subr.mxu0 0.0
    %6081 = vmatpush2.msra.mxu0 0.0
    %6082 = vmatprep.subr.mxu0 0.0
    %6083 = vmatpush2.msra.mxu0 0.0
    %6084 = vmatprep.subr.mxu0 0.0
    %6085 = vmatpush2.msra.mxu0 0.0
    %6086 = vmatprep.subr.mxu0 0.0
    %6087 = vmatpush2.msra.mxu0 0.0
    %6088 = vmatprep.subr.mxu0 0.0
    %6089 = vmatpush2.msra.mxu0 0.0
    %6090 = vmatprep.subr.mxu0 0.0
    %6091 = vmatpush2.msra.mxu0 0.0
    %6092 = vmatprep.mubr.f32.mxu0 0.0
    %v6093 = vand.u32 %v5677, 4294901760
    %6094 = vmatmul.mubr.f32.gmra.mxu0 %v6093
    %v6095 = vpop.f32.mrf.mxu0
    %v6096 = vadd.f32 %v6011, %v6095
    %v6097 = vpop.f32.mrf.mxu0
    %6098 = vmatprep.mubr.f32.mxu0 0.0
    %v6099 = vand.u32 %v5680, 4294901760
    %6100 = vmatmul.mubr.f32.gmra.mxu0 %v6099
    %v6101 = vpop.f32.mrf.mxu0
    %v6102 = vadd.f32 %v6019, %v6101
    %v6103 = vpop.f32.mrf.mxu0
    %6104 = vdwg.mxu0
    %6105 = vmatprep.subr.mxu0 0.0
    %6106 = vmatpush1.msra.mxu0 0.0
    %6107 = vmatprep.subr.mxu0 0.0
    %6108 = vmatpush1.msra.mxu0 0.0
    %6109 = vmatprep.subr.mxu0 0.0
    %6110 = vmatpush1.msra.mxu0 0.0
    %6111 = vmatprep.subr.mxu0 0.0
    %6112 = vmatpush1.msra.mxu0 0.0
    %6113 = vmatprep.subr.mxu0 0.0
    %6114 = vmatpush1.msra.mxu0 0.0
    %6115 = vmatprep.subr.mxu0 0.0
    %6116 = vmatpush1.msra.mxu0 0.0
    %6117 = vmatprep.subr.mxu0 0.0
    %6118 = vmatpush1.msra.mxu0 0.0
    %6119 = vmatprep.subr.mxu0 0.0
    %6120 = vmatpush1.msra.mxu0 0.0
    %6121 = vmatprep.subr.mxu0 0.0
    %6122 = vmatpush1.msra.mxu0 0.0
    %6123 = vmatprep.subr.mxu0 0.0
    %6124 = vmatpush1.msra.mxu0 0.0
    %6125 = vmatprep.subr.mxu0 0.0
    %6126 = vmatpush1.msra.mxu0 0.0
    %6127 = vmatprep.subr.mxu0 0.0
    %6128 = vmatpush1.msra.mxu0 0.0
    %6129 = vmatprep.subr.mxu0 0.0
    %6130 = vmatpush1.msra.mxu0 0.0
    %6131 = vmatprep.subr.mxu0 0.0
    %6132 = vmatpush1.msra.mxu0 0.0
    %6133 = vmatprep.subr.mxu0 0.0
    %v6134 = vand.u32 %v76, 4294901760
    %6135 = vmatpush1.msra.mxu0 %v6134
    %6136 = vmatprep.subr.mxu0 0.0
    %v6137 = vand.u32 %v75, 4294901760
    %6138 = vmatpush1.msra.mxu0 %v6137
    %6139 = vmatprep.subr.mxu0 0.0
    %6140 = vmatpush2.msra.mxu0 0.0
    %6141 = vmatprep.subr.mxu0 0.0
    %6142 = vmatpush2.msra.mxu0 0.0
    %6143 = vmatprep.subr.mxu0 0.0
    %6144 = vmatpush2.msra.mxu0 0.0
    %6145 = vmatprep.subr.mxu0 0.0
    %6146 = vmatpush2.msra.mxu0 0.0
    %6147 = vmatprep.subr.mxu0 0.0
    %6148 = vmatpush2.msra.mxu0 0.0
    %6149 = vmatprep.subr.mxu0 0.0
    %6150 = vmatpush2.msra.mxu0 0.0
    %6151 = vmatprep.subr.mxu0 0.0
    %6152 = vmatpush2.msra.mxu0 0.0
    %6153 = vmatprep.subr.mxu0 0.0
    %6154 = vmatpush2.msra.mxu0 0.0
    %6155 = vmatprep.subr.mxu0 0.0
    %6156 = vmatpush2.msra.mxu0 0.0
    %6157 = vmatprep.subr.mxu0 0.0
    %6158 = vmatpush2.msra.mxu0 0.0
    %6159 = vmatprep.subr.mxu0 0.0
    %6160 = vmatpush2.msra.mxu0 0.0
    %6161 = vmatprep.subr.mxu0 0.0
    %6162 = vmatpush2.msra.mxu0 0.0
    %6163 = vmatprep.subr.mxu0 0.0
    %6164 = vmatpush2.msra.mxu0 0.0
    %6165 = vmatprep.subr.mxu0 0.0
    %6166 = vmatpush2.msra.mxu0 0.0
    %6167 = vmatprep.subr.mxu0 0.0
    %6168 = vmatpush2.msra.mxu0 0.0
    %6169 = vmatprep.subr.mxu0 0.0
    %6170 = vmatpush2.msra.mxu0 0.0
    %6171 = vmatprep.mubr.f32.mxu0 0.0
    %v6172 = vand.u32 %v5677, 4294901760
    %6173 = vmatmul.mubr.f32.gmra.mxu0 %v6172
    %v6174 = vpop.f32.mrf.mxu0
    %v6175 = vadd.f32 %v6096, %v6174
    %v6176 = vpop.f32.mrf.mxu0
    %6177 = vmatprep.mubr.f32.mxu0 0.0
    %v6178 = vand.u32 %v5680, 4294901760
    %6179 = vmatmul.mubr.f32.gmra.mxu0 %v6178
    %v6180 = vpop.f32.mrf.mxu0
    %v6181 = vadd.f32 %v6102, %v6180
    %v6182 = vpop.f32.mrf.mxu0
    %6183 = vdwg.mxu0
    %vm6184 = vcmp.lt.f32.partialorder %v6175, %v4150
    %vm6185 = vcmp.lt.f32.partialorder %v6181, %v4151
    %v6186 = vsel %vm6184, 2, %v4148
    %v6187 = vsel %vm6185, 2, %v4149
    %v6188 = vsel %vm6184, %v6175, %v4150
    %v6189 = vsel %vm6185, %v6181, %v4151
    %s6190 = scalar_lea.vmem [#allocation9], 48
    %v6191 = vld [vmem:[%s6190] sm:$0xff]
    %v6192 = vld [vmem:[%s6190 + $0x8] sm:$0xff]
    %s6193 = scalar_lea.vmem [#allocation8], 48
    %v6194 = vld [vmem:[%s6193] sm:$0xff]
    %v6195 = vld [vmem:[%s6193 + $0x8] sm:$0xff]
    %v6196 = vsub.f32 %v6191, %v6194
    %v6197 = vsub.f32 %v6192, %v6195
    %6198 = vmatprep.subr.mxu0 0.0
    %6199 = vmatpush1.msra.mxu0 0.0
    %6200 = vmatprep.subr.mxu0 0.0
    %6201 = vmatpush1.msra.mxu0 0.0
    %6202 = vmatprep.subr.mxu0 0.0
    %6203 = vmatpush1.msra.mxu0 0.0
    %6204 = vmatprep.subr.mxu0 0.0
    %6205 = vmatpush1.msra.mxu0 0.0
    %6206 = vmatprep.subr.mxu0 0.0
    %6207 = vmatpush1.msra.mxu0 0.0
    %6208 = vmatprep.subr.mxu0 0.0
    %6209 = vmatpush1.msra.mxu0 0.0
    %6210 = vmatprep.subr.mxu0 0.0
    %6211 = vmatpush1.msra.mxu0 0.0
    %6212 = vmatprep.subr.mxu0 0.0
    %6213 = vmatpush1.msra.mxu0 0.0
    %6214 = vmatprep.subr.mxu0 0.0
    %6215 = vmatpush1.msra.mxu0 0.0
    %6216 = vmatprep.subr.mxu0 0.0
    %6217 = vmatpush1.msra.mxu0 0.0
    %6218 = vmatprep.subr.mxu0 0.0
    %6219 = vmatpush1.msra.mxu0 0.0
    %6220 = vmatprep.subr.mxu0 0.0
    %6221 = vmatpush1.msra.mxu0 0.0
    %6222 = vmatprep.subr.mxu0 0.0
    %6223 = vmatpush1.msra.mxu0 0.0
    %6224 = vmatprep.subr.mxu0 0.0
    %6225 = vmatpush1.msra.mxu0 0.0
    %6226 = vmatprep.subr.mxu0 0.0
    %v6227 = vand.u32 %v6197, 4294901760
    %6228 = vmatpush1.msra.mxu0 %v6227
    %6229 = vmatprep.subr.mxu0 0.0
    %v6230 = vand.u32 %v6196, 4294901760
    %6231 = vmatpush1.msra.mxu0 %v6230
    %6232 = vmatprep.subr.mxu0 0.0
    %6233 = vmatpush2.msra.mxu0 0.0
    %6234 = vmatprep.subr.mxu0 0.0
    %6235 = vmatpush2.msra.mxu0 0.0
    %6236 = vmatprep.subr.mxu0 0.0
    %6237 = vmatpush2.msra.mxu0 0.0
    %6238 = vmatprep.subr.mxu0 0.0
    %6239 = vmatpush2.msra.mxu0 0.0
    %6240 = vmatprep.subr.mxu0 0.0
    %6241 = vmatpush2.msra.mxu0 0.0
    %6242 = vmatprep.subr.mxu0 0.0
    %6243 = vmatpush2.msra.mxu0 0.0
    %6244 = vmatprep.subr.mxu0 0.0
    %6245 = vmatpush2.msra.mxu0 0.0
    %6246 = vmatprep.subr.mxu0 0.0
    %6247 = vmatpush2.msra.mxu0 0.0
    %6248 = vmatprep.subr.mxu0 0.0
    %6249 = vmatpush2.msra.mxu0 0.0
    %6250 = vmatprep.subr.mxu0 0.0
    %6251 = vmatpush2.msra.mxu0 0.0
    %6252 = vmatprep.subr.mxu0 0.0
    %6253 = vmatpush2.msra.mxu0 0.0
    %6254 = vmatprep.subr.mxu0 0.0
    %6255 = vmatpush2.msra.mxu0 0.0
    %6256 = vmatprep.subr.mxu0 0.0
    %6257 = vmatpush2.msra.mxu0 0.0
    %6258 = vmatprep.subr.mxu0 0.0
    %6259 = vmatpush2.msra.mxu0 0.0
    %6260 = vmatprep.subr.mxu0 0.0
    %6261 = vmatpush2.msra.mxu0 0.0
    %6262 = vmatprep.subr.mxu0 0.0
    %6263 = vmatpush2.msra.mxu0 0.0
    %6264 = vmatprep.mubr.f32.mxu0 0.0
    %v6265 = vand.u32 %v85, 4294901760
    %v6266 = vsub.f32 %v85, %v6265
    %v6267 = vand.u32 %v6266, 4294901760
    %v6268 = vsub.f32 %v6266, %v6267
    %v6269 = vand.u32 %v6268, 4294901760
    %6270 = vmatmul.mubr.f32.gmra.mxu0 %v6269
    %v6271 = vpop.f32.mrf.mxu0
    %v6272 = vadd.f32 0.0, %v6271
    %v6273 = vpop.f32.mrf.mxu0
    %6274 = vmatprep.mubr.f32.mxu0 0.0
    %v6275 = vand.u32 %v88, 4294901760
    %v6276 = vsub.f32 %v88, %v6275
    %v6277 = vand.u32 %v6276, 4294901760
    %v6278 = vsub.f32 %v6276, %v6277
    %v6279 = vand.u32 %v6278, 4294901760
    %6280 = vmatmul.mubr.f32.gmra.mxu0 %v6279
    %v6281 = vpop.f32.mrf.mxu0
    %v6282 = vadd.f32 0.0, %v6281
    %v6283 = vpop.f32.mrf.mxu0
    %6284 = vdwg.mxu0
    %6285 = vmatprep.subr.mxu0 0.0
    %6286 = vmatpush1.msra.mxu0 0.0
    %6287 = vmatprep.subr.mxu0 0.0
    %6288 = vmatpush1.msra.mxu0 0.0
    %6289 = vmatprep.subr.mxu0 0.0
    %6290 = vmatpush1.msra.mxu0 0.0
    %6291 = vmatprep.subr.mxu0 0.0
    %6292 = vmatpush1.msra.mxu0 0.0
    %6293 = vmatprep.subr.mxu0 0.0
    %6294 = vmatpush1.msra.mxu0 0.0
    %6295 = vmatprep.subr.mxu0 0.0
    %6296 = vmatpush1.msra.mxu0 0.0
    %6297 = vmatprep.subr.mxu0 0.0
    %6298 = vmatpush1.msra.mxu0 0.0
    %6299 = vmatprep.subr.mxu0 0.0
    %6300 = vmatpush1.msra.mxu0 0.0
    %6301 = vmatprep.subr.mxu0 0.0
    %6302 = vmatpush1.msra.mxu0 0.0
    %6303 = vmatprep.subr.mxu0 0.0
    %6304 = vmatpush1.msra.mxu0 0.0
    %6305 = vmatprep.subr.mxu0 0.0
    %6306 = vmatpush1.msra.mxu0 0.0
    %6307 = vmatprep.subr.mxu0 0.0
    %6308 = vmatpush1.msra.mxu0 0.0
    %6309 = vmatprep.subr.mxu0 0.0
    %6310 = vmatpush1.msra.mxu0 0.0
    %6311 = vmatprep.subr.mxu0 0.0
    %6312 = vmatpush1.msra.mxu0 0.0
    %6313 = vmatprep.subr.mxu0 0.0
    %v6314 = vand.u32 %v6197, 4294901760
    %v6315 = vsub.f32 %v6197, %v6314
    %v6316 = vand.u32 %v6315, 4294901760
    %v6317 = vsub.f32 %v6315, %v6316
    %v6318 = vand.u32 %v6317, 4294901760
    %6319 = vmatpush1.msra.mxu0 %v6318
    %6320 = vmatprep.subr.mxu0 0.0
    %v6321 = vand.u32 %v6196, 4294901760
    %v6322 = vsub.f32 %v6196, %v6321
    %v6323 = vand.u32 %v6322, 4294901760
    %v6324 = vsub.f32 %v6322, %v6323
    %v6325 = vand.u32 %v6324, 4294901760
    %6326 = vmatpush1.msra.mxu0 %v6325
    %6327 = vmatprep.subr.mxu0 0.0
    %6328 = vmatpush2.msra.mxu0 0.0
    %6329 = vmatprep.subr.mxu0 0.0
    %6330 = vmatpush2.msra.mxu0 0.0
    %6331 = vmatprep.subr.mxu0 0.0
    %6332 = vmatpush2.msra.mxu0 0.0
    %6333 = vmatprep.subr.mxu0 0.0
    %6334 = vmatpush2.msra.mxu0 0.0
    %6335 = vmatprep.subr.mxu0 0.0
    %6336 = vmatpush2.msra.mxu0 0.0
    %6337 = vmatprep.subr.mxu0 0.0
    %6338 = vmatpush2.msra.mxu0 0.0
    %6339 = vmatprep.subr.mxu0 0.0
    %6340 = vmatpush2.msra.mxu0 0.0
    %6341 = vmatprep.subr.mxu0 0.0
    %6342 = vmatpush2.msra.mxu0 0.0
    %6343 = vmatprep.subr.mxu0 0.0
    %6344 = vmatpush2.msra.mxu0 0.0
    %6345 = vmatprep.subr.mxu0 0.0
    %6346 = vmatpush2.msra.mxu0 0.0
    %6347 = vmatprep.subr.mxu0 0.0
    %6348 = vmatpush2.msra.mxu0 0.0
    %6349 = vmatprep.subr.mxu0 0.0
    %6350 = vmatpush2.msra.mxu0 0.0
    %6351 = vmatprep.subr.mxu0 0.0
    %6352 = vmatpush2.msra.mxu0 0.0
    %6353 = vmatprep.subr.mxu0 0.0
    %6354 = vmatpush2.msra.mxu0 0.0
    %6355 = vmatprep.subr.mxu0 0.0
    %6356 = vmatpush2.msra.mxu0 0.0
    %6357 = vmatprep.subr.mxu0 0.0
    %6358 = vmatpush2.msra.mxu0 0.0
    %6359 = vmatprep.mubr.f32.mxu0 0.0
    %v6360 = vand.u32 %v85, 4294901760
    %6361 = vmatmul.mubr.f32.gmra.mxu0 %v6360
    %v6362 = vpop.f32.mrf.mxu0
    %v6363 = vadd.f32 %v6272, %v6362
    %v6364 = vpop.f32.mrf.mxu0
    %6365 = vmatprep.mubr.f32.mxu0 0.0
    %v6366 = vand.u32 %v88, 4294901760
    %6367 = vmatmul.mubr.f32.gmra.mxu0 %v6366
    %v6368 = vpop.f32.mrf.mxu0
    %v6369 = vadd.f32 %v6282, %v6368
    %v6370 = vpop.f32.mrf.mxu0
    %6371 = vdwg.mxu0
    %6372 = vmatprep.subr.mxu0 0.0
    %6373 = vmatpush1.msra.mxu0 0.0
    %6374 = vmatprep.subr.mxu0 0.0
    %6375 = vmatpush1.msra.mxu0 0.0
    %6376 = vmatprep.subr.mxu0 0.0
    %6377 = vmatpush1.msra.mxu0 0.0
    %6378 = vmatprep.subr.mxu0 0.0
    %6379 = vmatpush1.msra.mxu0 0.0
    %6380 = vmatprep.subr.mxu0 0.0
    %6381 = vmatpush1.msra.mxu0 0.0
    %6382 = vmatprep.subr.mxu0 0.0
    %6383 = vmatpush1.msra.mxu0 0.0
    %6384 = vmatprep.subr.mxu0 0.0
    %6385 = vmatpush1.msra.mxu0 0.0
    %6386 = vmatprep.subr.mxu0 0.0
    %6387 = vmatpush1.msra.mxu0 0.0
    %6388 = vmatprep.subr.mxu0 0.0
    %6389 = vmatpush1.msra.mxu0 0.0
    %6390 = vmatprep.subr.mxu0 0.0
    %6391 = vmatpush1.msra.mxu0 0.0
    %6392 = vmatprep.subr.mxu0 0.0
    %6393 = vmatpush1.msra.mxu0 0.0
    %6394 = vmatprep.subr.mxu0 0.0
    %6395 = vmatpush1.msra.mxu0 0.0
    %6396 = vmatprep.subr.mxu0 0.0
    %6397 = vmatpush1.msra.mxu0 0.0
    %6398 = vmatprep.subr.mxu0 0.0
    %6399 = vmatpush1.msra.mxu0 0.0
    %6400 = vmatprep.subr.mxu0 0.0
    %v6401 = vand.u32 %v6197, 4294901760
    %v6402 = vsub.f32 %v6197, %v6401
    %6403 = vmatpush1.msra.mxu0 %v6402
    %6404 = vmatprep.subr.mxu0 0.0
    %v6405 = vand.u32 %v6196, 4294901760
    %v6406 = vsub.f32 %v6196, %v6405
    %6407 = vmatpush1.msra.mxu0 %v6406
    %6408 = vmatprep.subr.mxu0 0.0
    %6409 = vmatpush2.msra.mxu0 0.0
    %6410 = vmatprep.subr.mxu0 0.0
    %6411 = vmatpush2.msra.mxu0 0.0
    %6412 = vmatprep.subr.mxu0 0.0
    %6413 = vmatpush2.msra.mxu0 0.0
    %6414 = vmatprep.subr.mxu0 0.0
    %6415 = vmatpush2.msra.mxu0 0.0
    %6416 = vmatprep.subr.mxu0 0.0
    %6417 = vmatpush2.msra.mxu0 0.0
    %6418 = vmatprep.subr.mxu0 0.0
    %6419 = vmatpush2.msra.mxu0 0.0
    %6420 = vmatprep.subr.mxu0 0.0
    %6421 = vmatpush2.msra.mxu0 0.0
    %6422 = vmatprep.subr.mxu0 0.0
    %6423 = vmatpush2.msra.mxu0 0.0
    %6424 = vmatprep.subr.mxu0 0.0
    %6425 = vmatpush2.msra.mxu0 0.0
    %6426 = vmatprep.subr.mxu0 0.0
    %6427 = vmatpush2.msra.mxu0 0.0
    %6428 = vmatprep.subr.mxu0 0.0
    %6429 = vmatpush2.msra.mxu0 0.0
    %6430 = vmatprep.subr.mxu0 0.0
    %6431 = vmatpush2.msra.mxu0 0.0
    %6432 = vmatprep.subr.mxu0 0.0
    %6433 = vmatpush2.msra.mxu0 0.0
    %6434 = vmatprep.subr.mxu0 0.0
    %6435 = vmatpush2.msra.mxu0 0.0
    %6436 = vmatprep.subr.mxu0 0.0
    %6437 = vmatpush2.msra.mxu0 0.0
    %6438 = vmatprep.subr.mxu0 0.0
    %6439 = vmatpush2.msra.mxu0 0.0
    %6440 = vmatprep.mubr.f32.mxu0 0.0
    %v6441 = vand.u32 %v85, 4294901760
    %v6442 = vsub.f32 %v85, %v6441
    %6443 = vmatmul.mubr.f32.gmra.mxu0 %v6442
    %v6444 = vpop.f32.mrf.mxu0
    %v6445 = vadd.f32 %v6363, %v6444
    %v6446 = vpop.f32.mrf.mxu0
    %6447 = vmatprep.mubr.f32.mxu0 0.0
    %v6448 = vand.u32 %v88, 4294901760
    %v6449 = vsub.f32 %v88, %v6448
    %6450 = vmatmul.mubr.f32.gmra.mxu0 %v6449
    %v6451 = vpop.f32.mrf.mxu0
    %v6452 = vadd.f32 %v6369, %v6451
    %v6453 = vpop.f32.mrf.mxu0
    %6454 = vdwg.mxu0
    %6455 = vmatprep.subr.mxu0 0.0
    %6456 = vmatpush1.msra.mxu0 0.0
    %6457 = vmatprep.subr.mxu0 0.0
    %6458 = vmatpush1.msra.mxu0 0.0
    %6459 = vmatprep.subr.mxu0 0.0
    %6460 = vmatpush1.msra.mxu0 0.0
    %6461 = vmatprep.subr.mxu0 0.0
    %6462 = vmatpush1.msra.mxu0 0.0
    %6463 = vmatprep.subr.mxu0 0.0
    %6464 = vmatpush1.msra.mxu0 0.0
    %6465 = vmatprep.subr.mxu0 0.0
    %6466 = vmatpush1.msra.mxu0 0.0
    %6467 = vmatprep.subr.mxu0 0.0
    %6468 = vmatpush1.msra.mxu0 0.0
    %6469 = vmatprep.subr.mxu0 0.0
    %6470 = vmatpush1.msra.mxu0 0.0
    %6471 = vmatprep.subr.mxu0 0.0
    %6472 = vmatpush1.msra.mxu0 0.0
    %6473 = vmatprep.subr.mxu0 0.0
    %6474 = vmatpush1.msra.mxu0 0.0
    %6475 = vmatprep.subr.mxu0 0.0
    %6476 = vmatpush1.msra.mxu0 0.0
    %6477 = vmatprep.subr.mxu0 0.0
    %6478 = vmatpush1.msra.mxu0 0.0
    %6479 = vmatprep.subr.mxu0 0.0
    %6480 = vmatpush1.msra.mxu0 0.0
    %6481 = vmatprep.subr.mxu0 0.0
    %6482 = vmatpush1.msra.mxu0 0.0
    %6483 = vmatprep.subr.mxu0 0.0
    %v6484 = vand.u32 %v6197, 4294901760
    %6485 = vmatpush1.msra.mxu0 %v6484
    %6486 = vmatprep.subr.mxu0 0.0
    %v6487 = vand.u32 %v6196, 4294901760
    %6488 = vmatpush1.msra.mxu0 %v6487
    %6489 = vmatprep.subr.mxu0 0.0
    %6490 = vmatpush2.msra.mxu0 0.0
    %6491 = vmatprep.subr.mxu0 0.0
    %6492 = vmatpush2.msra.mxu0 0.0
    %6493 = vmatprep.subr.mxu0 0.0
    %6494 = vmatpush2.msra.mxu0 0.0
    %6495 = vmatprep.subr.mxu0 0.0
    %6496 = vmatpush2.msra.mxu0 0.0
    %6497 = vmatprep.subr.mxu0 0.0
    %6498 = vmatpush2.msra.mxu0 0.0
    %6499 = vmatprep.subr.mxu0 0.0
    %6500 = vmatpush2.msra.mxu0 0.0
    %6501 = vmatprep.subr.mxu0 0.0
    %6502 = vmatpush2.msra.mxu0 0.0
    %6503 = vmatprep.subr.mxu0 0.0
    %6504 = vmatpush2.msra.mxu0 0.0
    %6505 = vmatprep.subr.mxu0 0.0
    %6506 = vmatpush2.msra.mxu0 0.0
    %6507 = vmatprep.subr.mxu0 0.0
    %6508 = vmatpush2.msra.mxu0 0.0
    %6509 = vmatprep.subr.mxu0 0.0
    %6510 = vmatpush2.msra.mxu0 0.0
    %6511 = vmatprep.subr.mxu0 0.0
    %6512 = vmatpush2.msra.mxu0 0.0
    %6513 = vmatprep.subr.mxu0 0.0
    %6514 = vmatpush2.msra.mxu0 0.0
    %6515 = vmatprep.subr.mxu0 0.0
    %6516 = vmatpush2.msra.mxu0 0.0
    %6517 = vmatprep.subr.mxu0 0.0
    %6518 = vmatpush2.msra.mxu0 0.0
    %6519 = vmatprep.subr.mxu0 0.0
    %6520 = vmatpush2.msra.mxu0 0.0
    %6521 = vmatprep.mubr.f32.mxu0 0.0
    %v6522 = vand.u32 %v85, 4294901760
    %v6523 = vsub.f32 %v85, %v6522
    %v6524 = vand.u32 %v6523, 4294901760
    %6525 = vmatmul.mubr.f32.gmra.mxu0 %v6524
    %v6526 = vpop.f32.mrf.mxu0
    %v6527 = vadd.f32 %v6445, %v6526
    %v6528 = vpop.f32.mrf.mxu0
    %6529 = vmatprep.mubr.f32.mxu0 0.0
    %v6530 = vand.u32 %v88, 4294901760
    %v6531 = vsub.f32 %v88, %v6530
    %v6532 = vand.u32 %v6531, 4294901760
    %6533 = vmatmul.mubr.f32.gmra.mxu0 %v6532
    %v6534 = vpop.f32.mrf.mxu0
    %v6535 = vadd.f32 %v6452, %v6534
    %v6536 = vpop.f32.mrf.mxu0
    %6537 = vdwg.mxu0
    %6538 = vmatprep.subr.mxu0 0.0
    %6539 = vmatpush1.msra.mxu0 0.0
    %6540 = vmatprep.subr.mxu0 0.0
    %6541 = vmatpush1.msra.mxu0 0.0
    %6542 = vmatprep.subr.mxu0 0.0
    %6543 = vmatpush1.msra.mxu0 0.0
    %6544 = vmatprep.subr.mxu0 0.0
    %6545 = vmatpush1.msra.mxu0 0.0
    %6546 = vmatprep.subr.mxu0 0.0
    %6547 = vmatpush1.msra.mxu0 0.0
    %6548 = vmatprep.subr.mxu0 0.0
    %6549 = vmatpush1.msra.mxu0 0.0
    %6550 = vmatprep.subr.mxu0 0.0
    %6551 = vmatpush1.msra.mxu0 0.0
    %6552 = vmatprep.subr.mxu0 0.0
    %6553 = vmatpush1.msra.mxu0 0.0
    %6554 = vmatprep.subr.mxu0 0.0
    %6555 = vmatpush1.msra.mxu0 0.0
    %6556 = vmatprep.subr.mxu0 0.0
    %6557 = vmatpush1.msra.mxu0 0.0
    %6558 = vmatprep.subr.mxu0 0.0
    %6559 = vmatpush1.msra.mxu0 0.0
    %6560 = vmatprep.subr.mxu0 0.0
    %6561 = vmatpush1.msra.mxu0 0.0
    %6562 = vmatprep.subr.mxu0 0.0
    %6563 = vmatpush1.msra.mxu0 0.0
    %6564 = vmatprep.subr.mxu0 0.0
    %6565 = vmatpush1.msra.mxu0 0.0
    %6566 = vmatprep.subr.mxu0 0.0
    %v6567 = vand.u32 %v6197, 4294901760
    %v6568 = vsub.f32 %v6197, %v6567
    %v6569 = vand.u32 %v6568, 4294901760
    %6570 = vmatpush1.msra.mxu0 %v6569
    %6571 = vmatprep.subr.mxu0 0.0
    %v6572 = vand.u32 %v6196, 4294901760
    %v6573 = vsub.f32 %v6196, %v6572
    %v6574 = vand.u32 %v6573, 4294901760
    %6575 = vmatpush1.msra.mxu0 %v6574
    %6576 = vmatprep.subr.mxu0 0.0
    %6577 = vmatpush2.msra.mxu0 0.0
    %6578 = vmatprep.subr.mxu0 0.0
    %6579 = vmatpush2.msra.mxu0 0.0
    %6580 = vmatprep.subr.mxu0 0.0
    %6581 = vmatpush2.msra.mxu0 0.0
    %6582 = vmatprep.subr.mxu0 0.0
    %6583 = vmatpush2.msra.mxu0 0.0
    %6584 = vmatprep.subr.mxu0 0.0
    %6585 = vmatpush2.msra.mxu0 0.0
    %6586 = vmatprep.subr.mxu0 0.0
    %6587 = vmatpush2.msra.mxu0 0.0
    %6588 = vmatprep.subr.mxu0 0.0
    %6589 = vmatpush2.msra.mxu0 0.0
    %6590 = vmatprep.subr.mxu0 0.0
    %6591 = vmatpush2.msra.mxu0 0.0
    %6592 = vmatprep.subr.mxu0 0.0
    %6593 = vmatpush2.msra.mxu0 0.0
    %6594 = vmatprep.subr.mxu0 0.0
    %6595 = vmatpush2.msra.mxu0 0.0
    %6596 = vmatprep.subr.mxu0 0.0
    %6597 = vmatpush2.msra.mxu0 0.0
    %6598 = vmatprep.subr.mxu0 0.0
    %6599 = vmatpush2.msra.mxu0 0.0
    %6600 = vmatprep.subr.mxu0 0.0
    %6601 = vmatpush2.msra.mxu0 0.0
    %6602 = vmatprep.subr.mxu0 0.0
    %6603 = vmatpush2.msra.mxu0 0.0
    %6604 = vmatprep.subr.mxu0 0.0
    %6605 = vmatpush2.msra.mxu0 0.0
    %6606 = vmatprep.subr.mxu0 0.0
    %6607 = vmatpush2.msra.mxu0 0.0
    %6608 = vmatprep.mubr.f32.mxu0 0.0
    %v6609 = vand.u32 %v85, 4294901760
    %6610 = vmatmul.mubr.f32.gmra.mxu0 %v6609
    %v6611 = vpop.f32.mrf.mxu0
    %v6612 = vadd.f32 %v6527, %v6611
    %v6613 = vpop.f32.mrf.mxu0
    %6614 = vmatprep.mubr.f32.mxu0 0.0
    %v6615 = vand.u32 %v88, 4294901760
    %6616 = vmatmul.mubr.f32.gmra.mxu0 %v6615
    %v6617 = vpop.f32.mrf.mxu0
    %v6618 = vadd.f32 %v6535, %v6617
    %v6619 = vpop.f32.mrf.mxu0
    %6620 = vdwg.mxu0
    %6621 = vmatprep.subr.mxu0 0.0
    %6622 = vmatpush1.msra.mxu0 0.0
    %6623 = vmatprep.subr.mxu0 0.0
    %6624 = vmatpush1.msra.mxu0 0.0
    %6625 = vmatprep.subr.mxu0 0.0
    %6626 = vmatpush1.msra.mxu0 0.0
    %6627 = vmatprep.subr.mxu0 0.0
    %6628 = vmatpush1.msra.mxu0 0.0
    %6629 = vmatprep.subr.mxu0 0.0
    %6630 = vmatpush1.msra.mxu0 0.0
    %6631 = vmatprep.subr.mxu0 0.0
    %6632 = vmatpush1.msra.mxu0 0.0
    %6633 = vmatprep.subr.mxu0 0.0
    %6634 = vmatpush1.msra.mxu0 0.0
    %6635 = vmatprep.subr.mxu0 0.0
    %6636 = vmatpush1.msra.mxu0 0.0
    %6637 = vmatprep.subr.mxu0 0.0
    %6638 = vmatpush1.msra.mxu0 0.0
    %6639 = vmatprep.subr.mxu0 0.0
    %6640 = vmatpush1.msra.mxu0 0.0
    %6641 = vmatprep.subr.mxu0 0.0
    %6642 = vmatpush1.msra.mxu0 0.0
    %6643 = vmatprep.subr.mxu0 0.0
    %6644 = vmatpush1.msra.mxu0 0.0
    %6645 = vmatprep.subr.mxu0 0.0
    %6646 = vmatpush1.msra.mxu0 0.0
    %6647 = vmatprep.subr.mxu0 0.0
    %6648 = vmatpush1.msra.mxu0 0.0
    %6649 = vmatprep.subr.mxu0 0.0
    %v6650 = vand.u32 %v6197, 4294901760
    %6651 = vmatpush1.msra.mxu0 %v6650
    %6652 = vmatprep.subr.mxu0 0.0
    %v6653 = vand.u32 %v6196, 4294901760
    %6654 = vmatpush1.msra.mxu0 %v6653
    %6655 = vmatprep.subr.mxu0 0.0
    %6656 = vmatpush2.msra.mxu0 0.0
    %6657 = vmatprep.subr.mxu0 0.0
    %6658 = vmatpush2.msra.mxu0 0.0
    %6659 = vmatprep.subr.mxu0 0.0
    %6660 = vmatpush2.msra.mxu0 0.0
    %6661 = vmatprep.subr.mxu0 0.0
    %6662 = vmatpush2.msra.mxu0 0.0
    %6663 = vmatprep.subr.mxu0 0.0
    %6664 = vmatpush2.msra.mxu0 0.0
    %6665 = vmatprep.subr.mxu0 0.0
    %6666 = vmatpush2.msra.mxu0 0.0
    %6667 = vmatprep.subr.mxu0 0.0
    %6668 = vmatpush2.msra.mxu0 0.0
    %6669 = vmatprep.subr.mxu0 0.0
    %6670 = vmatpush2.msra.mxu0 0.0
    %6671 = vmatprep.subr.mxu0 0.0
    %6672 = vmatpush2.msra.mxu0 0.0
    %6673 = vmatprep.subr.mxu0 0.0
    %6674 = vmatpush2.msra.mxu0 0.0
    %6675 = vmatprep.subr.mxu0 0.0
    %6676 = vmatpush2.msra.mxu0 0.0
    %6677 = vmatprep.subr.mxu0 0.0
    %6678 = vmatpush2.msra.mxu0 0.0
    %6679 = vmatprep.subr.mxu0 0.0
    %6680 = vmatpush2.msra.mxu0 0.0
    %6681 = vmatprep.subr.mxu0 0.0
    %6682 = vmatpush2.msra.mxu0 0.0
    %6683 = vmatprep.subr.mxu0 0.0
    %6684 = vmatpush2.msra.mxu0 0.0
    %6685 = vmatprep.subr.mxu0 0.0
    %6686 = vmatpush2.msra.mxu0 0.0
    %6687 = vmatprep.mubr.f32.mxu0 0.0
    %v6688 = vand.u32 %v85, 4294901760
    %6689 = vmatmul.mubr.f32.gmra.mxu0 %v6688
    %v6690 = vpop.f32.mrf.mxu0
    %v6691 = vadd.f32 %v6612, %v6690
    %v6692 = vpop.f32.mrf.mxu0
    %6693 = vmatprep.mubr.f32.mxu0 0.0
    %v6694 = vand.u32 %v88, 4294901760
    %6695 = vmatmul.mubr.f32.gmra.mxu0 %v6694
    %v6696 = vpop.f32.mrf.mxu0
    %v6697 = vadd.f32 %v6618, %v6696
    %v6698 = vpop.f32.mrf.mxu0
    %6699 = vdwg.mxu0
    %v6701 = vsel %vm83, %v6691, 0
    %v6704 = vsel %vm83, %v6697, 0
    %6706 = vmatprep.subr.mxu0 0.0
    %6707 = vmatpush1.msra.mxu0 0.0
    %6708 = vmatprep.subr.mxu0 0.0
    %6709 = vmatpush1.msra.mxu0 0.0
    %6710 = vmatprep.subr.mxu0 0.0
    %6711 = vmatpush1.msra.mxu0 0.0
    %6712 = vmatprep.subr.mxu0 0.0
    %6713 = vmatpush1.msra.mxu0 0.0
    %6714 = vmatprep.subr.mxu0 0.0
    %6715 = vmatpush1.msra.mxu0 0.0
    %6716 = vmatprep.subr.mxu0 0.0
    %6717 = vmatpush1.msra.mxu0 0.0
    %6718 = vmatprep.subr.mxu0 0.0
    %6719 = vmatpush1.msra.mxu0 0.0
    %6720 = vmatprep.subr.mxu0 0.0
    %6721 = vmatpush1.msra.mxu0 0.0
    %6722 = vmatprep.subr.mxu0 0.0
    %6723 = vmatpush1.msra.mxu0 0.0
    %6724 = vmatprep.subr.mxu0 0.0
    %6725 = vmatpush1.msra.mxu0 0.0
    %6726 = vmatprep.subr.mxu0 0.0
    %6727 = vmatpush1.msra.mxu0 0.0
    %6728 = vmatprep.subr.mxu0 0.0
    %6729 = vmatpush1.msra.mxu0 0.0
    %6730 = vmatprep.subr.mxu0 0.0
    %6731 = vmatpush1.msra.mxu0 0.0
    %6732 = vmatprep.subr.mxu0 0.0
    %6733 = vmatpush1.msra.mxu0 0.0
    %6734 = vmatprep.subr.mxu0 0.0
    %v6735 = vand.u32 %v76, 4294901760
    %6736 = vmatpush1.msra.mxu0 %v6735
    %6737 = vmatprep.subr.mxu0 0.0
    %v6738 = vand.u32 %v75, 4294901760
    %6739 = vmatpush1.msra.mxu0 %v6738
    %6740 = vmatprep.subr.mxu0 0.0
    %6741 = vmatpush2.msra.mxu0 0.0
    %6742 = vmatprep.subr.mxu0 0.0
    %6743 = vmatpush2.msra.mxu0 0.0
    %6744 = vmatprep.subr.mxu0 0.0
    %6745 = vmatpush2.msra.mxu0 0.0
    %6746 = vmatprep.subr.mxu0 0.0
    %6747 = vmatpush2.msra.mxu0 0.0
    %6748 = vmatprep.subr.mxu0 0.0
    %6749 = vmatpush2.msra.mxu0 0.0
    %6750 = vmatprep.subr.mxu0 0.0
    %6751 = vmatpush2.msra.mxu0 0.0
    %6752 = vmatprep.subr.mxu0 0.0
    %6753 = vmatpush2.msra.mxu0 0.0
    %6754 = vmatprep.subr.mxu0 0.0
    %6755 = vmatpush2.msra.mxu0 0.0
    %6756 = vmatprep.subr.mxu0 0.0
    %6757 = vmatpush2.msra.mxu0 0.0
    %6758 = vmatprep.subr.mxu0 0.0
    %6759 = vmatpush2.msra.mxu0 0.0
    %6760 = vmatprep.subr.mxu0 0.0
    %6761 = vmatpush2.msra.mxu0 0.0
    %6762 = vmatprep.subr.mxu0 0.0
    %6763 = vmatpush2.msra.mxu0 0.0
    %6764 = vmatprep.subr.mxu0 0.0
    %6765 = vmatpush2.msra.mxu0 0.0
    %6766 = vmatprep.subr.mxu0 0.0
    %6767 = vmatpush2.msra.mxu0 0.0
    %6768 = vmatprep.subr.mxu0 0.0
    %6769 = vmatpush2.msra.mxu0 0.0
    %6770 = vmatprep.subr.mxu0 0.0
    %6771 = vmatpush2.msra.mxu0 0.0
    %6772 = vmatprep.mubr.f32.mxu0 0.0
    %v6773 = vand.u32 %v6701, 4294901760
    %v6774 = vsub.f32 %v6701, %v6773
    %v6775 = vand.u32 %v6774, 4294901760
    %v6776 = vsub.f32 %v6774, %v6775
    %v6777 = vand.u32 %v6776, 4294901760
    %6778 = vmatmul.mubr.f32.gmra.mxu0 %v6777
    %v6779 = vpop.f32.mrf.mxu0
    %v6780 = vadd.f32 0.0, %v6779
    %v6781 = vpop.f32.mrf.mxu0
    %6782 = vmatprep.mubr.f32.mxu0 0.0
    %v6783 = vand.u32 %v6704, 4294901760
    %v6784 = vsub.f32 %v6704, %v6783
    %v6785 = vand.u32 %v6784, 4294901760
    %v6786 = vsub.f32 %v6784, %v6785
    %v6787 = vand.u32 %v6786, 4294901760
    %6788 = vmatmul.mubr.f32.gmra.mxu0 %v6787
    %v6789 = vpop.f32.mrf.mxu0
    %v6790 = vadd.f32 0.0, %v6789
    %v6791 = vpop.f32.mrf.mxu0
    %6792 = vdwg.mxu0
    %6793 = vmatprep.subr.mxu0 0.0
    %6794 = vmatpush1.msra.mxu0 0.0
    %6795 = vmatprep.subr.mxu0 0.0
    %6796 = vmatpush1.msra.mxu0 0.0
    %6797 = vmatprep.subr.mxu0 0.0
    %6798 = vmatpush1.msra.mxu0 0.0
    %6799 = vmatprep.subr.mxu0 0.0
    %6800 = vmatpush1.msra.mxu0 0.0
    %6801 = vmatprep.subr.mxu0 0.0
    %6802 = vmatpush1.msra.mxu0 0.0
    %6803 = vmatprep.subr.mxu0 0.0
    %6804 = vmatpush1.msra.mxu0 0.0
    %6805 = vmatprep.subr.mxu0 0.0
    %6806 = vmatpush1.msra.mxu0 0.0
    %6807 = vmatprep.subr.mxu0 0.0
    %6808 = vmatpush1.msra.mxu0 0.0
    %6809 = vmatprep.subr.mxu0 0.0
    %6810 = vmatpush1.msra.mxu0 0.0
    %6811 = vmatprep.subr.mxu0 0.0
    %6812 = vmatpush1.msra.mxu0 0.0
    %6813 = vmatprep.subr.mxu0 0.0
    %6814 = vmatpush1.msra.mxu0 0.0
    %6815 = vmatprep.subr.mxu0 0.0
    %6816 = vmatpush1.msra.mxu0 0.0
    %6817 = vmatprep.subr.mxu0 0.0
    %6818 = vmatpush1.msra.mxu0 0.0
    %6819 = vmatprep.subr.mxu0 0.0
    %6820 = vmatpush1.msra.mxu0 0.0
    %6821 = vmatprep.subr.mxu0 0.0
    %v6822 = vand.u32 %v76, 4294901760
    %v6823 = vsub.f32 %v76, %v6822
    %v6824 = vand.u32 %v6823, 4294901760
    %v6825 = vsub.f32 %v6823, %v6824
    %v6826 = vand.u32 %v6825, 4294901760
    %6827 = vmatpush1.msra.mxu0 %v6826
    %6828 = vmatprep.subr.mxu0 0.0
    %v6829 = vand.u32 %v75, 4294901760
    %v6830 = vsub.f32 %v75, %v6829
    %v6831 = vand.u32 %v6830, 4294901760
    %v6832 = vsub.f32 %v6830, %v6831
    %v6833 = vand.u32 %v6832, 4294901760
    %6834 = vmatpush1.msra.mxu0 %v6833
    %6835 = vmatprep.subr.mxu0 0.0
    %6836 = vmatpush2.msra.mxu0 0.0
    %6837 = vmatprep.subr.mxu0 0.0
    %6838 = vmatpush2.msra.mxu0 0.0
    %6839 = vmatprep.subr.mxu0 0.0
    %6840 = vmatpush2.msra.mxu0 0.0
    %6841 = vmatprep.subr.mxu0 0.0
    %6842 = vmatpush2.msra.mxu0 0.0
    %6843 = vmatprep.subr.mxu0 0.0
    %6844 = vmatpush2.msra.mxu0 0.0
    %6845 = vmatprep.subr.mxu0 0.0
    %6846 = vmatpush2.msra.mxu0 0.0
    %6847 = vmatprep.subr.mxu0 0.0
    %6848 = vmatpush2.msra.mxu0 0.0
    %6849 = vmatprep.subr.mxu0 0.0
    %6850 = vmatpush2.msra.mxu0 0.0
    %6851 = vmatprep.subr.mxu0 0.0
    %6852 = vmatpush2.msra.mxu0 0.0
    %6853 = vmatprep.subr.mxu0 0.0
    %6854 = vmatpush2.msra.mxu0 0.0
    %6855 = vmatprep.subr.mxu0 0.0
    %6856 = vmatpush2.msra.mxu0 0.0
    %6857 = vmatprep.subr.mxu0 0.0
    %6858 = vmatpush2.msra.mxu0 0.0
    %6859 = vmatprep.subr.mxu0 0.0
    %6860 = vmatpush2.msra.mxu0 0.0
    %6861 = vmatprep.subr.mxu0 0.0
    %6862 = vmatpush2.msra.mxu0 0.0
    %6863 = vmatprep.subr.mxu0 0.0
    %6864 = vmatpush2.msra.mxu0 0.0
    %6865 = vmatprep.subr.mxu0 0.0
    %6866 = vmatpush2.msra.mxu0 0.0
    %6867 = vmatprep.mubr.f32.mxu0 0.0
    %v6868 = vand.u32 %v6701, 4294901760
    %6869 = vmatmul.mubr.f32.gmra.mxu0 %v6868
    %v6870 = vpop.f32.mrf.mxu0
    %v6871 = vadd.f32 %v6780, %v6870
    %v6872 = vpop.f32.mrf.mxu0
    %6873 = vmatprep.mubr.f32.mxu0 0.0
    %v6874 = vand.u32 %v6704, 4294901760
    %6875 = vmatmul.mubr.f32.gmra.mxu0 %v6874
    %v6876 = vpop.f32.mrf.mxu0
    %v6877 = vadd.f32 %v6790, %v6876
    %v6878 = vpop.f32.mrf.mxu0
    %6879 = vdwg.mxu0
    %6880 = vmatprep.subr.mxu0 0.0
    %6881 = vmatpush1.msra.mxu0 0.0
    %6882 = vmatprep.subr.mxu0 0.0
    %6883 = vmatpush1.msra.mxu0 0.0
    %6884 = vmatprep.subr.mxu0 0.0
    %6885 = vmatpush1.msra.mxu0 0.0
    %6886 = vmatprep.subr.mxu0 0.0
    %6887 = vmatpush1.msra.mxu0 0.0
    %6888 = vmatprep.subr.mxu0 0.0
    %6889 = vmatpush1.msra.mxu0 0.0
    %6890 = vmatprep.subr.mxu0 0.0
    %6891 = vmatpush1.msra.mxu0 0.0
    %6892 = vmatprep.subr.mxu0 0.0
    %6893 = vmatpush1.msra.mxu0 0.0
    %6894 = vmatprep.subr.mxu0 0.0
    %6895 = vmatpush1.msra.mxu0 0.0
    %6896 = vmatprep.subr.mxu0 0.0
    %6897 = vmatpush1.msra.mxu0 0.0
    %6898 = vmatprep.subr.mxu0 0.0
    %6899 = vmatpush1.msra.mxu0 0.0
    %6900 = vmatprep.subr.mxu0 0.0
    %6901 = vmatpush1.msra.mxu0 0.0
    %6902 = vmatprep.subr.mxu0 0.0
    %6903 = vmatpush1.msra.mxu0 0.0
    %6904 = vmatprep.subr.mxu0 0.0
    %6905 = vmatpush1.msra.mxu0 0.0
    %6906 = vmatprep.subr.mxu0 0.0
    %6907 = vmatpush1.msra.mxu0 0.0
    %6908 = vmatprep.subr.mxu0 0.0
    %v6909 = vand.u32 %v76, 4294901760
    %v6910 = vsub.f32 %v76, %v6909
    %6911 = vmatpush1.msra.mxu0 %v6910
    %6912 = vmatprep.subr.mxu0 0.0
    %v6913 = vand.u32 %v75, 4294901760
    %v6914 = vsub.f32 %v75, %v6913
    %6915 = vmatpush1.msra.mxu0 %v6914
    %6916 = vmatprep.subr.mxu0 0.0
    %6917 = vmatpush2.msra.mxu0 0.0
    %6918 = vmatprep.subr.mxu0 0.0
    %6919 = vmatpush2.msra.mxu0 0.0
    %6920 = vmatprep.subr.mxu0 0.0
    %6921 = vmatpush2.msra.mxu0 0.0
    %6922 = vmatprep.subr.mxu0 0.0
    %6923 = vmatpush2.msra.mxu0 0.0
    %6924 = vmatprep.subr.mxu0 0.0
    %6925 = vmatpush2.msra.mxu0 0.0
    %6926 = vmatprep.subr.mxu0 0.0
    %6927 = vmatpush2.msra.mxu0 0.0
    %6928 = vmatprep.subr.mxu0 0.0
    %6929 = vmatpush2.msra.mxu0 0.0
    %6930 = vmatprep.subr.mxu0 0.0
    %6931 = vmatpush2.msra.mxu0 0.0
    %6932 = vmatprep.subr.mxu0 0.0
    %6933 = vmatpush2.msra.mxu0 0.0
    %6934 = vmatprep.subr.mxu0 0.0
    %6935 = vmatpush2.msra.mxu0 0.0
    %6936 = vmatprep.subr.mxu0 0.0
    %6937 = vmatpush2.msra.mxu0 0.0
    %6938 = vmatprep.subr.mxu0 0.0
    %6939 = vmatpush2.msra.mxu0 0.0
    %6940 = vmatprep.subr.mxu0 0.0
    %6941 = vmatpush2.msra.mxu0 0.0
    %6942 = vmatprep.subr.mxu0 0.0
    %6943 = vmatpush2.msra.mxu0 0.0
    %6944 = vmatprep.subr.mxu0 0.0
    %6945 = vmatpush2.msra.mxu0 0.0
    %6946 = vmatprep.subr.mxu0 0.0
    %6947 = vmatpush2.msra.mxu0 0.0
    %6948 = vmatprep.mubr.f32.mxu0 0.0
    %v6949 = vand.u32 %v6701, 4294901760
    %v6950 = vsub.f32 %v6701, %v6949
    %6951 = vmatmul.mubr.f32.gmra.mxu0 %v6950
    %v6952 = vpop.f32.mrf.mxu0
    %v6953 = vadd.f32 %v6871, %v6952
    %v6954 = vpop.f32.mrf.mxu0
    %6955 = vmatprep.mubr.f32.mxu0 0.0
    %v6956 = vand.u32 %v6704, 4294901760
    %v6957 = vsub.f32 %v6704, %v6956
    %6958 = vmatmul.mubr.f32.gmra.mxu0 %v6957
    %v6959 = vpop.f32.mrf.mxu0
    %v6960 = vadd.f32 %v6877, %v6959
    %v6961 = vpop.f32.mrf.mxu0
    %6962 = vdwg.mxu0
    %6963 = vmatprep.subr.mxu0 0.0
    %6964 = vmatpush1.msra.mxu0 0.0
    %6965 = vmatprep.subr.mxu0 0.0
    %6966 = vmatpush1.msra.mxu0 0.0
    %6967 = vmatprep.subr.mxu0 0.0
    %6968 = vmatpush1.msra.mxu0 0.0
    %6969 = vmatprep.subr.mxu0 0.0
    %6970 = vmatpush1.msra.mxu0 0.0
    %6971 = vmatprep.subr.mxu0 0.0
    %6972 = vmatpush1.msra.mxu0 0.0
    %6973 = vmatprep.subr.mxu0 0.0
    %6974 = vmatpush1.msra.mxu0 0.0
    %6975 = vmatprep.subr.mxu0 0.0
    %6976 = vmatpush1.msra.mxu0 0.0
    %6977 = vmatprep.subr.mxu0 0.0
    %6978 = vmatpush1.msra.mxu0 0.0
    %6979 = vmatprep.subr.mxu0 0.0
    %6980 = vmatpush1.msra.mxu0 0.0
    %6981 = vmatprep.subr.mxu0 0.0
    %6982 = vmatpush1.msra.mxu0 0.0
    %6983 = vmatprep.subr.mxu0 0.0
    %6984 = vmatpush1.msra.mxu0 0.0
    %6985 = vmatprep.subr.mxu0 0.0
    %6986 = vmatpush1.msra.mxu0 0.0
    %6987 = vmatprep.subr.mxu0 0.0
    %6988 = vmatpush1.msra.mxu0 0.0
    %6989 = vmatprep.subr.mxu0 0.0
    %6990 = vmatpush1.msra.mxu0 0.0
    %6991 = vmatprep.subr.mxu0 0.0
    %v6992 = vand.u32 %v76, 4294901760
    %6993 = vmatpush1.msra.mxu0 %v6992
    %6994 = vmatprep.subr.mxu0 0.0
    %v6995 = vand.u32 %v75, 4294901760
    %6996 = vmatpush1.msra.mxu0 %v6995
    %6997 = vmatprep.subr.mxu0 0.0
    %6998 = vmatpush2.msra.mxu0 0.0
    %6999 = vmatprep.subr.mxu0 0.0
    %7000 = vmatpush2.msra.mxu0 0.0
    %7001 = vmatprep.subr.mxu0 0.0
    %7002 = vmatpush2.msra.mxu0 0.0
    %7003 = vmatprep.subr.mxu0 0.0
    %7004 = vmatpush2.msra.mxu0 0.0
    %7005 = vmatprep.subr.mxu0 0.0
    %7006 = vmatpush2.msra.mxu0 0.0
    %7007 = vmatprep.subr.mxu0 0.0
    %7008 = vmatpush2.msra.mxu0 0.0
    %7009 = vmatprep.subr.mxu0 0.0
    %7010 = vmatpush2.msra.mxu0 0.0
    %7011 = vmatprep.subr.mxu0 0.0
    %7012 = vmatpush2.msra.mxu0 0.0
    %7013 = vmatprep.subr.mxu0 0.0
    %7014 = vmatpush2.msra.mxu0 0.0
    %7015 = vmatprep.subr.mxu0 0.0
    %7016 = vmatpush2.msra.mxu0 0.0
    %7017 = vmatprep.subr.mxu0 0.0
    %7018 = vmatpush2.msra.mxu0 0.0
    %7019 = vmatprep.subr.mxu0 0.0
    %7020 = vmatpush2.msra.mxu0 0.0
    %7021 = vmatprep.subr.mxu0 0.0
    %7022 = vmatpush2.msra.mxu0 0.0
    %7023 = vmatprep.subr.mxu0 0.0
    %7024 = vmatpush2.msra.mxu0 0.0
    %7025 = vmatprep.subr.mxu0 0.0
    %7026 = vmatpush2.msra.mxu0 0.0
    %7027 = vmatprep.subr.mxu0 0.0
    %7028 = vmatpush2.msra.mxu0 0.0
    %7029 = vmatprep.mubr.f32.mxu0 0.0
    %v7030 = vand.u32 %v6701, 4294901760
    %v7031 = vsub.f32 %v6701, %v7030
    %v7032 = vand.u32 %v7031, 4294901760
    %7033 = vmatmul.mubr.f32.gmra.mxu0 %v7032
    %v7034 = vpop.f32.mrf.mxu0
    %v7035 = vadd.f32 %v6953, %v7034
    %v7036 = vpop.f32.mrf.mxu0
    %7037 = vmatprep.mubr.f32.mxu0 0.0
    %v7038 = vand.u32 %v6704, 4294901760
    %v7039 = vsub.f32 %v6704, %v7038
    %v7040 = vand.u32 %v7039, 4294901760
    %7041 = vmatmul.mubr.f32.gmra.mxu0 %v7040
    %v7042 = vpop.f32.mrf.mxu0
    %v7043 = vadd.f32 %v6960, %v7042
    %v7044 = vpop.f32.mrf.mxu0
    %7045 = vdwg.mxu0
    %7046 = vmatprep.subr.mxu0 0.0
    %7047 = vmatpush1.msra.mxu0 0.0
    %7048 = vmatprep.subr.mxu0 0.0
    %7049 = vmatpush1.msra.mxu0 0.0
    %7050 = vmatprep.subr.mxu0 0.0
    %7051 = vmatpush1.msra.mxu0 0.0
    %7052 = vmatprep.subr.mxu0 0.0
    %7053 = vmatpush1.msra.mxu0 0.0
    %7054 = vmatprep.subr.mxu0 0.0
    %7055 = vmatpush1.msra.mxu0 0.0
    %7056 = vmatprep.subr.mxu0 0.0
    %7057 = vmatpush1.msra.mxu0 0.0
    %7058 = vmatprep.subr.mxu0 0.0
    %7059 = vmatpush1.msra.mxu0 0.0
    %7060 = vmatprep.subr.mxu0 0.0
    %7061 = vmatpush1.msra.mxu0 0.0
    %7062 = vmatprep.subr.mxu0 0.0
    %7063 = vmatpush1.msra.mxu0 0.0
    %7064 = vmatprep.subr.mxu0 0.0
    %7065 = vmatpush1.msra.mxu0 0.0
    %7066 = vmatprep.subr.mxu0 0.0
    %7067 = vmatpush1.msra.mxu0 0.0
    %7068 = vmatprep.subr.mxu0 0.0
    %7069 = vmatpush1.msra.mxu0 0.0
    %7070 = vmatprep.subr.mxu0 0.0
    %7071 = vmatpush1.msra.mxu0 0.0
    %7072 = vmatprep.subr.mxu0 0.0
    %7073 = vmatpush1.msra.mxu0 0.0
    %7074 = vmatprep.subr.mxu0 0.0
    %v7075 = vand.u32 %v76, 4294901760
    %v7076 = vsub.f32 %v76, %v7075
    %v7077 = vand.u32 %v7076, 4294901760
    %7078 = vmatpush1.msra.mxu0 %v7077
    %7079 = vmatprep.subr.mxu0 0.0
    %v7080 = vand.u32 %v75, 4294901760
    %v7081 = vsub.f32 %v75, %v7080
    %v7082 = vand.u32 %v7081, 4294901760
    %7083 = vmatpush1.msra.mxu0 %v7082
    %7084 = vmatprep.subr.mxu0 0.0
    %7085 = vmatpush2.msra.mxu0 0.0
    %7086 = vmatprep.subr.mxu0 0.0
    %7087 = vmatpush2.msra.mxu0 0.0
    %7088 = vmatprep.subr.mxu0 0.0
    %7089 = vmatpush2.msra.mxu0 0.0
    %7090 = vmatprep.subr.mxu0 0.0
    %7091 = vmatpush2.msra.mxu0 0.0
    %7092 = vmatprep.subr.mxu0 0.0
    %7093 = vmatpush2.msra.mxu0 0.0
    %7094 = vmatprep.subr.mxu0 0.0
    %7095 = vmatpush2.msra.mxu0 0.0
    %7096 = vmatprep.subr.mxu0 0.0
    %7097 = vmatpush2.msra.mxu0 0.0
    %7098 = vmatprep.subr.mxu0 0.0
    %7099 = vmatpush2.msra.mxu0 0.0
    %7100 = vmatprep.subr.mxu0 0.0
    %7101 = vmatpush2.msra.mxu0 0.0
    %7102 = vmatprep.subr.mxu0 0.0
    %7103 = vmatpush2.msra.mxu0 0.0
    %7104 = vmatprep.subr.mxu0 0.0
    %7105 = vmatpush2.msra.mxu0 0.0
    %7106 = vmatprep.subr.mxu0 0.0
    %7107 = vmatpush2.msra.mxu0 0.0
    %7108 = vmatprep.subr.mxu0 0.0
    %7109 = vmatpush2.msra.mxu0 0.0
    %7110 = vmatprep.subr.mxu0 0.0
    %7111 = vmatpush2.msra.mxu0 0.0
    %7112 = vmatprep.subr.mxu0 0.0
    %7113 = vmatpush2.msra.mxu0 0.0
    %7114 = vmatprep.subr.mxu0 0.0
    %7115 = vmatpush2.msra.mxu0 0.0
    %7116 = vmatprep.mubr.f32.mxu0 0.0
    %v7117 = vand.u32 %v6701, 4294901760
    %7118 = vmatmul.mubr.f32.gmra.mxu0 %v7117
    %v7119 = vpop.f32.mrf.mxu0
    %v7120 = vadd.f32 %v7035, %v7119
    %v7121 = vpop.f32.mrf.mxu0
    %7122 = vmatprep.mubr.f32.mxu0 0.0
    %v7123 = vand.u32 %v6704, 4294901760
    %7124 = vmatmul.mubr.f32.gmra.mxu0 %v7123
    %v7125 = vpop.f32.mrf.mxu0
    %v7126 = vadd.f32 %v7043, %v7125
    %v7127 = vpop.f32.mrf.mxu0
    %7128 = vdwg.mxu0
    %7129 = vmatprep.subr.mxu0 0.0
    %7130 = vmatpush1.msra.mxu0 0.0
    %7131 = vmatprep.subr.mxu0 0.0
    %7132 = vmatpush1.msra.mxu0 0.0
    %7133 = vmatprep.subr.mxu0 0.0
    %7134 = vmatpush1.msra.mxu0 0.0
    %7135 = vmatprep.subr.mxu0 0.0
    %7136 = vmatpush1.msra.mxu0 0.0
    %7137 = vmatprep.subr.mxu0 0.0
    %7138 = vmatpush1.msra.mxu0 0.0
    %7139 = vmatprep.subr.mxu0 0.0
    %7140 = vmatpush1.msra.mxu0 0.0
    %7141 = vmatprep.subr.mxu0 0.0
    %7142 = vmatpush1.msra.mxu0 0.0
    %7143 = vmatprep.subr.mxu0 0.0
    %7144 = vmatpush1.msra.mxu0 0.0
    %7145 = vmatprep.subr.mxu0 0.0
    %7146 = vmatpush1.msra.mxu0 0.0
    %7147 = vmatprep.subr.mxu0 0.0
    %7148 = vmatpush1.msra.mxu0 0.0
    %7149 = vmatprep.subr.mxu0 0.0
    %7150 = vmatpush1.msra.mxu0 0.0
    %7151 = vmatprep.subr.mxu0 0.0
    %7152 = vmatpush1.msra.mxu0 0.0
    %7153 = vmatprep.subr.mxu0 0.0
    %7154 = vmatpush1.msra.mxu0 0.0
    %7155 = vmatprep.subr.mxu0 0.0
    %7156 = vmatpush1.msra.mxu0 0.0
    %7157 = vmatprep.subr.mxu0 0.0
    %v7158 = vand.u32 %v76, 4294901760
    %7159 = vmatpush1.msra.mxu0 %v7158
    %7160 = vmatprep.subr.mxu0 0.0
    %v7161 = vand.u32 %v75, 4294901760
    %7162 = vmatpush1.msra.mxu0 %v7161
    %7163 = vmatprep.subr.mxu0 0.0
    %7164 = vmatpush2.msra.mxu0 0.0
    %7165 = vmatprep.subr.mxu0 0.0
    %7166 = vmatpush2.msra.mxu0 0.0
    %7167 = vmatprep.subr.mxu0 0.0
    %7168 = vmatpush2.msra.mxu0 0.0
    %7169 = vmatprep.subr.mxu0 0.0
    %7170 = vmatpush2.msra.mxu0 0.0
    %7171 = vmatprep.subr.mxu0 0.0
    %7172 = vmatpush2.msra.mxu0 0.0
    %7173 = vmatprep.subr.mxu0 0.0
    %7174 = vmatpush2.msra.mxu0 0.0
    %7175 = vmatprep.subr.mxu0 0.0
    %7176 = vmatpush2.msra.mxu0 0.0
    %7177 = vmatprep.subr.mxu0 0.0
    %7178 = vmatpush2.msra.mxu0 0.0
    %7179 = vmatprep.subr.mxu0 0.0
    %7180 = vmatpush2.msra.mxu0 0.0
    %7181 = vmatprep.subr.mxu0 0.0
    %7182 = vmatpush2.msra.mxu0 0.0
    %7183 = vmatprep.subr.mxu0 0.0
    %7184 = vmatpush2.msra.mxu0 0.0
    %7185 = vmatprep.subr.mxu0 0.0
    %7186 = vmatpush2.msra.mxu0 0.0
    %7187 = vmatprep.subr.mxu0 0.0
    %7188 = vmatpush2.msra.mxu0 0.0
    %7189 = vmatprep.subr.mxu0 0.0
    %7190 = vmatpush2.msra.mxu0 0.0
    %7191 = vmatprep.subr.mxu0 0.0
    %7192 = vmatpush2.msra.mxu0 0.0
    %7193 = vmatprep.subr.mxu0 0.0
    %7194 = vmatpush2.msra.mxu0 0.0
    %7195 = vmatprep.mubr.f32.mxu0 0.0
    %v7196 = vand.u32 %v6701, 4294901760
    %7197 = vmatmul.mubr.f32.gmra.mxu0 %v7196
    %v7198 = vpop.f32.mrf.mxu0
    %v7199 = vadd.f32 %v7120, %v7198
    %v7200 = vpop.f32.mrf.mxu0
    %7201 = vmatprep.mubr.f32.mxu0 0.0
    %v7202 = vand.u32 %v6704, 4294901760
    %7203 = vmatmul.mubr.f32.gmra.mxu0 %v7202
    %v7204 = vpop.f32.mrf.mxu0
    %v7205 = vadd.f32 %v7126, %v7204
    %v7206 = vpop.f32.mrf.mxu0
    %7207 = vdwg.mxu0
    %v7208 = vsub.f32 %v6196, %v7199
    %v7209 = vsub.f32 %v6197, %v7205
    %v7210 = vand.u32 2147483647, %v7208
    %v7211 = vand.u32 2147483647, %v7209
    %7212 = vmatprep.subr.mxu0 0.0
    %7213 = vmatpush1.msra.mxu0 0.0
    %7214 = vmatprep.subr.mxu0 0.0
    %7215 = vmatpush1.msra.mxu0 0.0
    %7216 = vmatprep.subr.mxu0 0.0
    %7217 = vmatpush1.msra.mxu0 0.0
    %7218 = vmatprep.subr.mxu0 0.0
    %7219 = vmatpush1.msra.mxu0 0.0
    %7220 = vmatprep.subr.mxu0 0.0
    %7221 = vmatpush1.msra.mxu0 0.0
    %7222 = vmatprep.subr.mxu0 0.0
    %7223 = vmatpush1.msra.mxu0 0.0
    %7224 = vmatprep.subr.mxu0 0.0
    %7225 = vmatpush1.msra.mxu0 0.0
    %7226 = vmatprep.subr.mxu0 0.0
    %7227 = vmatpush1.msra.mxu0 0.0
    %7228 = vmatprep.subr.mxu0 0.0
    %7229 = vmatpush1.msra.mxu0 0.0
    %7230 = vmatprep.subr.mxu0 0.0
    %7231 = vmatpush1.msra.mxu0 0.0
    %7232 = vmatprep.subr.mxu0 0.0
    %7233 = vmatpush1.msra.mxu0 0.0
    %7234 = vmatprep.subr.mxu0 0.0
    %7235 = vmatpush1.msra.mxu0 0.0
    %7236 = vmatprep.subr.mxu0 0.0
    %7237 = vmatpush1.msra.mxu0 0.0
    %7238 = vmatprep.subr.mxu0 0.0
    %7239 = vmatpush1.msra.mxu0 0.0
    %7240 = vmatprep.subr.mxu0 0.0
    %v7241 = vand.u32 %v7211, 4294901760
    %7242 = vmatpush1.msra.mxu0 %v7241
    %7243 = vmatprep.subr.mxu0 0.0
    %v7244 = vand.u32 %v7210, 4294901760
    %7245 = vmatpush1.msra.mxu0 %v7244
    %7246 = vmatprep.subr.mxu0 0.0
    %7247 = vmatpush2.msra.mxu0 0.0
    %7248 = vmatprep.subr.mxu0 0.0
    %7249 = vmatpush2.msra.mxu0 0.0
    %7250 = vmatprep.subr.mxu0 0.0
    %7251 = vmatpush2.msra.mxu0 0.0
    %7252 = vmatprep.subr.mxu0 0.0
    %7253 = vmatpush2.msra.mxu0 0.0
    %7254 = vmatprep.subr.mxu0 0.0
    %7255 = vmatpush2.msra.mxu0 0.0
    %7256 = vmatprep.subr.mxu0 0.0
    %7257 = vmatpush2.msra.mxu0 0.0
    %7258 = vmatprep.subr.mxu0 0.0
    %7259 = vmatpush2.msra.mxu0 0.0
    %7260 = vmatprep.subr.mxu0 0.0
    %7261 = vmatpush2.msra.mxu0 0.0
    %7262 = vmatprep.subr.mxu0 0.0
    %7263 = vmatpush2.msra.mxu0 0.0
    %7264 = vmatprep.subr.mxu0 0.0
    %7265 = vmatpush2.msra.mxu0 0.0
    %7266 = vmatprep.subr.mxu0 0.0
    %7267 = vmatpush2.msra.mxu0 0.0
    %7268 = vmatprep.subr.mxu0 0.0
    %7269 = vmatpush2.msra.mxu0 0.0
    %7270 = vmatprep.subr.mxu0 0.0
    %7271 = vmatpush2.msra.mxu0 0.0
    %7272 = vmatprep.subr.mxu0 0.0
    %7273 = vmatpush2.msra.mxu0 0.0
    %7274 = vmatprep.subr.mxu0 0.0
    %7275 = vmatpush2.msra.mxu0 0.0
    %7276 = vmatprep.subr.mxu0 0.0
    %7277 = vmatpush2.msra.mxu0 0.0
    %7278 = vmatprep.mubr.f32.mxu0 0.0
    %v7279 = vand.u32 %v85, 4294901760
    %v7280 = vsub.f32 %v85, %v7279
    %v7281 = vand.u32 %v7280, 4294901760
    %v7282 = vsub.f32 %v7280, %v7281
    %v7283 = vand.u32 %v7282, 4294901760
    %7284 = vmatmul.mubr.f32.gmra.mxu0 %v7283
    %v7285 = vpop.f32.mrf.mxu0
    %v7286 = vadd.f32 0.0, %v7285
    %v7287 = vpop.f32.mrf.mxu0
    %7288 = vmatprep.mubr.f32.mxu0 0.0
    %v7289 = vand.u32 %v88, 4294901760
    %v7290 = vsub.f32 %v88, %v7289
    %v7291 = vand.u32 %v7290, 4294901760
    %v7292 = vsub.f32 %v7290, %v7291
    %v7293 = vand.u32 %v7292, 4294901760
    %7294 = vmatmul.mubr.f32.gmra.mxu0 %v7293
    %v7295 = vpop.f32.mrf.mxu0
    %v7296 = vadd.f32 0.0, %v7295
    %v7297 = vpop.f32.mrf.mxu0
    %7298 = vdwg.mxu0
    %7299 = vmatprep.subr.mxu0 0.0
    %7300 = vmatpush1.msra.mxu0 0.0
    %7301 = vmatprep.subr.mxu0 0.0
    %7302 = vmatpush1.msra.mxu0 0.0
    %7303 = vmatprep.subr.mxu0 0.0
    %7304 = vmatpush1.msra.mxu0 0.0
    %7305 = vmatprep.subr.mxu0 0.0
    %7306 = vmatpush1.msra.mxu0 0.0
    %7307 = vmatprep.subr.mxu0 0.0
    %7308 = vmatpush1.msra.mxu0 0.0
    %7309 = vmatprep.subr.mxu0 0.0
    %7310 = vmatpush1.msra.mxu0 0.0
    %7311 = vmatprep.subr.mxu0 0.0
    %7312 = vmatpush1.msra.mxu0 0.0
    %7313 = vmatprep.subr.mxu0 0.0
    %7314 = vmatpush1.msra.mxu0 0.0
    %7315 = vmatprep.subr.mxu0 0.0
    %7316 = vmatpush1.msra.mxu0 0.0
    %7317 = vmatprep.subr.mxu0 0.0
    %7318 = vmatpush1.msra.mxu0 0.0
    %7319 = vmatprep.subr.mxu0 0.0
    %7320 = vmatpush1.msra.mxu0 0.0
    %7321 = vmatprep.subr.mxu0 0.0
    %7322 = vmatpush1.msra.mxu0 0.0
    %7323 = vmatprep.subr.mxu0 0.0
    %7324 = vmatpush1.msra.mxu0 0.0
    %7325 = vmatprep.subr.mxu0 0.0
    %7326 = vmatpush1.msra.mxu0 0.0
    %7327 = vmatprep.subr.mxu0 0.0
    %v7328 = vand.u32 %v7211, 4294901760
    %v7329 = vsub.f32 %v7211, %v7328
    %v7330 = vand.u32 %v7329, 4294901760
    %v7331 = vsub.f32 %v7329, %v7330
    %v7332 = vand.u32 %v7331, 4294901760
    %7333 = vmatpush1.msra.mxu0 %v7332
    %7334 = vmatprep.subr.mxu0 0.0
    %v7335 = vand.u32 %v7210, 4294901760
    %v7336 = vsub.f32 %v7210, %v7335
    %v7337 = vand.u32 %v7336, 4294901760
    %v7338 = vsub.f32 %v7336, %v7337
    %v7339 = vand.u32 %v7338, 4294901760
    %7340 = vmatpush1.msra.mxu0 %v7339
    %7341 = vmatprep.subr.mxu0 0.0
    %7342 = vmatpush2.msra.mxu0 0.0
    %7343 = vmatprep.subr.mxu0 0.0
    %7344 = vmatpush2.msra.mxu0 0.0
    %7345 = vmatprep.subr.mxu0 0.0
    %7346 = vmatpush2.msra.mxu0 0.0
    %7347 = vmatprep.subr.mxu0 0.0
    %7348 = vmatpush2.msra.mxu0 0.0
    %7349 = vmatprep.subr.mxu0 0.0
    %7350 = vmatpush2.msra.mxu0 0.0
    %7351 = vmatprep.subr.mxu0 0.0
    %7352 = vmatpush2.msra.mxu0 0.0
    %7353 = vmatprep.subr.mxu0 0.0
    %7354 = vmatpush2.msra.mxu0 0.0
    %7355 = vmatprep.subr.mxu0 0.0
    %7356 = vmatpush2.msra.mxu0 0.0
    %7357 = vmatprep.subr.mxu0 0.0
    %7358 = vmatpush2.msra.mxu0 0.0
    %7359 = vmatprep.subr.mxu0 0.0
    %7360 = vmatpush2.msra.mxu0 0.0
    %7361 = vmatprep.subr.mxu0 0.0
    %7362 = vmatpush2.msra.mxu0 0.0
    %7363 = vmatprep.subr.mxu0 0.0
    %7364 = vmatpush2.msra.mxu0 0.0
    %7365 = vmatprep.subr.mxu0 0.0
    %7366 = vmatpush2.msra.mxu0 0.0
    %7367 = vmatprep.subr.mxu0 0.0
    %7368 = vmatpush2.msra.mxu0 0.0
    %7369 = vmatprep.subr.mxu0 0.0
    %7370 = vmatpush2.msra.mxu0 0.0
    %7371 = vmatprep.subr.mxu0 0.0
    %7372 = vmatpush2.msra.mxu0 0.0
    %7373 = vmatprep.mubr.f32.mxu0 0.0
    %v7374 = vand.u32 %v85, 4294901760
    %7375 = vmatmul.mubr.f32.gmra.mxu0 %v7374
    %v7376 = vpop.f32.mrf.mxu0
    %v7377 = vadd.f32 %v7286, %v7376
    %v7378 = vpop.f32.mrf.mxu0
    %7379 = vmatprep.mubr.f32.mxu0 0.0
    %v7380 = vand.u32 %v88, 4294901760
    %7381 = vmatmul.mubr.f32.gmra.mxu0 %v7380
    %v7382 = vpop.f32.mrf.mxu0
    %v7383 = vadd.f32 %v7296, %v7382
    %v7384 = vpop.f32.mrf.mxu0
    %7385 = vdwg.mxu0
    %7386 = vmatprep.subr.mxu0 0.0
    %7387 = vmatpush1.msra.mxu0 0.0
    %7388 = vmatprep.subr.mxu0 0.0
    %7389 = vmatpush1.msra.mxu0 0.0
    %7390 = vmatprep.subr.mxu0 0.0
    %7391 = vmatpush1.msra.mxu0 0.0
    %7392 = vmatprep.subr.mxu0 0.0
    %7393 = vmatpush1.msra.mxu0 0.0
    %7394 = vmatprep.subr.mxu0 0.0
    %7395 = vmatpush1.msra.mxu0 0.0
    %7396 = vmatprep.subr.mxu0 0.0
    %7397 = vmatpush1.msra.mxu0 0.0
    %7398 = vmatprep.subr.mxu0 0.0
    %7399 = vmatpush1.msra.mxu0 0.0
    %7400 = vmatprep.subr.mxu0 0.0
    %7401 = vmatpush1.msra.mxu0 0.0
    %7402 = vmatprep.subr.mxu0 0.0
    %7403 = vmatpush1.msra.mxu0 0.0
    %7404 = vmatprep.subr.mxu0 0.0
    %7405 = vmatpush1.msra.mxu0 0.0
    %7406 = vmatprep.subr.mxu0 0.0
    %7407 = vmatpush1.msra.mxu0 0.0
    %7408 = vmatprep.subr.mxu0 0.0
    %7409 = vmatpush1.msra.mxu0 0.0
    %7410 = vmatprep.subr.mxu0 0.0
    %7411 = vmatpush1.msra.mxu0 0.0
    %7412 = vmatprep.subr.mxu0 0.0
    %7413 = vmatpush1.msra.mxu0 0.0
    %7414 = vmatprep.subr.mxu0 0.0
    %v7415 = vand.u32 %v7211, 4294901760
    %v7416 = vsub.f32 %v7211, %v7415
    %7417 = vmatpush1.msra.mxu0 %v7416
    %7418 = vmatprep.subr.mxu0 0.0
    %v7419 = vand.u32 %v7210, 4294901760
    %v7420 = vsub.f32 %v7210, %v7419
    %7421 = vmatpush1.msra.mxu0 %v7420
    %7422 = vmatprep.subr.mxu0 0.0
    %7423 = vmatpush2.msra.mxu0 0.0
    %7424 = vmatprep.subr.mxu0 0.0
    %7425 = vmatpush2.msra.mxu0 0.0
    %7426 = vmatprep.subr.mxu0 0.0
    %7427 = vmatpush2.msra.mxu0 0.0
    %7428 = vmatprep.subr.mxu0 0.0
    %7429 = vmatpush2.msra.mxu0 0.0
    %7430 = vmatprep.subr.mxu0 0.0
    %7431 = vmatpush2.msra.mxu0 0.0
    %7432 = vmatprep.subr.mxu0 0.0
    %7433 = vmatpush2.msra.mxu0 0.0
    %7434 = vmatprep.subr.mxu0 0.0
    %7435 = vmatpush2.msra.mxu0 0.0
    %7436 = vmatprep.subr.mxu0 0.0
    %7437 = vmatpush2.msra.mxu0 0.0
    %7438 = vmatprep.subr.mxu0 0.0
    %7439 = vmatpush2.msra.mxu0 0.0
    %7440 = vmatprep.subr.mxu0 0.0
    %7441 = vmatpush2.msra.mxu0 0.0
    %7442 = vmatprep.subr.mxu0 0.0
    %7443 = vmatpush2.msra.mxu0 0.0
    %7444 = vmatprep.subr.mxu0 0.0
    %7445 = vmatpush2.msra.mxu0 0.0
    %7446 = vmatprep.subr.mxu0 0.0
    %7447 = vmatpush2.msra.mxu0 0.0
    %7448 = vmatprep.subr.mxu0 0.0
    %7449 = vmatpush2.msra.mxu0 0.0
    %7450 = vmatprep.subr.mxu0 0.0
    %7451 = vmatpush2.msra.mxu0 0.0
    %7452 = vmatprep.subr.mxu0 0.0
    %7453 = vmatpush2.msra.mxu0 0.0
    %7454 = vmatprep.mubr.f32.mxu0 0.0
    %v7455 = vand.u32 %v85, 4294901760
    %v7456 = vsub.f32 %v85, %v7455
    %7457 = vmatmul.mubr.f32.gmra.mxu0 %v7456
    %v7458 = vpop.f32.mrf.mxu0
    %v7459 = vadd.f32 %v7377, %v7458
    %v7460 = vpop.f32.mrf.mxu0
    %7461 = vmatprep.mubr.f32.mxu0 0.0
    %v7462 = vand.u32 %v88, 4294901760
    %v7463 = vsub.f32 %v88, %v7462
    %7464 = vmatmul.mubr.f32.gmra.mxu0 %v7463
    %v7465 = vpop.f32.mrf.mxu0
    %v7466 = vadd.f32 %v7383, %v7465
    %v7467 = vpop.f32.mrf.mxu0
    %7468 = vdwg.mxu0
    %7469 = vmatprep.subr.mxu0 0.0
    %7470 = vmatpush1.msra.mxu0 0.0
    %7471 = vmatprep.subr.mxu0 0.0
    %7472 = vmatpush1.msra.mxu0 0.0
    %7473 = vmatprep.subr.mxu0 0.0
    %7474 = vmatpush1.msra.mxu0 0.0
    %7475 = vmatprep.subr.mxu0 0.0
    %7476 = vmatpush1.msra.mxu0 0.0
    %7477 = vmatprep.subr.mxu0 0.0
    %7478 = vmatpush1.msra.mxu0 0.0
    %7479 = vmatprep.subr.mxu0 0.0
    %7480 = vmatpush1.msra.mxu0 0.0
    %7481 = vmatprep.subr.mxu0 0.0
    %7482 = vmatpush1.msra.mxu0 0.0
    %7483 = vmatprep.subr.mxu0 0.0
    %7484 = vmatpush1.msra.mxu0 0.0
    %7485 = vmatprep.subr.mxu0 0.0
    %7486 = vmatpush1.msra.mxu0 0.0
    %7487 = vmatprep.subr.mxu0 0.0
    %7488 = vmatpush1.msra.mxu0 0.0
    %7489 = vmatprep.subr.mxu0 0.0
    %7490 = vmatpush1.msra.mxu0 0.0
    %7491 = vmatprep.subr.mxu0 0.0
    %7492 = vmatpush1.msra.mxu0 0.0
    %7493 = vmatprep.subr.mxu0 0.0
    %7494 = vmatpush1.msra.mxu0 0.0
    %7495 = vmatprep.subr.mxu0 0.0
    %7496 = vmatpush1.msra.mxu0 0.0
    %7497 = vmatprep.subr.mxu0 0.0
    %v7498 = vand.u32 %v7211, 4294901760
    %7499 = vmatpush1.msra.mxu0 %v7498
    %7500 = vmatprep.subr.mxu0 0.0
    %v7501 = vand.u32 %v7210, 4294901760
    %7502 = vmatpush1.msra.mxu0 %v7501
    %7503 = vmatprep.subr.mxu0 0.0
    %7504 = vmatpush2.msra.mxu0 0.0
    %7505 = vmatprep.subr.mxu0 0.0
    %7506 = vmatpush2.msra.mxu0 0.0
    %7507 = vmatprep.subr.mxu0 0.0
    %7508 = vmatpush2.msra.mxu0 0.0
    %7509 = vmatprep.subr.mxu0 0.0
    %7510 = vmatpush2.msra.mxu0 0.0
    %7511 = vmatprep.subr.mxu0 0.0
    %7512 = vmatpush2.msra.mxu0 0.0
    %7513 = vmatprep.subr.mxu0 0.0
    %7514 = vmatpush2.msra.mxu0 0.0
    %7515 = vmatprep.subr.mxu0 0.0
    %7516 = vmatpush2.msra.mxu0 0.0
    %7517 = vmatprep.subr.mxu0 0.0
    %7518 = vmatpush2.msra.mxu0 0.0
    %7519 = vmatprep.subr.mxu0 0.0
    %7520 = vmatpush2.msra.mxu0 0.0
    %7521 = vmatprep.subr.mxu0 0.0
    %7522 = vmatpush2.msra.mxu0 0.0
    %7523 = vmatprep.subr.mxu0 0.0
    %7524 = vmatpush2.msra.mxu0 0.0
    %7525 = vmatprep.subr.mxu0 0.0
    %7526 = vmatpush2.msra.mxu0 0.0
    %7527 = vmatprep.subr.mxu0 0.0
    %7528 = vmatpush2.msra.mxu0 0.0
    %7529 = vmatprep.subr.mxu0 0.0
    %7530 = vmatpush2.msra.mxu0 0.0
    %7531 = vmatprep.subr.mxu0 0.0
    %7532 = vmatpush2.msra.mxu0 0.0
    %7533 = vmatprep.subr.mxu0 0.0
    %7534 = vmatpush2.msra.mxu0 0.0
    %7535 = vmatprep.mubr.f32.mxu0 0.0
    %v7536 = vand.u32 %v85, 4294901760
    %v7537 = vsub.f32 %v85, %v7536
    %v7538 = vand.u32 %v7537, 4294901760
    %7539 = vmatmul.mubr.f32.gmra.mxu0 %v7538
    %v7540 = vpop.f32.mrf.mxu0
    %v7541 = vadd.f32 %v7459, %v7540
    %v7542 = vpop.f32.mrf.mxu0
    %7543 = vmatprep.mubr.f32.mxu0 0.0
    %v7544 = vand.u32 %v88, 4294901760
    %v7545 = vsub.f32 %v88, %v7544
    %v7546 = vand.u32 %v7545, 4294901760
    %7547 = vmatmul.mubr.f32.gmra.mxu0 %v7546
    %v7548 = vpop.f32.mrf.mxu0
    %v7549 = vadd.f32 %v7466, %v7548
    %v7550 = vpop.f32.mrf.mxu0
    %7551 = vdwg.mxu0
    %7552 = vmatprep.subr.mxu0 0.0
    %7553 = vmatpush1.msra.mxu0 0.0
    %7554 = vmatprep.subr.mxu0 0.0
    %7555 = vmatpush1.msra.mxu0 0.0
    %7556 = vmatprep.subr.mxu0 0.0
    %7557 = vmatpush1.msra.mxu0 0.0
    %7558 = vmatprep.subr.mxu0 0.0
    %7559 = vmatpush1.msra.mxu0 0.0
    %7560 = vmatprep.subr.mxu0 0.0
    %7561 = vmatpush1.msra.mxu0 0.0
    %7562 = vmatprep.subr.mxu0 0.0
    %7563 = vmatpush1.msra.mxu0 0.0
    %7564 = vmatprep.subr.mxu0 0.0
    %7565 = vmatpush1.msra.mxu0 0.0
    %7566 = vmatprep.subr.mxu0 0.0
    %7567 = vmatpush1.msra.mxu0 0.0
    %7568 = vmatprep.subr.mxu0 0.0
    %7569 = vmatpush1.msra.mxu0 0.0
    %7570 = vmatprep.subr.mxu0 0.0
    %7571 = vmatpush1.msra.mxu0 0.0
    %7572 = vmatprep.subr.mxu0 0.0
    %7573 = vmatpush1.msra.mxu0 0.0
    %7574 = vmatprep.subr.mxu0 0.0
    %7575 = vmatpush1.msra.mxu0 0.0
    %7576 = vmatprep.subr.mxu0 0.0
    %7577 = vmatpush1.msra.mxu0 0.0
    %7578 = vmatprep.subr.mxu0 0.0
    %7579 = vmatpush1.msra.mxu0 0.0
    %7580 = vmatprep.subr.mxu0 0.0
    %v7581 = vand.u32 %v7211, 4294901760
    %v7582 = vsub.f32 %v7211, %v7581
    %v7583 = vand.u32 %v7582, 4294901760
    %7584 = vmatpush1.msra.mxu0 %v7583
    %7585 = vmatprep.subr.mxu0 0.0
    %v7586 = vand.u32 %v7210, 4294901760
    %v7587 = vsub.f32 %v7210, %v7586
    %v7588 = vand.u32 %v7587, 4294901760
    %7589 = vmatpush1.msra.mxu0 %v7588
    %7590 = vmatprep.subr.mxu0 0.0
    %7591 = vmatpush2.msra.mxu0 0.0
    %7592 = vmatprep.subr.mxu0 0.0
    %7593 = vmatpush2.msra.mxu0 0.0
    %7594 = vmatprep.subr.mxu0 0.0
    %7595 = vmatpush2.msra.mxu0 0.0
    %7596 = vmatprep.subr.mxu0 0.0
    %7597 = vmatpush2.msra.mxu0 0.0
    %7598 = vmatprep.subr.mxu0 0.0
    %7599 = vmatpush2.msra.mxu0 0.0
    %7600 = vmatprep.subr.mxu0 0.0
    %7601 = vmatpush2.msra.mxu0 0.0
    %7602 = vmatprep.subr.mxu0 0.0
    %7603 = vmatpush2.msra.mxu0 0.0
    %7604 = vmatprep.subr.mxu0 0.0
    %7605 = vmatpush2.msra.mxu0 0.0
    %7606 = vmatprep.subr.mxu0 0.0
    %7607 = vmatpush2.msra.mxu0 0.0
    %7608 = vmatprep.subr.mxu0 0.0
    %7609 = vmatpush2.msra.mxu0 0.0
    %7610 = vmatprep.subr.mxu0 0.0
    %7611 = vmatpush2.msra.mxu0 0.0
    %7612 = vmatprep.subr.mxu0 0.0
    %7613 = vmatpush2.msra.mxu0 0.0
    %7614 = vmatprep.subr.mxu0 0.0
    %7615 = vmatpush2.msra.mxu0 0.0
    %7616 = vmatprep.subr.mxu0 0.0
    %7617 = vmatpush2.msra.mxu0 0.0
    %7618 = vmatprep.subr.mxu0 0.0
    %7619 = vmatpush2.msra.mxu0 0.0
    %7620 = vmatprep.subr.mxu0 0.0
    %7621 = vmatpush2.msra.mxu0 0.0
    %7622 = vmatprep.mubr.f32.mxu0 0.0
    %v7623 = vand.u32 %v85, 4294901760
    %7624 = vmatmul.mubr.f32.gmra.mxu0 %v7623
    %v7625 = vpop.f32.mrf.mxu0
    %v7626 = vadd.f32 %v7541, %v7625
    %v7627 = vpop.f32.mrf.mxu0
    %7628 = vmatprep.mubr.f32.mxu0 0.0
    %v7629 = vand.u32 %v88, 4294901760
    %7630 = vmatmul.mubr.f32.gmra.mxu0 %v7629
    %v7631 = vpop.f32.mrf.mxu0
    %v7632 = vadd.f32 %v7549, %v7631
    %v7633 = vpop.f32.mrf.mxu0
    %7634 = vdwg.mxu0
    %7635 = vmatprep.subr.mxu0 0.0
    %7636 = vmatpush1.msra.mxu0 0.0
    %7637 = vmatprep.subr.mxu0 0.0
    %7638 = vmatpush1.msra.mxu0 0.0
    %7639 = vmatprep.subr.mxu0 0.0
    %7640 = vmatpush1.msra.mxu0 0.0
    %7641 = vmatprep.subr.mxu0 0.0
    %7642 = vmatpush1.msra.mxu0 0.0
    %7643 = vmatprep.subr.mxu0 0.0
    %7644 = vmatpush1.msra.mxu0 0.0
    %7645 = vmatprep.subr.mxu0 0.0
    %7646 = vmatpush1.msra.mxu0 0.0
    %7647 = vmatprep.subr.mxu0 0.0
    %7648 = vmatpush1.msra.mxu0 0.0
    %7649 = vmatprep.subr.mxu0 0.0
    %7650 = vmatpush1.msra.mxu0 0.0
    %7651 = vmatprep.subr.mxu0 0.0
    %7652 = vmatpush1.msra.mxu0 0.0
    %7653 = vmatprep.subr.mxu0 0.0
    %7654 = vmatpush1.msra.mxu0 0.0
    %7655 = vmatprep.subr.mxu0 0.0
    %7656 = vmatpush1.msra.mxu0 0.0
    %7657 = vmatprep.subr.mxu0 0.0
    %7658 = vmatpush1.msra.mxu0 0.0
    %7659 = vmatprep.subr.mxu0 0.0
    %7660 = vmatpush1.msra.mxu0 0.0
    %7661 = vmatprep.subr.mxu0 0.0
    %7662 = vmatpush1.msra.mxu0 0.0
    %7663 = vmatprep.subr.mxu0 0.0
    %v7664 = vand.u32 %v7211, 4294901760
    %7665 = vmatpush1.msra.mxu0 %v7664
    %7666 = vmatprep.subr.mxu0 0.0
    %v7667 = vand.u32 %v7210, 4294901760
    %7668 = vmatpush1.msra.mxu0 %v7667
    %7669 = vmatprep.subr.mxu0 0.0
    %7670 = vmatpush2.msra.mxu0 0.0
    %7671 = vmatprep.subr.mxu0 0.0
    %7672 = vmatpush2.msra.mxu0 0.0
    %7673 = vmatprep.subr.mxu0 0.0
    %7674 = vmatpush2.msra.mxu0 0.0
    %7675 = vmatprep.subr.mxu0 0.0
    %7676 = vmatpush2.msra.mxu0 0.0
    %7677 = vmatprep.subr.mxu0 0.0
    %7678 = vmatpush2.msra.mxu0 0.0
    %7679 = vmatprep.subr.mxu0 0.0
    %7680 = vmatpush2.msra.mxu0 0.0
    %7681 = vmatprep.subr.mxu0 0.0
    %7682 = vmatpush2.msra.mxu0 0.0
    %7683 = vmatprep.subr.mxu0 0.0
    %7684 = vmatpush2.msra.mxu0 0.0
    %7685 = vmatprep.subr.mxu0 0.0
    %7686 = vmatpush2.msra.mxu0 0.0
    %7687 = vmatprep.subr.mxu0 0.0
    %7688 = vmatpush2.msra.mxu0 0.0
    %7689 = vmatprep.subr.mxu0 0.0
    %7690 = vmatpush2.msra.mxu0 0.0
    %7691 = vmatprep.subr.mxu0 0.0
    %7692 = vmatpush2.msra.mxu0 0.0
    %7693 = vmatprep.subr.mxu0 0.0
    %7694 = vmatpush2.msra.mxu0 0.0
    %7695 = vmatprep.subr.mxu0 0.0
    %7696 = vmatpush2.msra.mxu0 0.0
    %7697 = vmatprep.subr.mxu0 0.0
    %7698 = vmatpush2.msra.mxu0 0.0
    %7699 = vmatprep.subr.mxu0 0.0
    %7700 = vmatpush2.msra.mxu0 0.0
    %7701 = vmatprep.mubr.f32.mxu0 0.0
    %v7702 = vand.u32 %v85, 4294901760
    %7703 = vmatmul.mubr.f32.gmra.mxu0 %v7702
    %v7704 = vpop.f32.mrf.mxu0
    %v7705 = vadd.f32 %v7626, %v7704
    %v7706 = vpop.f32.mrf.mxu0
    %7707 = vmatprep.mubr.f32.mxu0 0.0
    %v7708 = vand.u32 %v88, 4294901760
    %7709 = vmatmul.mubr.f32.gmra.mxu0 %v7708
    %v7710 = vpop.f32.mrf.mxu0
    %v7711 = vadd.f32 %v7632, %v7710
    %v7712 = vpop.f32.mrf.mxu0
    %7713 = vdwg.mxu0
    %v7715 = vsel %vm83, %v7705, 0
    %v7718 = vsel %vm83, %v7711, 0
    %7720 = vmatprep.subr.mxu0 0.0
    %7721 = vmatpush1.msra.mxu0 0.0
    %7722 = vmatprep.subr.mxu0 0.0
    %7723 = vmatpush1.msra.mxu0 0.0
    %7724 = vmatprep.subr.mxu0 0.0
    %7725 = vmatpush1.msra.mxu0 0.0
    %7726 = vmatprep.subr.mxu0 0.0
    %7727 = vmatpush1.msra.mxu0 0.0
    %7728 = vmatprep.subr.mxu0 0.0
    %7729 = vmatpush1.msra.mxu0 0.0
    %7730 = vmatprep.subr.mxu0 0.0
    %7731 = vmatpush1.msra.mxu0 0.0
    %7732 = vmatprep.subr.mxu0 0.0
    %7733 = vmatpush1.msra.mxu0 0.0
    %7734 = vmatprep.subr.mxu0 0.0
    %7735 = vmatpush1.msra.mxu0 0.0
    %7736 = vmatprep.subr.mxu0 0.0
    %7737 = vmatpush1.msra.mxu0 0.0
    %7738 = vmatprep.subr.mxu0 0.0
    %7739 = vmatpush1.msra.mxu0 0.0
    %7740 = vmatprep.subr.mxu0 0.0
    %7741 = vmatpush1.msra.mxu0 0.0
    %7742 = vmatprep.subr.mxu0 0.0
    %7743 = vmatpush1.msra.mxu0 0.0
    %7744 = vmatprep.subr.mxu0 0.0
    %7745 = vmatpush1.msra.mxu0 0.0
    %7746 = vmatprep.subr.mxu0 0.0
    %7747 = vmatpush1.msra.mxu0 0.0
    %7748 = vmatprep.subr.mxu0 0.0
    %v7749 = vand.u32 %v76, 4294901760
    %7750 = vmatpush1.msra.mxu0 %v7749
    %7751 = vmatprep.subr.mxu0 0.0
    %v7752 = vand.u32 %v75, 4294901760
    %7753 = vmatpush1.msra.mxu0 %v7752
    %7754 = vmatprep.subr.mxu0 0.0
    %7755 = vmatpush2.msra.mxu0 0.0
    %7756 = vmatprep.subr.mxu0 0.0
    %7757 = vmatpush2.msra.mxu0 0.0
    %7758 = vmatprep.subr.mxu0 0.0
    %7759 = vmatpush2.msra.mxu0 0.0
    %7760 = vmatprep.subr.mxu0 0.0
    %7761 = vmatpush2.msra.mxu0 0.0
    %7762 = vmatprep.subr.mxu0 0.0
    %7763 = vmatpush2.msra.mxu0 0.0
    %7764 = vmatprep.subr.mxu0 0.0
    %7765 = vmatpush2.msra.mxu0 0.0
    %7766 = vmatprep.subr.mxu0 0.0
    %7767 = vmatpush2.msra.mxu0 0.0
    %7768 = vmatprep.subr.mxu0 0.0
    %7769 = vmatpush2.msra.mxu0 0.0
    %7770 = vmatprep.subr.mxu0 0.0
    %7771 = vmatpush2.msra.mxu0 0.0
    %7772 = vmatprep.subr.mxu0 0.0
    %7773 = vmatpush2.msra.mxu0 0.0
    %7774 = vmatprep.subr.mxu0 0.0
    %7775 = vmatpush2.msra.mxu0 0.0
    %7776 = vmatprep.subr.mxu0 0.0
    %7777 = vmatpush2.msra.mxu0 0.0
    %7778 = vmatprep.subr.mxu0 0.0
    %7779 = vmatpush2.msra.mxu0 0.0
    %7780 = vmatprep.subr.mxu0 0.0
    %7781 = vmatpush2.msra.mxu0 0.0
    %7782 = vmatprep.subr.mxu0 0.0
    %7783 = vmatpush2.msra.mxu0 0.0
    %7784 = vmatprep.subr.mxu0 0.0
    %7785 = vmatpush2.msra.mxu0 0.0
    %7786 = vmatprep.mubr.f32.mxu0 0.0
    %v7787 = vand.u32 %v7715, 4294901760
    %v7788 = vsub.f32 %v7715, %v7787
    %v7789 = vand.u32 %v7788, 4294901760
    %v7790 = vsub.f32 %v7788, %v7789
    %v7791 = vand.u32 %v7790, 4294901760
    %7792 = vmatmul.mubr.f32.gmra.mxu0 %v7791
    %v7793 = vpop.f32.mrf.mxu0
    %v7794 = vadd.f32 0.0, %v7793
    %v7795 = vpop.f32.mrf.mxu0
    %7796 = vmatprep.mubr.f32.mxu0 0.0
    %v7797 = vand.u32 %v7718, 4294901760
    %v7798 = vsub.f32 %v7718, %v7797
    %v7799 = vand.u32 %v7798, 4294901760
    %v7800 = vsub.f32 %v7798, %v7799
    %v7801 = vand.u32 %v7800, 4294901760
    %7802 = vmatmul.mubr.f32.gmra.mxu0 %v7801
    %v7803 = vpop.f32.mrf.mxu0
    %v7804 = vadd.f32 0.0, %v7803
    %v7805 = vpop.f32.mrf.mxu0
    %7806 = vdwg.mxu0
    %7807 = vmatprep.subr.mxu0 0.0
    %7808 = vmatpush1.msra.mxu0 0.0
    %7809 = vmatprep.subr.mxu0 0.0
    %7810 = vmatpush1.msra.mxu0 0.0
    %7811 = vmatprep.subr.mxu0 0.0
    %7812 = vmatpush1.msra.mxu0 0.0
    %7813 = vmatprep.subr.mxu0 0.0
    %7814 = vmatpush1.msra.mxu0 0.0
    %7815 = vmatprep.subr.mxu0 0.0
    %7816 = vmatpush1.msra.mxu0 0.0
    %7817 = vmatprep.subr.mxu0 0.0
    %7818 = vmatpush1.msra.mxu0 0.0
    %7819 = vmatprep.subr.mxu0 0.0
    %7820 = vmatpush1.msra.mxu0 0.0
    %7821 = vmatprep.subr.mxu0 0.0
    %7822 = vmatpush1.msra.mxu0 0.0
    %7823 = vmatprep.subr.mxu0 0.0
    %7824 = vmatpush1.msra.mxu0 0.0
    %7825 = vmatprep.subr.mxu0 0.0
    %7826 = vmatpush1.msra.mxu0 0.0
    %7827 = vmatprep.subr.mxu0 0.0
    %7828 = vmatpush1.msra.mxu0 0.0
    %7829 = vmatprep.subr.mxu0 0.0
    %7830 = vmatpush1.msra.mxu0 0.0
    %7831 = vmatprep.subr.mxu0 0.0
    %7832 = vmatpush1.msra.mxu0 0.0
    %7833 = vmatprep.subr.mxu0 0.0
    %7834 = vmatpush1.msra.mxu0 0.0
    %7835 = vmatprep.subr.mxu0 0.0
    %v7836 = vand.u32 %v76, 4294901760
    %v7837 = vsub.f32 %v76, %v7836
    %v7838 = vand.u32 %v7837, 4294901760
    %v7839 = vsub.f32 %v7837, %v7838
    %v7840 = vand.u32 %v7839, 4294901760
    %7841 = vmatpush1.msra.mxu0 %v7840
    %7842 = vmatprep.subr.mxu0 0.0
    %v7843 = vand.u32 %v75, 4294901760
    %v7844 = vsub.f32 %v75, %v7843
    %v7845 = vand.u32 %v7844, 4294901760
    %v7846 = vsub.f32 %v7844, %v7845
    %v7847 = vand.u32 %v7846, 4294901760
    %7848 = vmatpush1.msra.mxu0 %v7847
    %7849 = vmatprep.subr.mxu0 0.0
    %7850 = vmatpush2.msra.mxu0 0.0
    %7851 = vmatprep.subr.mxu0 0.0
    %7852 = vmatpush2.msra.mxu0 0.0
    %7853 = vmatprep.subr.mxu0 0.0
    %7854 = vmatpush2.msra.mxu0 0.0
    %7855 = vmatprep.subr.mxu0 0.0
    %7856 = vmatpush2.msra.mxu0 0.0
    %7857 = vmatprep.subr.mxu0 0.0
    %7858 = vmatpush2.msra.mxu0 0.0
    %7859 = vmatprep.subr.mxu0 0.0
    %7860 = vmatpush2.msra.mxu0 0.0
    %7861 = vmatprep.subr.mxu0 0.0
    %7862 = vmatpush2.msra.mxu0 0.0
    %7863 = vmatprep.subr.mxu0 0.0
    %7864 = vmatpush2.msra.mxu0 0.0
    %7865 = vmatprep.subr.mxu0 0.0
    %7866 = vmatpush2.msra.mxu0 0.0
    %7867 = vmatprep.subr.mxu0 0.0
    %7868 = vmatpush2.msra.mxu0 0.0
    %7869 = vmatprep.subr.mxu0 0.0
    %7870 = vmatpush2.msra.mxu0 0.0
    %7871 = vmatprep.subr.mxu0 0.0
    %7872 = vmatpush2.msra.mxu0 0.0
    %7873 = vmatprep.subr.mxu0 0.0
    %7874 = vmatpush2.msra.mxu0 0.0
    %7875 = vmatprep.subr.mxu0 0.0
    %7876 = vmatpush2.msra.mxu0 0.0
    %7877 = vmatprep.subr.mxu0 0.0
    %7878 = vmatpush2.msra.mxu0 0.0
    %7879 = vmatprep.subr.mxu0 0.0
    %7880 = vmatpush2.msra.mxu0 0.0
    %7881 = vmatprep.mubr.f32.mxu0 0.0
    %v7882 = vand.u32 %v7715, 4294901760
    %7883 = vmatmul.mubr.f32.gmra.mxu0 %v7882
    %v7884 = vpop.f32.mrf.mxu0
    %v7885 = vadd.f32 %v7794, %v7884
    %v7886 = vpop.f32.mrf.mxu0
    %7887 = vmatprep.mubr.f32.mxu0 0.0
    %v7888 = vand.u32 %v7718, 4294901760
    %7889 = vmatmul.mubr.f32.gmra.mxu0 %v7888
    %v7890 = vpop.f32.mrf.mxu0
    %v7891 = vadd.f32 %v7804, %v7890
    %v7892 = vpop.f32.mrf.mxu0
    %7893 = vdwg.mxu0
    %7894 = vmatprep.subr.mxu0 0.0
    %7895 = vmatpush1.msra.mxu0 0.0
    %7896 = vmatprep.subr.mxu0 0.0
    %7897 = vmatpush1.msra.mxu0 0.0
    %7898 = vmatprep.subr.mxu0 0.0
    %7899 = vmatpush1.msra.mxu0 0.0
    %7900 = vmatprep.subr.mxu0 0.0
    %7901 = vmatpush1.msra.mxu0 0.0
    %7902 = vmatprep.subr.mxu0 0.0
    %7903 = vmatpush1.msra.mxu0 0.0
    %7904 = vmatprep.subr.mxu0 0.0
    %7905 = vmatpush1.msra.mxu0 0.0
    %7906 = vmatprep.subr.mxu0 0.0
    %7907 = vmatpush1.msra.mxu0 0.0
    %7908 = vmatprep.subr.mxu0 0.0
    %7909 = vmatpush1.msra.mxu0 0.0
    %7910 = vmatprep.subr.mxu0 0.0
    %7911 = vmatpush1.msra.mxu0 0.0
    %7912 = vmatprep.subr.mxu0 0.0
    %7913 = vmatpush1.msra.mxu0 0.0
    %7914 = vmatprep.subr.mxu0 0.0
    %7915 = vmatpush1.msra.mxu0 0.0
    %7916 = vmatprep.subr.mxu0 0.0
    %7917 = vmatpush1.msra.mxu0 0.0
    %7918 = vmatprep.subr.mxu0 0.0
    %7919 = vmatpush1.msra.mxu0 0.0
    %7920 = vmatprep.subr.mxu0 0.0
    %7921 = vmatpush1.msra.mxu0 0.0
    %7922 = vmatprep.subr.mxu0 0.0
    %v7923 = vand.u32 %v76, 4294901760
    %v7924 = vsub.f32 %v76, %v7923
    %7925 = vmatpush1.msra.mxu0 %v7924
    %7926 = vmatprep.subr.mxu0 0.0
    %v7927 = vand.u32 %v75, 4294901760
    %v7928 = vsub.f32 %v75, %v7927
    %7929 = vmatpush1.msra.mxu0 %v7928
    %7930 = vmatprep.subr.mxu0 0.0
    %7931 = vmatpush2.msra.mxu0 0.0
    %7932 = vmatprep.subr.mxu0 0.0
    %7933 = vmatpush2.msra.mxu0 0.0
    %7934 = vmatprep.subr.mxu0 0.0
    %7935 = vmatpush2.msra.mxu0 0.0
    %7936 = vmatprep.subr.mxu0 0.0
    %7937 = vmatpush2.msra.mxu0 0.0
    %7938 = vmatprep.subr.mxu0 0.0
    %7939 = vmatpush2.msra.mxu0 0.0
    %7940 = vmatprep.subr.mxu0 0.0
    %7941 = vmatpush2.msra.mxu0 0.0
    %7942 = vmatprep.subr.mxu0 0.0
    %7943 = vmatpush2.msra.mxu0 0.0
    %7944 = vmatprep.subr.mxu0 0.0
    %7945 = vmatpush2.msra.mxu0 0.0
    %7946 = vmatprep.subr.mxu0 0.0
    %7947 = vmatpush2.msra.mxu0 0.0
    %7948 = vmatprep.subr.mxu0 0.0
    %7949 = vmatpush2.msra.mxu0 0.0
    %7950 = vmatprep.subr.mxu0 0.0
    %7951 = vmatpush2.msra.mxu0 0.0
    %7952 = vmatprep.subr.mxu0 0.0
    %7953 = vmatpush2.msra.mxu0 0.0
    %7954 = vmatprep.subr.mxu0 0.0
    %7955 = vmatpush2.msra.mxu0 0.0
    %7956 = vmatprep.subr.mxu0 0.0
    %7957 = vmatpush2.msra.mxu0 0.0
    %7958 = vmatprep.subr.mxu0 0.0
    %7959 = vmatpush2.msra.mxu0 0.0
    %7960 = vmatprep.subr.mxu0 0.0
    %7961 = vmatpush2.msra.mxu0 0.0
    %7962 = vmatprep.mubr.f32.mxu0 0.0
    %v7963 = vand.u32 %v7715, 4294901760
    %v7964 = vsub.f32 %v7715, %v7963
    %7965 = vmatmul.mubr.f32.gmra.mxu0 %v7964
    %v7966 = vpop.f32.mrf.mxu0
    %v7967 = vadd.f32 %v7885, %v7966
    %v7968 = vpop.f32.mrf.mxu0
    %7969 = vmatprep.mubr.f32.mxu0 0.0
    %v7970 = vand.u32 %v7718, 4294901760
    %v7971 = vsub.f32 %v7718, %v7970
    %7972 = vmatmul.mubr.f32.gmra.mxu0 %v7971
    %v7973 = vpop.f32.mrf.mxu0
    %v7974 = vadd.f32 %v7891, %v7973
    %v7975 = vpop.f32.mrf.mxu0
    %7976 = vdwg.mxu0
    %7977 = vmatprep.subr.mxu0 0.0
    %7978 = vmatpush1.msra.mxu0 0.0
    %7979 = vmatprep.subr.mxu0 0.0
    %7980 = vmatpush1.msra.mxu0 0.0
    %7981 = vmatprep.subr.mxu0 0.0
    %7982 = vmatpush1.msra.mxu0 0.0
    %7983 = vmatprep.subr.mxu0 0.0
    %7984 = vmatpush1.msra.mxu0 0.0
    %7985 = vmatprep.subr.mxu0 0.0
    %7986 = vmatpush1.msra.mxu0 0.0
    %7987 = vmatprep.subr.mxu0 0.0
    %7988 = vmatpush1.msra.mxu0 0.0
    %7989 = vmatprep.subr.mxu0 0.0
    %7990 = vmatpush1.msra.mxu0 0.0
    %7991 = vmatprep.subr.mxu0 0.0
    %7992 = vmatpush1.msra.mxu0 0.0
    %7993 = vmatprep.subr.mxu0 0.0
    %7994 = vmatpush1.msra.mxu0 0.0
    %7995 = vmatprep.subr.mxu0 0.0
    %7996 = vmatpush1.msra.mxu0 0.0
    %7997 = vmatprep.subr.mxu0 0.0
    %7998 = vmatpush1.msra.mxu0 0.0
    %7999 = vmatprep.subr.mxu0 0.0
    %8000 = vmatpush1.msra.mxu0 0.0
    %8001 = vmatprep.subr.mxu0 0.0
    %8002 = vmatpush1.msra.mxu0 0.0
    %8003 = vmatprep.subr.mxu0 0.0
    %8004 = vmatpush1.msra.mxu0 0.0
    %8005 = vmatprep.subr.mxu0 0.0
    %v8006 = vand.u32 %v76, 4294901760
    %8007 = vmatpush1.msra.mxu0 %v8006
    %8008 = vmatprep.subr.mxu0 0.0
    %v8009 = vand.u32 %v75, 4294901760
    %8010 = vmatpush1.msra.mxu0 %v8009
    %8011 = vmatprep.subr.mxu0 0.0
    %8012 = vmatpush2.msra.mxu0 0.0
    %8013 = vmatprep.subr.mxu0 0.0
    %8014 = vmatpush2.msra.mxu0 0.0
    %8015 = vmatprep.subr.mxu0 0.0
    %8016 = vmatpush2.msra.mxu0 0.0
    %8017 = vmatprep.subr.mxu0 0.0
    %8018 = vmatpush2.msra.mxu0 0.0
    %8019 = vmatprep.subr.mxu0 0.0
    %8020 = vmatpush2.msra.mxu0 0.0
    %8021 = vmatprep.subr.mxu0 0.0
    %8022 = vmatpush2.msra.mxu0 0.0
    %8023 = vmatprep.subr.mxu0 0.0
    %8024 = vmatpush2.msra.mxu0 0.0
    %8025 = vmatprep.subr.mxu0 0.0
    %8026 = vmatpush2.msra.mxu0 0.0
    %8027 = vmatprep.subr.mxu0 0.0
    %8028 = vmatpush2.msra.mxu0 0.0
    %8029 = vmatprep.subr.mxu0 0.0
    %8030 = vmatpush2.msra.mxu0 0.0
    %8031 = vmatprep.subr.mxu0 0.0
    %8032 = vmatpush2.msra.mxu0 0.0
    %8033 = vmatprep.subr.mxu0 0.0
    %8034 = vmatpush2.msra.mxu0 0.0
    %8035 = vmatprep.subr.mxu0 0.0
    %8036 = vmatpush2.msra.mxu0 0.0
    %8037 = vmatprep.subr.mxu0 0.0
    %8038 = vmatpush2.msra.mxu0 0.0
    %8039 = vmatprep.subr.mxu0 0.0
    %8040 = vmatpush2.msra.mxu0 0.0
    %8041 = vmatprep.subr.mxu0 0.0
    %8042 = vmatpush2.msra.mxu0 0.0
    %8043 = vmatprep.mubr.f32.mxu0 0.0
    %v8044 = vand.u32 %v7715, 4294901760
    %v8045 = vsub.f32 %v7715, %v8044
    %v8046 = vand.u32 %v8045, 4294901760
    %8047 = vmatmul.mubr.f32.gmra.mxu0 %v8046
    %v8048 = vpop.f32.mrf.mxu0
    %v8049 = vadd.f32 %v7967, %v8048
    %v8050 = vpop.f32.mrf.mxu0
    %8051 = vmatprep.mubr.f32.mxu0 0.0
    %v8052 = vand.u32 %v7718, 4294901760
    %v8053 = vsub.f32 %v7718, %v8052
    %v8054 = vand.u32 %v8053, 4294901760
    %8055 = vmatmul.mubr.f32.gmra.mxu0 %v8054
    %v8056 = vpop.f32.mrf.mxu0
    %v8057 = vadd.f32 %v7974, %v8056
    %v8058 = vpop.f32.mrf.mxu0
    %8059 = vdwg.mxu0
    %8060 = vmatprep.subr.mxu0 0.0
    %8061 = vmatpush1.msra.mxu0 0.0
    %8062 = vmatprep.subr.mxu0 0.0
    %8063 = vmatpush1.msra.mxu0 0.0
    %8064 = vmatprep.subr.mxu0 0.0
    %8065 = vmatpush1.msra.mxu0 0.0
    %8066 = vmatprep.subr.mxu0 0.0
    %8067 = vmatpush1.msra.mxu0 0.0
    %8068 = vmatprep.subr.mxu0 0.0
    %8069 = vmatpush1.msra.mxu0 0.0
    %8070 = vmatprep.subr.mxu0 0.0
    %8071 = vmatpush1.msra.mxu0 0.0
    %8072 = vmatprep.subr.mxu0 0.0
    %8073 = vmatpush1.msra.mxu0 0.0
    %8074 = vmatprep.subr.mxu0 0.0
    %8075 = vmatpush1.msra.mxu0 0.0
    %8076 = vmatprep.subr.mxu0 0.0
    %8077 = vmatpush1.msra.mxu0 0.0
    %8078 = vmatprep.subr.mxu0 0.0
    %8079 = vmatpush1.msra.mxu0 0.0
    %8080 = vmatprep.subr.mxu0 0.0
    %8081 = vmatpush1.msra.mxu0 0.0
    %8082 = vmatprep.subr.mxu0 0.0
    %8083 = vmatpush1.msra.mxu0 0.0
    %8084 = vmatprep.subr.mxu0 0.0
    %8085 = vmatpush1.msra.mxu0 0.0
    %8086 = vmatprep.subr.mxu0 0.0
    %8087 = vmatpush1.msra.mxu0 0.0
    %8088 = vmatprep.subr.mxu0 0.0
    %v8089 = vand.u32 %v76, 4294901760
    %v8090 = vsub.f32 %v76, %v8089
    %v8091 = vand.u32 %v8090, 4294901760
    %8092 = vmatpush1.msra.mxu0 %v8091
    %8093 = vmatprep.subr.mxu0 0.0
    %v8094 = vand.u32 %v75, 4294901760
    %v8095 = vsub.f32 %v75, %v8094
    %v8096 = vand.u32 %v8095, 4294901760
    %8097 = vmatpush1.msra.mxu0 %v8096
    %8098 = vmatprep.subr.mxu0 0.0
    %8099 = vmatpush2.msra.mxu0 0.0
    %8100 = vmatprep.subr.mxu0 0.0
    %8101 = vmatpush2.msra.mxu0 0.0
    %8102 = vmatprep.subr.mxu0 0.0
    %8103 = vmatpush2.msra.mxu0 0.0
    %8104 = vmatprep.subr.mxu0 0.0
    %8105 = vmatpush2.msra.mxu0 0.0
    %8106 = vmatprep.subr.mxu0 0.0
    %8107 = vmatpush2.msra.mxu0 0.0
    %8108 = vmatprep.subr.mxu0 0.0
    %8109 = vmatpush2.msra.mxu0 0.0
    %8110 = vmatprep.subr.mxu0 0.0
    %8111 = vmatpush2.msra.mxu0 0.0
    %8112 = vmatprep.subr.mxu0 0.0
    %8113 = vmatpush2.msra.mxu0 0.0
    %8114 = vmatprep.subr.mxu0 0.0
    %8115 = vmatpush2.msra.mxu0 0.0
    %8116 = vmatprep.subr.mxu0 0.0
    %8117 = vmatpush2.msra.mxu0 0.0
    %8118 = vmatprep.subr.mxu0 0.0
    %8119 = vmatpush2.msra.mxu0 0.0
    %8120 = vmatprep.subr.mxu0 0.0
    %8121 = vmatpush2.msra.mxu0 0.0
    %8122 = vmatprep.subr.mxu0 0.0
    %8123 = vmatpush2.msra.mxu0 0.0
    %8124 = vmatprep.subr.mxu0 0.0
    %8125 = vmatpush2.msra.mxu0 0.0
    %8126 = vmatprep.subr.mxu0 0.0
    %8127 = vmatpush2.msra.mxu0 0.0
    %8128 = vmatprep.subr.mxu0 0.0
    %8129 = vmatpush2.msra.mxu0 0.0
    %8130 = vmatprep.mubr.f32.mxu0 0.0
    %v8131 = vand.u32 %v7715, 4294901760
    %8132 = vmatmul.mubr.f32.gmra.mxu0 %v8131
    %v8133 = vpop.f32.mrf.mxu0
    %v8134 = vadd.f32 %v8049, %v8133
    %v8135 = vpop.f32.mrf.mxu0
    %8136 = vmatprep.mubr.f32.mxu0 0.0
    %v8137 = vand.u32 %v7718, 4294901760
    %8138 = vmatmul.mubr.f32.gmra.mxu0 %v8137
    %v8139 = vpop.f32.mrf.mxu0
    %v8140 = vadd.f32 %v8057, %v8139
    %v8141 = vpop.f32.mrf.mxu0
    %8142 = vdwg.mxu0
    %8143 = vmatprep.subr.mxu0 0.0
    %8144 = vmatpush1.msra.mxu0 0.0
    %8145 = vmatprep.subr.mxu0 0.0
    %8146 = vmatpush1.msra.mxu0 0.0
    %8147 = vmatprep.subr.mxu0 0.0
    %8148 = vmatpush1.msra.mxu0 0.0
    %8149 = vmatprep.subr.mxu0 0.0
    %8150 = vmatpush1.msra.mxu0 0.0
    %8151 = vmatprep.subr.mxu0 0.0
    %8152 = vmatpush1.msra.mxu0 0.0
    %8153 = vmatprep.subr.mxu0 0.0
    %8154 = vmatpush1.msra.mxu0 0.0
    %8155 = vmatprep.subr.mxu0 0.0
    %8156 = vmatpush1.msra.mxu0 0.0
    %8157 = vmatprep.subr.mxu0 0.0
    %8158 = vmatpush1.msra.mxu0 0.0
    %8159 = vmatprep.subr.mxu0 0.0
    %8160 = vmatpush1.msra.mxu0 0.0
    %8161 = vmatprep.subr.mxu0 0.0
    %8162 = vmatpush1.msra.mxu0 0.0
    %8163 = vmatprep.subr.mxu0 0.0
    %8164 = vmatpush1.msra.mxu0 0.0
    %8165 = vmatprep.subr.mxu0 0.0
    %8166 = vmatpush1.msra.mxu0 0.0
    %8167 = vmatprep.subr.mxu0 0.0
    %8168 = vmatpush1.msra.mxu0 0.0
    %8169 = vmatprep.subr.mxu0 0.0
    %8170 = vmatpush1.msra.mxu0 0.0
    %8171 = vmatprep.subr.mxu0 0.0
    %v8172 = vand.u32 %v76, 4294901760
    %8173 = vmatpush1.msra.mxu0 %v8172
    %8174 = vmatprep.subr.mxu0 0.0
    %v8175 = vand.u32 %v75, 4294901760
    %8176 = vmatpush1.msra.mxu0 %v8175
    %8177 = vmatprep.subr.mxu0 0.0
    %8178 = vmatpush2.msra.mxu0 0.0
    %8179 = vmatprep.subr.mxu0 0.0
    %8180 = vmatpush2.msra.mxu0 0.0
    %8181 = vmatprep.subr.mxu0 0.0
    %8182 = vmatpush2.msra.mxu0 0.0
    %8183 = vmatprep.subr.mxu0 0.0
    %8184 = vmatpush2.msra.mxu0 0.0
    %8185 = vmatprep.subr.mxu0 0.0
    %8186 = vmatpush2.msra.mxu0 0.0
    %8187 = vmatprep.subr.mxu0 0.0
    %8188 = vmatpush2.msra.mxu0 0.0
    %8189 = vmatprep.subr.mxu0 0.0
    %8190 = vmatpush2.msra.mxu0 0.0
    %8191 = vmatprep.subr.mxu0 0.0
    %8192 = vmatpush2.msra.mxu0 0.0
    %8193 = vmatprep.subr.mxu0 0.0
    %8194 = vmatpush2.msra.mxu0 0.0
    %8195 = vmatprep.subr.mxu0 0.0
    %8196 = vmatpush2.msra.mxu0 0.0
    %8197 = vmatprep.subr.mxu0 0.0
    %8198 = vmatpush2.msra.mxu0 0.0
    %8199 = vmatprep.subr.mxu0 0.0
    %8200 = vmatpush2.msra.mxu0 0.0
    %8201 = vmatprep.subr.mxu0 0.0
    %8202 = vmatpush2.msra.mxu0 0.0
    %8203 = vmatprep.subr.mxu0 0.0
    %8204 = vmatpush2.msra.mxu0 0.0
    %8205 = vmatprep.subr.mxu0 0.0
    %8206 = vmatpush2.msra.mxu0 0.0
    %8207 = vmatprep.subr.mxu0 0.0
    %8208 = vmatpush2.msra.mxu0 0.0
    %8209 = vmatprep.mubr.f32.mxu0 0.0
    %v8210 = vand.u32 %v7715, 4294901760
    %8211 = vmatmul.mubr.f32.gmra.mxu0 %v8210
    %v8212 = vpop.f32.mrf.mxu0
    %v8213 = vadd.f32 %v8134, %v8212
    %v8214 = vpop.f32.mrf.mxu0
    %8215 = vmatprep.mubr.f32.mxu0 0.0
    %v8216 = vand.u32 %v7718, 4294901760
    %8217 = vmatmul.mubr.f32.gmra.mxu0 %v8216
    %v8218 = vpop.f32.mrf.mxu0
    %v8219 = vadd.f32 %v8140, %v8218
    %v8220 = vpop.f32.mrf.mxu0
    %8221 = vdwg.mxu0
    %vm8222 = vcmp.lt.f32.partialorder %v8213, %v6188
    %vm8223 = vcmp.lt.f32.partialorder %v8219, %v6189
    %v8224 = vsel %vm8222, 3, %v6186
    %v8225 = vsel %vm8223, 3, %v6187
    %v8226 = vsel %vm8222, %v8213, %v6188
    %v8227 = vsel %vm8223, %v8219, %v6189
    %p8228 = scmp.eq.s32.totalorder 0, 0
    // Predicated region
    $region34: #{tpu_custom_call.1} parent=1 // pred_check
      %p8229 = pneg %p8228
    $region35: #{tpu_custom_call.1} parent=1 // pred_check_branch
      %8231 = sbr.rel (%p8229) target = $region37
    $region36: #{tpu_custom_call.1} parent=1 // pred_region
      %8232 = vst.msk [vmem:[#allocation2] sm:$0xff] %vm83, %v8226
      %8233 = vst.msk [vmem:[#allocation2 + $0x8] sm:$0xff] %vm83, %v8227
      %8234 = vst.msk [vmem:[#allocation11] sm:$0xff] %vm83, %v8224
      %8235 = vst.msk [vmem:[#allocation11 + $0x8] sm:$0xff] %vm83, %v8225
    $region37: #{tpu_custom_call.1} parent=1 // pred_fallthru
      _
    %p8236 = scmp.gt.s32.totalorder 0, 0
    // Predicated region
    $region38: #{tpu_custom_call.1} parent=1 // pred_check
      %p8237 = pneg %p8236
    $region39: #{tpu_custom_call.1} parent=1 // pred_check_branch
      %8239 = sbr.rel (%p8237) target = $region41
    $region40: #{tpu_custom_call.1} parent=1 // pred_region
      %v8240 = vld [vmem:[#allocation2] sm:$0xff]
      %v8241 = vld [vmem:[#allocation2 + $0x8] sm:$0xff]
      %vm8242 = vcmp.lt.f32.partialorder %v8226, %v8240
      %vm8243 = vcmp.lt.f32.partialorder %v8227, %v8241
      %s8244 = smul.u32 0, 4
      %v8245 = vstv %s8244
      %v8246 = vadd.s32 %v8245, %v8224
      %v8247 = vadd.s32 %v8245, %v8225
      %v8248 = vld [vmem:[#allocation11] sm:$0xff]
      %v8249 = vld [vmem:[#allocation11 + $0x8] sm:$0xff]
      %v8250 = vsel %vm8242, %v8246, %v8248
      %v8251 = vsel %vm8243, %v8247, %v8249
      %8252 = vst.msk [vmem:[#allocation11] sm:$0xff] %vm83, %v8250
      %8253 = vst.msk [vmem:[#allocation11 + $0x8] sm:$0xff] %vm83, %v8251
      %v8254 = vld [vmem:[#allocation2] sm:$0xff]
      %v8255 = vld [vmem:[#allocation2 + $0x8] sm:$0xff]
      %v8256 = vsel %vm8242, %v8226, %v8254
      %v8257 = vsel %vm8243, %v8227, %v8255
      %8258 = vst.msk [vmem:[#allocation2] sm:$0xff] %vm83, %v8256
      %8259 = vst.msk [vmem:[#allocation2 + $0x8] sm:$0xff] %vm83, %v8257
    $region41: #{tpu_custom_call.1} parent=1 // pred_fallthru
      _
    // Predicated region
    $region42: #{tpu_custom_call.1} parent=1 // pred_check
      _
    $region43: #{tpu_custom_call.1} parent=1 // pred_check_branch
      %8261 = sbr.rel (0) target = $region45
    $region44: #{tpu_custom_call.1} parent=1 // pred_region
      %s8263 = ssub.s32 256, 256
      %8264 = vsyncadd [#allocation5], %s8263
      %s8265 = sshll.u32 [#allocation11], 4
      %s8266 = int_to_ptr.vmem [resolvable:$true] %s8265
      %8271 = dma.vmem_to_hbm [thread:$0]  %s8266, 256, %s4, [#allocation5], 128, 128, 8
    $region45: #{tpu_custom_call.1} parent=1 // pred_fallthru
      _
    // Predicated region
    $region46: #{tpu_custom_call.1} parent=1 // pred_check
      _
    $region47: #{tpu_custom_call.1} parent=1 // pred_check_branch
      %8273 = sbr.rel (0) target = $region49
    $region48: #{tpu_custom_call.1} parent=1 // pred_region
      %8274 = dma.done [#allocation5], 256
    $region49: #{tpu_custom_call.1} parent=1 // pred_fallthru
      _
    %8275 = vsyncpa [#allocation4], 1
    %8276 = vsyncpa [#allocation7], 1
    %8277 = vsyncpa [#allocation10], 1
    %8278 = vsyncpa [#allocation5], 1

</llo_original>
